<compile_context>
chip_gen: v7x
topology: tpu7x:2x2x1
jax: 0.10.0
libtpu: 0.0.40
codegen_flags: <defaults>
</compile_context>

<pallas_src>
import functools

import jax
import jax.numpy as jnp
from jax import lax
from jax.experimental import pallas as pl
from jax.experimental.pallas import tpu as pltpu


def _round_up(x, m):
    return (x + m - 1) // m * m


# ----------------------------------------------------------------------------
# Fused kernel: conv3x3 -> FILM -> LeakyReLU -> conv3x3, one (n, row-tile) step
# ----------------------------------------------------------------------------
def _fused_block_kernel(x_ref, w1_ref, w2_ref, scale_ref, bias_ref, b2_ref,
                        o_ref, xpad_ref, *, H, W, TH, HT, Wo, slope):
    # x_ref:     (H, W, Cin)      full image of this batch element
    # w1_ref:    (9, Cin, Lp)     conv1 weights, tap-major (dy*3+dx)
    # w2_ref:    (9, Lp, CP)      conv2 weights, tap-major, Cout padded to CP
    # scale_ref: (1, Lp) f32      FILM scale (per batch element)
    # bias_ref:  (1, Lp) f32      FILM bias + folded conv1 bias
    # b2_ref:    (1, CP) f32      conv2 bias (zero-padded)
    # o_ref:     (Cout, TH*W)     lane-dense output block
    # xpad_ref:  (TH+4, Wo+2, Cin) scratch: zero-padded input window
    Cin = x_ref.shape[-1]
    Lp = w1_ref.shape[-1]
    CP = w2_ref.shape[-1]
    Cout = o_ref.shape[0]
    He = TH + 2                      # conv1-output rows needed (1-row halo for conv2)

    h = pl.program_id(1)
    a = h * TH                       # first output row of this tile
    zdt = xpad_ref.dtype

    # ---- stage the zero-padded input window with a few bulk copies -------------
    # 2-column left/right zero borders (never touched by the copies below).
    xpad_ref[:, pl.ds(0, 2), :] = jnp.zeros((TH + 4, 2, Cin), zdt)
    xpad_ref[:, pl.ds(2 + W, Wo - W), :] = jnp.zeros((TH + 4, Wo - W, Cin), zdt)
    # Body rows of this tile: ONE contiguous copy (replaces the per-row loop).
    xpad_ref[pl.ds(2, TH), pl.ds(2, W), :] = x_ref[pl.ds(a, TH), :, :]
    if HT == 1:
        # Single row tile: the top/bottom halos are always the conv zero padding.
        xpad_ref[pl.ds(0, 2), pl.ds(2, W), :] = jnp.zeros((2, W, Cin), zdt)
        xpad_ref[pl.ds(TH + 2, 2), pl.ds(2, W), :] = jnp.zeros((2, W, Cin), zdt)
    else:
        @pl.when(h > 0)
        def _():
            xpad_ref[pl.ds(0, 2), pl.ds(2, W), :] = x_ref[pl.ds(a - 2, 2), :, :]

        @pl.when(h == 0)
        def _():
            xpad_ref[pl.ds(0, 2), pl.ds(2, W), :] = jnp.zeros((2, W, Cin), zdt)

        @pl.when(h < HT - 1)
        def _():
            xpad_ref[pl.ds(TH + 2, 2), pl.ds(2, W), :] = x_ref[pl.ds(a + TH, 2), :, :]

        @pl.when(h == HT - 1)
        def _():
            xpad_ref[pl.ds(TH + 2, 2), pl.ds(2, W), :] = jnp.zeros((2, W, Cin), zdt)

    xpad = xpad_ref[...]             # (TH+4, Wo+2, Cin)

    # ---- conv1: 9 accumulated per-tap matmuls (no 9*Cin lane concatenation) ----
    y1 = jnp.zeros((He * Wo, Lp), jnp.float32)
    for t in range(9):
        dy, dx = t // 3, t % 3
        tap = xpad[dy:dy + He, dx:dx + Wo, :].reshape(He * Wo, Cin)
        y1 = y1 + jnp.dot(tap, w1_ref[t], preferred_element_type=jnp.float32)

    # ---- FILM (Identity norm; conv1 bias folded into `bias`) + LeakyReLU, f32 --
    y1 = y1 * scale_ref[...] + bias_ref[...]
    y1 = jnp.where(y1 >= 0, y1, slope * y1)

    # ---- zero every position outside the image: conv2 sees SAME zero-padding ---
    y1 = y1.reshape(He, Wo, Lp)
    rpos = (a - 1) + lax.broadcasted_iota(jnp.int32, (He, Wo, 1), 0)
    cpos = -1 + lax.broadcasted_iota(jnp.int32, (He, Wo, 1), 1)
    inside = (rpos >= 0) & (rpos < H) & (cpos >= 0) & (cpos < W)
    y1 = jnp.where(inside, y1, 0.0).astype(w2_ref.dtype)

    # ---- conv2: 9 accumulated per-tap matmuls (K = Lp, lane-dense N = CP) ------
    acc = jnp.zeros((TH * W, CP), jnp.float32)
    for t in range(9):
        dy, dx = t // 3, t % 3
        tap = y1[dy:dy + TH, dx:dx + W, :].reshape(TH * W, Lp)
        acc = acc + jnp.dot(tap, w2_ref[t], preferred_element_type=jnp.float32)
    acc = acc + b2_ref[...]

    # ---- lane-dense store: (Cout, TH*W) block; padded channels sliced off ------
    o_ref[...] = jnp.transpose(acc)[:Cout, :].astype(o_ref.dtype)


def fused_cno_film_block(x_nhwc, w1, w2, scale, bias, b2, *, Cout, TH, slope,
                         out_dtype, vmem_limit):
    N, H, W, Cin = x_nhwc.shape
    Lp = w1.shape[-1]
    CP = w2.shape[-1]
    HT = H // TH
    Wo = _round_up(W + 2, 8)          # conv1-output width (8-aligned for reshapes)

    kernel = functools.partial(_fused_block_kernel, H=H, W=W, TH=TH, HT=HT,
                               Wo=Wo, slope=slope)

    return pl.pallas_call(
        kernel,
        out_shape=jax.ShapeDtypeStruct((N, HT, Cout, TH * W), out_dtype),
        grid_spec=pltpu.PrefetchScalarGridSpec(
            num_scalar_prefetch=0,
            grid=(N, HT),
            in_specs=[
                # full image per batch element; index constant in h -> no refetch
                pl.BlockSpec((None, H, W, Cin), lambda n, h: (n, 0, 0, 0)),
                # weights/biases: constant index_map -> resident in VMEM
                pl.BlockSpec((9, Cin, Lp), lambda n, h: (0, 0, 0)),
                pl.BlockSpec((9, Lp, CP), lambda n, h: (0, 0, 0)),
                pl.BlockSpec((None, 1, Lp), lambda n, h: (n, 0, 0)),
                pl.BlockSpec((None, 1, Lp), lambda n, h: (n, 0, 0)),
                pl.BlockSpec((1, CP), lambda n, h: (0, 0)),
            ],
            out_specs=pl.BlockSpec((None, None, Cout, TH * W),
                                   lambda n, h: (n, h, 0, 0)),
            scratch_shapes=[pltpu.VMEM((TH + 4, Wo + 2, Cin), x_nhwc.dtype)],
        ),
        compiler_params=pltpu.CompilerParams(
            dimension_semantics=("parallel", "parallel"),
            vmem_limit_bytes=vmem_limit),
    )(x_nhwc, w1, w2, scale, bias, b2)


# ----------------------------------------------------------------------------
# Row-tile / VMEM-budget selection
# ----------------------------------------------------------------------------
def _vmem_budget_bytes():
    try:
        cap = pltpu.get_tpu_info().vmem_capacity_bytes
    except Exception:
        cap = 128 * 1024 * 1024
    # <= ~48 MiB on v7x (64 MiB VMEM), up to 96 MiB on v5e/v6e (128 MiB VMEM).
    return int(min(cap * 3 // 4, 96 * 1024 * 1024))


def _pick_row_tile(H, W, Cin, Lp, CP, Cout, esz, budget):
    """Whole image per step for small H; otherwise the largest row tile whose
    per-step working set stays well inside the scoped-VMEM budget."""
    if H <= 64:
        return H
    wo = _round_up(W + 2, 8)

    def need(th):
        return (2 * H * W * Cin * esz                 # double-buffered input block
                + (th + 4) * (wo + 2) * Cin * esz     # padded-input scratch
                + (th + 2) * wo * Lp * 4              # conv1 output (f32)
                + th * W * CP * 4                     # conv2 accumulator (f32)
                + 9 * Cin * Lp * esz + 9 * Lp * CP * esz   # resident weights
                + 2 * Cout * th * W * 4)              # double-buffered output block

    for th in (H, 128, 64, 32, 16, 8):
        if H % th == 0 and need(th) <= budget * 7 // 10:
            return th
    return 8 if H % 8 == 0 else H


# ----------------------------------------------------------------------------
# FILM scale/bias MLPs (tiny Linear layers; always f32, negligible cost)
# ----------------------------------------------------------------------------
def film_scale_bias(film, time):
    t = time.reshape(-1, 1).astype(jnp.float32)                  # (N, 1)
    lat_s = t @ film['inp2lat_scale_w'].T + film['inp2lat_scale_b']
    scale = lat_s @ film['lat2scale_w'].T + film['lat2scale_b']  # (N, C)
    lat_b = t @ film['inp2lat_bias_w'].T + film['inp2lat_bias_b']
    bias = lat_b @ film['lat2bias_w'].T + film['lat2bias_b']     # (N, C)
    return scale, bias


# ----------------------------------------------------------------------------
# Parameter init (mirrors the module's __init__ shapes / fills)
# ----------------------------------------------------------------------------
def init_params(key, in_channels, out_channels, latent_dim, intermediate=128):
    keys = jax.random.split(key, 4)

    def conv_init(k, cout, cin, kh, kw):
        fan_in = cin * kh * kw
        bound = 1.0 / jnp.sqrt(jnp.float32(fan_in))
        kw_, kb_ = jax.random.split(k)
        w = jax.random.uniform(kw_, (cout, cin, kh, kw), jnp.float32, -bound, bound)
        b = jax.random.uniform(kb_, (cout,), jnp.float32, -bound, bound)
        return w, b

    w1, b1 = conv_init(keys[0], latent_dim, in_channels, 3, 3)   # OIHW
    w2, b2 = conv_init(keys[1], out_channels, latent_dim, 3, 3)  # OIHW

    film = dict(
        inp2lat_scale_w=jnp.zeros((intermediate, 1), jnp.float32),   # fill_(0)
        inp2lat_scale_b=jax.random.uniform(keys[2], (intermediate,), jnp.float32, -1.0, 1.0),
        lat2scale_w=jnp.zeros((latent_dim, intermediate), jnp.float32),  # fill_(0)
        lat2scale_b=jnp.ones((latent_dim,), jnp.float32),                # fill_(1)
        inp2lat_bias_w=jnp.zeros((intermediate, 1), jnp.float32),        # fill_(0)
        inp2lat_bias_b=jax.random.uniform(keys[3], (intermediate,), jnp.float32, -1.0, 1.0),
        lat2bias_w=jnp.zeros((latent_dim, intermediate), jnp.float32),   # fill_(0)
        lat2bias_b=jnp.zeros((latent_dim,), jnp.float32),                # fill_(0)
    )
    return dict(w1=w1, b1=b1, w2=w2, b2=b2, film=film)


# ----------------------------------------------------------------------------
# LiftProjectBlock forward (public wrapper, NCHW in / NCHW out)
# ----------------------------------------------------------------------------
def lift_project_block(x_nchw, time, params, slope=0.2,
                       compute_dtype=jnp.bfloat16):
    N, Cin, H, W = x_nchw.shape
    L = params['b1'].shape[0]
    Cout = params['b2'].shape[0]
    assert W % 8 == 0, "kernel assumes W % 8 == 0 (free sublane reshapes)"
    # TODO(synk): pad/mask the width inside the kernel for arbitrary W.

    Lp = _round_up(max(L, 128), 128)          # lane-dense latent channels
    CP = _round_up(max(Cout, 128), 128)       # lane-dense conv2 matmul width

    vmem_limit = _vmem_budget_bytes()
    esz = jnp.dtype(compute_dtype).itemsize
    TH = _pick_row_tile(H, W, Cin, Lp, CP, Cout, esz, vmem_limit)
    assert H % TH == 0
    HT = H // TH

    # NCHW -> NHWC; MXU operands in compute_dtype (bf16 by default, f32 accum).
    x = jnp.transpose(x_nchw, (0, 2, 3, 1)).astype(compute_dtype)

    # conv1 weight OIHW -> (9, Cin, Lp); conv2 weight OIHW -> (9, Lp, CP).
    w1 = jnp.transpose(params['w1'], (2, 3, 1, 0))                       # (3,3,Cin,L)
    w1 = jnp.pad(w1, ((0, 0), (0, 0), (0, 0), (0, Lp - L)))
    w1 = w1.reshape(9, Cin, Lp).astype(compute_dtype)
    w2 = jnp.transpose(params['w2'], (2, 3, 1, 0))                       # (3,3,L,Cout)
    w2 = jnp.pad(w2, ((0, 0), (0, 0), (0, Lp - L), (0, CP - Cout)))
    w2 = w2.reshape(9, Lp, CP).astype(compute_dtype)

    # FILM scale/bias (f32). conv1 bias is folded into the FILM bias:
    #   (conv + b1) * scale + bias = conv * scale + (b1 * scale + bias)
    scale, bias = film_scale_bias(params['film'], time)                  # (N, L) f32
    bias_eff = scale * params['b1'][None, :] + bias
    scale_p = jnp.pad(scale, ((0, 0), (0, Lp - L))).reshape(N, 1, Lp)
    bias_p = jnp.pad(bias_eff, ((0, 0), (0, Lp - L))).reshape(N, 1, Lp)
    b2 = jnp.pad(params['b2'].astype(jnp.float32), (0, CP - Cout)).reshape(1, CP)

    # CNOBlock conv + Identity bn + FILM + activation, then the second conv,
    # all fused in one kernel.
    # TODO(synk): the reference 'cno_lrelu' (class LReLu) is the StyleGAN3-style
    # anti-aliased LeakyReLU with filtered up/down-sampling; its definition is
    # not included in the provided source, so a plain LeakyReLU(0.2) is applied.
    y = fused_cno_film_block(x, w1, w2, scale_p, bias_p, b2, Cout=Cout,
                             TH=TH, slope=slope, out_dtype=x_nchw.dtype,
                             vmem_limit=vmem_limit)      # (N, HT, Cout, TH*W)

    # Undo the lane-dense (Cout, TH*W) block layout -> NCHW.
    y = y.reshape(N, HT, Cout, TH, W)
    y = jnp.transpose(y, (0, 2, 1, 3, 4)).reshape(N, Cout, H, W)
    return y


# ----------------------------------------------------------------------------
# Pure-JAX reference (lax.conv) for correctness checks
# ----------------------------------------------------------------------------
def ref_forward(x_nchw, time, params, slope=0.2):
    dn = ('NCHW', 'OIHW', 'NCHW')
    y = lax.conv_general_dilated(x_nchw, params['w1'], (1, 1), 'SAME',
                                 dimension_numbers=dn)
    y = y + params['b1'][None, :, None, None]
    scale, bias = film_scale_bias(params['film'], time)
    y = y * scale[:, :, None, None] + bias[:, :, None, None]
    y = jnp.where(y >= 0, y, slope * y)
    z = lax.conv_general_dilated(y, params['w2'], (1, 1), 'SAME',
                                 dimension_numbers=dn)
    z = z + params['b2'][None, :, None, None]
    return z


if __name__ == "__main__":
    key = jax.random.PRNGKey(0)
    in_channels, out_channels, latent_dim = 4, 4, 32
    N, H, W = 2, 16, 16

    kx, kt, kp, kf = jax.random.split(key, 4)
    x = jax.random.normal(kx, (N, in_channels, H, W), jnp.float32)
    time = jax.random.uniform(kt, (N,), jnp.float32)
    params = init_params(kp, in_channels, out_channels, latent_dim)

    # 1) faithful FILM init (scale=1, bias=0), f32 MXU operands, tight tolerance
    ref = ref_forward(x, time, params)
    out = jax.block_until_ready(
        lift_project_block(x, time, params, compute_dtype=jnp.float32))
    assert out.shape == (N, out_channels, H, W), out.shape
    assert jnp.allclose(out, ref, atol=1e-3, rtol=1e-3), float(
        jnp.max(jnp.abs(out - ref)))

    # 2) randomized FILM weights (exercises the scale/bias path), f32, tight tol
    kfs = jax.random.split(kf, 5)
    film2 = dict(
        inp2lat_scale_w=0.1 * jax.random.normal(kfs[0], (128, 1), jnp.float32),
        inp2lat_scale_b=params['film']['inp2lat_scale_b'],
        lat2scale_w=0.1 * jax.random.normal(kfs[1], (latent_dim, 128), jnp.float32),
        lat2scale_b=jnp.ones((latent_dim,), jnp.float32),
        inp2lat_bias_w=0.1 * jax.random.normal(kfs[2], (128, 1), jnp.float32),
        inp2lat_bias_b=params['film']['inp2lat_bias_b'],
        lat2bias_w=0.1 * jax.random.normal(kfs[3], (latent_dim, 128), jnp.float32),
        lat2bias_b=0.1 * jax.random.normal(kfs[4], (latent_dim,), jnp.float32),
    )
    params2 = dict(params, film=film2)
    ref2 = ref_forward(x, time, params2)
    out2 = jax.block_until_ready(
        lift_project_block(x, time, params2, compute_dtype=jnp.float32))
    assert jnp.allclose(out2, ref2, atol=1e-3, rtol=1e-3), float(
        jnp.max(jnp.abs(out2 - ref2)))

    # 3) default bf16 MXU operands, f32 accumulation / FILM / activation
    out_bf = jax.block_until_ready(lift_project_block(x, time, params2))
    assert jnp.allclose(out_bf, ref2, atol=5e-2, rtol=5e-2), float(
        jnp.max(jnp.abs(out_bf - ref2)))

    print("KERNEL_OK")
</pallas_src>

<mosaic_0001>
module attributes {stable_mosaic.version = 11 : i64} {
  func.func @_fused_block_kernel(%arg0: i32, %arg1: i32, %arg2: memref<1x16x16x4xf32, #tpu.memory_space<vmem>>, %arg3: memref<9x4x128xf32, #tpu.memory_space<vmem>>, %arg4: memref<9x128x128xf32, #tpu.memory_space<vmem>>, %arg5: memref<1x1x128xf32, #tpu.memory_space<vmem>>, %arg6: memref<1x1x128xf32, #tpu.memory_space<vmem>>, %arg7: memref<1x128xf32, #tpu.memory_space<vmem>>, %arg8: memref<1x1x4x256xf32, #tpu.memory_space<vmem>>, %arg9: memref<20x26x4xf32, #tpu.memory_space<vmem>>) attributes {dimension_semantics = [#tpu.dimension_semantics<parallel>, #tpu.dimension_semantics<parallel>], iteration_bounds = array<i64: 2, 1>, scalar_prefetch = 0 : i64, scratch_operands = 1 : i64, tpu.core_type = #tpu.core_type<tc>, window_params = [{transform_indices = @transform_0, window_bounds = array<i64: 1, 16, 16, 4>}, {pipeline_mode = #tpu.pipeline_mode<synchronous>, transform_indices = @transform_1, window_bounds = array<i64: 9, 4, 128>}, {pipeline_mode = #tpu.pipeline_mode<synchronous>, transform_indices = @transform_2, window_bounds = array<i64: 9, 128, 128>}, {transform_indices = @transform_3, window_bounds = array<i64: 1, 1, 128>}, {transform_indices = @transform_4, window_bounds = array<i64: 1, 1, 128>}, {pipeline_mode = #tpu.pipeline_mode<synchronous>, transform_indices = @transform_5, window_bounds = array<i64: 1, 128>}, {transform_indices = @transform_6, window_bounds = array<i64: 1, 1, 4, 256>}]} {
    %c16_i32 = arith.constant 16 : i32
    %0 = arith.muli %arg1, %c16_i32 : i32
    %cst = arith.constant 0.000000e+00 : f32
    %1 = vector.broadcast %cst : f32 to vector<20x2x4xf32>
    %c0 = arith.constant 0 : index
    %c0_0 = arith.constant 0 : index
    %c0_1 = arith.constant 0 : index
    %2 = vector.load %arg9[%c0, %c0_0, %c0_1] : memref<20x26x4xf32, #tpu.memory_space<vmem>>, vector<20x2x4xf32>
    tpu.vector_store %arg9[%c0, %c0_0, %c0_1], %1 {strides = array<i32>} : memref<20x26x4xf32, #tpu.memory_space<vmem>>, vector<20x2x4xf32>,
    %cst_2 = arith.constant 0.000000e+00 : f32
    %3 = vector.broadcast %cst_2 : f32 to vector<20x8x4xf32>
    %c0_3 = arith.constant 0 : index
    %c18 = arith.constant 18 : index
    %c0_4 = arith.constant 0 : index
    %4 = vector.load %arg9[%c0_3, %c18, %c0_4] : memref<20x26x4xf32, #tpu.memory_space<vmem>>, vector<20x8x4xf32>
    tpu.vector_store %arg9[%c0_3, %c18, %c0_4], %3 {strides = array<i32>} : memref<20x26x4xf32, #tpu.memory_space<vmem>>, vector<20x8x4xf32>,
    %c0_5 = arith.constant 0 : index
    %5 = arith.index_cast %0 : i32 to index
    %c0_6 = arith.constant 0 : index
    %c0_7 = arith.constant 0 : index
    %6 = vector.load %arg2[%c0_5, %5, %c0_6, %c0_7] : memref<1x16x16x4xf32, #tpu.memory_space<vmem>>, vector<1x16x16x4xf32>
    %7 = vector.shape_cast %6 : vector<1x16x16x4xf32> to vector<16x16x4xf32>
    %c2 = arith.constant 2 : index
    %c2_8 = arith.constant 2 : index
    %c0_9 = arith.constant 0 : index
    %8 = vector.load %arg9[%c2, %c2_8, %c0_9] : memref<20x26x4xf32, #tpu.memory_space<vmem>>, vector<16x16x4xf32>
    tpu.vector_store %arg9[%c2, %c2_8, %c0_9], %7 {strides = array<i32>} : memref<20x26x4xf32, #tpu.memory_space<vmem>>, vector<16x16x4xf32>,
    %cst_10 = arith.constant 0.000000e+00 : f32
    %9 = vector.broadcast %cst_10 : f32 to vector<2x16x4xf32>
    %c0_11 = arith.constant 0 : index
    %c2_12 = arith.constant 2 : index
    %c0_13 = arith.constant 0 : index
    %10 = vector.load %arg9[%c0_11, %c2_12, %c0_13] : memref<20x26x4xf32, #tpu.memory_space<vmem>>, vector<2x16x4xf32>
    tpu.vector_store %arg9[%c0_11, %c2_12, %c0_13], %9 {strides = array<i32>} : memref<20x26x4xf32, #tpu.memory_space<vmem>>, vector<2x16x4xf32>,
    %cst_14 = arith.constant 0.000000e+00 : f32
    %11 = vector.broadcast %cst_14 : f32 to vector<2x16x4xf32>
    %c18_15 = arith.constant 18 : index
    %c2_16 = arith.constant 2 : index
    %c0_17 = arith.constant 0 : index
    %12 = vector.load %arg9[%c18_15, %c2_16, %c0_17] : memref<20x26x4xf32, #tpu.memory_space<vmem>>, vector<2x16x4xf32>
    tpu.vector_store %arg9[%c18_15, %c2_16, %c0_17], %11 {strides = array<i32>} : memref<20x26x4xf32, #tpu.memory_space<vmem>>, vector<2x16x4xf32>,
    %c0_18 = arith.constant 0 : index
    %c0_19 = arith.constant 0 : index
    %c0_20 = arith.constant 0 : index
    %13 = vector.load %arg9[%c0_18, %c0_19, %c0_20] : memref<20x26x4xf32, #tpu.memory_space<vmem>>, vector<20x26x4xf32>
    %cst_21 = arith.constant 0.000000e+00 : f32
    %14 = vector.broadcast %cst_21 : f32 to vector<432x128xf32>
    %15 = vector.extract_strided_slice %13 {offsets = [0, 0, 0], sizes = [18, 24, 4], strides = [1, 1, 1]} : vector<20x26x4xf32> to vector<18x24x4xf32>
    %16 = vector.shape_cast %15 : vector<18x24x4xf32> to vector<432x4xf32>
    %c0_22 = arith.constant 0 : index
    %c0_23 = arith.constant 0 : index
    %c0_24 = arith.constant 0 : index
    %17 = vector.load %arg3[%c0_22, %c0_23, %c0_24] : memref<9x4x128xf32, #tpu.memory_space<vmem>>, vector<1x4x128xf32>
    %18 = vector.shape_cast %17 : vector<1x4x128xf32> to vector<4x128xf32>
    %cst_25 = arith.constant dense<0.000000e+00> : vector<432x128xf32>
    %19 = tpu.matmul %16, %18, %cst_25 {dimension_numbers = #tpu.dot_dimension_numbers<[1], [0], [0], [1], [0, 0, 1, 1], [], []>} : vector<432x4xf32>, vector<4x128xf32>, vector<432x128xf32> -> vector<432x128xf32>
    %20 = arith.addf %14, %19 : vector<432x128xf32>
    %21 = vector.extract_strided_slice %13 {offsets = [0, 1, 0], sizes = [18, 24, 4], strides = [1, 1, 1]} : vector<20x26x4xf32> to vector<18x24x4xf32>
    %22 = vector.shape_cast %21 : vector<18x24x4xf32> to vector<432x4xf32>
    %c1 = arith.constant 1 : index
    %c0_26 = arith.constant 0 : index
    %c0_27 = arith.constant 0 : index
    %23 = vector.load %arg3[%c1, %c0_26, %c0_27] : memref<9x4x128xf32, #tpu.memory_space<vmem>>, vector<1x4x128xf32>
    %24 = vector.shape_cast %23 : vector<1x4x128xf32> to vector<4x128xf32>
    %cst_28 = arith.constant dense<0.000000e+00> : vector<432x128xf32>
    %25 = tpu.matmul %22, %24, %cst_28 {dimension_numbers = #tpu.dot_dimension_numbers<[1], [0], [0], [1], [0, 0, 1, 1], [], []>} : vector<432x4xf32>, vector<4x128xf32>, vector<432x128xf32> -> vector<432x128xf32>
    %26 = arith.addf %20, %25 : vector<432x128xf32>
    %27 = vector.extract_strided_slice %13 {offsets = [0, 2, 0], sizes = [18, 24, 4], strides = [1, 1, 1]} : vector<20x26x4xf32> to vector<18x24x4xf32>
    %28 = vector.shape_cast %27 : vector<18x24x4xf32> to vector<432x4xf32>
    %c2_29 = arith.constant 2 : index
    %c0_30 = arith.constant 0 : index
    %c0_31 = arith.constant 0 : index
    %29 = vector.load %arg3[%c2_29, %c0_30, %c0_31] : memref<9x4x128xf32, #tpu.memory_space<vmem>>, vector<1x4x128xf32>
    %30 = vector.shape_cast %29 : vector<1x4x128xf32> to vector<4x128xf32>
    %cst_32 = arith.constant dense<0.000000e+00> : vector<432x128xf32>
    %31 = tpu.matmul %28, %30, %cst_32 {dimension_numbers = #tpu.dot_dimension_numbers<[1], [0], [0], [1], [0, 0, 1, 1], [], []>} : vector<432x4xf32>, vector<4x128xf32>, vector<432x128xf32> -> vector<432x128xf32>
    %32 = arith.addf %26, %31 : vector<432x128xf32>
    %33 = vector.extract_strided_slice %13 {offsets = [1, 0, 0], sizes = [18, 24, 4], strides = [1, 1, 1]} : vector<20x26x4xf32> to vector<18x24x4xf32>
    %34 = vector.shape_cast %33 : vector<18x24x4xf32> to vector<432x4xf32>
    %c3 = arith.constant 3 : index
    %c0_33 = arith.constant 0 : index
    %c0_34 = arith.constant 0 : index
    %35 = vector.load %arg3[%c3, %c0_33, %c0_34] : memref<9x4x128xf32, #tpu.memory_space<vmem>>, vector<1x4x128xf32>
    %36 = vector.shape_cast %35 : vector<1x4x128xf32> to vector<4x128xf32>
    %cst_35 = arith.constant dense<0.000000e+00> : vector<432x128xf32>
    %37 = tpu.matmul %34, %36, %cst_35 {dimension_numbers = #tpu.dot_dimension_numbers<[1], [0], [0], [1], [0, 0, 1, 1], [], []>} : vector<432x4xf32>, vector<4x128xf32>, vector<432x128xf32> -> vector<432x128xf32>
    %38 = arith.addf %32, %37 : vector<432x128xf32>
    %39 = vector.extract_strided_slice %13 {offsets = [1, 1, 0], sizes = [18, 24, 4], strides = [1, 1, 1]} : vector<20x26x4xf32> to vector<18x24x4xf32>
    %40 = vector.shape_cast %39 : vector<18x24x4xf32> to vector<432x4xf32>
    %c4 = arith.constant 4 : index
    %c0_36 = arith.constant 0 : index
    %c0_37 = arith.constant 0 : index
    %41 = vector.load %arg3[%c4, %c0_36, %c0_37] : memref<9x4x128xf32, #tpu.memory_space<vmem>>, vector<1x4x128xf32>
    %42 = vector.shape_cast %41 : vector<1x4x128xf32> to vector<4x128xf32>
    %cst_38 = arith.constant dense<0.000000e+00> : vector<432x128xf32>
    %43 = tpu.matmul %40, %42, %cst_38 {dimension_numbers = #tpu.dot_dimension_numbers<[1], [0], [0], [1], [0, 0, 1, 1], [], []>} : vector<432x4xf32>, vector<4x128xf32>, vector<432x128xf32> -> vector<432x128xf32>
    %44 = arith.addf %38, %43 : vector<432x128xf32>
    %45 = vector.extract_strided_slice %13 {offsets = [1, 2, 0], sizes = [18, 24, 4], strides = [1, 1, 1]} : vector<20x26x4xf32> to vector<18x24x4xf32>
    %46 = vector.shape_cast %45 : vector<18x24x4xf32> to vector<432x4xf32>
    %c5 = arith.constant 5 : index
    %c0_39 = arith.constant 0 : index
    %c0_40 = arith.constant 0 : index
    %47 = vector.load %arg3[%c5, %c0_39, %c0_40] : memref<9x4x128xf32, #tpu.memory_space<vmem>>, vector<1x4x128xf32>
    %48 = vector.shape_cast %47 : vector<1x4x128xf32> to vector<4x128xf32>
    %cst_41 = arith.constant dense<0.000000e+00> : vector<432x128xf32>
    %49 = tpu.matmul %46, %48, %cst_41 {dimension_numbers = #tpu.dot_dimension_numbers<[1], [0], [0], [1], [0, 0, 1, 1], [], []>} : vector<432x4xf32>, vector<4x128xf32>, vector<432x128xf32> -> vector<432x128xf32>
    %50 = arith.addf %44, %49 : vector<432x128xf32>
    %51 = vector.extract_strided_slice %13 {offsets = [2, 0, 0], sizes = [18, 24, 4], strides = [1, 1, 1]} : vector<20x26x4xf32> to vector<18x24x4xf32>
    %52 = vector.shape_cast %51 : vector<18x24x4xf32> to vector<432x4xf32>
    %c6 = arith.constant 6 : index
    %c0_42 = arith.constant 0 : index
    %c0_43 = arith.constant 0 : index
    %53 = vector.load %arg3[%c6, %c0_42, %c0_43] : memref<9x4x128xf32, #tpu.memory_space<vmem>>, vector<1x4x128xf32>
    %54 = vector.shape_cast %53 : vector<1x4x128xf32> to vector<4x128xf32>
    %cst_44 = arith.constant dense<0.000000e+00> : vector<432x128xf32>
    %55 = tpu.matmul %52, %54, %cst_44 {dimension_numbers = #tpu.dot_dimension_numbers<[1], [0], [0], [1], [0, 0, 1, 1], [], []>} : vector<432x4xf32>, vector<4x128xf32>, vector<432x128xf32> -> vector<432x128xf32>
    %56 = arith.addf %50, %55 : vector<432x128xf32>
    %57 = vector.extract_strided_slice %13 {offsets = [2, 1, 0], sizes = [18, 24, 4], strides = [1, 1, 1]} : vector<20x26x4xf32> to vector<18x24x4xf32>
    %58 = vector.shape_cast %57 : vector<18x24x4xf32> to vector<432x4xf32>
    %c7 = arith.constant 7 : index
    %c0_45 = arith.constant 0 : index
    %c0_46 = arith.constant 0 : index
    %59 = vector.load %arg3[%c7, %c0_45, %c0_46] : memref<9x4x128xf32, #tpu.memory_space<vmem>>, vector<1x4x128xf32>
    %60 = vector.shape_cast %59 : vector<1x4x128xf32> to vector<4x128xf32>
    %cst_47 = arith.constant dense<0.000000e+00> : vector<432x128xf32>
    %61 = tpu.matmul %58, %60, %cst_47 {dimension_numbers = #tpu.dot_dimension_numbers<[1], [0], [0], [1], [0, 0, 1, 1], [], []>} : vector<432x4xf32>, vector<4x128xf32>, vector<432x128xf32> -> vector<432x128xf32>
    %62 = arith.addf %56, %61 : vector<432x128xf32>
    %63 = vector.extract_strided_slice %13 {offsets = [2, 2, 0], sizes = [18, 24, 4], strides = [1, 1, 1]} : vector<20x26x4xf32> to vector<18x24x4xf32>
    %64 = vector.shape_cast %63 : vector<18x24x4xf32> to vector<432x4xf32>
    %c8 = arith.constant 8 : index
    %c0_48 = arith.constant 0 : index
    %c0_49 = arith.constant 0 : index
    %65 = vector.load %arg3[%c8, %c0_48, %c0_49] : memref<9x4x128xf32, #tpu.memory_space<vmem>>, vector<1x4x128xf32>
    %66 = vector.shape_cast %65 : vector<1x4x128xf32> to vector<4x128xf32>
    %cst_50 = arith.constant dense<0.000000e+00> : vector<432x128xf32>
    %67 = tpu.matmul %64, %66, %cst_50 {dimension_numbers = #tpu.dot_dimension_numbers<[1], [0], [0], [1], [0, 0, 1, 1], [], []>} : vector<432x4xf32>, vector<4x128xf32>, vector<432x128xf32> -> vector<432x128xf32>
    %68 = arith.addf %62, %67 : vector<432x128xf32>
    %c0_51 = arith.constant 0 : index
    %c0_52 = arith.constant 0 : index
    %c0_53 = arith.constant 0 : index
    %69 = vector.load %arg5[%c0_51, %c0_52, %c0_53] : memref<1x1x128xf32, #tpu.memory_space<vmem>>, vector<1x1x128xf32>
    %70 = vector.shape_cast %69 : vector<1x1x128xf32> to vector<1x128xf32>
    %71 = vector.broadcast %70 : vector<1x128xf32> to vector<432x128xf32>
    %72 = arith.mulf %68, %71 : vector<432x128xf32>
    %c0_54 = arith.constant 0 : index
    %c0_55 = arith.constant 0 : index
    %c0_56 = arith.constant 0 : index
    %73 = vector.load %arg6[%c0_54, %c0_55, %c0_56] : memref<1x1x128xf32, #tpu.memory_space<vmem>>, vector<1x1x128xf32>
    %74 = vector.shape_cast %73 : vector<1x1x128xf32> to vector<1x128xf32>
    %75 = vector.broadcast %74 : vector<1x128xf32> to vector<432x128xf32>
    %76 = arith.addf %72, %75 : vector<432x128xf32>
    %cst_57 = arith.constant 0.000000e+00 : f32
    %77 = vector.broadcast %cst_57 : f32 to vector<432x128xf32>
    %78 = arith.cmpf oge, %76, %77 : vector<432x128xf32>
    %cst_58 = arith.constant 2.000000e-01 : f32
    %79 = vector.broadcast %cst_58 : f32 to vector<432x128xf32>
    %80 = arith.mulf %79, %76 : vector<432x128xf32>
    %81 = arith.select %78, %76, %80 : vector<432x128xi1>, vector<432x128xf32>
    %82 = vector.shape_cast %81 : vector<432x128xf32> to vector<18x24x128xf32>
    %c1_i32 = arith.constant 1 : i32
    %83 = arith.subi %0, %c1_i32 : i32
    %84 = tpu.iota {dimensions = array<i32: 0>} : vector<18x24x1xi32>
    %85 = vector.broadcast %83 : i32 to vector<18x24x1xi32>
    %86 = arith.addi %85, %84 : vector<18x24x1xi32>
    %87 = tpu.iota {dimensions = array<i32: 1>} : vector<18x24x1xi32>
    %c-1_i32 = arith.constant -1 : i32
    %88 = vector.broadcast %c-1_i32 : i32 to vector<18x24x1xi32>
    %89 = arith.addi %88, %87 : vector<18x24x1xi32>
    %c0_i32 = arith.constant 0 : i32
    %90 = vector.broadcast %c0_i32 : i32 to vector<18x24x1xi32>
    %91 = arith.cmpi sge, %86, %90 : vector<18x24x1xi32>
    %c16_i32_59 = arith.constant 16 : i32
    %92 = vector.broadcast %c16_i32_59 : i32 to vector<18x24x1xi32>
    %93 = arith.cmpi slt, %86, %92 : vector<18x24x1xi32>
    %94 = arith.andi %91, %93 : vector<18x24x1xi1>
    %c0_i32_60 = arith.constant 0 : i32
    %95 = vector.broadcast %c0_i32_60 : i32 to vector<18x24x1xi32>
    %96 = arith.cmpi sge, %89, %95 : vector<18x24x1xi32>
    %97 = arith.andi %94, %96 : vector<18x24x1xi1>
    %c16_i32_61 = arith.constant 16 : i32
    %98 = vector.broadcast %c16_i32_61 : i32 to vector<18x24x1xi32>
    %99 = arith.cmpi slt, %89, %98 : vector<18x24x1xi32>
    %100 = arith.andi %97, %99 : vector<18x24x1xi1>
    %cst_62 = arith.constant 0.000000e+00 : f32
    %101 = vector.shape_cast %100 : vector<18x24x1xi1> to vector<18x24x1xi1>
    %102 = vector.broadcast %101 : vector<18x24x1xi1> to vector<18x24x128xi1>
    %103 = vector.broadcast %cst_62 : f32 to vector<18x24x128xf32>
    %104 = arith.select %102, %82, %103 : vector<18x24x128xi1>, vector<18x24x128xf32>
    %cst_63 = arith.constant 0.000000e+00 : f32
    %105 = vector.broadcast %cst_63 : f32 to vector<256x128xf32>
    %106 = vector.extract_strided_slice %104 {offsets = [0, 0, 0], sizes = [16, 16, 128], strides = [1, 1, 1]} : vector<18x24x128xf32> to vector<16x16x128xf32>
    %107 = vector.shape_cast %106 : vector<16x16x128xf32> to vector<256x128xf32>
    %c0_64 = arith.constant 0 : index
    %c0_65 = arith.constant 0 : index
    %c0_66 = arith.constant 0 : index
    %108 = vector.load %arg4[%c0_64, %c0_65, %c0_66] : memref<9x128x128xf32, #tpu.memory_space<vmem>>, vector<1x128x128xf32>
    %109 = vector.shape_cast %108 : vector<1x128x128xf32> to vector<128x128xf32>
    %cst_67 = arith.constant dense<0.000000e+00> : vector<256x128xf32>
    %110 = tpu.matmul %107, %109, %cst_67 {dimension_numbers = #tpu.dot_dimension_numbers<[1], [0], [0], [1], [0, 0, 1, 1], [], []>} : vector<256x128xf32>, vector<128x128xf32>, vector<256x128xf32> -> vector<256x128xf32>
    %111 = arith.addf %105, %110 : vector<256x128xf32>
    %112 = vector.extract_strided_slice %104 {offsets = [0, 1, 0], sizes = [16, 16, 128], strides = [1, 1, 1]} : vector<18x24x128xf32> to vector<16x16x128xf32>
    %113 = vector.shape_cast %112 : vector<16x16x128xf32> to vector<256x128xf32>
    %c1_68 = arith.constant 1 : index
    %c0_69 = arith.constant 0 : index
    %c0_70 = arith.constant 0 : index
    %114 = vector.load %arg4[%c1_68, %c0_69, %c0_70] : memref<9x128x128xf32, #tpu.memory_space<vmem>>, vector<1x128x128xf32>
    %115 = vector.shape_cast %114 : vector<1x128x128xf32> to vector<128x128xf32>
    %cst_71 = arith.constant dense<0.000000e+00> : vector<256x128xf32>
    %116 = tpu.matmul %113, %115, %cst_71 {dimension_numbers = #tpu.dot_dimension_numbers<[1], [0], [0], [1], [0, 0, 1, 1], [], []>} : vector<256x128xf32>, vector<128x128xf32>, vector<256x128xf32> -> vector<256x128xf32>
    %117 = arith.addf %111, %116 : vector<256x128xf32>
    %118 = vector.extract_strided_slice %104 {offsets = [0, 2, 0], sizes = [16, 16, 128], strides = [1, 1, 1]} : vector<18x24x128xf32> to vector<16x16x128xf32>
    %119 = vector.shape_cast %118 : vector<16x16x128xf32> to vector<256x128xf32>
    %c2_72 = arith.constant 2 : index
    %c0_73 = arith.constant 0 : index
    %c0_74 = arith.constant 0 : index
    %120 = vector.load %arg4[%c2_72, %c0_73, %c0_74] : memref<9x128x128xf32, #tpu.memory_space<vmem>>, vector<1x128x128xf32>
    %121 = vector.shape_cast %120 : vector<1x128x128xf32> to vector<128x128xf32>
    %cst_75 = arith.constant dense<0.000000e+00> : vector<256x128xf32>
    %122 = tpu.matmul %119, %121, %cst_75 {dimension_numbers = #tpu.dot_dimension_numbers<[1], [0], [0], [1], [0, 0, 1, 1], [], []>} : vector<256x128xf32>, vector<128x128xf32>, vector<256x128xf32> -> vector<256x128xf32>
    %123 = arith.addf %117, %122 : vector<256x128xf32>
    %124 = vector.extract_strided_slice %104 {offsets = [1, 0, 0], sizes = [16, 16, 128], strides = [1, 1, 1]} : vector<18x24x128xf32> to vector<16x16x128xf32>
    %125 = vector.shape_cast %124 : vector<16x16x128xf32> to vector<256x128xf32>
    %c3_76 = arith.constant 3 : index
    %c0_77 = arith.constant 0 : index
    %c0_78 = arith.constant 0 : index
    %126 = vector.load %arg4[%c3_76, %c0_77, %c0_78] : memref<9x128x128xf32, #tpu.memory_space<vmem>>, vector<1x128x128xf32>
    %127 = vector.shape_cast %126 : vector<1x128x128xf32> to vector<128x128xf32>
    %cst_79 = arith.constant dense<0.000000e+00> : vector<256x128xf32>
    %128 = tpu.matmul %125, %127, %cst_79 {dimension_numbers = #tpu.dot_dimension_numbers<[1], [0], [0], [1], [0, 0, 1, 1], [], []>} : vector<256x128xf32>, vector<128x128xf32>, vector<256x128xf32> -> vector<256x128xf32>
    %129 = arith.addf %123, %128 : vector<256x128xf32>
    %130 = vector.extract_strided_slice %104 {offsets = [1, 1, 0], sizes = [16, 16, 128], strides = [1, 1, 1]} : vector<18x24x128xf32> to vector<16x16x128xf32>
    %131 = vector.shape_cast %130 : vector<16x16x128xf32> to vector<256x128xf32>
    %c4_80 = arith.constant 4 : index
    %c0_81 = arith.constant 0 : index
    %c0_82 = arith.constant 0 : index
    %132 = vector.load %arg4[%c4_80, %c0_81, %c0_82] : memref<9x128x128xf32, #tpu.memory_space<vmem>>, vector<1x128x128xf32>
    %133 = vector.shape_cast %132 : vector<1x128x128xf32> to vector<128x128xf32>
    %cst_83 = arith.constant dense<0.000000e+00> : vector<256x128xf32>
    %134 = tpu.matmul %131, %133, %cst_83 {dimension_numbers = #tpu.dot_dimension_numbers<[1], [0], [0], [1], [0, 0, 1, 1], [], []>} : vector<256x128xf32>, vector<128x128xf32>, vector<256x128xf32> -> vector<256x128xf32>
    %135 = arith.addf %129, %134 : vector<256x128xf32>
    %136 = vector.extract_strided_slice %104 {offsets = [1, 2, 0], sizes = [16, 16, 128], strides = [1, 1, 1]} : vector<18x24x128xf32> to vector<16x16x128xf32>
    %137 = vector.shape_cast %136 : vector<16x16x128xf32> to vector<256x128xf32>
    %c5_84 = arith.constant 5 : index
    %c0_85 = arith.constant 0 : index
    %c0_86 = arith.constant 0 : index
    %138 = vector.load %arg4[%c5_84, %c0_85, %c0_86] : memref<9x128x128xf32, #tpu.memory_space<vmem>>, vector<1x128x128xf32>
    %139 = vector.shape_cast %138 : vector<1x128x128xf32> to vector<128x128xf32>
    %cst_87 = arith.constant dense<0.000000e+00> : vector<256x128xf32>
    %140 = tpu.matmul %137, %139, %cst_87 {dimension_numbers = #tpu.dot_dimension_numbers<[1], [0], [0], [1], [0, 0, 1, 1], [], []>} : vector<256x128xf32>, vector<128x128xf32>, vector<256x128xf32> -> vector<256x128xf32>
    %141 = arith.addf %135, %140 : vector<256x128xf32>
    %142 = vector.extract_strided_slice %104 {offsets = [2, 0, 0], sizes = [16, 16, 128], strides = [1, 1, 1]} : vector<18x24x128xf32> to vector<16x16x128xf32>
    %143 = vector.shape_cast %142 : vector<16x16x128xf32> to vector<256x128xf32>
    %c6_88 = arith.constant 6 : index
    %c0_89 = arith.constant 0 : index
    %c0_90 = arith.constant 0 : index
    %144 = vector.load %arg4[%c6_88, %c0_89, %c0_90] : memref<9x128x128xf32, #tpu.memory_space<vmem>>, vector<1x128x128xf32>
    %145 = vector.shape_cast %144 : vector<1x128x128xf32> to vector<128x128xf32>
    %cst_91 = arith.constant dense<0.000000e+00> : vector<256x128xf32>
    %146 = tpu.matmul %143, %145, %cst_91 {dimension_numbers = #tpu.dot_dimension_numbers<[1], [0], [0], [1], [0, 0, 1, 1], [], []>} : vector<256x128xf32>, vector<128x128xf32>, vector<256x128xf32> -> vector<256x128xf32>
    %147 = arith.addf %141, %146 : vector<256x128xf32>
    %148 = vector.extract_strided_slice %104 {offsets = [2, 1, 0], sizes = [16, 16, 128], strides = [1, 1, 1]} : vector<18x24x128xf32> to vector<16x16x128xf32>
    %149 = vector.shape_cast %148 : vector<16x16x128xf32> to vector<256x128xf32>
    %c7_92 = arith.constant 7 : index
    %c0_93 = arith.constant 0 : index
    %c0_94 = arith.constant 0 : index
    %150 = vector.load %arg4[%c7_92, %c0_93, %c0_94] : memref<9x128x128xf32, #tpu.memory_space<vmem>>, vector<1x128x128xf32>
    %151 = vector.shape_cast %150 : vector<1x128x128xf32> to vector<128x128xf32>
    %cst_95 = arith.constant dense<0.000000e+00> : vector<256x128xf32>
    %152 = tpu.matmul %149, %151, %cst_95 {dimension_numbers = #tpu.dot_dimension_numbers<[1], [0], [0], [1], [0, 0, 1, 1], [], []>} : vector<256x128xf32>, vector<128x128xf32>, vector<256x128xf32> -> vector<256x128xf32>
    %153 = arith.addf %147, %152 : vector<256x128xf32>
    %154 = vector.extract_strided_slice %104 {offsets = [2, 2, 0], sizes = [16, 16, 128], strides = [1, 1, 1]} : vector<18x24x128xf32> to vector<16x16x128xf32>
    %155 = vector.shape_cast %154 : vector<16x16x128xf32> to vector<256x128xf32>
    %c8_96 = arith.constant 8 : index
    %c0_97 = arith.constant 0 : index
    %c0_98 = arith.constant 0 : index
    %156 = vector.load %arg4[%c8_96, %c0_97, %c0_98] : memref<9x128x128xf32, #tpu.memory_space<vmem>>, vector<1x128x128xf32>
    %157 = vector.shape_cast %156 : vector<1x128x128xf32> to vector<128x128xf32>
    %cst_99 = arith.constant dense<0.000000e+00> : vector<256x128xf32>
    %158 = tpu.matmul %155, %157, %cst_99 {dimension_numbers = #tpu.dot_dimension_numbers<[1], [0], [0], [1], [0, 0, 1, 1], [], []>} : vector<256x128xf32>, vector<128x128xf32>, vector<256x128xf32> -> vector<256x128xf32>
    %159 = arith.addf %153, %158 : vector<256x128xf32>
    %c0_100 = arith.constant 0 : index
    %c0_101 = arith.constant 0 : index
    %160 = vector.load %arg7[%c0_100, %c0_101] : memref<1x128xf32, #tpu.memory_space<vmem>>, vector<1x128xf32>
    %161 = vector.broadcast %160 : vector<1x128xf32> to vector<256x128xf32>
    %162 = arith.addf %159, %161 : vector<256x128xf32>
    %163 = tpu.transpose %162, [1, 0] : vector<256x128xf32> -> vector<128x256xf32>
    %164 = vector.extract_strided_slice %163 {offsets = [0, 0], sizes = [4, 256], strides = [1, 1]} : vector<128x256xf32> to vector<4x256xf32>
    %c0_102 = arith.constant 0 : index
    %c0_103 = arith.constant 0 : index
    %c0_104 = arith.constant 0 : index
    %c0_105 = arith.constant 0 : index
    %165 = vector.load %arg8[%c0_102, %c0_103, %c0_104, %c0_105] : memref<1x1x4x256xf32, #tpu.memory_space<vmem>>, vector<1x1x4x256xf32>
    %166 = vector.shape_cast %165 : vector<1x1x4x256xf32> to vector<4x256xf32>
    %167 = vector.shape_cast %164 : vector<4x256xf32> to vector<1x1x4x256xf32>
    tpu.vector_store %arg8[%c0_102, %c0_103, %c0_104, %c0_105], %167 {strides = array<i32>} : memref<1x1x4x256xf32, #tpu.memory_space<vmem>>, vector<1x1x4x256xf32>,
    return
  }
  func.func @transform_0(%arg0: i32, %arg1: i32) -> (i32, i32, i32, i32) {
    %c0_i32 = arith.constant 0 : i32
    %c0_i32_0 = arith.constant 0 : i32
    %c0_i32_1 = arith.constant 0 : i32
    %c0_i32_2 = arith.constant 0 : i32
    return %arg0, %c0_i32, %c0_i32_0, %c0_i32_1 : i32, i32, i32, i32
  }
  func.func @transform_1(%arg0: i32, %arg1: i32) -> (i32, i32, i32) {
    %c0_i32 = arith.constant 0 : i32
    %c0_i32_0 = arith.constant 0 : i32
    %c0_i32_1 = arith.constant 0 : i32
    %c0_i32_2 = arith.constant 0 : i32
    return %c0_i32, %c0_i32_0, %c0_i32_1 : i32, i32, i32
  }
  func.func @transform_2(%arg0: i32, %arg1: i32) -> (i32, i32, i32) {
    %c0_i32 = arith.constant 0 : i32
    %c0_i32_0 = arith.constant 0 : i32
    %c0_i32_1 = arith.constant 0 : i32
    %c0_i32_2 = arith.constant 0 : i32
    return %c0_i32, %c0_i32_0, %c0_i32_1 : i32, i32, i32
  }
  func.func @transform_3(%arg0: i32, %arg1: i32) -> (i32, i32, i32) {
    %c0_i32 = arith.constant 0 : i32
    %c0_i32_0 = arith.constant 0 : i32
    %c0_i32_1 = arith.constant 0 : i32
    return %arg0, %c0_i32, %c0_i32_0 : i32, i32, i32
  }
  func.func @transform_4(%arg0: i32, %arg1: i32) -> (i32, i32, i32) {
    %c0_i32 = arith.constant 0 : i32
    %c0_i32_0 = arith.constant 0 : i32
    %c0_i32_1 = arith.constant 0 : i32
    return %arg0, %c0_i32, %c0_i32_0 : i32, i32, i32
  }
  func.func @transform_5(%arg0: i32, %arg1: i32) -> (i32, i32) {
    %c0_i32 = arith.constant 0 : i32
    %c0_i32_0 = arith.constant 0 : i32
    %c0_i32_1 = arith.constant 0 : i32
    return %c0_i32, %c0_i32_0 : i32, i32
  }
  func.func @transform_6(%arg0: i32, %arg1: i32) -> (i32, i32, i32, i32) {
    %c0_i32 = arith.constant 0 : i32
    %c0_i32_0 = arith.constant 0 : i32
    %c0_i32_1 = arith.constant 0 : i32
    return %arg0, %arg1, %c0_i32, %c0_i32_0 : i32, i32, i32, i32
  }
}

</mosaic_0001>

<llo_original>
// kernel: tpu_custom_call.1
$region0: #{tpu_custom_call.1}
  #allocation0 [shape = 'u32[]', space=smem, size = 0x4, offset = 0x4, fixed_abs, tag = 'smem constant byte address 0x4 - core index']
  #allocation1 [shape = 'u32[144,128]{1,0:T(1,128)}', space=vmem, size = 0x12000, scoped, tag = 'internal scratch']
  #allocation2 [shape = 'f32[20,26,4]{2,1,0:T(8,128)}', space=vmem, size = 0x50000, scoped, tag = 'scratch operand']
  %s0 = inlined_call_operand.hbm [shape: f32[2,16,16,4], index: 0, kind: input, shape index: {}]
  %s1 = inlined_call_operand.hbm [shape: f32[9,4,128], index: 1, kind: input, shape index: {}]
  %s2 = inlined_call_operand.hbm [shape: f32[9,128,128], index: 2, kind: input, shape index: {}]
  %s3 = inlined_call_operand.hbm [shape: f32[2,1,128], index: 3, kind: input, shape index: {}]
  %s4 = inlined_call_operand.hbm [shape: f32[2,1,128], index: 4, kind: input, shape index: {}]
  %s5 = inlined_call_operand.hbm [shape: f32[1,128], index: 5, kind: input, shape index: {}]
  %s6 = inlined_call_operand.hbm [shape: f32[2,1,4,256], index: 6, kind: output, shape index: {}]
  %s7 = sld [smem:[#allocation0]]
  $region81: #{tpu_custom_call.1} parent=0
    _
  %s9 = ssub.s32 1, %s7
  %s10 = scalar_select 0, %s9, %s7
  $region1: #{tpu_custom_call.1} parent=0
    #allocation3 [shape = 'u8[262144]{0}', space=vmem, size = 0x40000, scoped, tag = 'input window, operand 0']
    #allocation4 [shape = 's32[2]{0}', space=sflag, size = 0x8, scoped, tag = 'scoped memory for tpu_custom_call.1']
    #allocation5 [shape = 's32[2]{0}', space=sflag, size = 0x8, scoped, tag = 'scoped memory for tpu_custom_call.1']
    #allocation6 [shape = 'u8[18432]{0}', space=vmem, size = 0x4800, scoped, tag = 'input window, operand 1, single buffered']
    #allocation7 [shape = 's32[1]{0}', space=sflag, size = 0x4, scoped, tag = 'scoped memory for tpu_custom_call.1']
    #allocation8 [shape = 'u8[589824]{0}', space=vmem, size = 0x90000, scoped, tag = 'input window, operand 2, single buffered']
    #allocation9 [shape = 'u8[1024]{0}', space=vmem, size = 0x400, scoped, tag = 'input window, operand 3']
    #allocation10 [shape = 's32[2]{0}', space=sflag, size = 0x8, scoped, tag = 'scoped memory for tpu_custom_call.1']
    #allocation11 [shape = 'u8[1024]{0}', space=vmem, size = 0x400, scoped, tag = 'input window, operand 4']
    #allocation12 [shape = 'u8[512]{0}', space=vmem, size = 0x400, scoped, tag = 'input window, operand 5, single buffered']
    #allocation13 [shape = 's32[1]{0}', space=sflag, size = 0x4, scoped, tag = 'scoped memory for tpu_custom_call.1']
    #allocation14 [shape = 'u8[8192]{0}', space=vmem, size = 0x2000, scoped, tag = 'output window, operand 0']
    %11 = vsyncpa [#allocation4], 0
    %s12 = scalar_lea.sflag [#allocation4], 1
    %13 = vsyncpa %s12, 0
    %14 = vsyncpa [#allocation7], 0
    %15 = vsyncpa [#allocation10], 0
    %s16 = scalar_lea.sflag [#allocation10], 1
    %17 = vsyncpa %s16, 0
    %18 = vsyncpa [#allocation13], 0
    %19 = vsyncpa [#allocation5], 0
    %s20 = scalar_lea.sflag [#allocation5], 1
    %21 = vsyncpa %s20, 0
    loop: start=0, step=1, limit=4
    $region2: #{tpu_custom_call.1} parent=1 // loop_pre_header
      _
    $region3: #{tpu_custom_call.1} parent=1 // loop_header
      %s23 = sphi 0, %s27
      %p24 = scmp.ge.s32.totalorder %s23, 4
      %s30 = sphi 0, %s42
      %s31 = sphi 0, %s38
      %s32 = sphi 0, %s30
      %s33 = sphi 0, %s31
      %s34 = sphi 0, %s32
      %s35 = sphi 0, %s33
      %s45 = sphi 0, %s47
      %s48 = sphi 0, %s45
      %s49 = sphi 0, %s48
      %s65 = sphi 0, %s49
      %s69 = sphi 0, %s69
      %s71 = sphi 0, %s69
      %s72 = sphi 0, %s71
      %s86 = sphi 0, %s72
      %s90 = sphi 0, %s90
      %s92 = sphi 0, %s90
      %s93 = sphi 0, %s92
      %s107 = sphi 0, %s93
      %s113 = sphi 0, %s115
      %s116 = sphi 0, %s113
      %s117 = sphi 0, %s116
      %s133 = sphi 0, %s117
      %s139 = sphi 0, %s141
      %s142 = sphi 0, %s139
      %s143 = sphi 0, %s142
      %s159 = sphi 0, %s143
      %s163 = sphi 0, %s163
      %s165 = sphi 0, %s163
      %s166 = sphi 0, %s165
      %s180 = sphi 0, %s166
      %s188 = sphi 0, %s190
      %s191 = sphi 0, %s188
      %s192 = sphi 0, %s191
      %s208 = sphi 0, %s192
    $region4: #{tpu_custom_call.1} parent=1 // loop_header_branch
      %26 = sbr.rel (%p24) target = $region8
    $region5: #{tpu_custom_call.1} parent=1 // loop_body
      %s28 = ssub.s32 %s23, 1
      %s29 = ssub.s32 %s23, 2
      %s36 = sadd.s32 1, %s31
      %p37 = scmp.ge.s32.totalorder %s36, 1
      %s38 = scalar_select %p37, 0, %s36
      %s39 = sadd.s32 1, %s30
      %s40 = scalar_select %p37, %s39, %s30
      %p41 = scmp.ge.s32.totalorder %s40, 2
      %s42 = scalar_select %p41, 0, %s40
      %s43 = ssub.s32 %s30, %s42
      %p44 = scmp.eq.s32.totalorder %s43, 0
      %s46 = sadd.s32 %s45, 1
      %s47 = scalar_select %p44, %s45, %s46
      %p50 = pneg %p44
      %p51 = scmp.eq.s32.totalorder %s23, 1
      %p52 = por %p50, %p51
      %p53 = scmp.ne.s32.totalorder %s45, %s48
      %p54 = scmp.eq.s32.totalorder %s23, 0
      %p55 = por %p53, %p54
      %p56 = scmp.ne.s32.totalorder %s45, %s48
      %p57 = scmp.eq.s32.totalorder %s28, 1
      %p58 = por %p56, %p57
      %p59 = scmp.ne.s32.totalorder %s48, %s49
      %p60 = scmp.eq.s32.totalorder %s28, 0
      %p61 = por %p59, %p60
      %p62 = scmp.ne.s32.totalorder %s48, %s49
      %p63 = scmp.eq.s32.totalorder %s29, 1
      %p64 = por %p62, %p63
      %p66 = scmp.ne.s32.totalorder %s49, %s65
      %p67 = scmp.eq.s32.totalorder %s29, 0
      %p68 = por %p66, %p67
      %s70 = sadd.s32 %s69, 1
      %p73 = scmp.eq.s32.totalorder %s23, 1
      %p74 = scmp.ne.s32.totalorder %s69, %s71
      %p75 = scmp.eq.s32.totalorder %s23, 0
      %p76 = por %p74, %p75
      %p77 = scmp.ne.s32.totalorder %s69, %s71
      %p78 = scmp.eq.s32.totalorder %s28, 1
      %p79 = por %p77, %p78
      %p80 = scmp.ne.s32.totalorder %s71, %s72
      %p81 = scmp.eq.s32.totalorder %s28, 0
      %p82 = por %p80, %p81
      %p83 = scmp.ne.s32.totalorder %s71, %s72
      %p84 = scmp.eq.s32.totalorder %s29, 1
      %p85 = por %p83, %p84
      %p87 = scmp.ne.s32.totalorder %s72, %s86
      %p88 = scmp.eq.s32.totalorder %s29, 0
      %p89 = por %p87, %p88
      %s91 = sadd.s32 %s90, 1
      %p94 = scmp.eq.s32.totalorder %s23, 1
      %p95 = scmp.ne.s32.totalorder %s90, %s92
      %p96 = scmp.eq.s32.totalorder %s23, 0
      %p97 = por %p95, %p96
      %p98 = scmp.ne.s32.totalorder %s90, %s92
      %p99 = scmp.eq.s32.totalorder %s28, 1
      %p100 = por %p98, %p99
      %p101 = scmp.ne.s32.totalorder %s92, %s93
      %p102 = scmp.eq.s32.totalorder %s28, 0
      %p103 = por %p101, %p102
      %p104 = scmp.ne.s32.totalorder %s92, %s93
      %p105 = scmp.eq.s32.totalorder %s29, 1
      %p106 = por %p104, %p105
      %p108 = scmp.ne.s32.totalorder %s93, %s107
      %p109 = scmp.eq.s32.totalorder %s29, 0
      %p110 = por %p108, %p109
      %s111 = ssub.s32 %s30, %s42
      %p112 = scmp.eq.s32.totalorder %s111, 0
      %s114 = sadd.s32 %s113, 1
      %s115 = scalar_select %p112, %s113, %s114
      %p118 = pneg %p112
      %p119 = scmp.eq.s32.totalorder %s23, 1
      %p120 = por %p118, %p119
      %p121 = scmp.ne.s32.totalorder %s113, %s116
      %p122 = scmp.eq.s32.totalorder %s23, 0
      %p123 = por %p121, %p122
      %p124 = scmp.ne.s32.totalorder %s113, %s116
      %p125 = scmp.eq.s32.totalorder %s28, 1
      %p126 = por %p124, %p125
      %p127 = scmp.ne.s32.totalorder %s116, %s117
      %p128 = scmp.eq.s32.totalorder %s28, 0
      %p129 = por %p127, %p128
      %p130 = scmp.ne.s32.totalorder %s116, %s117
      %p131 = scmp.eq.s32.totalorder %s29, 1
      %p132 = por %p130, %p131
      %p134 = scmp.ne.s32.totalorder %s117, %s133
      %p135 = scmp.eq.s32.totalorder %s29, 0
      %p136 = por %p134, %p135
      %s137 = ssub.s32 %s30, %s42
      %p138 = scmp.eq.s32.totalorder %s137, 0
      %s140 = sadd.s32 %s139, 1
      %s141 = scalar_select %p138, %s139, %s140
      %p144 = pneg %p138
      %p145 = scmp.eq.s32.totalorder %s23, 1
      %p146 = por %p144, %p145
      %p147 = scmp.ne.s32.totalorder %s139, %s142
      %p148 = scmp.eq.s32.totalorder %s23, 0
      %p149 = por %p147, %p148
      %p150 = scmp.ne.s32.totalorder %s139, %s142
      %p151 = scmp.eq.s32.totalorder %s28, 1
      %p152 = por %p150, %p151
      %p153 = scmp.ne.s32.totalorder %s142, %s143
      %p154 = scmp.eq.s32.totalorder %s28, 0
      %p155 = por %p153, %p154
      %p156 = scmp.ne.s32.totalorder %s142, %s143
      %p157 = scmp.eq.s32.totalorder %s29, 1
      %p158 = por %p156, %p157
      %p160 = scmp.ne.s32.totalorder %s143, %s159
      %p161 = scmp.eq.s32.totalorder %s29, 0
      %p162 = por %p160, %p161
      %s164 = sadd.s32 %s163, 1
      %p167 = scmp.eq.s32.totalorder %s23, 1
      %p168 = scmp.ne.s32.totalorder %s163, %s165
      %p169 = scmp.eq.s32.totalorder %s23, 0
      %p170 = por %p168, %p169
      %p171 = scmp.ne.s32.totalorder %s163, %s165
      %p172 = scmp.eq.s32.totalorder %s28, 1
      %p173 = por %p171, %p172
      %p174 = scmp.ne.s32.totalorder %s165, %s166
      %p175 = scmp.eq.s32.totalorder %s28, 0
      %p176 = por %p174, %p175
      %p177 = scmp.ne.s32.totalorder %s165, %s166
      %p178 = scmp.eq.s32.totalorder %s29, 1
      %p179 = por %p177, %p178
      %p181 = scmp.ne.s32.totalorder %s166, %s180
      %p182 = scmp.eq.s32.totalorder %s29, 0
      %p183 = por %p181, %p182
      %s184 = ssub.s32 %s30, %s42
      %s185 = ssub.s32 %s31, %s38
      %s186 = sor.u32 %s184, %s185
      %p187 = scmp.eq.s32.totalorder %s186, 0
      %s189 = sadd.s32 %s188, 1
      %s190 = scalar_select %p187, %s188, %s189
      %p193 = pneg %p187
      %p194 = scmp.eq.s32.totalorder %s23, 1
      %p195 = por %p193, %p194
      %p196 = scmp.ne.s32.totalorder %s188, %s191
      %p197 = scmp.eq.s32.totalorder %s23, 0
      %p198 = por %p196, %p197
      %p199 = scmp.ne.s32.totalorder %s188, %s191
      %p200 = scmp.eq.s32.totalorder %s28, 1
      %p201 = por %p199, %p200
      %p202 = scmp.ne.s32.totalorder %s191, %s192
      %p203 = scmp.eq.s32.totalorder %s28, 0
      %p204 = por %p202, %p203
      %p205 = scmp.ne.s32.totalorder %s191, %s192
      %p206 = scmp.eq.s32.totalorder %s29, 1
      %p207 = por %p205, %p206
      %p209 = scmp.ne.s32.totalorder %s192, %s208
      %p210 = scmp.eq.s32.totalorder %s29, 0
      %p211 = por %p209, %p210
      %p212 = scmp.le.s32.totalorder 1, %s23
      %p213 = scmp.lt.s32.totalorder %s23, 3
      %p214 = pnand %p212, %p213
      %p215 = pneg %p214
      // Predicated region
      $region9: #{tpu_custom_call.1} parent=5 // pred_check
        _
      $region10: #{tpu_custom_call.1} parent=5 // pred_check_branch
        %217 = sbr.rel (%p214) target = $region12
      $region11: #{tpu_custom_call.1} parent=5 // pred_region
        %s218 = ssub.s32 %s23, 1
        // Predicated region
        $region13: #{tpu_custom_call.1} parent=11 // pred_check
          %p219 = pneg %p82
        $region14: #{tpu_custom_call.1} parent=11 // pred_check_branch
          %221 = sbr.rel (%p219) target = $region16
        $region15: #{tpu_custom_call.1} parent=11 // pred_region
          %s223 = ssub.s32 576, 576
          %224 = vsyncadd [#allocation7], %s223
          %s225 = sshll.u32 [#allocation6], 4
          %s226 = int_to_ptr.vmem [resolvable:$true] %s225
          %231 = dma.hbm_to_vmem [thread:$0]  %s1, 576, %s226, [#allocation7], 64, 64, 4
        $region16: #{tpu_custom_call.1} parent=11 // pred_fallthru
          _
        // Predicated region
        $region17: #{tpu_custom_call.1} parent=11 // pred_check
          %p232 = pneg %p103
        $region18: #{tpu_custom_call.1} parent=11 // pred_check_branch
          %234 = sbr.rel (%p232) target = $region20
        $region19: #{tpu_custom_call.1} parent=11 // pred_region
          %s236 = ssub.s32 18432, 18432
          %237 = vsyncadd [#allocation7], %s236
          %s238 = sshll.u32 [#allocation8], 4
          %s239 = int_to_ptr.vmem [resolvable:$true] %s238
          %244 = dma.hbm_to_vmem [thread:$0]  %s2, 18432, %s239, [#allocation7], 128, 128, 8
        $region20: #{tpu_custom_call.1} parent=11 // pred_fallthru
          _
        // Predicated region
        $region21: #{tpu_custom_call.1} parent=11 // pred_check
          %p245 = pneg %p176
        $region22: #{tpu_custom_call.1} parent=11 // pred_check_branch
          %247 = sbr.rel (%p245) target = $region24
        $region23: #{tpu_custom_call.1} parent=11 // pred_region
          %s249 = ssub.s32 16, 16
          %250 = vsyncadd [#allocation13], %s249
          %s252 = sshll.u32 [#allocation12], 4
          %s253 = int_to_ptr.vmem [resolvable:$true] %s252
          %255 = dma.hbm_to_vmem [thread:$0]  %s5, 16, %s253, [#allocation13]
        $region24: #{tpu_custom_call.1} parent=11 // pred_fallthru
          _
      $region12: #{tpu_custom_call.1} parent=5 // pred_fallthru
        _
      %p256 = scmp.lt.s32.totalorder %s23, 2
      // Predicated region
      $region25: #{tpu_custom_call.1} parent=5 // pred_check
        %p257 = pneg %p256
      $region26: #{tpu_custom_call.1} parent=5 // pred_check_branch
        %259 = sbr.rel (%p257) target = $region28
      $region27: #{tpu_custom_call.1} parent=5 // pred_region
        // Predicated region
        $region29: #{tpu_custom_call.1} parent=27 // pred_check
          %p260 = pneg %p55
        $region30: #{tpu_custom_call.1} parent=27 // pred_check_branch
          %262 = sbr.rel (%p260) target = $region32
        $region31: #{tpu_custom_call.1} parent=27 // pred_region
          %s263 = sand.u32 %s45, 1
          %s264 = scalar_lea.sflag [#allocation4], %s263
          %s265 = sand.u32 %s45, 1
          %s266 = smul.addr %s265, 256
          %s267 = scalar_lea.vmem [#allocation3], %s266
          %s269 = ssub.s32 4096, 4096
          %270 = vsyncadd %s264, %s269
          %s271 = smul.addr %s30, 32
          %s272 = smul.addr %s271, 128
          %s273 = scalar_lea.hbm %s0, %s272
          %s274 = sshll.u32 %s267, 4
          %s275 = int_to_ptr.vmem [resolvable:$true] %s274
          %280 = dma.hbm_to_vmem [thread:$0]  %s273, 4096, %s275, %s264, 128, 128, 8
        $region32: #{tpu_custom_call.1} parent=27 // pred_fallthru
          _
        // Predicated region
        $region33: #{tpu_custom_call.1} parent=27 // pred_check
          %p281 = pneg %p123
        $region34: #{tpu_custom_call.1} parent=27 // pred_check_branch
          %283 = sbr.rel (%p281) target = $region36
        $region35: #{tpu_custom_call.1} parent=27 // pred_region
          %s284 = sand.u32 %s23, 1
          %s285 = scalar_lea.sflag [#allocation10], %s284
          %s286 = sand.u32 %s113, 1
          %s287 = scalar_lea.vmem [#allocation9], %s286
          %s289 = ssub.s32 16, 16
          %290 = vsyncadd %s285, %s289
          %s291 = smul.addr %s30, 16
          %s292 = scalar_lea.hbm %s3, %s291
          %s294 = sshll.u32 %s287, 4
          %s295 = int_to_ptr.vmem [resolvable:$true] %s294
          %297 = dma.hbm_to_vmem [thread:$0]  %s292, 16, %s295, %s285
        $region36: #{tpu_custom_call.1} parent=27 // pred_fallthru
          _
        // Predicated region
        $region37: #{tpu_custom_call.1} parent=27 // pred_check
          %p298 = pneg %p149
        $region38: #{tpu_custom_call.1} parent=27 // pred_check_branch
          %300 = sbr.rel (%p298) target = $region40
        $region39: #{tpu_custom_call.1} parent=27 // pred_region
          %s301 = sand.u32 %s23, 1
          %s302 = scalar_lea.sflag [#allocation10], %s301
          %s303 = sand.u32 %s139, 1
          %s304 = scalar_lea.vmem [#allocation11], %s303
          %s306 = ssub.s32 16, 16
          %307 = vsyncadd %s302, %s306
          %s308 = smul.addr %s30, 16
          %s309 = scalar_lea.hbm %s4, %s308
          %s311 = sshll.u32 %s304, 4
          %s312 = int_to_ptr.vmem [resolvable:$true] %s311
          %314 = dma.hbm_to_vmem [thread:$0]  %s309, 16, %s312, %s302
        $region40: #{tpu_custom_call.1} parent=27 // pred_fallthru
          _
      $region28: #{tpu_custom_call.1} parent=5 // pred_fallthru
        _
      %p315 = scmp.le.s32.totalorder 1, %s23
      %p316 = scmp.lt.s32.totalorder %s23, 3
      %p317 = pnand %p315, %p316
      %p318 = pneg %p317
      // Predicated region
      $region41: #{tpu_custom_call.1} parent=5 // pred_check
        _
      $region42: #{tpu_custom_call.1} parent=5 // pred_check_branch
        %320 = sbr.rel (%p317) target = $region44
      $region43: #{tpu_custom_call.1} parent=5 // pred_region
        %s321 = ssub.s32 %s23, 1
        %s322 = sand.u32 %s48, 1
        %s323 = scalar_lea.sflag [#allocation4], %s322
        %s324 = sand.u32 %s48, 1
        %s325 = smul.addr %s324, 256
        %s326 = scalar_lea.vmem [#allocation3], %s325
        // Predicated region
        $region45: #{tpu_custom_call.1} parent=43 // pred_check
          %p327 = pneg %p61
        $region46: #{tpu_custom_call.1} parent=43 // pred_check_branch
          %329 = sbr.rel (%p327) target = $region48
        $region47: #{tpu_custom_call.1} parent=43 // pred_region
          %330 = dma.done %s323, 4096
        $region48: #{tpu_custom_call.1} parent=43 // pred_fallthru
          _
        // Predicated region
        $region49: #{tpu_custom_call.1} parent=43 // pred_check
          %p331 = pneg %p82
        $region50: #{tpu_custom_call.1} parent=43 // pred_check_branch
          %333 = sbr.rel (%p331) target = $region52
        $region51: #{tpu_custom_call.1} parent=43 // pred_region
          %334 = dma.done [#allocation7], 576
        $region52: #{tpu_custom_call.1} parent=43 // pred_fallthru
          _
        // Predicated region
        $region53: #{tpu_custom_call.1} parent=43 // pred_check
          %p335 = pneg %p103
        $region54: #{tpu_custom_call.1} parent=43 // pred_check_branch
          %337 = sbr.rel (%p335) target = $region56
        $region55: #{tpu_custom_call.1} parent=43 // pred_region
          %338 = dma.done [#allocation7], 18432
        $region56: #{tpu_custom_call.1} parent=43 // pred_fallthru
          _
        %s339 = sand.u32 %s28, 1
        %s340 = scalar_lea.sflag [#allocation10], %s339
        %s341 = sand.u32 %s116, 1
        %s342 = scalar_lea.vmem [#allocation9], %s341
        // Predicated region
        $region57: #{tpu_custom_call.1} parent=43 // pred_check
          %p343 = pneg %p129
        $region58: #{tpu_custom_call.1} parent=43 // pred_check_branch
          %345 = sbr.rel (%p343) target = $region60
        $region59: #{tpu_custom_call.1} parent=43 // pred_region
          %346 = dma.done %s340, 16
        $region60: #{tpu_custom_call.1} parent=43 // pred_fallthru
          _
        %s347 = sand.u32 %s28, 1
        %s348 = scalar_lea.sflag [#allocation10], %s347
        %s349 = sand.u32 %s142, 1
        %s350 = scalar_lea.vmem [#allocation11], %s349
        // Predicated region
        $region61: #{tpu_custom_call.1} parent=43 // pred_check
          %p351 = pneg %p155
        $region62: #{tpu_custom_call.1} parent=43 // pred_check_branch
          %353 = sbr.rel (%p351) target = $region64
        $region63: #{tpu_custom_call.1} parent=43 // pred_region
          %354 = dma.done %s348, 16
        $region64: #{tpu_custom_call.1} parent=43 // pred_fallthru
          _
        // Predicated region
        $region65: #{tpu_custom_call.1} parent=43 // pred_check
          %p355 = pneg %p176
        $region66: #{tpu_custom_call.1} parent=43 // pred_check_branch
          %357 = sbr.rel (%p355) target = $region68
        $region67: #{tpu_custom_call.1} parent=43 // pred_region
          %358 = dma.done [#allocation13], 16
        $region68: #{tpu_custom_call.1} parent=43 // pred_fallthru
          _
        %s359 = sand.u32 %s48, 1
        %s360 = scalar_lea.sflag [#allocation4], %s359
        %s361 = sand.u32 %s48, 1
        %s362 = smul.addr %s361, 256
        %s363 = scalar_lea.vmem [#allocation3], %s362
        %p364 = pneg %p61
        %p365 = pneg %p58
        %p366 = pneg %p82
        %p367 = pneg %p79
        %p368 = pneg %p103
        %p369 = pneg %p100
        %s370 = sand.u32 %s28, 1
        %s371 = scalar_lea.sflag [#allocation10], %s370
        %s372 = sand.u32 %s116, 1
        %s373 = scalar_lea.vmem [#allocation9], %s372
        %p374 = pneg %p129
        %p375 = pneg %p126
        %s376 = sand.u32 %s28, 1
        %s377 = scalar_lea.sflag [#allocation10], %s376
        %s378 = sand.u32 %s142, 1
        %s379 = scalar_lea.vmem [#allocation11], %s378
        %p380 = pneg %p155
        %p381 = pneg %p152
        %p382 = pneg %p176
        %p383 = pneg %p173
        %p384 = pneg %p204
        %p385 = pneg %p201
        %s386 = sand.u32 %s191, 1
        %s387 = scalar_lea.sflag [#allocation5], %s386
        %s388 = sand.u32 %s191, 1
        %s389 = smul.addr %s388, 8
        %s390 = scalar_lea.vmem [#allocation14], %s389
        %s391 = smul.u32 %s33, 16
        %vm392 = vcmask 25600
        %393 = vst.msk [vmem:[#allocation2] sm:$0x3] %vm392, 0.0
        %394 = vst.msk [vmem:[#allocation2 + $0x20] sm:$0x3] %vm392, 0.0
        %395 = vst.msk [vmem:[#allocation2 + $0x40] sm:$0x3] %vm392, 0.0
        %396 = vst.msk [vmem:[#allocation2 + $0x60] sm:$0x3] %vm392, 0.0
        %397 = vst.msk [vmem:[#allocation2 + $0x80] sm:$0x3] %vm392, 0.0
        %398 = vst.msk [vmem:[#allocation2 + $0xa0] sm:$0x3] %vm392, 0.0
        %399 = vst.msk [vmem:[#allocation2 + $0xc0] sm:$0x3] %vm392, 0.0
        %400 = vst.msk [vmem:[#allocation2 + $0xe0] sm:$0x3] %vm392, 0.0
        %401 = vst.msk [vmem:[#allocation2 + $0x100] sm:$0x3] %vm392, 0.0
        %402 = vst.msk [vmem:[#allocation2 + $0x120] sm:$0x3] %vm392, 0.0
        %403 = vst.msk [vmem:[#allocation2 + $0x140] sm:$0x3] %vm392, 0.0
        %404 = vst.msk [vmem:[#allocation2 + $0x160] sm:$0x3] %vm392, 0.0
        %405 = vst.msk [vmem:[#allocation2 + $0x180] sm:$0x3] %vm392, 0.0
        %406 = vst.msk [vmem:[#allocation2 + $0x1a0] sm:$0x3] %vm392, 0.0
        %407 = vst.msk [vmem:[#allocation2 + $0x1c0] sm:$0x3] %vm392, 0.0
        %408 = vst.msk [vmem:[#allocation2 + $0x1e0] sm:$0x3] %vm392, 0.0
        %409 = vst.msk [vmem:[#allocation2 + $0x200] sm:$0x3] %vm392, 0.0
        %410 = vst.msk [vmem:[#allocation2 + $0x220] sm:$0x3] %vm392, 0.0
        %411 = vst.msk [vmem:[#allocation2 + $0x240] sm:$0x3] %vm392, 0.0
        %412 = vst.msk [vmem:[#allocation2 + $0x260] sm:$0x3] %vm392, 0.0
        %vm413 = vcmask 31744
        %414 = vst.msk [vmem:[#allocation2 + $0x12] sm:$0xff] %vm413, 0.0
        %415 = vst.msk [vmem:[#allocation2 + $0x32] sm:$0xff] %vm413, 0.0
        %416 = vst.msk [vmem:[#allocation2 + $0x52] sm:$0xff] %vm413, 0.0
        %417 = vst.msk [vmem:[#allocation2 + $0x72] sm:$0xff] %vm413, 0.0
        %418 = vst.msk [vmem:[#allocation2 + $0x92] sm:$0xff] %vm413, 0.0
        %419 = vst.msk [vmem:[#allocation2 + $0xb2] sm:$0xff] %vm413, 0.0
        %420 = vst.msk [vmem:[#allocation2 + $0xd2] sm:$0xff] %vm413, 0.0
        %421 = vst.msk [vmem:[#allocation2 + $0xf2] sm:$0xff] %vm413, 0.0
        %422 = vst.msk [vmem:[#allocation2 + $0x112] sm:$0xff] %vm413, 0.0
        %423 = vst.msk [vmem:[#allocation2 + $0x132] sm:$0xff] %vm413, 0.0
        %424 = vst.msk [vmem:[#allocation2 + $0x152] sm:$0xff] %vm413, 0.0
        %425 = vst.msk [vmem:[#allocation2 + $0x172] sm:$0xff] %vm413, 0.0
        %426 = vst.msk [vmem:[#allocation2 + $0x192] sm:$0xff] %vm413, 0.0
        %427 = vst.msk [vmem:[#allocation2 + $0x1b2] sm:$0xff] %vm413, 0.0
        %428 = vst.msk [vmem:[#allocation2 + $0x1d2] sm:$0xff] %vm413, 0.0
        %429 = vst.msk [vmem:[#allocation2 + $0x1f2] sm:$0xff] %vm413, 0.0
        %430 = vst.msk [vmem:[#allocation2 + $0x212] sm:$0xff] %vm413, 0.0
        %431 = vst.msk [vmem:[#allocation2 + $0x232] sm:$0xff] %vm413, 0.0
        %432 = vst.msk [vmem:[#allocation2 + $0x252] sm:$0xff] %vm413, 0.0
        %433 = vst.msk [vmem:[#allocation2 + $0x272] sm:$0xff] %vm413, 0.0
        %s434 = smul.u32 %s391, 16
        %s435 = scalar_lea.vmem %s326, %s434 [#allocation3]
        %v436 = vld [vmem:[%s435] sm:$0xff]
        %v437 = vld [vmem:[%s435 + $0x8] sm:$0xff]
        %v438 = vld [vmem:[%s435 + $0x10] sm:$0xff]
        %v439 = vld [vmem:[%s435 + $0x18] sm:$0xff]
        %v440 = vld [vmem:[%s435 + $0x20] sm:$0xff]
        %v441 = vld [vmem:[%s435 + $0x28] sm:$0xff]
        %v442 = vld [vmem:[%s435 + $0x30] sm:$0xff]
        %v443 = vld [vmem:[%s435 + $0x38] sm:$0xff]
        %v444 = vld [vmem:[%s435 + $0x40] sm:$0xff]
        %v445 = vld [vmem:[%s435 + $0x48] sm:$0xff]
        %v446 = vld [vmem:[%s435 + $0x50] sm:$0xff]
        %v447 = vld [vmem:[%s435 + $0x58] sm:$0xff]
        %v448 = vld [vmem:[%s435 + $0x60] sm:$0xff]
        %v449 = vld [vmem:[%s435 + $0x68] sm:$0xff]
        %v450 = vld [vmem:[%s435 + $0x70] sm:$0xff]
        %v451 = vld [vmem:[%s435 + $0x78] sm:$0xff]
        %v452 = vld [vmem:[%s435 + $0x80] sm:$0xff]
        %v453 = vld [vmem:[%s435 + $0x88] sm:$0xff]
        %v454 = vld [vmem:[%s435 + $0x90] sm:$0xff]
        %v455 = vld [vmem:[%s435 + $0x98] sm:$0xff]
        %v456 = vld [vmem:[%s435 + $0xa0] sm:$0xff]
        %v457 = vld [vmem:[%s435 + $0xa8] sm:$0xff]
        %v458 = vld [vmem:[%s435 + $0xb0] sm:$0xff]
        %v459 = vld [vmem:[%s435 + $0xb8] sm:$0xff]
        %v460 = vld [vmem:[%s435 + $0xc0] sm:$0xff]
        %v461 = vld [vmem:[%s435 + $0xc8] sm:$0xff]
        %v462 = vld [vmem:[%s435 + $0xd0] sm:$0xff]
        %v463 = vld [vmem:[%s435 + $0xd8] sm:$0xff]
        %v464 = vld [vmem:[%s435 + $0xe0] sm:$0xff]
        %v465 = vld [vmem:[%s435 + $0xe8] sm:$0xff]
        %v466 = vld [vmem:[%s435 + $0xf0] sm:$0xff]
        %v467 = vld [vmem:[%s435 + $0xf8] sm:$0xff]
        %s468 = scalar_lea.vmem [#allocation2], 64
        %469 = vst.msk [vmem:[%s468 + $0x2] sm:$0xff] %vm413, %v436
        %470 = vst.msk [vmem:[%s468 + $0xa] sm:$0xff] %vm413, %v437
        %471 = vst.msk [vmem:[%s468 + $0x22] sm:$0xff] %vm413, %v438
        %472 = vst.msk [vmem:[%s468 + $0x2a] sm:$0xff] %vm413, %v439
        %473 = vst.msk [vmem:[%s468 + $0x42] sm:$0xff] %vm413, %v440
        %474 = vst.msk [vmem:[%s468 + $0x4a] sm:$0xff] %vm413, %v441
        %475 = vst.msk [vmem:[%s468 + $0x62] sm:$0xff] %vm413, %v442
        %476 = vst.msk [vmem:[%s468 + $0x6a] sm:$0xff] %vm413, %v443
        %477 = vst.msk [vmem:[%s468 + $0x82] sm:$0xff] %vm413, %v444
        %478 = vst.msk [vmem:[%s468 + $0x8a] sm:$0xff] %vm413, %v445
        %479 = vst.msk [vmem:[%s468 + $0xa2] sm:$0xff] %vm413, %v446
        %480 = vst.msk [vmem:[%s468 + $0xaa] sm:$0xff] %vm413, %v447
        %481 = vst.msk [vmem:[%s468 + $0xc2] sm:$0xff] %vm413, %v448
        %482 = vst.msk [vmem:[%s468 + $0xca] sm:$0xff] %vm413, %v449
        %483 = vst.msk [vmem:[%s468 + $0xe2] sm:$0xff] %vm413, %v450
        %484 = vst.msk [vmem:[%s468 + $0xea] sm:$0xff] %vm413, %v451
        %485 = vst.msk [vmem:[%s468 + $0x102] sm:$0xff] %vm413, %v452
        %486 = vst.msk [vmem:[%s468 + $0x10a] sm:$0xff] %vm413, %v453
        %487 = vst.msk [vmem:[%s468 + $0x122] sm:$0xff] %vm413, %v454
        %488 = vst.msk [vmem:[%s468 + $0x12a] sm:$0xff] %vm413, %v455
        %489 = vst.msk [vmem:[%s468 + $0x142] sm:$0xff] %vm413, %v456
        %490 = vst.msk [vmem:[%s468 + $0x14a] sm:$0xff] %vm413, %v457
        %491 = vst.msk [vmem:[%s468 + $0x162] sm:$0xff] %vm413, %v458
        %492 = vst.msk [vmem:[%s468 + $0x16a] sm:$0xff] %vm413, %v459
        %493 = vst.msk [vmem:[%s468 + $0x182] sm:$0xff] %vm413, %v460
        %494 = vst.msk [vmem:[%s468 + $0x18a] sm:$0xff] %vm413, %v461
        %495 = vst.msk [vmem:[%s468 + $0x1a2] sm:$0xff] %vm413, %v462
        %496 = vst.msk [vmem:[%s468 + $0x1aa] sm:$0xff] %vm413, %v463
        %497 = vst.msk [vmem:[%s468 + $0x1c2] sm:$0xff] %vm413, %v464
        %498 = vst.msk [vmem:[%s468 + $0x1ca] sm:$0xff] %vm413, %v465
        %499 = vst.msk [vmem:[%s468 + $0x1e2] sm:$0xff] %vm413, %v466
        %500 = vst.msk [vmem:[%s468 + $0x1ea] sm:$0xff] %vm413, %v467
        %501 = vst.msk [vmem:[#allocation2 + $0x2] sm:$0xff] %vm413, 0.0
        %502 = vst.msk [vmem:[#allocation2 + $0xa] sm:$0xff] %vm413, 0.0
        %503 = vst.msk [vmem:[#allocation2 + $0x22] sm:$0xff] %vm413, 0.0
        %504 = vst.msk [vmem:[#allocation2 + $0x2a] sm:$0xff] %vm413, 0.0
        %s505 = scalar_lea.vmem [#allocation2], 576
        %506 = vst.msk [vmem:[%s505 + $0x2] sm:$0xff] %vm413, 0.0
        %507 = vst.msk [vmem:[%s505 + $0xa] sm:$0xff] %vm413, 0.0
        %508 = vst.msk [vmem:[%s505 + $0x22] sm:$0xff] %vm413, 0.0
        %509 = vst.msk [vmem:[%s505 + $0x2a] sm:$0xff] %vm413, 0.0
        %v510 = vld [vmem:[#allocation2] sm:$0xff]
        %v511 = vld [vmem:[#allocation2 + $0x8] sm:$0xff]
        %v512 = vld [vmem:[#allocation2 + $0x10] sm:$0xff]
        %v513 = vld [vmem:[#allocation2 + $0x18] sm:$0x3]
        %v514 = vld [vmem:[#allocation2 + $0x20] sm:$0xff]
        %v515 = vld [vmem:[#allocation2 + $0x28] sm:$0xff]
        %v516 = vld [vmem:[#allocation2 + $0x30] sm:$0xff]
        %v517 = vld [vmem:[#allocation2 + $0x38] sm:$0x3]
        %v518 = vld [vmem:[#allocation2 + $0x40] sm:$0xff]
        %v519 = vld [vmem:[#allocation2 + $0x48] sm:$0xff]
        %v520 = vld [vmem:[#allocation2 + $0x50] sm:$0xff]
        %v521 = vld [vmem:[#allocation2 + $0x58] sm:$0x3]
        %v522 = vld [vmem:[#allocation2 + $0x60] sm:$0xff]
        %v523 = vld [vmem:[#allocation2 + $0x68] sm:$0xff]
        %v524 = vld [vmem:[#allocation2 + $0x70] sm:$0xff]
        %v525 = vld [vmem:[#allocation2 + $0x78] sm:$0x3]
        %v526 = vld [vmem:[#allocation2 + $0x80] sm:$0xff]
        %v527 = vld [vmem:[#allocation2 + $0x88] sm:$0xff]
        %v528 = vld [vmem:[#allocation2 + $0x90] sm:$0xff]
        %v529 = vld [vmem:[#allocation2 + $0x98] sm:$0x3]
        %v530 = vld [vmem:[#allocation2 + $0xa0] sm:$0xff]
        %v531 = vld [vmem:[#allocation2 + $0xa8] sm:$0xff]
        %v532 = vld [vmem:[#allocation2 + $0xb0] sm:$0xff]
        %v533 = vld [vmem:[#allocation2 + $0xb8] sm:$0x3]
        %v534 = vld [vmem:[#allocation2 + $0xc0] sm:$0xff]
        %v535 = vld [vmem:[#allocation2 + $0xc8] sm:$0xff]
        %v536 = vld [vmem:[#allocation2 + $0xd0] sm:$0xff]
        %v537 = vld [vmem:[#allocation2 + $0xd8] sm:$0x3]
        %v538 = vld [vmem:[#allocation2 + $0xe0] sm:$0xff]
        %v539 = vld [vmem:[#allocation2 + $0xe8] sm:$0xff]
        %v540 = vld [vmem:[#allocation2 + $0xf0] sm:$0xff]
        %v541 = vld [vmem:[#allocation2 + $0xf8] sm:$0x3]
        %v542 = vld [vmem:[#allocation2 + $0x100] sm:$0xff]
        %v543 = vld [vmem:[#allocation2 + $0x108] sm:$0xff]
        %v544 = vld [vmem:[#allocation2 + $0x110] sm:$0xff]
        %v545 = vld [vmem:[#allocation2 + $0x118] sm:$0x3]
        %v546 = vld [vmem:[#allocation2 + $0x120] sm:$0xff]
        %v547 = vld [vmem:[#allocation2 + $0x128] sm:$0xff]
        %v548 = vld [vmem:[#allocation2 + $0x130] sm:$0xff]
        %v549 = vld [vmem:[#allocation2 + $0x138] sm:$0x3]
        %v550 = vld [vmem:[#allocation2 + $0x140] sm:$0xff]
        %v551 = vld [vmem:[#allocation2 + $0x148] sm:$0xff]
        %v552 = vld [vmem:[#allocation2 + $0x150] sm:$0xff]
        %v553 = vld [vmem:[#allocation2 + $0x158] sm:$0x3]
        %v554 = vld [vmem:[#allocation2 + $0x160] sm:$0xff]
        %v555 = vld [vmem:[#allocation2 + $0x168] sm:$0xff]
        %v556 = vld [vmem:[#allocation2 + $0x170] sm:$0xff]
        %v557 = vld [vmem:[#allocation2 + $0x178] sm:$0x3]
        %v558 = vld [vmem:[#allocation2 + $0x180] sm:$0xff]
        %v559 = vld [vmem:[#allocation2 + $0x188] sm:$0xff]
        %v560 = vld [vmem:[#allocation2 + $0x190] sm:$0xff]
        %v561 = vld [vmem:[#allocation2 + $0x198] sm:$0x3]
        %v562 = vld [vmem:[#allocation2 + $0x1a0] sm:$0xff]
        %v563 = vld [vmem:[#allocation2 + $0x1a8] sm:$0xff]
        %v564 = vld [vmem:[#allocation2 + $0x1b0] sm:$0xff]
        %v565 = vld [vmem:[#allocation2 + $0x1b8] sm:$0x3]
        %v566 = vld [vmem:[#allocation2 + $0x1c0] sm:$0xff]
        %v567 = vld [vmem:[#allocation2 + $0x1c8] sm:$0xff]
        %v568 = vld [vmem:[#allocation2 + $0x1d0] sm:$0xff]
        %v569 = vld [vmem:[#allocation2 + $0x1d8] sm:$0x3]
        %v570 = vld [vmem:[#allocation2 + $0x1e0] sm:$0xff]
        %v571 = vld [vmem:[#allocation2 + $0x1e8] sm:$0xff]
        %v572 = vld [vmem:[#allocation2 + $0x1f0] sm:$0xff]
        %v573 = vld [vmem:[#allocation2 + $0x1f8] sm:$0x3]
        %v574 = vld [vmem:[#allocation2 + $0x200] sm:$0xff]
        %v575 = vld [vmem:[#allocation2 + $0x208] sm:$0xff]
        %v576 = vld [vmem:[#allocation2 + $0x210] sm:$0xff]
        %v577 = vld [vmem:[#allocation2 + $0x218] sm:$0x3]
        %v578 = vld [vmem:[#allocation2 + $0x220] sm:$0xff]
        %v579 = vld [vmem:[#allocation2 + $0x228] sm:$0xff]
        %v580 = vld [vmem:[#allocation2 + $0x230] sm:$0xff]
        %v581 = vld [vmem:[#allocation2 + $0x238] sm:$0x3]
        %v582 = vld [vmem:[#allocation2 + $0x240] sm:$0xff]
        %v583 = vld [vmem:[#allocation2 + $0x248] sm:$0xff]
        %v584 = vld [vmem:[#allocation2 + $0x250] sm:$0xff]
        %v585 = vld [vmem:[#allocation2 + $0x258] sm:$0x3]
        %v586 = vld [vmem:[#allocation2 + $0x260] sm:$0xff]
        %v587 = vld [vmem:[#allocation2 + $0x268] sm:$0xff]
        %v588 = vld [vmem:[#allocation2 + $0x270] sm:$0xff]
        %v589 = vld [vmem:[#allocation2 + $0x278] sm:$0x3]
        %v590 = vld [vmem:[#allocation6] sm:$0xf]
        %vm663 = vcmask 1046528
        %v664 = vrot.slane %v510, 1
        %v665 = vrot.slane %v511, 1
        %v666 = vsel %vm663, %v664, %v665
        %v667 = vrot.slane %v512, 1
        %v668 = vsel %vm663, %v665, %v667
        %v669 = vrot.slane %v513, 1
        %v670 = vsel %vm663, %v667, %v669
        %v671 = vrot.slane %v514, 1
        %v672 = vrot.slane %v515, 1
        %v673 = vsel %vm663, %v671, %v672
        %v674 = vrot.slane %v516, 1
        %v675 = vsel %vm663, %v672, %v674
        %v676 = vrot.slane %v517, 1
        %v677 = vsel %vm663, %v674, %v676
        %v678 = vrot.slane %v518, 1
        %v679 = vrot.slane %v519, 1
        %v680 = vsel %vm663, %v678, %v679
        %v681 = vrot.slane %v520, 1
        %v682 = vsel %vm663, %v679, %v681
        %v683 = vrot.slane %v521, 1
        %v684 = vsel %vm663, %v681, %v683
        %v685 = vrot.slane %v522, 1
        %v686 = vrot.slane %v523, 1
        %v687 = vsel %vm663, %v685, %v686
        %v688 = vrot.slane %v524, 1
        %v689 = vsel %vm663, %v686, %v688
        %v690 = vrot.slane %v525, 1
        %v691 = vsel %vm663, %v688, %v690
        %v692 = vrot.slane %v526, 1
        %v693 = vrot.slane %v527, 1
        %v694 = vsel %vm663, %v692, %v693
        %v695 = vrot.slane %v528, 1
        %v696 = vsel %vm663, %v693, %v695
        %v697 = vrot.slane %v529, 1
        %v698 = vsel %vm663, %v695, %v697
        %v699 = vrot.slane %v530, 1
        %v700 = vrot.slane %v531, 1
        %v701 = vsel %vm663, %v699, %v700
        %v702 = vrot.slane %v532, 1
        %v703 = vsel %vm663, %v700, %v702
        %v704 = vrot.slane %v533, 1
        %v705 = vsel %vm663, %v702, %v704
        %v706 = vrot.slane %v534, 1
        %v707 = vrot.slane %v535, 1
        %v708 = vsel %vm663, %v706, %v707
        %v709 = vrot.slane %v536, 1
        %v710 = vsel %vm663, %v707, %v709
        %v711 = vrot.slane %v537, 1
        %v712 = vsel %vm663, %v709, %v711
        %v713 = vrot.slane %v538, 1
        %v714 = vrot.slane %v539, 1
        %v715 = vsel %vm663, %v713, %v714
        %v716 = vrot.slane %v540, 1
        %v717 = vsel %vm663, %v714, %v716
        %v718 = vrot.slane %v541, 1
        %v719 = vsel %vm663, %v716, %v718
        %v720 = vrot.slane %v542, 1
        %v721 = vrot.slane %v543, 1
        %v722 = vsel %vm663, %v720, %v721
        %v723 = vrot.slane %v544, 1
        %v724 = vsel %vm663, %v721, %v723
        %v725 = vrot.slane %v545, 1
        %v726 = vsel %vm663, %v723, %v725
        %v727 = vrot.slane %v546, 1
        %v728 = vrot.slane %v547, 1
        %v729 = vsel %vm663, %v727, %v728
        %v730 = vrot.slane %v548, 1
        %v731 = vsel %vm663, %v728, %v730
        %v732 = vrot.slane %v549, 1
        %v733 = vsel %vm663, %v730, %v732
        %v734 = vrot.slane %v550, 1
        %v735 = vrot.slane %v551, 1
        %v736 = vsel %vm663, %v734, %v735
        %v737 = vrot.slane %v552, 1
        %v738 = vsel %vm663, %v735, %v737
        %v739 = vrot.slane %v553, 1
        %v740 = vsel %vm663, %v737, %v739
        %v741 = vrot.slane %v554, 1
        %v742 = vrot.slane %v555, 1
        %v743 = vsel %vm663, %v741, %v742
        %v744 = vrot.slane %v556, 1
        %v745 = vsel %vm663, %v742, %v744
        %v746 = vrot.slane %v557, 1
        %v747 = vsel %vm663, %v744, %v746
        %v748 = vrot.slane %v558, 1
        %v749 = vrot.slane %v559, 1
        %v750 = vsel %vm663, %v748, %v749
        %v751 = vrot.slane %v560, 1
        %v752 = vsel %vm663, %v749, %v751
        %v753 = vrot.slane %v561, 1
        %v754 = vsel %vm663, %v751, %v753
        %v755 = vrot.slane %v562, 1
        %v756 = vrot.slane %v563, 1
        %v757 = vsel %vm663, %v755, %v756
        %v758 = vrot.slane %v564, 1
        %v759 = vsel %vm663, %v756, %v758
        %v760 = vrot.slane %v565, 1
        %v761 = vsel %vm663, %v758, %v760
        %v762 = vrot.slane %v566, 1
        %v763 = vrot.slane %v567, 1
        %v764 = vsel %vm663, %v762, %v763
        %v765 = vrot.slane %v568, 1
        %v766 = vsel %vm663, %v763, %v765
        %v767 = vrot.slane %v569, 1
        %v768 = vsel %vm663, %v765, %v767
        %v769 = vrot.slane %v570, 1
        %v770 = vrot.slane %v571, 1
        %v771 = vsel %vm663, %v769, %v770
        %v772 = vrot.slane %v572, 1
        %v773 = vsel %vm663, %v770, %v772
        %v774 = vrot.slane %v573, 1
        %v775 = vsel %vm663, %v772, %v774
        %v776 = vrot.slane %v574, 1
        %v777 = vrot.slane %v575, 1
        %v778 = vsel %vm663, %v776, %v777
        %v779 = vrot.slane %v576, 1
        %v780 = vsel %vm663, %v777, %v779
        %v781 = vrot.slane %v577, 1
        %v782 = vsel %vm663, %v779, %v781
        %v783 = vrot.slane %v578, 1
        %v784 = vrot.slane %v579, 1
        %v785 = vsel %vm663, %v783, %v784
        %v786 = vrot.slane %v580, 1
        %v787 = vsel %vm663, %v784, %v786
        %v788 = vrot.slane %v581, 1
        %v789 = vsel %vm663, %v786, %v788
        %s790 = scalar_lea.vmem [#allocation6], 4
        %v791 = vld [vmem:[%s790] sm:$0xf]
        %v792 = vsel %vm413, %v666, 0
        %v794 = vsel %vm413, %v668, 0
        %v796 = vsel %vm413, %v670, 0
        %v798 = vsel %vm413, %v673, 0
        %v800 = vsel %vm413, %v675, 0
        %v802 = vsel %vm413, %v677, 0
        %v804 = vsel %vm413, %v680, 0
        %v806 = vsel %vm413, %v682, 0
        %v808 = vsel %vm413, %v684, 0
        %v810 = vsel %vm413, %v687, 0
        %v812 = vsel %vm413, %v689, 0
        %v814 = vsel %vm413, %v691, 0
        %v816 = vsel %vm413, %v694, 0
        %v818 = vsel %vm413, %v696, 0
        %v820 = vsel %vm413, %v698, 0
        %v822 = vsel %vm413, %v701, 0
        %v824 = vsel %vm413, %v703, 0
        %v826 = vsel %vm413, %v705, 0
        %v828 = vsel %vm413, %v708, 0
        %v830 = vsel %vm413, %v710, 0
        %v832 = vsel %vm413, %v712, 0
        %v834 = vsel %vm413, %v715, 0
        %v836 = vsel %vm413, %v717, 0
        %v838 = vsel %vm413, %v719, 0
        %v840 = vsel %vm413, %v722, 0
        %v842 = vsel %vm413, %v724, 0
        %v844 = vsel %vm413, %v726, 0
        %v846 = vsel %vm413, %v729, 0
        %v848 = vsel %vm413, %v731, 0
        %v850 = vsel %vm413, %v733, 0
        %v852 = vsel %vm413, %v736, 0
        %v854 = vsel %vm413, %v738, 0
        %v856 = vsel %vm413, %v740, 0
        %v858 = vsel %vm413, %v743, 0
        %v860 = vsel %vm413, %v745, 0
        %v862 = vsel %vm413, %v747, 0
        %v864 = vsel %vm413, %v750, 0
        %v866 = vsel %vm413, %v752, 0
        %v868 = vsel %vm413, %v754, 0
        %v870 = vsel %vm413, %v757, 0
        %v872 = vsel %vm413, %v759, 0
        %v874 = vsel %vm413, %v761, 0
        %v876 = vsel %vm413, %v764, 0
        %v878 = vsel %vm413, %v766, 0
        %v880 = vsel %vm413, %v768, 0
        %v882 = vsel %vm413, %v771, 0
        %v884 = vsel %vm413, %v773, 0
        %v886 = vsel %vm413, %v775, 0
        %v888 = vsel %vm413, %v778, 0
        %v890 = vsel %vm413, %v780, 0
        %v892 = vsel %vm413, %v782, 0
        %v894 = vsel %vm413, %v785, 0
        %v896 = vsel %vm413, %v787, 0
        %v898 = vsel %vm413, %v789, 0
        %vm900 = vcmask 1043456
        %v902 = vsel %vm900, %v791, 0
        %904 = vmatprep.subr.mxu0 0.0
        %905 = vmatpush1.msra.mxu0 %v902
        %906 = vmatprep.subr.mxu0 0.0
        %907 = vmatpush1.msra.mxu0 0.0
        %908 = vmatprep.subr.mxu0 0.0
        %909 = vmatpush1.msra.mxu0 0.0
        %910 = vmatprep.subr.mxu0 0.0
        %911 = vmatpush1.msra.mxu0 0.0
        %912 = vmatprep.subr.mxu0 0.0
        %913 = vmatpush1.msra.mxu0 0.0
        %914 = vmatprep.subr.mxu0 0.0
        %915 = vmatpush1.msra.mxu0 0.0
        %916 = vmatprep.subr.mxu0 0.0
        %917 = vmatpush1.msra.mxu0 0.0
        %918 = vmatprep.subr.mxu0 0.0
        %919 = vmatpush1.msra.mxu0 0.0
        %920 = vmatprep.subr.mxu0 0.0
        %921 = vmatpush1.msra.mxu0 0.0
        %922 = vmatprep.subr.mxu0 0.0
        %923 = vmatpush1.msra.mxu0 0.0
        %924 = vmatprep.subr.mxu0 0.0
        %925 = vmatpush1.msra.mxu0 0.0
        %926 = vmatprep.subr.mxu0 0.0
        %927 = vmatpush1.msra.mxu0 0.0
        %928 = vmatprep.subr.mxu0 0.0
        %929 = vmatpush1.msra.mxu0 0.0
        %930 = vmatprep.subr.mxu0 0.0
        %931 = vmatpush1.msra.mxu0 0.0
        %932 = vmatprep.subr.mxu0 0.0
        %933 = vmatpush1.msra.mxu0 0.0
        %934 = vmatprep.subr.mxu0 0.0
        %935 = vmatpush1.msra.mxu0 0.0
        %936 = vmatprep.subr.mxu0 0.0
        %937 = vmatpush1.msra.mxu0 0.0
        %938 = vmatprep.subr.mxu0 0.0
        %939 = vmatpush1.msra.mxu0 0.0
        %940 = vmatprep.subr.mxu0 0.0
        %941 = vmatpush1.msra.mxu0 0.0
        %942 = vmatprep.subr.mxu0 0.0
        %943 = vmatpush1.msra.mxu0 0.0
        %944 = vmatprep.subr.mxu0 0.0
        %945 = vmatpush1.msra.mxu0 0.0
        %946 = vmatprep.subr.mxu0 0.0
        %947 = vmatpush1.msra.mxu0 0.0
        %948 = vmatprep.subr.mxu0 0.0
        %949 = vmatpush1.msra.mxu0 0.0
        %950 = vmatprep.subr.mxu0 0.0
        %951 = vmatpush1.msra.mxu0 0.0
        %952 = vmatprep.subr.mxu0 0.0
        %953 = vmatpush1.msra.mxu0 0.0
        %954 = vmatprep.subr.mxu0 0.0
        %955 = vmatpush1.msra.mxu0 0.0
        %956 = vmatprep.subr.mxu0 0.0
        %957 = vmatpush1.msra.mxu0 0.0
        %958 = vmatprep.subr.mxu0 0.0
        %959 = vmatpush1.msra.mxu0 0.0
        %960 = vmatprep.subr.mxu0 0.0
        %961 = vmatpush1.msra.mxu0 0.0
        %962 = vmatprep.subr.mxu0 0.0
        %963 = vmatpush1.msra.mxu0 0.0
        %964 = vmatprep.subr.mxu0 0.0
        %965 = vmatpush1.msra.mxu0 0.0
        %966 = vmatprep.subr.mxu0 0.0
        %967 = vmatpush1.msra.mxu0 0.0
        %968 = vmatprep.mubr.f32.mxu0 0.0
        %969 = vmatmul.mubr.f32.gmra.mrb[0].mxu0 %v792
        %v970 = vpop.f32.mrb[0].mxu0
        %v971 = vadd.f32 0.0, %v970
        %v972 = vpop.f32.mrb[0].mxu0
        %973 = vmatprep.mubr.f32.mxu0 0.0
        %974 = vmatmul.mubr.f32.gmra.mrb[0].mxu0 %v794
        %v975 = vpop.f32.mrb[0].mxu0
        %v976 = vadd.f32 0.0, %v975
        %v977 = vpop.f32.mrb[0].mxu0
        %978 = vmatprep.mubr.f32.mxu0 0.0
        %979 = vmatmul.mubr.f32.gmra.mrb[0].mxu0 %v796
        %v980 = vpop.f32.mrb[0].mxu0
        %v981 = vadd.f32 0.0, %v980
        %v982 = vpop.f32.mrb[0].mxu0
        %983 = vmatprep.mubr.f32.mxu0 0.0
        %984 = vmatmul.mubr.f32.gmra.mrb[0].mxu0 %v798
        %v985 = vpop.f32.mrb[0].mxu0
        %v986 = vadd.f32 0.0, %v985
        %v987 = vpop.f32.mrb[0].mxu0
        %988 = vmatprep.mubr.f32.mxu0 0.0
        %989 = vmatmul.mubr.f32.gmra.mrb[0].mxu0 %v800
        %v990 = vpop.f32.mrb[0].mxu0
        %v991 = vadd.f32 0.0, %v990
        %v992 = vpop.f32.mrb[0].mxu0
        %993 = vmatprep.mubr.f32.mxu0 0.0
        %994 = vmatmul.mubr.f32.gmra.mrb[0].mxu0 %v802
        %v995 = vpop.f32.mrb[0].mxu0
        %v996 = vadd.f32 0.0, %v995
        %v997 = vpop.f32.mrb[0].mxu0
        %998 = vmatprep.mubr.f32.mxu0 0.0
        %999 = vmatmul.mubr.f32.gmra.mrb[0].mxu0 %v804
        %v1000 = vpop.f32.mrb[0].mxu0
        %v1001 = vadd.f32 0.0, %v1000
        %v1002 = vpop.f32.mrb[0].mxu0
        %1003 = vmatprep.mubr.f32.mxu0 0.0
        %1004 = vmatmul.mubr.f32.gmra.mrb[0].mxu0 %v806
        %v1005 = vpop.f32.mrb[0].mxu0
        %v1006 = vadd.f32 0.0, %v1005
        %v1007 = vpop.f32.mrb[0].mxu0
        %1008 = vmatprep.mubr.f32.mxu0 0.0
        %1009 = vmatmul.mubr.f32.gmra.mrb[0].mxu0 %v808
        %v1010 = vpop.f32.mrb[0].mxu0
        %v1011 = vadd.f32 0.0, %v1010
        %v1012 = vpop.f32.mrb[0].mxu0
        %1013 = vmatprep.mubr.f32.mxu0 0.0
        %1014 = vmatmul.mubr.f32.gmra.mrb[0].mxu0 %v810
        %v1015 = vpop.f32.mrb[0].mxu0
        %v1016 = vadd.f32 0.0, %v1015
        %v1017 = vpop.f32.mrb[0].mxu0
        %1018 = vmatprep.mubr.f32.mxu0 0.0
        %1019 = vmatmul.mubr.f32.gmra.mrb[0].mxu0 %v812
        %v1020 = vpop.f32.mrb[0].mxu0
        %v1021 = vadd.f32 0.0, %v1020
        %v1022 = vpop.f32.mrb[0].mxu0
        %1023 = vmatprep.mubr.f32.mxu0 0.0
        %1024 = vmatmul.mubr.f32.gmra.mrb[0].mxu0 %v814
        %v1025 = vpop.f32.mrb[0].mxu0
        %v1026 = vadd.f32 0.0, %v1025
        %v1027 = vpop.f32.mrb[0].mxu0
        %1028 = vmatprep.mubr.f32.mxu0 0.0
        %1029 = vmatmul.mubr.f32.gmra.mrb[0].mxu0 %v816
        %v1030 = vpop.f32.mrb[0].mxu0
        %v1031 = vadd.f32 0.0, %v1030
        %v1032 = vpop.f32.mrb[0].mxu0
        %1033 = vmatprep.mubr.f32.mxu0 0.0
        %1034 = vmatmul.mubr.f32.gmra.mrb[0].mxu0 %v818
        %v1035 = vpop.f32.mrb[0].mxu0
        %v1036 = vadd.f32 0.0, %v1035
        %v1037 = vpop.f32.mrb[0].mxu0
        %1038 = vmatprep.mubr.f32.mxu0 0.0
        %1039 = vmatmul.mubr.f32.gmra.mrb[0].mxu0 %v820
        %v1040 = vpop.f32.mrb[0].mxu0
        %v1041 = vadd.f32 0.0, %v1040
        %v1042 = vpop.f32.mrb[0].mxu0
        %1043 = vmatprep.mubr.f32.mxu0 0.0
        %1044 = vmatmul.mubr.f32.gmra.mrb[0].mxu0 %v822
        %v1045 = vpop.f32.mrb[0].mxu0
        %v1046 = vadd.f32 0.0, %v1045
        %v1047 = vpop.f32.mrb[0].mxu0
        %1048 = vmatprep.mubr.f32.mxu0 0.0
        %1049 = vmatmul.mubr.f32.gmra.mrb[0].mxu0 %v824
        %v1050 = vpop.f32.mrb[0].mxu0
        %v1051 = vadd.f32 0.0, %v1050
        %v1052 = vpop.f32.mrb[0].mxu0
        %1053 = vmatprep.mubr.f32.mxu0 0.0
        %1054 = vmatmul.mubr.f32.gmra.mrb[0].mxu0 %v826
        %v1055 = vpop.f32.mrb[0].mxu0
        %v1056 = vadd.f32 0.0, %v1055
        %v1057 = vpop.f32.mrb[0].mxu0
        %1058 = vmatprep.mubr.f32.mxu0 0.0
        %1059 = vmatmul.mubr.f32.gmra.mrb[0].mxu0 %v828
        %v1060 = vpop.f32.mrb[0].mxu0
        %v1061 = vadd.f32 0.0, %v1060
        %v1062 = vpop.f32.mrb[0].mxu0
        %1063 = vmatprep.mubr.f32.mxu0 0.0
        %1064 = vmatmul.mubr.f32.gmra.mrb[0].mxu0 %v830
        %v1065 = vpop.f32.mrb[0].mxu0
        %v1066 = vadd.f32 0.0, %v1065
        %v1067 = vpop.f32.mrb[0].mxu0
        %1068 = vmatprep.mubr.f32.mxu0 0.0
        %1069 = vmatmul.mubr.f32.gmra.mrb[0].mxu0 %v832
        %v1070 = vpop.f32.mrb[0].mxu0
        %v1071 = vadd.f32 0.0, %v1070
        %v1072 = vpop.f32.mrb[0].mxu0
        %1073 = vmatprep.mubr.f32.mxu0 0.0
        %1074 = vmatmul.mubr.f32.gmra.mrb[0].mxu0 %v834
        %v1075 = vpop.f32.mrb[0].mxu0
        %v1076 = vadd.f32 0.0, %v1075
        %v1077 = vpop.f32.mrb[0].mxu0
        %1078 = vmatprep.mubr.f32.mxu0 0.0
        %1079 = vmatmul.mubr.f32.gmra.mrb[0].mxu0 %v836
        %v1080 = vpop.f32.mrb[0].mxu0
        %v1081 = vadd.f32 0.0, %v1080
        %v1082 = vpop.f32.mrb[0].mxu0
        %1083 = vmatprep.mubr.f32.mxu0 0.0
        %1084 = vmatmul.mubr.f32.gmra.mrb[0].mxu0 %v838
        %v1085 = vpop.f32.mrb[0].mxu0
        %v1086 = vadd.f32 0.0, %v1085
        %v1087 = vpop.f32.mrb[0].mxu0
        %1088 = vmatprep.mubr.f32.mxu0 0.0
        %1089 = vmatmul.mubr.f32.gmra.mrb[0].mxu0 %v840
        %v1090 = vpop.f32.mrb[0].mxu0
        %v1091 = vadd.f32 0.0, %v1090
        %v1092 = vpop.f32.mrb[0].mxu0
        %1093 = vmatprep.mubr.f32.mxu0 0.0
        %1094 = vmatmul.mubr.f32.gmra.mrb[0].mxu0 %v842
        %v1095 = vpop.f32.mrb[0].mxu0
        %v1096 = vadd.f32 0.0, %v1095
        %v1097 = vpop.f32.mrb[0].mxu0
        %1098 = vmatprep.mubr.f32.mxu0 0.0
        %1099 = vmatmul.mubr.f32.gmra.mrb[0].mxu0 %v844
        %v1100 = vpop.f32.mrb[0].mxu0
        %v1101 = vadd.f32 0.0, %v1100
        %v1102 = vpop.f32.mrb[0].mxu0
        %1103 = vmatprep.mubr.f32.mxu0 0.0
        %1104 = vmatmul.mubr.f32.gmra.mrb[0].mxu0 %v846
        %v1105 = vpop.f32.mrb[0].mxu0
        %v1106 = vadd.f32 0.0, %v1105
        %v1107 = vpop.f32.mrb[0].mxu0
        %1108 = vmatprep.mubr.f32.mxu0 0.0
        %1109 = vmatmul.mubr.f32.gmra.mrb[0].mxu0 %v848
        %v1110 = vpop.f32.mrb[0].mxu0
        %v1111 = vadd.f32 0.0, %v1110
        %v1112 = vpop.f32.mrb[0].mxu0
        %1113 = vmatprep.mubr.f32.mxu0 0.0
        %1114 = vmatmul.mubr.f32.gmra.mrb[0].mxu0 %v850
        %v1115 = vpop.f32.mrb[0].mxu0
        %v1116 = vadd.f32 0.0, %v1115
        %v1117 = vpop.f32.mrb[0].mxu0
        %1118 = vmatprep.mubr.f32.mxu0 0.0
        %1119 = vmatmul.mubr.f32.gmra.mrb[0].mxu0 %v852
        %v1120 = vpop.f32.mrb[0].mxu0
        %v1121 = vadd.f32 0.0, %v1120
        %v1122 = vpop.f32.mrb[0].mxu0
        %1123 = vmatprep.mubr.f32.mxu0 0.0
        %1124 = vmatmul.mubr.f32.gmra.mrb[0].mxu0 %v854
        %v1125 = vpop.f32.mrb[0].mxu0
        %v1126 = vadd.f32 0.0, %v1125
        %v1127 = vpop.f32.mrb[0].mxu0
        %1128 = vmatprep.mubr.f32.mxu0 0.0
        %1129 = vmatmul.mubr.f32.gmra.mrb[0].mxu0 %v856
        %v1130 = vpop.f32.mrb[0].mxu0
        %v1131 = vadd.f32 0.0, %v1130
        %v1132 = vpop.f32.mrb[0].mxu0
        %1133 = vmatprep.mubr.f32.mxu0 0.0
        %1134 = vmatmul.mubr.f32.gmra.mrb[0].mxu0 %v858
        %v1135 = vpop.f32.mrb[0].mxu0
        %v1136 = vadd.f32 0.0, %v1135
        %v1137 = vpop.f32.mrb[0].mxu0
        %1138 = vmatprep.mubr.f32.mxu0 0.0
        %1139 = vmatmul.mubr.f32.gmra.mrb[0].mxu0 %v860
        %v1140 = vpop.f32.mrb[0].mxu0
        %v1141 = vadd.f32 0.0, %v1140
        %v1142 = vpop.f32.mrb[0].mxu0
        %1143 = vmatprep.mubr.f32.mxu0 0.0
        %1144 = vmatmul.mubr.f32.gmra.mrb[0].mxu0 %v862
        %v1145 = vpop.f32.mrb[0].mxu0
        %v1146 = vadd.f32 0.0, %v1145
        %v1147 = vpop.f32.mrb[0].mxu0
        %1148 = vmatprep.mubr.f32.mxu0 0.0
        %1149 = vmatmul.mubr.f32.gmra.mrb[0].mxu0 %v864
        %v1150 = vpop.f32.mrb[0].mxu0
        %v1151 = vadd.f32 0.0, %v1150
        %v1152 = vpop.f32.mrb[0].mxu0
        %1153 = vmatprep.mubr.f32.mxu0 0.0
        %1154 = vmatmul.mubr.f32.gmra.mrb[0].mxu0 %v866
        %v1155 = vpop.f32.mrb[0].mxu0
        %v1156 = vadd.f32 0.0, %v1155
        %v1157 = vpop.f32.mrb[0].mxu0
        %1158 = vmatprep.mubr.f32.mxu0 0.0
        %1159 = vmatmul.mubr.f32.gmra.mrb[0].mxu0 %v868
        %v1160 = vpop.f32.mrb[0].mxu0
        %v1161 = vadd.f32 0.0, %v1160
        %v1162 = vpop.f32.mrb[0].mxu0
        %1163 = vmatprep.mubr.f32.mxu0 0.0
        %1164 = vmatmul.mubr.f32.gmra.mrb[0].mxu0 %v870
        %v1165 = vpop.f32.mrb[0].mxu0
        %v1166 = vadd.f32 0.0, %v1165
        %v1167 = vpop.f32.mrb[0].mxu0
        %1168 = vmatprep.mubr.f32.mxu0 0.0
        %1169 = vmatmul.mubr.f32.gmra.mrb[0].mxu0 %v872
        %v1170 = vpop.f32.mrb[0].mxu0
        %v1171 = vadd.f32 0.0, %v1170
        %v1172 = vpop.f32.mrb[0].mxu0
        %1173 = vmatprep.mubr.f32.mxu0 0.0
        %1174 = vmatmul.mubr.f32.gmra.mrb[0].mxu0 %v874
        %v1175 = vpop.f32.mrb[0].mxu0
        %v1176 = vadd.f32 0.0, %v1175
        %v1177 = vpop.f32.mrb[0].mxu0
        %1178 = vmatprep.mubr.f32.mxu0 0.0
        %1179 = vmatmul.mubr.f32.gmra.mrb[0].mxu0 %v876
        %v1180 = vpop.f32.mrb[0].mxu0
        %v1181 = vadd.f32 0.0, %v1180
        %v1182 = vpop.f32.mrb[0].mxu0
        %1183 = vmatprep.mubr.f32.mxu0 0.0
        %1184 = vmatmul.mubr.f32.gmra.mrb[0].mxu0 %v878
        %v1185 = vpop.f32.mrb[0].mxu0
        %v1186 = vadd.f32 0.0, %v1185
        %v1187 = vpop.f32.mrb[0].mxu0
        %1188 = vmatprep.mubr.f32.mxu0 0.0
        %1189 = vmatmul.mubr.f32.gmra.mrb[0].mxu0 %v880
        %v1190 = vpop.f32.mrb[0].mxu0
        %v1191 = vadd.f32 0.0, %v1190
        %v1192 = vpop.f32.mrb[0].mxu0
        %1193 = vmatprep.mubr.f32.mxu0 0.0
        %1194 = vmatmul.mubr.f32.gmra.mrb[0].mxu0 %v882
        %v1195 = vpop.f32.mrb[0].mxu0
        %v1196 = vadd.f32 0.0, %v1195
        %v1197 = vpop.f32.mrb[0].mxu0
        %1198 = vmatprep.mubr.f32.mxu0 0.0
        %1199 = vmatmul.mubr.f32.gmra.mrb[0].mxu0 %v884
        %v1200 = vpop.f32.mrb[0].mxu0
        %v1201 = vadd.f32 0.0, %v1200
        %v1202 = vpop.f32.mrb[0].mxu0
        %1203 = vmatprep.mubr.f32.mxu0 0.0
        %1204 = vmatmul.mubr.f32.gmra.mrb[0].mxu0 %v886
        %v1205 = vpop.f32.mrb[0].mxu0
        %v1206 = vadd.f32 0.0, %v1205
        %v1207 = vpop.f32.mrb[0].mxu0
        %1208 = vmatprep.mubr.f32.mxu0 0.0
        %1209 = vmatmul.mubr.f32.gmra.mrb[0].mxu0 %v888
        %v1210 = vpop.f32.mrb[0].mxu0
        %v1211 = vadd.f32 0.0, %v1210
        %v1212 = vpop.f32.mrb[0].mxu0
        %1213 = vmatprep.mubr.f32.mxu0 0.0
        %1214 = vmatmul.mubr.f32.gmra.mrb[0].mxu0 %v890
        %v1215 = vpop.f32.mrb[0].mxu0
        %v1216 = vadd.f32 0.0, %v1215
        %v1217 = vpop.f32.mrb[0].mxu0
        %1218 = vmatprep.mubr.f32.mxu0 0.0
        %1219 = vmatmul.mubr.f32.gmra.mrb[0].mxu0 %v892
        %v1220 = vpop.f32.mrb[0].mxu0
        %v1221 = vadd.f32 0.0, %v1220
        %v1222 = vpop.f32.mrb[0].mxu0
        %1223 = vmatprep.mubr.f32.mxu0 0.0
        %1224 = vmatmul.mubr.f32.gmra.mrb[0].mxu0 %v894
        %v1225 = vpop.f32.mrb[0].mxu0
        %v1226 = vadd.f32 0.0, %v1225
        %v1227 = vpop.f32.mrb[0].mxu0
        %1228 = vmatprep.mubr.f32.mxu0 0.0
        %1229 = vmatmul.mubr.f32.gmra.mrb[0].mxu0 %v896
        %v1230 = vpop.f32.mrb[0].mxu0
        %v1231 = vadd.f32 0.0, %v1230
        %v1232 = vpop.f32.mrb[0].mxu0
        %1233 = vmatprep.mubr.f32.mxu0 0.0
        %1234 = vmatmul.mubr.f32.gmra.mrb[0].mxu0 %v898
        %v1235 = vpop.f32.mrb[0].mxu0
        %v1236 = vadd.f32 0.0, %v1235
        %v1237 = vpop.f32.mrb[0].mxu0
        %1238 = vdwg.mxu0
        %v1239 = vsel %vm413, %v510, 0
        %v1241 = vsel %vm413, %v511, 0
        %v1243 = vsel %vm413, %v512, 0
        %v1245 = vsel %vm413, %v514, 0
        %v1247 = vsel %vm413, %v515, 0
        %v1249 = vsel %vm413, %v516, 0
        %v1251 = vsel %vm413, %v518, 0
        %v1253 = vsel %vm413, %v519, 0
        %v1255 = vsel %vm413, %v520, 0
        %v1257 = vsel %vm413, %v522, 0
        %v1259 = vsel %vm413, %v523, 0
        %v1261 = vsel %vm413, %v524, 0
        %v1263 = vsel %vm413, %v526, 0
        %v1265 = vsel %vm413, %v527, 0
        %v1267 = vsel %vm413, %v528, 0
        %v1269 = vsel %vm413, %v530, 0
        %v1271 = vsel %vm413, %v531, 0
        %v1273 = vsel %vm413, %v532, 0
        %v1275 = vsel %vm413, %v534, 0
        %v1277 = vsel %vm413, %v535, 0
        %v1279 = vsel %vm413, %v536, 0
        %v1281 = vsel %vm413, %v538, 0
        %v1283 = vsel %vm413, %v539, 0
        %v1285 = vsel %vm413, %v540, 0
        %v1287 = vsel %vm413, %v542, 0
        %v1289 = vsel %vm413, %v543, 0
        %v1291 = vsel %vm413, %v544, 0
        %v1293 = vsel %vm413, %v546, 0
        %v1295 = vsel %vm413, %v547, 0
        %v1297 = vsel %vm413, %v548, 0
        %v1299 = vsel %vm413, %v550, 0
        %v1301 = vsel %vm413, %v551, 0
        %v1303 = vsel %vm413, %v552, 0
        %v1305 = vsel %vm413, %v554, 0
        %v1307 = vsel %vm413, %v555, 0
        %v1309 = vsel %vm413, %v556, 0
        %v1311 = vsel %vm413, %v558, 0
        %v1313 = vsel %vm413, %v559, 0
        %v1315 = vsel %vm413, %v560, 0
        %v1317 = vsel %vm413, %v562, 0
        %v1319 = vsel %vm413, %v563, 0
        %v1321 = vsel %vm413, %v564, 0
        %v1323 = vsel %vm413, %v566, 0
        %v1325 = vsel %vm413, %v567, 0
        %v1327 = vsel %vm413, %v568, 0
        %v1329 = vsel %vm413, %v570, 0
        %v1331 = vsel %vm413, %v571, 0
        %v1333 = vsel %vm413, %v572, 0
        %v1335 = vsel %vm413, %v574, 0
        %v1337 = vsel %vm413, %v575, 0
        %v1339 = vsel %vm413, %v576, 0
        %v1341 = vsel %vm413, %v578, 0
        %v1343 = vsel %vm413, %v579, 0
        %v1345 = vsel %vm413, %v580, 0
        %v1348 = vsel %vm900, %v590, 0
        %1350 = vmatprep.subr.mxu0 0.0
        %1351 = vmatpush1.msra.mxu0 %v1348
        %1352 = vmatprep.subr.mxu0 0.0
        %1353 = vmatpush1.msra.mxu0 0.0
        %1354 = vmatprep.subr.mxu0 0.0
        %1355 = vmatpush1.msra.mxu0 0.0
        %1356 = vmatprep.subr.mxu0 0.0
        %1357 = vmatpush1.msra.mxu0 0.0
        %1358 = vmatprep.subr.mxu0 0.0
        %1359 = vmatpush1.msra.mxu0 0.0
        %1360 = vmatprep.subr.mxu0 0.0
        %1361 = vmatpush1.msra.mxu0 0.0
        %1362 = vmatprep.subr.mxu0 0.0
        %1363 = vmatpush1.msra.mxu0 0.0
        %1364 = vmatprep.subr.mxu0 0.0
        %1365 = vmatpush1.msra.mxu0 0.0
        %1366 = vmatprep.subr.mxu0 0.0
        %1367 = vmatpush1.msra.mxu0 0.0
        %1368 = vmatprep.subr.mxu0 0.0
        %1369 = vmatpush1.msra.mxu0 0.0
        %1370 = vmatprep.subr.mxu0 0.0
        %1371 = vmatpush1.msra.mxu0 0.0
        %1372 = vmatprep.subr.mxu0 0.0
        %1373 = vmatpush1.msra.mxu0 0.0
        %1374 = vmatprep.subr.mxu0 0.0
        %1375 = vmatpush1.msra.mxu0 0.0
        %1376 = vmatprep.subr.mxu0 0.0
        %1377 = vmatpush1.msra.mxu0 0.0
        %1378 = vmatprep.subr.mxu0 0.0
        %1379 = vmatpush1.msra.mxu0 0.0
        %1380 = vmatprep.subr.mxu0 0.0
        %1381 = vmatpush1.msra.mxu0 0.0
        %1382 = vmatprep.subr.mxu0 0.0
        %1383 = vmatpush1.msra.mxu0 0.0
        %1384 = vmatprep.subr.mxu0 0.0
        %1385 = vmatpush1.msra.mxu0 0.0
        %1386 = vmatprep.subr.mxu0 0.0
        %1387 = vmatpush1.msra.mxu0 0.0
        %1388 = vmatprep.subr.mxu0 0.0
        %1389 = vmatpush1.msra.mxu0 0.0
        %1390 = vmatprep.subr.mxu0 0.0
        %1391 = vmatpush1.msra.mxu0 0.0
        %1392 = vmatprep.subr.mxu0 0.0
        %1393 = vmatpush1.msra.mxu0 0.0
        %1394 = vmatprep.subr.mxu0 0.0
        %1395 = vmatpush1.msra.mxu0 0.0
        %1396 = vmatprep.subr.mxu0 0.0
        %1397 = vmatpush1.msra.mxu0 0.0
        %1398 = vmatprep.subr.mxu0 0.0
        %1399 = vmatpush1.msra.mxu0 0.0
        %1400 = vmatprep.subr.mxu0 0.0
        %1401 = vmatpush1.msra.mxu0 0.0
        %1402 = vmatprep.subr.mxu0 0.0
        %1403 = vmatpush1.msra.mxu0 0.0
        %1404 = vmatprep.subr.mxu0 0.0
        %1405 = vmatpush1.msra.mxu0 0.0
        %1406 = vmatprep.subr.mxu0 0.0
        %1407 = vmatpush1.msra.mxu0 0.0
        %1408 = vmatprep.subr.mxu0 0.0
        %1409 = vmatpush1.msra.mxu0 0.0
        %1410 = vmatprep.subr.mxu0 0.0
        %1411 = vmatpush1.msra.mxu0 0.0
        %1412 = vmatprep.subr.mxu0 0.0
        %1413 = vmatpush1.msra.mxu0 0.0
        %1414 = vmatprep.mubr.f32.mxu0 0.0
        %1415 = vmatmul.mubr.f32.gmra.mrb[0].mxu0 %v1239
        %v1416 = vpop.f32.mrb[0].mxu0
        %v1417 = vadd.f32 %v971, %v1416
        %v1418 = vpop.f32.mrb[0].mxu0
        %1419 = vmatprep.mubr.f32.mxu0 0.0
        %1420 = vmatmul.mubr.f32.gmra.mrb[0].mxu0 %v1241
        %v1421 = vpop.f32.mrb[0].mxu0
        %v1422 = vadd.f32 %v976, %v1421
        %v1423 = vpop.f32.mrb[0].mxu0
        %1424 = vmatprep.mubr.f32.mxu0 0.0
        %1425 = vmatmul.mubr.f32.gmra.mrb[0].mxu0 %v1243
        %v1426 = vpop.f32.mrb[0].mxu0
        %v1427 = vadd.f32 %v981, %v1426
        %v1428 = vpop.f32.mrb[0].mxu0
        %1429 = vmatprep.mubr.f32.mxu0 0.0
        %1430 = vmatmul.mubr.f32.gmra.mrb[0].mxu0 %v1245
        %v1431 = vpop.f32.mrb[0].mxu0
        %v1432 = vadd.f32 %v986, %v1431
        %v1433 = vpop.f32.mrb[0].mxu0
        %1434 = vmatprep.mubr.f32.mxu0 0.0
        %1435 = vmatmul.mubr.f32.gmra.mrb[0].mxu0 %v1247
        %v1436 = vpop.f32.mrb[0].mxu0
        %v1437 = vadd.f32 %v991, %v1436
        %v1438 = vpop.f32.mrb[0].mxu0
        %1439 = vmatprep.mubr.f32.mxu0 0.0
        %1440 = vmatmul.mubr.f32.gmra.mrb[0].mxu0 %v1249
        %v1441 = vpop.f32.mrb[0].mxu0
        %v1442 = vadd.f32 %v996, %v1441
        %v1443 = vpop.f32.mrb[0].mxu0
        %1444 = vmatprep.mubr.f32.mxu0 0.0
        %1445 = vmatmul.mubr.f32.gmra.mrb[0].mxu0 %v1251
        %v1446 = vpop.f32.mrb[0].mxu0
        %v1447 = vadd.f32 %v1001, %v1446
        %v1448 = vpop.f32.mrb[0].mxu0
        %1449 = vmatprep.mubr.f32.mxu0 0.0
        %1450 = vmatmul.mubr.f32.gmra.mrb[0].mxu0 %v1253
        %v1451 = vpop.f32.mrb[0].mxu0
        %v1452 = vadd.f32 %v1006, %v1451
        %v1453 = vpop.f32.mrb[0].mxu0
        %1454 = vmatprep.mubr.f32.mxu0 0.0
        %1455 = vmatmul.mubr.f32.gmra.mrb[0].mxu0 %v1255
        %v1456 = vpop.f32.mrb[0].mxu0
        %v1457 = vadd.f32 %v1011, %v1456
        %v1458 = vpop.f32.mrb[0].mxu0
        %1459 = vmatprep.mubr.f32.mxu0 0.0
        %1460 = vmatmul.mubr.f32.gmra.mrb[0].mxu0 %v1257
        %v1461 = vpop.f32.mrb[0].mxu0
        %v1462 = vadd.f32 %v1016, %v1461
        %v1463 = vpop.f32.mrb[0].mxu0
        %1464 = vmatprep.mubr.f32.mxu0 0.0
        %1465 = vmatmul.mubr.f32.gmra.mrb[0].mxu0 %v1259
        %v1466 = vpop.f32.mrb[0].mxu0
        %v1467 = vadd.f32 %v1021, %v1466
        %v1468 = vpop.f32.mrb[0].mxu0
        %1469 = vmatprep.mubr.f32.mxu0 0.0
        %1470 = vmatmul.mubr.f32.gmra.mrb[0].mxu0 %v1261
        %v1471 = vpop.f32.mrb[0].mxu0
        %v1472 = vadd.f32 %v1026, %v1471
        %v1473 = vpop.f32.mrb[0].mxu0
        %1474 = vmatprep.mubr.f32.mxu0 0.0
        %1475 = vmatmul.mubr.f32.gmra.mrb[0].mxu0 %v1263
        %v1476 = vpop.f32.mrb[0].mxu0
        %v1477 = vadd.f32 %v1031, %v1476
        %v1478 = vpop.f32.mrb[0].mxu0
        %1479 = vmatprep.mubr.f32.mxu0 0.0
        %1480 = vmatmul.mubr.f32.gmra.mrb[0].mxu0 %v1265
        %v1481 = vpop.f32.mrb[0].mxu0
        %v1482 = vadd.f32 %v1036, %v1481
        %v1483 = vpop.f32.mrb[0].mxu0
        %1484 = vmatprep.mubr.f32.mxu0 0.0
        %1485 = vmatmul.mubr.f32.gmra.mrb[0].mxu0 %v1267
        %v1486 = vpop.f32.mrb[0].mxu0
        %v1487 = vadd.f32 %v1041, %v1486
        %v1488 = vpop.f32.mrb[0].mxu0
        %1489 = vmatprep.mubr.f32.mxu0 0.0
        %1490 = vmatmul.mubr.f32.gmra.mrb[0].mxu0 %v1269
        %v1491 = vpop.f32.mrb[0].mxu0
        %v1492 = vadd.f32 %v1046, %v1491
        %v1493 = vpop.f32.mrb[0].mxu0
        %1494 = vmatprep.mubr.f32.mxu0 0.0
        %1495 = vmatmul.mubr.f32.gmra.mrb[0].mxu0 %v1271
        %v1496 = vpop.f32.mrb[0].mxu0
        %v1497 = vadd.f32 %v1051, %v1496
        %v1498 = vpop.f32.mrb[0].mxu0
        %1499 = vmatprep.mubr.f32.mxu0 0.0
        %1500 = vmatmul.mubr.f32.gmra.mrb[0].mxu0 %v1273
        %v1501 = vpop.f32.mrb[0].mxu0
        %v1502 = vadd.f32 %v1056, %v1501
        %v1503 = vpop.f32.mrb[0].mxu0
        %1504 = vmatprep.mubr.f32.mxu0 0.0
        %1505 = vmatmul.mubr.f32.gmra.mrb[0].mxu0 %v1275
        %v1506 = vpop.f32.mrb[0].mxu0
        %v1507 = vadd.f32 %v1061, %v1506
        %v1508 = vpop.f32.mrb[0].mxu0
        %1509 = vmatprep.mubr.f32.mxu0 0.0
        %1510 = vmatmul.mubr.f32.gmra.mrb[0].mxu0 %v1277
        %v1511 = vpop.f32.mrb[0].mxu0
        %v1512 = vadd.f32 %v1066, %v1511
        %v1513 = vpop.f32.mrb[0].mxu0
        %1514 = vmatprep.mubr.f32.mxu0 0.0
        %1515 = vmatmul.mubr.f32.gmra.mrb[0].mxu0 %v1279
        %v1516 = vpop.f32.mrb[0].mxu0
        %v1517 = vadd.f32 %v1071, %v1516
        %v1518 = vpop.f32.mrb[0].mxu0
        %1519 = vmatprep.mubr.f32.mxu0 0.0
        %1520 = vmatmul.mubr.f32.gmra.mrb[0].mxu0 %v1281
        %v1521 = vpop.f32.mrb[0].mxu0
        %v1522 = vadd.f32 %v1076, %v1521
        %v1523 = vpop.f32.mrb[0].mxu0
        %1524 = vmatprep.mubr.f32.mxu0 0.0
        %1525 = vmatmul.mubr.f32.gmra.mrb[0].mxu0 %v1283
        %v1526 = vpop.f32.mrb[0].mxu0
        %v1527 = vadd.f32 %v1081, %v1526
        %v1528 = vpop.f32.mrb[0].mxu0
        %1529 = vmatprep.mubr.f32.mxu0 0.0
        %1530 = vmatmul.mubr.f32.gmra.mrb[0].mxu0 %v1285
        %v1531 = vpop.f32.mrb[0].mxu0
        %v1532 = vadd.f32 %v1086, %v1531
        %v1533 = vpop.f32.mrb[0].mxu0
        %1534 = vmatprep.mubr.f32.mxu0 0.0
        %1535 = vmatmul.mubr.f32.gmra.mrb[0].mxu0 %v1287
        %v1536 = vpop.f32.mrb[0].mxu0
        %v1537 = vadd.f32 %v1091, %v1536
        %v1538 = vpop.f32.mrb[0].mxu0
        %1539 = vmatprep.mubr.f32.mxu0 0.0
        %1540 = vmatmul.mubr.f32.gmra.mrb[0].mxu0 %v1289
        %v1541 = vpop.f32.mrb[0].mxu0
        %v1542 = vadd.f32 %v1096, %v1541
        %v1543 = vpop.f32.mrb[0].mxu0
        %1544 = vmatprep.mubr.f32.mxu0 0.0
        %1545 = vmatmul.mubr.f32.gmra.mrb[0].mxu0 %v1291
        %v1546 = vpop.f32.mrb[0].mxu0
        %v1547 = vadd.f32 %v1101, %v1546
        %v1548 = vpop.f32.mrb[0].mxu0
        %1549 = vmatprep.mubr.f32.mxu0 0.0
        %1550 = vmatmul.mubr.f32.gmra.mrb[0].mxu0 %v1293
        %v1551 = vpop.f32.mrb[0].mxu0
        %v1552 = vadd.f32 %v1106, %v1551
        %v1553 = vpop.f32.mrb[0].mxu0
        %1554 = vmatprep.mubr.f32.mxu0 0.0
        %1555 = vmatmul.mubr.f32.gmra.mrb[0].mxu0 %v1295
        %v1556 = vpop.f32.mrb[0].mxu0
        %v1557 = vadd.f32 %v1111, %v1556
        %v1558 = vpop.f32.mrb[0].mxu0
        %1559 = vmatprep.mubr.f32.mxu0 0.0
        %1560 = vmatmul.mubr.f32.gmra.mrb[0].mxu0 %v1297
        %v1561 = vpop.f32.mrb[0].mxu0
        %v1562 = vadd.f32 %v1116, %v1561
        %v1563 = vpop.f32.mrb[0].mxu0
        %1564 = vmatprep.mubr.f32.mxu0 0.0
        %1565 = vmatmul.mubr.f32.gmra.mrb[0].mxu0 %v1299
        %v1566 = vpop.f32.mrb[0].mxu0
        %v1567 = vadd.f32 %v1121, %v1566
        %v1568 = vpop.f32.mrb[0].mxu0
        %1569 = vmatprep.mubr.f32.mxu0 0.0
        %1570 = vmatmul.mubr.f32.gmra.mrb[0].mxu0 %v1301
        %v1571 = vpop.f32.mrb[0].mxu0
        %v1572 = vadd.f32 %v1126, %v1571
        %v1573 = vpop.f32.mrb[0].mxu0
        %1574 = vmatprep.mubr.f32.mxu0 0.0
        %1575 = vmatmul.mubr.f32.gmra.mrb[0].mxu0 %v1303
        %v1576 = vpop.f32.mrb[0].mxu0
        %v1577 = vadd.f32 %v1131, %v1576
        %v1578 = vpop.f32.mrb[0].mxu0
        %1579 = vmatprep.mubr.f32.mxu0 0.0
        %1580 = vmatmul.mubr.f32.gmra.mrb[0].mxu0 %v1305
        %v1581 = vpop.f32.mrb[0].mxu0
        %v1582 = vadd.f32 %v1136, %v1581
        %v1583 = vpop.f32.mrb[0].mxu0
        %1584 = vmatprep.mubr.f32.mxu0 0.0
        %1585 = vmatmul.mubr.f32.gmra.mrb[0].mxu0 %v1307
        %v1586 = vpop.f32.mrb[0].mxu0
        %v1587 = vadd.f32 %v1141, %v1586
        %v1588 = vpop.f32.mrb[0].mxu0
        %1589 = vmatprep.mubr.f32.mxu0 0.0
        %1590 = vmatmul.mubr.f32.gmra.mrb[0].mxu0 %v1309
        %v1591 = vpop.f32.mrb[0].mxu0
        %v1592 = vadd.f32 %v1146, %v1591
        %v1593 = vpop.f32.mrb[0].mxu0
        %1594 = vmatprep.mubr.f32.mxu0 0.0
        %1595 = vmatmul.mubr.f32.gmra.mrb[0].mxu0 %v1311
        %v1596 = vpop.f32.mrb[0].mxu0
        %v1597 = vadd.f32 %v1151, %v1596
        %v1598 = vpop.f32.mrb[0].mxu0
        %1599 = vmatprep.mubr.f32.mxu0 0.0
        %1600 = vmatmul.mubr.f32.gmra.mrb[0].mxu0 %v1313
        %v1601 = vpop.f32.mrb[0].mxu0
        %v1602 = vadd.f32 %v1156, %v1601
        %v1603 = vpop.f32.mrb[0].mxu0
        %1604 = vmatprep.mubr.f32.mxu0 0.0
        %1605 = vmatmul.mubr.f32.gmra.mrb[0].mxu0 %v1315
        %v1606 = vpop.f32.mrb[0].mxu0
        %v1607 = vadd.f32 %v1161, %v1606
        %v1608 = vpop.f32.mrb[0].mxu0
        %1609 = vmatprep.mubr.f32.mxu0 0.0
        %1610 = vmatmul.mubr.f32.gmra.mrb[0].mxu0 %v1317
        %v1611 = vpop.f32.mrb[0].mxu0
        %v1612 = vadd.f32 %v1166, %v1611
        %v1613 = vpop.f32.mrb[0].mxu0
        %1614 = vmatprep.mubr.f32.mxu0 0.0
        %1615 = vmatmul.mubr.f32.gmra.mrb[0].mxu0 %v1319
        %v1616 = vpop.f32.mrb[0].mxu0
        %v1617 = vadd.f32 %v1171, %v1616
        %v1618 = vpop.f32.mrb[0].mxu0
        %1619 = vmatprep.mubr.f32.mxu0 0.0
        %1620 = vmatmul.mubr.f32.gmra.mrb[0].mxu0 %v1321
        %v1621 = vpop.f32.mrb[0].mxu0
        %v1622 = vadd.f32 %v1176, %v1621
        %v1623 = vpop.f32.mrb[0].mxu0
        %1624 = vmatprep.mubr.f32.mxu0 0.0
        %1625 = vmatmul.mubr.f32.gmra.mrb[0].mxu0 %v1323
        %v1626 = vpop.f32.mrb[0].mxu0
        %v1627 = vadd.f32 %v1181, %v1626
        %v1628 = vpop.f32.mrb[0].mxu0
        %1629 = vmatprep.mubr.f32.mxu0 0.0
        %1630 = vmatmul.mubr.f32.gmra.mrb[0].mxu0 %v1325
        %v1631 = vpop.f32.mrb[0].mxu0
        %v1632 = vadd.f32 %v1186, %v1631
        %v1633 = vpop.f32.mrb[0].mxu0
        %1634 = vmatprep.mubr.f32.mxu0 0.0
        %1635 = vmatmul.mubr.f32.gmra.mrb[0].mxu0 %v1327
        %v1636 = vpop.f32.mrb[0].mxu0
        %v1637 = vadd.f32 %v1191, %v1636
        %v1638 = vpop.f32.mrb[0].mxu0
        %1639 = vmatprep.mubr.f32.mxu0 0.0
        %1640 = vmatmul.mubr.f32.gmra.mrb[0].mxu0 %v1329
        %v1641 = vpop.f32.mrb[0].mxu0
        %v1642 = vadd.f32 %v1196, %v1641
        %v1643 = vpop.f32.mrb[0].mxu0
        %1644 = vmatprep.mubr.f32.mxu0 0.0
        %1645 = vmatmul.mubr.f32.gmra.mrb[0].mxu0 %v1331
        %v1646 = vpop.f32.mrb[0].mxu0
        %v1647 = vadd.f32 %v1201, %v1646
        %v1648 = vpop.f32.mrb[0].mxu0
        %1649 = vmatprep.mubr.f32.mxu0 0.0
        %1650 = vmatmul.mubr.f32.gmra.mrb[0].mxu0 %v1333
        %v1651 = vpop.f32.mrb[0].mxu0
        %v1652 = vadd.f32 %v1206, %v1651
        %v1653 = vpop.f32.mrb[0].mxu0
        %1654 = vmatprep.mubr.f32.mxu0 0.0
        %1655 = vmatmul.mubr.f32.gmra.mrb[0].mxu0 %v1335
        %v1656 = vpop.f32.mrb[0].mxu0
        %v1657 = vadd.f32 %v1211, %v1656
        %v1658 = vpop.f32.mrb[0].mxu0
        %1659 = vmatprep.mubr.f32.mxu0 0.0
        %1660 = vmatmul.mubr.f32.gmra.mrb[0].mxu0 %v1337
        %v1661 = vpop.f32.mrb[0].mxu0
        %v1662 = vadd.f32 %v1216, %v1661
        %v1663 = vpop.f32.mrb[0].mxu0
        %1664 = vmatprep.mubr.f32.mxu0 0.0
        %1665 = vmatmul.mubr.f32.gmra.mrb[0].mxu0 %v1339
        %v1666 = vpop.f32.mrb[0].mxu0
        %v1667 = vadd.f32 %v1221, %v1666
        %v1668 = vpop.f32.mrb[0].mxu0
        %1669 = vmatprep.mubr.f32.mxu0 0.0
        %1670 = vmatmul.mubr.f32.gmra.mrb[0].mxu0 %v1341
        %v1671 = vpop.f32.mrb[0].mxu0
        %v1672 = vadd.f32 %v1226, %v1671
        %v1673 = vpop.f32.mrb[0].mxu0
        %1674 = vmatprep.mubr.f32.mxu0 0.0
        %1675 = vmatmul.mubr.f32.gmra.mrb[0].mxu0 %v1343
        %v1676 = vpop.f32.mrb[0].mxu0
        %v1677 = vadd.f32 %v1231, %v1676
        %v1678 = vpop.f32.mrb[0].mxu0
        %1679 = vmatprep.mubr.f32.mxu0 0.0
        %1680 = vmatmul.mubr.f32.gmra.mrb[0].mxu0 %v1345
        %v1681 = vpop.f32.mrb[0].mxu0
        %v1682 = vadd.f32 %v1236, %v1681
        %v1683 = vpop.f32.mrb[0].mxu0
        %1684 = vdwg.mxu0
        %vm1685 = vcmask 1045504
        %v1686 = vrot.slane %v510, 2
        %v1687 = vrot.slane %v511, 2
        %v1688 = vsel %vm1685, %v1686, %v1687
        %v1689 = vrot.slane %v512, 2
        %v1690 = vsel %vm1685, %v1687, %v1689
        %v1691 = vrot.slane %v513, 2
        %v1692 = vsel %vm1685, %v1689, %v1691
        %v1693 = vrot.slane %v514, 2
        %v1694 = vrot.slane %v515, 2
        %v1695 = vsel %vm1685, %v1693, %v1694
        %v1696 = vrot.slane %v516, 2
        %v1697 = vsel %vm1685, %v1694, %v1696
        %v1698 = vrot.slane %v517, 2
        %v1699 = vsel %vm1685, %v1696, %v1698
        %v1700 = vrot.slane %v518, 2
        %v1701 = vrot.slane %v519, 2
        %v1702 = vsel %vm1685, %v1700, %v1701
        %v1703 = vrot.slane %v520, 2
        %v1704 = vsel %vm1685, %v1701, %v1703
        %v1705 = vrot.slane %v521, 2
        %v1706 = vsel %vm1685, %v1703, %v1705
        %v1707 = vrot.slane %v522, 2
        %v1708 = vrot.slane %v523, 2
        %v1709 = vsel %vm1685, %v1707, %v1708
        %v1710 = vrot.slane %v524, 2
        %v1711 = vsel %vm1685, %v1708, %v1710
        %v1712 = vrot.slane %v525, 2
        %v1713 = vsel %vm1685, %v1710, %v1712
        %v1714 = vrot.slane %v526, 2
        %v1715 = vrot.slane %v527, 2
        %v1716 = vsel %vm1685, %v1714, %v1715
        %v1717 = vrot.slane %v528, 2
        %v1718 = vsel %vm1685, %v1715, %v1717
        %v1719 = vrot.slane %v529, 2
        %v1720 = vsel %vm1685, %v1717, %v1719
        %v1721 = vrot.slane %v530, 2
        %v1722 = vrot.slane %v531, 2
        %v1723 = vsel %vm1685, %v1721, %v1722
        %v1724 = vrot.slane %v532, 2
        %v1725 = vsel %vm1685, %v1722, %v1724
        %v1726 = vrot.slane %v533, 2
        %v1727 = vsel %vm1685, %v1724, %v1726
        %v1728 = vrot.slane %v534, 2
        %v1729 = vrot.slane %v535, 2
        %v1730 = vsel %vm1685, %v1728, %v1729
        %v1731 = vrot.slane %v536, 2
        %v1732 = vsel %vm1685, %v1729, %v1731
        %v1733 = vrot.slane %v537, 2
        %v1734 = vsel %vm1685, %v1731, %v1733
        %v1735 = vrot.slane %v538, 2
        %v1736 = vrot.slane %v539, 2
        %v1737 = vsel %vm1685, %v1735, %v1736
        %v1738 = vrot.slane %v540, 2
        %v1739 = vsel %vm1685, %v1736, %v1738
        %v1740 = vrot.slane %v541, 2
        %v1741 = vsel %vm1685, %v1738, %v1740
        %v1742 = vrot.slane %v542, 2
        %v1743 = vrot.slane %v543, 2
        %v1744 = vsel %vm1685, %v1742, %v1743
        %v1745 = vrot.slane %v544, 2
        %v1746 = vsel %vm1685, %v1743, %v1745
        %v1747 = vrot.slane %v545, 2
        %v1748 = vsel %vm1685, %v1745, %v1747
        %v1749 = vrot.slane %v546, 2
        %v1750 = vrot.slane %v547, 2
        %v1751 = vsel %vm1685, %v1749, %v1750
        %v1752 = vrot.slane %v548, 2
        %v1753 = vsel %vm1685, %v1750, %v1752
        %v1754 = vrot.slane %v549, 2
        %v1755 = vsel %vm1685, %v1752, %v1754
        %v1756 = vrot.slane %v550, 2
        %v1757 = vrot.slane %v551, 2
        %v1758 = vsel %vm1685, %v1756, %v1757
        %v1759 = vrot.slane %v552, 2
        %v1760 = vsel %vm1685, %v1757, %v1759
        %v1761 = vrot.slane %v553, 2
        %v1762 = vsel %vm1685, %v1759, %v1761
        %v1763 = vrot.slane %v554, 2
        %v1764 = vrot.slane %v555, 2
        %v1765 = vsel %vm1685, %v1763, %v1764
        %v1766 = vrot.slane %v556, 2
        %v1767 = vsel %vm1685, %v1764, %v1766
        %v1768 = vrot.slane %v557, 2
        %v1769 = vsel %vm1685, %v1766, %v1768
        %v1770 = vrot.slane %v558, 2
        %v1771 = vrot.slane %v559, 2
        %v1772 = vsel %vm1685, %v1770, %v1771
        %v1773 = vrot.slane %v560, 2
        %v1774 = vsel %vm1685, %v1771, %v1773
        %v1775 = vrot.slane %v561, 2
        %v1776 = vsel %vm1685, %v1773, %v1775
        %v1777 = vrot.slane %v562, 2
        %v1778 = vrot.slane %v563, 2
        %v1779 = vsel %vm1685, %v1777, %v1778
        %v1780 = vrot.slane %v564, 2
        %v1781 = vsel %vm1685, %v1778, %v1780
        %v1782 = vrot.slane %v565, 2
        %v1783 = vsel %vm1685, %v1780, %v1782
        %v1784 = vrot.slane %v566, 2
        %v1785 = vrot.slane %v567, 2
        %v1786 = vsel %vm1685, %v1784, %v1785
        %v1787 = vrot.slane %v568, 2
        %v1788 = vsel %vm1685, %v1785, %v1787
        %v1789 = vrot.slane %v569, 2
        %v1790 = vsel %vm1685, %v1787, %v1789
        %v1791 = vrot.slane %v570, 2
        %v1792 = vrot.slane %v571, 2
        %v1793 = vsel %vm1685, %v1791, %v1792
        %v1794 = vrot.slane %v572, 2
        %v1795 = vsel %vm1685, %v1792, %v1794
        %v1796 = vrot.slane %v573, 2
        %v1797 = vsel %vm1685, %v1794, %v1796
        %v1798 = vrot.slane %v574, 2
        %v1799 = vrot.slane %v575, 2
        %v1800 = vsel %vm1685, %v1798, %v1799
        %v1801 = vrot.slane %v576, 2
        %v1802 = vsel %vm1685, %v1799, %v1801
        %v1803 = vrot.slane %v577, 2
        %v1804 = vsel %vm1685, %v1801, %v1803
        %v1805 = vrot.slane %v578, 2
        %v1806 = vrot.slane %v579, 2
        %v1807 = vsel %vm1685, %v1805, %v1806
        %v1808 = vrot.slane %v580, 2
        %v1809 = vsel %vm1685, %v1806, %v1808
        %v1810 = vrot.slane %v581, 2
        %v1811 = vsel %vm1685, %v1808, %v1810
        %s1812 = scalar_lea.vmem [#allocation6], 8
        %v1813 = vld [vmem:[%s1812] sm:$0xf]
        %v1814 = vsel %vm413, %v1688, 0
        %v1816 = vsel %vm413, %v1690, 0
        %v1818 = vsel %vm413, %v1692, 0
        %v1820 = vsel %vm413, %v1695, 0
        %v1822 = vsel %vm413, %v1697, 0
        %v1824 = vsel %vm413, %v1699, 0
        %v1826 = vsel %vm413, %v1702, 0
        %v1828 = vsel %vm413, %v1704, 0
        %v1830 = vsel %vm413, %v1706, 0
        %v1832 = vsel %vm413, %v1709, 0
        %v1834 = vsel %vm413, %v1711, 0
        %v1836 = vsel %vm413, %v1713, 0
        %v1838 = vsel %vm413, %v1716, 0
        %v1840 = vsel %vm413, %v1718, 0
        %v1842 = vsel %vm413, %v1720, 0
        %v1844 = vsel %vm413, %v1723, 0
        %v1846 = vsel %vm413, %v1725, 0
        %v1848 = vsel %vm413, %v1727, 0
        %v1850 = vsel %vm413, %v1730, 0
        %v1852 = vsel %vm413, %v1732, 0
        %v1854 = vsel %vm413, %v1734, 0
        %v1856 = vsel %vm413, %v1737, 0
        %v1858 = vsel %vm413, %v1739, 0
        %v1860 = vsel %vm413, %v1741, 0
        %v1862 = vsel %vm413, %v1744, 0
        %v1864 = vsel %vm413, %v1746, 0
        %v1866 = vsel %vm413, %v1748, 0
        %v1868 = vsel %vm413, %v1751, 0
        %v1870 = vsel %vm413, %v1753, 0
        %v1872 = vsel %vm413, %v1755, 0
        %v1874 = vsel %vm413, %v1758, 0
        %v1876 = vsel %vm413, %v1760, 0
        %v1878 = vsel %vm413, %v1762, 0
        %v1880 = vsel %vm413, %v1765, 0
        %v1882 = vsel %vm413, %v1767, 0
        %v1884 = vsel %vm413, %v1769, 0
        %v1886 = vsel %vm413, %v1772, 0
        %v1888 = vsel %vm413, %v1774, 0
        %v1890 = vsel %vm413, %v1776, 0
        %v1892 = vsel %vm413, %v1779, 0
        %v1894 = vsel %vm413, %v1781, 0
        %v1896 = vsel %vm413, %v1783, 0
        %v1898 = vsel %vm413, %v1786, 0
        %v1900 = vsel %vm413, %v1788, 0
        %v1902 = vsel %vm413, %v1790, 0
        %v1904 = vsel %vm413, %v1793, 0
        %v1906 = vsel %vm413, %v1795, 0
        %v1908 = vsel %vm413, %v1797, 0
        %v1910 = vsel %vm413, %v1800, 0
        %v1912 = vsel %vm413, %v1802, 0
        %v1914 = vsel %vm413, %v1804, 0
        %v1916 = vsel %vm413, %v1807, 0
        %v1918 = vsel %vm413, %v1809, 0
        %v1920 = vsel %vm413, %v1811, 0
        %v1923 = vsel %vm900, %v1813, 0
        %1925 = vmatprep.subr.mxu0 0.0
        %1926 = vmatpush1.msra.mxu0 %v1923
        %1927 = vmatprep.subr.mxu0 0.0
        %1928 = vmatpush1.msra.mxu0 0.0
        %1929 = vmatprep.subr.mxu0 0.0
        %1930 = vmatpush1.msra.mxu0 0.0
        %1931 = vmatprep.subr.mxu0 0.0
        %1932 = vmatpush1.msra.mxu0 0.0
        %1933 = vmatprep.subr.mxu0 0.0
        %1934 = vmatpush1.msra.mxu0 0.0
        %1935 = vmatprep.subr.mxu0 0.0
        %1936 = vmatpush1.msra.mxu0 0.0
        %1937 = vmatprep.subr.mxu0 0.0
        %1938 = vmatpush1.msra.mxu0 0.0
        %1939 = vmatprep.subr.mxu0 0.0
        %1940 = vmatpush1.msra.mxu0 0.0
        %1941 = vmatprep.subr.mxu0 0.0
        %1942 = vmatpush1.msra.mxu0 0.0
        %1943 = vmatprep.subr.mxu0 0.0
        %1944 = vmatpush1.msra.mxu0 0.0
        %1945 = vmatprep.subr.mxu0 0.0
        %1946 = vmatpush1.msra.mxu0 0.0
        %1947 = vmatprep.subr.mxu0 0.0
        %1948 = vmatpush1.msra.mxu0 0.0
        %1949 = vmatprep.subr.mxu0 0.0
        %1950 = vmatpush1.msra.mxu0 0.0
        %1951 = vmatprep.subr.mxu0 0.0
        %1952 = vmatpush1.msra.mxu0 0.0
        %1953 = vmatprep.subr.mxu0 0.0
        %1954 = vmatpush1.msra.mxu0 0.0
        %1955 = vmatprep.subr.mxu0 0.0
        %1956 = vmatpush1.msra.mxu0 0.0
        %1957 = vmatprep.subr.mxu0 0.0
        %1958 = vmatpush1.msra.mxu0 0.0
        %1959 = vmatprep.subr.mxu0 0.0
        %1960 = vmatpush1.msra.mxu0 0.0
        %1961 = vmatprep.subr.mxu0 0.0
        %1962 = vmatpush1.msra.mxu0 0.0
        %1963 = vmatprep.subr.mxu0 0.0
        %1964 = vmatpush1.msra.mxu0 0.0
        %1965 = vmatprep.subr.mxu0 0.0
        %1966 = vmatpush1.msra.mxu0 0.0
        %1967 = vmatprep.subr.mxu0 0.0
        %1968 = vmatpush1.msra.mxu0 0.0
        %1969 = vmatprep.subr.mxu0 0.0
        %1970 = vmatpush1.msra.mxu0 0.0
        %1971 = vmatprep.subr.mxu0 0.0
        %1972 = vmatpush1.msra.mxu0 0.0
        %1973 = vmatprep.subr.mxu0 0.0
        %1974 = vmatpush1.msra.mxu0 0.0
        %1975 = vmatprep.subr.mxu0 0.0
        %1976 = vmatpush1.msra.mxu0 0.0
        %1977 = vmatprep.subr.mxu0 0.0
        %1978 = vmatpush1.msra.mxu0 0.0
        %1979 = vmatprep.subr.mxu0 0.0
        %1980 = vmatpush1.msra.mxu0 0.0
        %1981 = vmatprep.subr.mxu0 0.0
        %1982 = vmatpush1.msra.mxu0 0.0
        %1983 = vmatprep.subr.mxu0 0.0
        %1984 = vmatpush1.msra.mxu0 0.0
        %1985 = vmatprep.subr.mxu0 0.0
        %1986 = vmatpush1.msra.mxu0 0.0
        %1987 = vmatprep.subr.mxu0 0.0
        %1988 = vmatpush1.msra.mxu0 0.0
        %1989 = vmatprep.mubr.f32.mxu0 0.0
        %1990 = vmatmul.mubr.f32.gmra.mrb[0].mxu0 %v1814
        %v1991 = vpop.f32.mrb[0].mxu0
        %v1992 = vadd.f32 0.0, %v1991
        %v1993 = vpop.f32.mrb[0].mxu0
        %1994 = vmatprep.mubr.f32.mxu0 0.0
        %1995 = vmatmul.mubr.f32.gmra.mrb[0].mxu0 %v1816
        %v1996 = vpop.f32.mrb[0].mxu0
        %v1997 = vadd.f32 0.0, %v1996
        %v1998 = vpop.f32.mrb[0].mxu0
        %1999 = vmatprep.mubr.f32.mxu0 0.0
        %2000 = vmatmul.mubr.f32.gmra.mrb[0].mxu0 %v1818
        %v2001 = vpop.f32.mrb[0].mxu0
        %v2002 = vadd.f32 0.0, %v2001
        %v2003 = vpop.f32.mrb[0].mxu0
        %2004 = vmatprep.mubr.f32.mxu0 0.0
        %2005 = vmatmul.mubr.f32.gmra.mrb[0].mxu0 %v1820
        %v2006 = vpop.f32.mrb[0].mxu0
        %v2007 = vadd.f32 0.0, %v2006
        %v2008 = vpop.f32.mrb[0].mxu0
        %2009 = vmatprep.mubr.f32.mxu0 0.0
        %2010 = vmatmul.mubr.f32.gmra.mrb[0].mxu0 %v1822
        %v2011 = vpop.f32.mrb[0].mxu0
        %v2012 = vadd.f32 0.0, %v2011
        %v2013 = vpop.f32.mrb[0].mxu0
        %2014 = vmatprep.mubr.f32.mxu0 0.0
        %2015 = vmatmul.mubr.f32.gmra.mrb[0].mxu0 %v1824
        %v2016 = vpop.f32.mrb[0].mxu0
        %v2017 = vadd.f32 0.0, %v2016
        %v2018 = vpop.f32.mrb[0].mxu0
        %2019 = vmatprep.mubr.f32.mxu0 0.0
        %2020 = vmatmul.mubr.f32.gmra.mrb[0].mxu0 %v1826
        %v2021 = vpop.f32.mrb[0].mxu0
        %v2022 = vadd.f32 0.0, %v2021
        %v2023 = vpop.f32.mrb[0].mxu0
        %2024 = vmatprep.mubr.f32.mxu0 0.0
        %2025 = vmatmul.mubr.f32.gmra.mrb[0].mxu0 %v1828
        %v2026 = vpop.f32.mrb[0].mxu0
        %v2027 = vadd.f32 0.0, %v2026
        %v2028 = vpop.f32.mrb[0].mxu0
        %2029 = vmatprep.mubr.f32.mxu0 0.0
        %2030 = vmatmul.mubr.f32.gmra.mrb[0].mxu0 %v1830
        %v2031 = vpop.f32.mrb[0].mxu0
        %v2032 = vadd.f32 0.0, %v2031
        %v2033 = vpop.f32.mrb[0].mxu0
        %2034 = vmatprep.mubr.f32.mxu0 0.0
        %2035 = vmatmul.mubr.f32.gmra.mrb[0].mxu0 %v1832
        %v2036 = vpop.f32.mrb[0].mxu0
        %v2037 = vadd.f32 0.0, %v2036
        %v2038 = vpop.f32.mrb[0].mxu0
        %2039 = vmatprep.mubr.f32.mxu0 0.0
        %2040 = vmatmul.mubr.f32.gmra.mrb[0].mxu0 %v1834
        %v2041 = vpop.f32.mrb[0].mxu0
        %v2042 = vadd.f32 0.0, %v2041
        %v2043 = vpop.f32.mrb[0].mxu0
        %2044 = vmatprep.mubr.f32.mxu0 0.0
        %2045 = vmatmul.mubr.f32.gmra.mrb[0].mxu0 %v1836
        %v2046 = vpop.f32.mrb[0].mxu0
        %v2047 = vadd.f32 0.0, %v2046
        %v2048 = vpop.f32.mrb[0].mxu0
        %2049 = vmatprep.mubr.f32.mxu0 0.0
        %2050 = vmatmul.mubr.f32.gmra.mrb[0].mxu0 %v1838
        %v2051 = vpop.f32.mrb[0].mxu0
        %v2052 = vadd.f32 0.0, %v2051
        %v2053 = vpop.f32.mrb[0].mxu0
        %2054 = vmatprep.mubr.f32.mxu0 0.0
        %2055 = vmatmul.mubr.f32.gmra.mrb[0].mxu0 %v1840
        %v2056 = vpop.f32.mrb[0].mxu0
        %v2057 = vadd.f32 0.0, %v2056
        %v2058 = vpop.f32.mrb[0].mxu0
        %2059 = vmatprep.mubr.f32.mxu0 0.0
        %2060 = vmatmul.mubr.f32.gmra.mrb[0].mxu0 %v1842
        %v2061 = vpop.f32.mrb[0].mxu0
        %v2062 = vadd.f32 0.0, %v2061
        %v2063 = vpop.f32.mrb[0].mxu0
        %2064 = vmatprep.mubr.f32.mxu0 0.0
        %2065 = vmatmul.mubr.f32.gmra.mrb[0].mxu0 %v1844
        %v2066 = vpop.f32.mrb[0].mxu0
        %v2067 = vadd.f32 0.0, %v2066
        %v2068 = vpop.f32.mrb[0].mxu0
        %2069 = vmatprep.mubr.f32.mxu0 0.0
        %2070 = vmatmul.mubr.f32.gmra.mrb[0].mxu0 %v1846
        %v2071 = vpop.f32.mrb[0].mxu0
        %v2072 = vadd.f32 0.0, %v2071
        %v2073 = vpop.f32.mrb[0].mxu0
        %2074 = vmatprep.mubr.f32.mxu0 0.0
        %2075 = vmatmul.mubr.f32.gmra.mrb[0].mxu0 %v1848
        %v2076 = vpop.f32.mrb[0].mxu0
        %v2077 = vadd.f32 0.0, %v2076
        %v2078 = vpop.f32.mrb[0].mxu0
        %2079 = vmatprep.mubr.f32.mxu0 0.0
        %2080 = vmatmul.mubr.f32.gmra.mrb[0].mxu0 %v1850
        %v2081 = vpop.f32.mrb[0].mxu0
        %v2082 = vadd.f32 0.0, %v2081
        %v2083 = vpop.f32.mrb[0].mxu0
        %2084 = vmatprep.mubr.f32.mxu0 0.0
        %2085 = vmatmul.mubr.f32.gmra.mrb[0].mxu0 %v1852
        %v2086 = vpop.f32.mrb[0].mxu0
        %v2087 = vadd.f32 0.0, %v2086
        %v2088 = vpop.f32.mrb[0].mxu0
        %2089 = vmatprep.mubr.f32.mxu0 0.0
        %2090 = vmatmul.mubr.f32.gmra.mrb[0].mxu0 %v1854
        %v2091 = vpop.f32.mrb[0].mxu0
        %v2092 = vadd.f32 0.0, %v2091
        %v2093 = vpop.f32.mrb[0].mxu0
        %2094 = vmatprep.mubr.f32.mxu0 0.0
        %2095 = vmatmul.mubr.f32.gmra.mrb[0].mxu0 %v1856
        %v2096 = vpop.f32.mrb[0].mxu0
        %v2097 = vadd.f32 0.0, %v2096
        %v2098 = vpop.f32.mrb[0].mxu0
        %2099 = vmatprep.mubr.f32.mxu0 0.0
        %2100 = vmatmul.mubr.f32.gmra.mrb[0].mxu0 %v1858
        %v2101 = vpop.f32.mrb[0].mxu0
        %v2102 = vadd.f32 0.0, %v2101
        %v2103 = vpop.f32.mrb[0].mxu0
        %2104 = vmatprep.mubr.f32.mxu0 0.0
        %2105 = vmatmul.mubr.f32.gmra.mrb[0].mxu0 %v1860
        %v2106 = vpop.f32.mrb[0].mxu0
        %v2107 = vadd.f32 0.0, %v2106
        %v2108 = vpop.f32.mrb[0].mxu0
        %2109 = vmatprep.mubr.f32.mxu0 0.0
        %2110 = vmatmul.mubr.f32.gmra.mrb[0].mxu0 %v1862
        %v2111 = vpop.f32.mrb[0].mxu0
        %v2112 = vadd.f32 0.0, %v2111
        %v2113 = vpop.f32.mrb[0].mxu0
        %2114 = vmatprep.mubr.f32.mxu0 0.0
        %2115 = vmatmul.mubr.f32.gmra.mrb[0].mxu0 %v1864
        %v2116 = vpop.f32.mrb[0].mxu0
        %v2117 = vadd.f32 0.0, %v2116
        %v2118 = vpop.f32.mrb[0].mxu0
        %2119 = vmatprep.mubr.f32.mxu0 0.0
        %2120 = vmatmul.mubr.f32.gmra.mrb[0].mxu0 %v1866
        %v2121 = vpop.f32.mrb[0].mxu0
        %v2122 = vadd.f32 0.0, %v2121
        %v2123 = vpop.f32.mrb[0].mxu0
        %2124 = vmatprep.mubr.f32.mxu0 0.0
        %2125 = vmatmul.mubr.f32.gmra.mrb[0].mxu0 %v1868
        %v2126 = vpop.f32.mrb[0].mxu0
        %v2127 = vadd.f32 0.0, %v2126
        %v2128 = vpop.f32.mrb[0].mxu0
        %2129 = vmatprep.mubr.f32.mxu0 0.0
        %2130 = vmatmul.mubr.f32.gmra.mrb[0].mxu0 %v1870
        %v2131 = vpop.f32.mrb[0].mxu0
        %v2132 = vadd.f32 0.0, %v2131
        %v2133 = vpop.f32.mrb[0].mxu0
        %2134 = vmatprep.mubr.f32.mxu0 0.0
        %2135 = vmatmul.mubr.f32.gmra.mrb[0].mxu0 %v1872
        %v2136 = vpop.f32.mrb[0].mxu0
        %v2137 = vadd.f32 0.0, %v2136
        %v2138 = vpop.f32.mrb[0].mxu0
        %2139 = vmatprep.mubr.f32.mxu0 0.0
        %2140 = vmatmul.mubr.f32.gmra.mrb[0].mxu0 %v1874
        %v2141 = vpop.f32.mrb[0].mxu0
        %v2142 = vadd.f32 0.0, %v2141
        %v2143 = vpop.f32.mrb[0].mxu0
        %2144 = vmatprep.mubr.f32.mxu0 0.0
        %2145 = vmatmul.mubr.f32.gmra.mrb[0].mxu0 %v1876
        %v2146 = vpop.f32.mrb[0].mxu0
        %v2147 = vadd.f32 0.0, %v2146
        %v2148 = vpop.f32.mrb[0].mxu0
        %2149 = vmatprep.mubr.f32.mxu0 0.0
        %2150 = vmatmul.mubr.f32.gmra.mrb[0].mxu0 %v1878
        %v2151 = vpop.f32.mrb[0].mxu0
        %v2152 = vadd.f32 0.0, %v2151
        %v2153 = vpop.f32.mrb[0].mxu0
        %2154 = vmatprep.mubr.f32.mxu0 0.0
        %2155 = vmatmul.mubr.f32.gmra.mrb[0].mxu0 %v1880
        %v2156 = vpop.f32.mrb[0].mxu0
        %v2157 = vadd.f32 0.0, %v2156
        %v2158 = vpop.f32.mrb[0].mxu0
        %2159 = vmatprep.mubr.f32.mxu0 0.0
        %2160 = vmatmul.mubr.f32.gmra.mrb[0].mxu0 %v1882
        %v2161 = vpop.f32.mrb[0].mxu0
        %v2162 = vadd.f32 0.0, %v2161
        %v2163 = vpop.f32.mrb[0].mxu0
        %2164 = vmatprep.mubr.f32.mxu0 0.0
        %2165 = vmatmul.mubr.f32.gmra.mrb[0].mxu0 %v1884
        %v2166 = vpop.f32.mrb[0].mxu0
        %v2167 = vadd.f32 0.0, %v2166
        %v2168 = vpop.f32.mrb[0].mxu0
        %2169 = vmatprep.mubr.f32.mxu0 0.0
        %2170 = vmatmul.mubr.f32.gmra.mrb[0].mxu0 %v1886
        %v2171 = vpop.f32.mrb[0].mxu0
        %v2172 = vadd.f32 0.0, %v2171
        %v2173 = vpop.f32.mrb[0].mxu0
        %2174 = vmatprep.mubr.f32.mxu0 0.0
        %2175 = vmatmul.mubr.f32.gmra.mrb[0].mxu0 %v1888
        %v2176 = vpop.f32.mrb[0].mxu0
        %v2177 = vadd.f32 0.0, %v2176
        %v2178 = vpop.f32.mrb[0].mxu0
        %2179 = vmatprep.mubr.f32.mxu0 0.0
        %2180 = vmatmul.mubr.f32.gmra.mrb[0].mxu0 %v1890
        %v2181 = vpop.f32.mrb[0].mxu0
        %v2182 = vadd.f32 0.0, %v2181
        %v2183 = vpop.f32.mrb[0].mxu0
        %2184 = vmatprep.mubr.f32.mxu0 0.0
        %2185 = vmatmul.mubr.f32.gmra.mrb[0].mxu0 %v1892
        %v2186 = vpop.f32.mrb[0].mxu0
        %v2187 = vadd.f32 0.0, %v2186
        %v2188 = vpop.f32.mrb[0].mxu0
        %2189 = vmatprep.mubr.f32.mxu0 0.0
        %2190 = vmatmul.mubr.f32.gmra.mrb[0].mxu0 %v1894
        %v2191 = vpop.f32.mrb[0].mxu0
        %v2192 = vadd.f32 0.0, %v2191
        %v2193 = vpop.f32.mrb[0].mxu0
        %2194 = vmatprep.mubr.f32.mxu0 0.0
        %2195 = vmatmul.mubr.f32.gmra.mrb[0].mxu0 %v1896
        %v2196 = vpop.f32.mrb[0].mxu0
        %v2197 = vadd.f32 0.0, %v2196
        %v2198 = vpop.f32.mrb[0].mxu0
        %2199 = vmatprep.mubr.f32.mxu0 0.0
        %2200 = vmatmul.mubr.f32.gmra.mrb[0].mxu0 %v1898
        %v2201 = vpop.f32.mrb[0].mxu0
        %v2202 = vadd.f32 0.0, %v2201
        %v2203 = vpop.f32.mrb[0].mxu0
        %2204 = vmatprep.mubr.f32.mxu0 0.0
        %2205 = vmatmul.mubr.f32.gmra.mrb[0].mxu0 %v1900
        %v2206 = vpop.f32.mrb[0].mxu0
        %v2207 = vadd.f32 0.0, %v2206
        %v2208 = vpop.f32.mrb[0].mxu0
        %2209 = vmatprep.mubr.f32.mxu0 0.0
        %2210 = vmatmul.mubr.f32.gmra.mrb[0].mxu0 %v1902
        %v2211 = vpop.f32.mrb[0].mxu0
        %v2212 = vadd.f32 0.0, %v2211
        %v2213 = vpop.f32.mrb[0].mxu0
        %2214 = vmatprep.mubr.f32.mxu0 0.0
        %2215 = vmatmul.mubr.f32.gmra.mrb[0].mxu0 %v1904
        %v2216 = vpop.f32.mrb[0].mxu0
        %v2217 = vadd.f32 0.0, %v2216
        %v2218 = vpop.f32.mrb[0].mxu0
        %2219 = vmatprep.mubr.f32.mxu0 0.0
        %2220 = vmatmul.mubr.f32.gmra.mrb[0].mxu0 %v1906
        %v2221 = vpop.f32.mrb[0].mxu0
        %v2222 = vadd.f32 0.0, %v2221
        %v2223 = vpop.f32.mrb[0].mxu0
        %2224 = vmatprep.mubr.f32.mxu0 0.0
        %2225 = vmatmul.mubr.f32.gmra.mrb[0].mxu0 %v1908
        %v2226 = vpop.f32.mrb[0].mxu0
        %v2227 = vadd.f32 0.0, %v2226
        %v2228 = vpop.f32.mrb[0].mxu0
        %2229 = vmatprep.mubr.f32.mxu0 0.0
        %2230 = vmatmul.mubr.f32.gmra.mrb[0].mxu0 %v1910
        %v2231 = vpop.f32.mrb[0].mxu0
        %v2232 = vadd.f32 0.0, %v2231
        %v2233 = vpop.f32.mrb[0].mxu0
        %2234 = vmatprep.mubr.f32.mxu0 0.0
        %2235 = vmatmul.mubr.f32.gmra.mrb[0].mxu0 %v1912
        %v2236 = vpop.f32.mrb[0].mxu0
        %v2237 = vadd.f32 0.0, %v2236
        %v2238 = vpop.f32.mrb[0].mxu0
        %2239 = vmatprep.mubr.f32.mxu0 0.0
        %2240 = vmatmul.mubr.f32.gmra.mrb[0].mxu0 %v1914
        %v2241 = vpop.f32.mrb[0].mxu0
        %v2242 = vadd.f32 0.0, %v2241
        %v2243 = vpop.f32.mrb[0].mxu0
        %2244 = vmatprep.mubr.f32.mxu0 0.0
        %2245 = vmatmul.mubr.f32.gmra.mrb[0].mxu0 %v1916
        %v2246 = vpop.f32.mrb[0].mxu0
        %v2247 = vadd.f32 0.0, %v2246
        %v2248 = vpop.f32.mrb[0].mxu0
        %2249 = vmatprep.mubr.f32.mxu0 0.0
        %2250 = vmatmul.mubr.f32.gmra.mrb[0].mxu0 %v1918
        %v2251 = vpop.f32.mrb[0].mxu0
        %v2252 = vadd.f32 0.0, %v2251
        %v2253 = vpop.f32.mrb[0].mxu0
        %2254 = vmatprep.mubr.f32.mxu0 0.0
        %2255 = vmatmul.mubr.f32.gmra.mrb[0].mxu0 %v1920
        %v2256 = vpop.f32.mrb[0].mxu0
        %v2257 = vadd.f32 0.0, %v2256
        %v2258 = vpop.f32.mrb[0].mxu0
        %2259 = vdwg.mxu0
        %v2260 = vadd.f32 %v1417, %v1992
        %v2261 = vadd.f32 %v1422, %v1997
        %v2262 = vadd.f32 %v1427, %v2002
        %v2263 = vadd.f32 %v1432, %v2007
        %v2264 = vadd.f32 %v1437, %v2012
        %v2265 = vadd.f32 %v1442, %v2017
        %v2266 = vadd.f32 %v1447, %v2022
        %v2267 = vadd.f32 %v1452, %v2027
        %v2268 = vadd.f32 %v1457, %v2032
        %v2269 = vadd.f32 %v1462, %v2037
        %v2270 = vadd.f32 %v1467, %v2042
        %v2271 = vadd.f32 %v1472, %v2047
        %v2272 = vadd.f32 %v1477, %v2052
        %v2273 = vadd.f32 %v1482, %v2057
        %v2274 = vadd.f32 %v1487, %v2062
        %v2275 = vadd.f32 %v1492, %v2067
        %v2276 = vadd.f32 %v1497, %v2072
        %v2277 = vadd.f32 %v1502, %v2077
        %v2278 = vadd.f32 %v1507, %v2082
        %v2279 = vadd.f32 %v1512, %v2087
        %v2280 = vadd.f32 %v1517, %v2092
        %v2281 = vadd.f32 %v1522, %v2097
        %v2282 = vadd.f32 %v1527, %v2102
        %v2283 = vadd.f32 %v1532, %v2107
        %v2284 = vadd.f32 %v1537, %v2112
        %v2285 = vadd.f32 %v1542, %v2117
        %v2286 = vadd.f32 %v1547, %v2122
        %v2287 = vadd.f32 %v1552, %v2127
        %v2288 = vadd.f32 %v1557, %v2132
        %v2289 = vadd.f32 %v1562, %v2137
        %v2290 = vadd.f32 %v1567, %v2142
        %v2291 = vadd.f32 %v1572, %v2147
        %v2292 = vadd.f32 %v1577, %v2152
        %v2293 = vadd.f32 %v1582, %v2157
        %v2294 = vadd.f32 %v1587, %v2162
        %v2295 = vadd.f32 %v1592, %v2167
        %v2296 = vadd.f32 %v1597, %v2172
        %v2297 = vadd.f32 %v1602, %v2177
        %v2298 = vadd.f32 %v1607, %v2182
        %v2299 = vadd.f32 %v1612, %v2187
        %v2300 = vadd.f32 %v1617, %v2192
        %v2301 = vadd.f32 %v1622, %v2197
        %v2302 = vadd.f32 %v1627, %v2202
        %v2303 = vadd.f32 %v1632, %v2207
        %v2304 = vadd.f32 %v1637, %v2212
        %v2305 = vadd.f32 %v1642, %v2217
        %v2306 = vadd.f32 %v1647, %v2222
        %v2307 = vadd.f32 %v1652, %v2227
        %v2308 = vadd.f32 %v1657, %v2232
        %v2309 = vadd.f32 %v1662, %v2237
        %v2310 = vadd.f32 %v1667, %v2242
        %v2311 = vadd.f32 %v1672, %v2247
        %v2312 = vadd.f32 %v1677, %v2252
        %v2313 = vadd.f32 %v1682, %v2257
        %s2314 = scalar_lea.vmem [#allocation6], 12
        %v2315 = vld [vmem:[%s2314] sm:$0xf]
        %v2317 = vsel %vm413, %v582, 0
        %v2320 = vsel %vm413, %v583, 0
        %v2323 = vsel %vm413, %v584, 0
        %v2326 = vsel %vm900, %v2315, 0
        %2328 = vmatprep.subr.mxu0 0.0
        %2329 = vmatpush1.msra.mxu0 %v2326
        %2330 = vmatprep.subr.mxu0 0.0
        %2331 = vmatpush1.msra.mxu0 0.0
        %2332 = vmatprep.subr.mxu0 0.0
        %2333 = vmatpush1.msra.mxu0 0.0
        %2334 = vmatprep.subr.mxu0 0.0
        %2335 = vmatpush1.msra.mxu0 0.0
        %2336 = vmatprep.subr.mxu0 0.0
        %2337 = vmatpush1.msra.mxu0 0.0
        %2338 = vmatprep.subr.mxu0 0.0
        %2339 = vmatpush1.msra.mxu0 0.0
        %2340 = vmatprep.subr.mxu0 0.0
        %2341 = vmatpush1.msra.mxu0 0.0
        %2342 = vmatprep.subr.mxu0 0.0
        %2343 = vmatpush1.msra.mxu0 0.0
        %2344 = vmatprep.subr.mxu0 0.0
        %2345 = vmatpush1.msra.mxu0 0.0
        %2346 = vmatprep.subr.mxu0 0.0
        %2347 = vmatpush1.msra.mxu0 0.0
        %2348 = vmatprep.subr.mxu0 0.0
        %2349 = vmatpush1.msra.mxu0 0.0
        %2350 = vmatprep.subr.mxu0 0.0
        %2351 = vmatpush1.msra.mxu0 0.0
        %2352 = vmatprep.subr.mxu0 0.0
        %2353 = vmatpush1.msra.mxu0 0.0
        %2354 = vmatprep.subr.mxu0 0.0
        %2355 = vmatpush1.msra.mxu0 0.0
        %2356 = vmatprep.subr.mxu0 0.0
        %2357 = vmatpush1.msra.mxu0 0.0
        %2358 = vmatprep.subr.mxu0 0.0
        %2359 = vmatpush1.msra.mxu0 0.0
        %2360 = vmatprep.subr.mxu0 0.0
        %2361 = vmatpush1.msra.mxu0 0.0
        %2362 = vmatprep.subr.mxu0 0.0
        %2363 = vmatpush1.msra.mxu0 0.0
        %2364 = vmatprep.subr.mxu0 0.0
        %2365 = vmatpush1.msra.mxu0 0.0
        %2366 = vmatprep.subr.mxu0 0.0
        %2367 = vmatpush1.msra.mxu0 0.0
        %2368 = vmatprep.subr.mxu0 0.0
        %2369 = vmatpush1.msra.mxu0 0.0
        %2370 = vmatprep.subr.mxu0 0.0
        %2371 = vmatpush1.msra.mxu0 0.0
        %2372 = vmatprep.subr.mxu0 0.0
        %2373 = vmatpush1.msra.mxu0 0.0
        %2374 = vmatprep.subr.mxu0 0.0
        %2375 = vmatpush1.msra.mxu0 0.0
        %2376 = vmatprep.subr.mxu0 0.0
        %2377 = vmatpush1.msra.mxu0 0.0
        %2378 = vmatprep.subr.mxu0 0.0
        %2379 = vmatpush1.msra.mxu0 0.0
        %2380 = vmatprep.subr.mxu0 0.0
        %2381 = vmatpush1.msra.mxu0 0.0
        %2382 = vmatprep.subr.mxu0 0.0
        %2383 = vmatpush1.msra.mxu0 0.0
        %2384 = vmatprep.subr.mxu0 0.0
        %2385 = vmatpush1.msra.mxu0 0.0
        %2386 = vmatprep.subr.mxu0 0.0
        %2387 = vmatpush1.msra.mxu0 0.0
        %2388 = vmatprep.subr.mxu0 0.0
        %2389 = vmatpush1.msra.mxu0 0.0
        %2390 = vmatprep.subr.mxu0 0.0
        %2391 = vmatpush1.msra.mxu0 0.0
        %2392 = vmatprep.mubr.f32.mxu0 0.0
        %2393 = vmatmul.mubr.f32.gmra.mrb[0].mxu0 %v1245
        %v2394 = vpop.f32.mrb[0].mxu0
        %v2395 = vadd.f32 0.0, %v2394
        %v2396 = vpop.f32.mrb[0].mxu0
        %2397 = vmatprep.mubr.f32.mxu0 0.0
        %2398 = vmatmul.mubr.f32.gmra.mrb[0].mxu0 %v1247
        %v2399 = vpop.f32.mrb[0].mxu0
        %v2400 = vadd.f32 0.0, %v2399
        %v2401 = vpop.f32.mrb[0].mxu0
        %2402 = vmatprep.mubr.f32.mxu0 0.0
        %2403 = vmatmul.mubr.f32.gmra.mrb[0].mxu0 %v1249
        %v2404 = vpop.f32.mrb[0].mxu0
        %v2405 = vadd.f32 0.0, %v2404
        %v2406 = vpop.f32.mrb[0].mxu0
        %2407 = vmatprep.mubr.f32.mxu0 0.0
        %2408 = vmatmul.mubr.f32.gmra.mrb[0].mxu0 %v1251
        %v2409 = vpop.f32.mrb[0].mxu0
        %v2410 = vadd.f32 0.0, %v2409
        %v2411 = vpop.f32.mrb[0].mxu0
        %2412 = vmatprep.mubr.f32.mxu0 0.0
        %2413 = vmatmul.mubr.f32.gmra.mrb[0].mxu0 %v1253
        %v2414 = vpop.f32.mrb[0].mxu0
        %v2415 = vadd.f32 0.0, %v2414
        %v2416 = vpop.f32.mrb[0].mxu0
        %2417 = vmatprep.mubr.f32.mxu0 0.0
        %2418 = vmatmul.mubr.f32.gmra.mrb[0].mxu0 %v1255
        %v2419 = vpop.f32.mrb[0].mxu0
        %v2420 = vadd.f32 0.0, %v2419
        %v2421 = vpop.f32.mrb[0].mxu0
        %2422 = vmatprep.mubr.f32.mxu0 0.0
        %2423 = vmatmul.mubr.f32.gmra.mrb[0].mxu0 %v1257
        %v2424 = vpop.f32.mrb[0].mxu0
        %v2425 = vadd.f32 0.0, %v2424
        %v2426 = vpop.f32.mrb[0].mxu0
        %2427 = vmatprep.mubr.f32.mxu0 0.0
        %2428 = vmatmul.mubr.f32.gmra.mrb[0].mxu0 %v1259
        %v2429 = vpop.f32.mrb[0].mxu0
        %v2430 = vadd.f32 0.0, %v2429
        %v2431 = vpop.f32.mrb[0].mxu0
        %2432 = vmatprep.mubr.f32.mxu0 0.0
        %2433 = vmatmul.mubr.f32.gmra.mrb[0].mxu0 %v1261
        %v2434 = vpop.f32.mrb[0].mxu0
        %v2435 = vadd.f32 0.0, %v2434
        %v2436 = vpop.f32.mrb[0].mxu0
        %2437 = vmatprep.mubr.f32.mxu0 0.0
        %2438 = vmatmul.mubr.f32.gmra.mrb[0].mxu0 %v1263
        %v2439 = vpop.f32.mrb[0].mxu0
        %v2440 = vadd.f32 0.0, %v2439
        %v2441 = vpop.f32.mrb[0].mxu0
        %2442 = vmatprep.mubr.f32.mxu0 0.0
        %2443 = vmatmul.mubr.f32.gmra.mrb[0].mxu0 %v1265
        %v2444 = vpop.f32.mrb[0].mxu0
        %v2445 = vadd.f32 0.0, %v2444
        %v2446 = vpop.f32.mrb[0].mxu0
        %2447 = vmatprep.mubr.f32.mxu0 0.0
        %2448 = vmatmul.mubr.f32.gmra.mrb[0].mxu0 %v1267
        %v2449 = vpop.f32.mrb[0].mxu0
        %v2450 = vadd.f32 0.0, %v2449
        %v2451 = vpop.f32.mrb[0].mxu0
        %2452 = vmatprep.mubr.f32.mxu0 0.0
        %2453 = vmatmul.mubr.f32.gmra.mrb[0].mxu0 %v1269
        %v2454 = vpop.f32.mrb[0].mxu0
        %v2455 = vadd.f32 0.0, %v2454
        %v2456 = vpop.f32.mrb[0].mxu0
        %2457 = vmatprep.mubr.f32.mxu0 0.0
        %2458 = vmatmul.mubr.f32.gmra.mrb[0].mxu0 %v1271
        %v2459 = vpop.f32.mrb[0].mxu0
        %v2460 = vadd.f32 0.0, %v2459
        %v2461 = vpop.f32.mrb[0].mxu0
        %2462 = vmatprep.mubr.f32.mxu0 0.0
        %2463 = vmatmul.mubr.f32.gmra.mrb[0].mxu0 %v1273
        %v2464 = vpop.f32.mrb[0].mxu0
        %v2465 = vadd.f32 0.0, %v2464
        %v2466 = vpop.f32.mrb[0].mxu0
        %2467 = vmatprep.mubr.f32.mxu0 0.0
        %2468 = vmatmul.mubr.f32.gmra.mrb[0].mxu0 %v1275
        %v2469 = vpop.f32.mrb[0].mxu0
        %v2470 = vadd.f32 0.0, %v2469
        %v2471 = vpop.f32.mrb[0].mxu0
        %2472 = vmatprep.mubr.f32.mxu0 0.0
        %2473 = vmatmul.mubr.f32.gmra.mrb[0].mxu0 %v1277
        %v2474 = vpop.f32.mrb[0].mxu0
        %v2475 = vadd.f32 0.0, %v2474
        %v2476 = vpop.f32.mrb[0].mxu0
        %2477 = vmatprep.mubr.f32.mxu0 0.0
        %2478 = vmatmul.mubr.f32.gmra.mrb[0].mxu0 %v1279
        %v2479 = vpop.f32.mrb[0].mxu0
        %v2480 = vadd.f32 0.0, %v2479
        %v2481 = vpop.f32.mrb[0].mxu0
        %2482 = vmatprep.mubr.f32.mxu0 0.0
        %2483 = vmatmul.mubr.f32.gmra.mrb[0].mxu0 %v1281
        %v2484 = vpop.f32.mrb[0].mxu0
        %v2485 = vadd.f32 0.0, %v2484
        %v2486 = vpop.f32.mrb[0].mxu0
        %2487 = vmatprep.mubr.f32.mxu0 0.0
        %2488 = vmatmul.mubr.f32.gmra.mrb[0].mxu0 %v1283
        %v2489 = vpop.f32.mrb[0].mxu0
        %v2490 = vadd.f32 0.0, %v2489
        %v2491 = vpop.f32.mrb[0].mxu0
        %2492 = vmatprep.mubr.f32.mxu0 0.0
        %2493 = vmatmul.mubr.f32.gmra.mrb[0].mxu0 %v1285
        %v2494 = vpop.f32.mrb[0].mxu0
        %v2495 = vadd.f32 0.0, %v2494
        %v2496 = vpop.f32.mrb[0].mxu0
        %2497 = vmatprep.mubr.f32.mxu0 0.0
        %2498 = vmatmul.mubr.f32.gmra.mrb[0].mxu0 %v1287
        %v2499 = vpop.f32.mrb[0].mxu0
        %v2500 = vadd.f32 0.0, %v2499
        %v2501 = vpop.f32.mrb[0].mxu0
        %2502 = vmatprep.mubr.f32.mxu0 0.0
        %2503 = vmatmul.mubr.f32.gmra.mrb[0].mxu0 %v1289
        %v2504 = vpop.f32.mrb[0].mxu0
        %v2505 = vadd.f32 0.0, %v2504
        %v2506 = vpop.f32.mrb[0].mxu0
        %2507 = vmatprep.mubr.f32.mxu0 0.0
        %2508 = vmatmul.mubr.f32.gmra.mrb[0].mxu0 %v1291
        %v2509 = vpop.f32.mrb[0].mxu0
        %v2510 = vadd.f32 0.0, %v2509
        %v2511 = vpop.f32.mrb[0].mxu0
        %2512 = vmatprep.mubr.f32.mxu0 0.0
        %2513 = vmatmul.mubr.f32.gmra.mrb[0].mxu0 %v1293
        %v2514 = vpop.f32.mrb[0].mxu0
        %v2515 = vadd.f32 0.0, %v2514
        %v2516 = vpop.f32.mrb[0].mxu0
        %2517 = vmatprep.mubr.f32.mxu0 0.0
        %2518 = vmatmul.mubr.f32.gmra.mrb[0].mxu0 %v1295
        %v2519 = vpop.f32.mrb[0].mxu0
        %v2520 = vadd.f32 0.0, %v2519
        %v2521 = vpop.f32.mrb[0].mxu0
        %2522 = vmatprep.mubr.f32.mxu0 0.0
        %2523 = vmatmul.mubr.f32.gmra.mrb[0].mxu0 %v1297
        %v2524 = vpop.f32.mrb[0].mxu0
        %v2525 = vadd.f32 0.0, %v2524
        %v2526 = vpop.f32.mrb[0].mxu0
        %2527 = vmatprep.mubr.f32.mxu0 0.0
        %2528 = vmatmul.mubr.f32.gmra.mrb[0].mxu0 %v1299
        %v2529 = vpop.f32.mrb[0].mxu0
        %v2530 = vadd.f32 0.0, %v2529
        %v2531 = vpop.f32.mrb[0].mxu0
        %2532 = vmatprep.mubr.f32.mxu0 0.0
        %2533 = vmatmul.mubr.f32.gmra.mrb[0].mxu0 %v1301
        %v2534 = vpop.f32.mrb[0].mxu0
        %v2535 = vadd.f32 0.0, %v2534
        %v2536 = vpop.f32.mrb[0].mxu0
        %2537 = vmatprep.mubr.f32.mxu0 0.0
        %2538 = vmatmul.mubr.f32.gmra.mrb[0].mxu0 %v1303
        %v2539 = vpop.f32.mrb[0].mxu0
        %v2540 = vadd.f32 0.0, %v2539
        %v2541 = vpop.f32.mrb[0].mxu0
        %2542 = vmatprep.mubr.f32.mxu0 0.0
        %2543 = vmatmul.mubr.f32.gmra.mrb[0].mxu0 %v1305
        %v2544 = vpop.f32.mrb[0].mxu0
        %v2545 = vadd.f32 0.0, %v2544
        %v2546 = vpop.f32.mrb[0].mxu0
        %2547 = vmatprep.mubr.f32.mxu0 0.0
        %2548 = vmatmul.mubr.f32.gmra.mrb[0].mxu0 %v1307
        %v2549 = vpop.f32.mrb[0].mxu0
        %v2550 = vadd.f32 0.0, %v2549
        %v2551 = vpop.f32.mrb[0].mxu0
        %2552 = vmatprep.mubr.f32.mxu0 0.0
        %2553 = vmatmul.mubr.f32.gmra.mrb[0].mxu0 %v1309
        %v2554 = vpop.f32.mrb[0].mxu0
        %v2555 = vadd.f32 0.0, %v2554
        %v2556 = vpop.f32.mrb[0].mxu0
        %2557 = vmatprep.mubr.f32.mxu0 0.0
        %2558 = vmatmul.mubr.f32.gmra.mrb[0].mxu0 %v1311
        %v2559 = vpop.f32.mrb[0].mxu0
        %v2560 = vadd.f32 0.0, %v2559
        %v2561 = vpop.f32.mrb[0].mxu0
        %2562 = vmatprep.mubr.f32.mxu0 0.0
        %2563 = vmatmul.mubr.f32.gmra.mrb[0].mxu0 %v1313
        %v2564 = vpop.f32.mrb[0].mxu0
        %v2565 = vadd.f32 0.0, %v2564
        %v2566 = vpop.f32.mrb[0].mxu0
        %2567 = vmatprep.mubr.f32.mxu0 0.0
        %2568 = vmatmul.mubr.f32.gmra.mrb[0].mxu0 %v1315
        %v2569 = vpop.f32.mrb[0].mxu0
        %v2570 = vadd.f32 0.0, %v2569
        %v2571 = vpop.f32.mrb[0].mxu0
        %2572 = vmatprep.mubr.f32.mxu0 0.0
        %2573 = vmatmul.mubr.f32.gmra.mrb[0].mxu0 %v1317
        %v2574 = vpop.f32.mrb[0].mxu0
        %v2575 = vadd.f32 0.0, %v2574
        %v2576 = vpop.f32.mrb[0].mxu0
        %2577 = vmatprep.mubr.f32.mxu0 0.0
        %2578 = vmatmul.mubr.f32.gmra.mrb[0].mxu0 %v1319
        %v2579 = vpop.f32.mrb[0].mxu0
        %v2580 = vadd.f32 0.0, %v2579
        %v2581 = vpop.f32.mrb[0].mxu0
        %2582 = vmatprep.mubr.f32.mxu0 0.0
        %2583 = vmatmul.mubr.f32.gmra.mrb[0].mxu0 %v1321
        %v2584 = vpop.f32.mrb[0].mxu0
        %v2585 = vadd.f32 0.0, %v2584
        %v2586 = vpop.f32.mrb[0].mxu0
        %2587 = vmatprep.mubr.f32.mxu0 0.0
        %2588 = vmatmul.mubr.f32.gmra.mrb[0].mxu0 %v1323
        %v2589 = vpop.f32.mrb[0].mxu0
        %v2590 = vadd.f32 0.0, %v2589
        %v2591 = vpop.f32.mrb[0].mxu0
        %2592 = vmatprep.mubr.f32.mxu0 0.0
        %2593 = vmatmul.mubr.f32.gmra.mrb[0].mxu0 %v1325
        %v2594 = vpop.f32.mrb[0].mxu0
        %v2595 = vadd.f32 0.0, %v2594
        %v2596 = vpop.f32.mrb[0].mxu0
        %2597 = vmatprep.mubr.f32.mxu0 0.0
        %2598 = vmatmul.mubr.f32.gmra.mrb[0].mxu0 %v1327
        %v2599 = vpop.f32.mrb[0].mxu0
        %v2600 = vadd.f32 0.0, %v2599
        %v2601 = vpop.f32.mrb[0].mxu0
        %2602 = vmatprep.mubr.f32.mxu0 0.0
        %2603 = vmatmul.mubr.f32.gmra.mrb[0].mxu0 %v1329
        %v2604 = vpop.f32.mrb[0].mxu0
        %v2605 = vadd.f32 0.0, %v2604
        %v2606 = vpop.f32.mrb[0].mxu0
        %2607 = vmatprep.mubr.f32.mxu0 0.0
        %2608 = vmatmul.mubr.f32.gmra.mrb[0].mxu0 %v1331
        %v2609 = vpop.f32.mrb[0].mxu0
        %v2610 = vadd.f32 0.0, %v2609
        %v2611 = vpop.f32.mrb[0].mxu0
        %2612 = vmatprep.mubr.f32.mxu0 0.0
        %2613 = vmatmul.mubr.f32.gmra.mrb[0].mxu0 %v1333
        %v2614 = vpop.f32.mrb[0].mxu0
        %v2615 = vadd.f32 0.0, %v2614
        %v2616 = vpop.f32.mrb[0].mxu0
        %2617 = vmatprep.mubr.f32.mxu0 0.0
        %2618 = vmatmul.mubr.f32.gmra.mrb[0].mxu0 %v1335
        %v2619 = vpop.f32.mrb[0].mxu0
        %v2620 = vadd.f32 0.0, %v2619
        %v2621 = vpop.f32.mrb[0].mxu0
        %2622 = vmatprep.mubr.f32.mxu0 0.0
        %2623 = vmatmul.mubr.f32.gmra.mrb[0].mxu0 %v1337
        %v2624 = vpop.f32.mrb[0].mxu0
        %v2625 = vadd.f32 0.0, %v2624
        %v2626 = vpop.f32.mrb[0].mxu0
        %2627 = vmatprep.mubr.f32.mxu0 0.0
        %2628 = vmatmul.mubr.f32.gmra.mrb[0].mxu0 %v1339
        %v2629 = vpop.f32.mrb[0].mxu0
        %v2630 = vadd.f32 0.0, %v2629
        %v2631 = vpop.f32.mrb[0].mxu0
        %2632 = vmatprep.mubr.f32.mxu0 0.0
        %2633 = vmatmul.mubr.f32.gmra.mrb[0].mxu0 %v1341
        %v2634 = vpop.f32.mrb[0].mxu0
        %v2635 = vadd.f32 0.0, %v2634
        %v2636 = vpop.f32.mrb[0].mxu0
        %2637 = vmatprep.mubr.f32.mxu0 0.0
        %2638 = vmatmul.mubr.f32.gmra.mrb[0].mxu0 %v1343
        %v2639 = vpop.f32.mrb[0].mxu0
        %v2640 = vadd.f32 0.0, %v2639
        %v2641 = vpop.f32.mrb[0].mxu0
        %2642 = vmatprep.mubr.f32.mxu0 0.0
        %2643 = vmatmul.mubr.f32.gmra.mrb[0].mxu0 %v1345
        %v2644 = vpop.f32.mrb[0].mxu0
        %v2645 = vadd.f32 0.0, %v2644
        %v2646 = vpop.f32.mrb[0].mxu0
        %2647 = vmatprep.mubr.f32.mxu0 0.0
        %2648 = vmatmul.mubr.f32.gmra.mrb[0].mxu0 %v2317
        %v2649 = vpop.f32.mrb[0].mxu0
        %v2650 = vadd.f32 0.0, %v2649
        %v2651 = vpop.f32.mrb[0].mxu0
        %2652 = vmatprep.mubr.f32.mxu0 0.0
        %2653 = vmatmul.mubr.f32.gmra.mrb[0].mxu0 %v2320
        %v2654 = vpop.f32.mrb[0].mxu0
        %v2655 = vadd.f32 0.0, %v2654
        %v2656 = vpop.f32.mrb[0].mxu0
        %2657 = vmatprep.mubr.f32.mxu0 0.0
        %2658 = vmatmul.mubr.f32.gmra.mrb[0].mxu0 %v2323
        %v2659 = vpop.f32.mrb[0].mxu0
        %v2660 = vadd.f32 0.0, %v2659
        %v2661 = vpop.f32.mrb[0].mxu0
        %2662 = vdwg.mxu0
        %v2663 = vadd.f32 %v2260, %v2395
        %v2664 = vadd.f32 %v2261, %v2400
        %v2665 = vadd.f32 %v2262, %v2405
        %v2666 = vadd.f32 %v2263, %v2410
        %v2667 = vadd.f32 %v2264, %v2415
        %v2668 = vadd.f32 %v2265, %v2420
        %v2669 = vadd.f32 %v2266, %v2425
        %v2670 = vadd.f32 %v2267, %v2430
        %v2671 = vadd.f32 %v2268, %v2435
        %v2672 = vadd.f32 %v2269, %v2440
        %v2673 = vadd.f32 %v2270, %v2445
        %v2674 = vadd.f32 %v2271, %v2450
        %v2675 = vadd.f32 %v2272, %v2455
        %v2676 = vadd.f32 %v2273, %v2460
        %v2677 = vadd.f32 %v2274, %v2465
        %v2678 = vadd.f32 %v2275, %v2470
        %v2679 = vadd.f32 %v2276, %v2475
        %v2680 = vadd.f32 %v2277, %v2480
        %v2681 = vadd.f32 %v2278, %v2485
        %v2682 = vadd.f32 %v2279, %v2490
        %v2683 = vadd.f32 %v2280, %v2495
        %v2684 = vadd.f32 %v2281, %v2500
        %v2685 = vadd.f32 %v2282, %v2505
        %v2686 = vadd.f32 %v2283, %v2510
        %v2687 = vadd.f32 %v2284, %v2515
        %v2688 = vadd.f32 %v2285, %v2520
        %v2689 = vadd.f32 %v2286, %v2525
        %v2690 = vadd.f32 %v2287, %v2530
        %v2691 = vadd.f32 %v2288, %v2535
        %v2692 = vadd.f32 %v2289, %v2540
        %v2693 = vadd.f32 %v2290, %v2545
        %v2694 = vadd.f32 %v2291, %v2550
        %v2695 = vadd.f32 %v2292, %v2555
        %v2696 = vadd.f32 %v2293, %v2560
        %v2697 = vadd.f32 %v2294, %v2565
        %v2698 = vadd.f32 %v2295, %v2570
        %v2699 = vadd.f32 %v2296, %v2575
        %v2700 = vadd.f32 %v2297, %v2580
        %v2701 = vadd.f32 %v2298, %v2585
        %v2702 = vadd.f32 %v2299, %v2590
        %v2703 = vadd.f32 %v2300, %v2595
        %v2704 = vadd.f32 %v2301, %v2600
        %v2705 = vadd.f32 %v2302, %v2605
        %v2706 = vadd.f32 %v2303, %v2610
        %v2707 = vadd.f32 %v2304, %v2615
        %v2708 = vadd.f32 %v2305, %v2620
        %v2709 = vadd.f32 %v2306, %v2625
        %v2710 = vadd.f32 %v2307, %v2630
        %v2711 = vadd.f32 %v2308, %v2635
        %v2712 = vadd.f32 %v2309, %v2640
        %v2713 = vadd.f32 %v2310, %v2645
        %v2714 = vadd.f32 %v2311, %v2650
        %v2715 = vadd.f32 %v2312, %v2655
        %v2716 = vadd.f32 %v2313, %v2660
        %v2718 = vrot.slane %v582, 1
        %v2719 = vrot.slane %v583, 1
        %v2720 = vsel %vm663, %v2718, %v2719
        %v2721 = vrot.slane %v584, 1
        %v2722 = vsel %vm663, %v2719, %v2721
        %v2723 = vrot.slane %v585, 1
        %v2724 = vsel %vm663, %v2721, %v2723
        %s2725 = scalar_lea.vmem [#allocation6], 16
        %v2726 = vld [vmem:[%s2725] sm:$0xf]
        %v2727 = vsel %vm413, %v2720, 0
        %v2729 = vsel %vm413, %v2722, 0
        %v2731 = vsel %vm413, %v2724, 0
        %v2734 = vsel %vm900, %v2726, 0
        %2736 = vmatprep.subr.mxu0 0.0
        %2737 = vmatpush1.msra.mxu0 %v2734
        %2738 = vmatprep.subr.mxu0 0.0
        %2739 = vmatpush1.msra.mxu0 0.0
        %2740 = vmatprep.subr.mxu0 0.0
        %2741 = vmatpush1.msra.mxu0 0.0
        %2742 = vmatprep.subr.mxu0 0.0
        %2743 = vmatpush1.msra.mxu0 0.0
        %2744 = vmatprep.subr.mxu0 0.0
        %2745 = vmatpush1.msra.mxu0 0.0
        %2746 = vmatprep.subr.mxu0 0.0
        %2747 = vmatpush1.msra.mxu0 0.0
        %2748 = vmatprep.subr.mxu0 0.0
        %2749 = vmatpush1.msra.mxu0 0.0
        %2750 = vmatprep.subr.mxu0 0.0
        %2751 = vmatpush1.msra.mxu0 0.0
        %2752 = vmatprep.subr.mxu0 0.0
        %2753 = vmatpush1.msra.mxu0 0.0
        %2754 = vmatprep.subr.mxu0 0.0
        %2755 = vmatpush1.msra.mxu0 0.0
        %2756 = vmatprep.subr.mxu0 0.0
        %2757 = vmatpush1.msra.mxu0 0.0
        %2758 = vmatprep.subr.mxu0 0.0
        %2759 = vmatpush1.msra.mxu0 0.0
        %2760 = vmatprep.subr.mxu0 0.0
        %2761 = vmatpush1.msra.mxu0 0.0
        %2762 = vmatprep.subr.mxu0 0.0
        %2763 = vmatpush1.msra.mxu0 0.0
        %2764 = vmatprep.subr.mxu0 0.0
        %2765 = vmatpush1.msra.mxu0 0.0
        %2766 = vmatprep.subr.mxu0 0.0
        %2767 = vmatpush1.msra.mxu0 0.0
        %2768 = vmatprep.subr.mxu0 0.0
        %2769 = vmatpush1.msra.mxu0 0.0
        %2770 = vmatprep.subr.mxu0 0.0
        %2771 = vmatpush1.msra.mxu0 0.0
        %2772 = vmatprep.subr.mxu0 0.0
        %2773 = vmatpush1.msra.mxu0 0.0
        %2774 = vmatprep.subr.mxu0 0.0
        %2775 = vmatpush1.msra.mxu0 0.0
        %2776 = vmatprep.subr.mxu0 0.0
        %2777 = vmatpush1.msra.mxu0 0.0
        %2778 = vmatprep.subr.mxu0 0.0
        %2779 = vmatpush1.msra.mxu0 0.0
        %2780 = vmatprep.subr.mxu0 0.0
        %2781 = vmatpush1.msra.mxu0 0.0
        %2782 = vmatprep.subr.mxu0 0.0
        %2783 = vmatpush1.msra.mxu0 0.0
        %2784 = vmatprep.subr.mxu0 0.0
        %2785 = vmatpush1.msra.mxu0 0.0
        %2786 = vmatprep.subr.mxu0 0.0
        %2787 = vmatpush1.msra.mxu0 0.0
        %2788 = vmatprep.subr.mxu0 0.0
        %2789 = vmatpush1.msra.mxu0 0.0
        %2790 = vmatprep.subr.mxu0 0.0
        %2791 = vmatpush1.msra.mxu0 0.0
        %2792 = vmatprep.subr.mxu0 0.0
        %2793 = vmatpush1.msra.mxu0 0.0
        %2794 = vmatprep.subr.mxu0 0.0
        %2795 = vmatpush1.msra.mxu0 0.0
        %2796 = vmatprep.subr.mxu0 0.0
        %2797 = vmatpush1.msra.mxu0 0.0
        %2798 = vmatprep.subr.mxu0 0.0
        %2799 = vmatpush1.msra.mxu0 0.0
        %2800 = vmatprep.mubr.f32.mxu0 0.0
        %2801 = vmatmul.mubr.f32.gmra.mrb[0].mxu0 %v798
        %v2802 = vpop.f32.mrb[0].mxu0
        %v2803 = vadd.f32 0.0, %v2802
        %v2804 = vpop.f32.mrb[0].mxu0
        %2805 = vmatprep.mubr.f32.mxu0 0.0
        %2806 = vmatmul.mubr.f32.gmra.mrb[0].mxu0 %v800
        %v2807 = vpop.f32.mrb[0].mxu0
        %v2808 = vadd.f32 0.0, %v2807
        %v2809 = vpop.f32.mrb[0].mxu0
        %2810 = vmatprep.mubr.f32.mxu0 0.0
        %2811 = vmatmul.mubr.f32.gmra.mrb[0].mxu0 %v802
        %v2812 = vpop.f32.mrb[0].mxu0
        %v2813 = vadd.f32 0.0, %v2812
        %v2814 = vpop.f32.mrb[0].mxu0
        %2815 = vmatprep.mubr.f32.mxu0 0.0
        %2816 = vmatmul.mubr.f32.gmra.mrb[0].mxu0 %v804
        %v2817 = vpop.f32.mrb[0].mxu0
        %v2818 = vadd.f32 0.0, %v2817
        %v2819 = vpop.f32.mrb[0].mxu0
        %2820 = vmatprep.mubr.f32.mxu0 0.0
        %2821 = vmatmul.mubr.f32.gmra.mrb[0].mxu0 %v806
        %v2822 = vpop.f32.mrb[0].mxu0
        %v2823 = vadd.f32 0.0, %v2822
        %v2824 = vpop.f32.mrb[0].mxu0
        %2825 = vmatprep.mubr.f32.mxu0 0.0
        %2826 = vmatmul.mubr.f32.gmra.mrb[0].mxu0 %v808
        %v2827 = vpop.f32.mrb[0].mxu0
        %v2828 = vadd.f32 0.0, %v2827
        %v2829 = vpop.f32.mrb[0].mxu0
        %2830 = vmatprep.mubr.f32.mxu0 0.0
        %2831 = vmatmul.mubr.f32.gmra.mrb[0].mxu0 %v810
        %v2832 = vpop.f32.mrb[0].mxu0
        %v2833 = vadd.f32 0.0, %v2832
        %v2834 = vpop.f32.mrb[0].mxu0
        %2835 = vmatprep.mubr.f32.mxu0 0.0
        %2836 = vmatmul.mubr.f32.gmra.mrb[0].mxu0 %v812
        %v2837 = vpop.f32.mrb[0].mxu0
        %v2838 = vadd.f32 0.0, %v2837
        %v2839 = vpop.f32.mrb[0].mxu0
        %2840 = vmatprep.mubr.f32.mxu0 0.0
        %2841 = vmatmul.mubr.f32.gmra.mrb[0].mxu0 %v814
        %v2842 = vpop.f32.mrb[0].mxu0
        %v2843 = vadd.f32 0.0, %v2842
        %v2844 = vpop.f32.mrb[0].mxu0
        %2845 = vmatprep.mubr.f32.mxu0 0.0
        %2846 = vmatmul.mubr.f32.gmra.mrb[0].mxu0 %v816
        %v2847 = vpop.f32.mrb[0].mxu0
        %v2848 = vadd.f32 0.0, %v2847
        %v2849 = vpop.f32.mrb[0].mxu0
        %2850 = vmatprep.mubr.f32.mxu0 0.0
        %2851 = vmatmul.mubr.f32.gmra.mrb[0].mxu0 %v818
        %v2852 = vpop.f32.mrb[0].mxu0
        %v2853 = vadd.f32 0.0, %v2852
        %v2854 = vpop.f32.mrb[0].mxu0
        %2855 = vmatprep.mubr.f32.mxu0 0.0
        %2856 = vmatmul.mubr.f32.gmra.mrb[0].mxu0 %v820
        %v2857 = vpop.f32.mrb[0].mxu0
        %v2858 = vadd.f32 0.0, %v2857
        %v2859 = vpop.f32.mrb[0].mxu0
        %2860 = vmatprep.mubr.f32.mxu0 0.0
        %2861 = vmatmul.mubr.f32.gmra.mrb[0].mxu0 %v822
        %v2862 = vpop.f32.mrb[0].mxu0
        %v2863 = vadd.f32 0.0, %v2862
        %v2864 = vpop.f32.mrb[0].mxu0
        %2865 = vmatprep.mubr.f32.mxu0 0.0
        %2866 = vmatmul.mubr.f32.gmra.mrb[0].mxu0 %v824
        %v2867 = vpop.f32.mrb[0].mxu0
        %v2868 = vadd.f32 0.0, %v2867
        %v2869 = vpop.f32.mrb[0].mxu0
        %2870 = vmatprep.mubr.f32.mxu0 0.0
        %2871 = vmatmul.mubr.f32.gmra.mrb[0].mxu0 %v826
        %v2872 = vpop.f32.mrb[0].mxu0
        %v2873 = vadd.f32 0.0, %v2872
        %v2874 = vpop.f32.mrb[0].mxu0
        %2875 = vmatprep.mubr.f32.mxu0 0.0
        %2876 = vmatmul.mubr.f32.gmra.mrb[0].mxu0 %v828
        %v2877 = vpop.f32.mrb[0].mxu0
        %v2878 = vadd.f32 0.0, %v2877
        %v2879 = vpop.f32.mrb[0].mxu0
        %2880 = vmatprep.mubr.f32.mxu0 0.0
        %2881 = vmatmul.mubr.f32.gmra.mrb[0].mxu0 %v830
        %v2882 = vpop.f32.mrb[0].mxu0
        %v2883 = vadd.f32 0.0, %v2882
        %v2884 = vpop.f32.mrb[0].mxu0
        %2885 = vmatprep.mubr.f32.mxu0 0.0
        %2886 = vmatmul.mubr.f32.gmra.mrb[0].mxu0 %v832
        %v2887 = vpop.f32.mrb[0].mxu0
        %v2888 = vadd.f32 0.0, %v2887
        %v2889 = vpop.f32.mrb[0].mxu0
        %2890 = vmatprep.mubr.f32.mxu0 0.0
        %2891 = vmatmul.mubr.f32.gmra.mrb[0].mxu0 %v834
        %v2892 = vpop.f32.mrb[0].mxu0
        %v2893 = vadd.f32 0.0, %v2892
        %v2894 = vpop.f32.mrb[0].mxu0
        %2895 = vmatprep.mubr.f32.mxu0 0.0
        %2896 = vmatmul.mubr.f32.gmra.mrb[0].mxu0 %v836
        %v2897 = vpop.f32.mrb[0].mxu0
        %v2898 = vadd.f32 0.0, %v2897
        %v2899 = vpop.f32.mrb[0].mxu0
        %2900 = vmatprep.mubr.f32.mxu0 0.0
        %2901 = vmatmul.mubr.f32.gmra.mrb[0].mxu0 %v838
        %v2902 = vpop.f32.mrb[0].mxu0
        %v2903 = vadd.f32 0.0, %v2902
        %v2904 = vpop.f32.mrb[0].mxu0
        %2905 = vmatprep.mubr.f32.mxu0 0.0
        %2906 = vmatmul.mubr.f32.gmra.mrb[0].mxu0 %v840
        %v2907 = vpop.f32.mrb[0].mxu0
        %v2908 = vadd.f32 0.0, %v2907
        %v2909 = vpop.f32.mrb[0].mxu0
        %2910 = vmatprep.mubr.f32.mxu0 0.0
        %2911 = vmatmul.mubr.f32.gmra.mrb[0].mxu0 %v842
        %v2912 = vpop.f32.mrb[0].mxu0
        %v2913 = vadd.f32 0.0, %v2912
        %v2914 = vpop.f32.mrb[0].mxu0
        %2915 = vmatprep.mubr.f32.mxu0 0.0
        %2916 = vmatmul.mubr.f32.gmra.mrb[0].mxu0 %v844
        %v2917 = vpop.f32.mrb[0].mxu0
        %v2918 = vadd.f32 0.0, %v2917
        %v2919 = vpop.f32.mrb[0].mxu0
        %2920 = vmatprep.mubr.f32.mxu0 0.0
        %2921 = vmatmul.mubr.f32.gmra.mrb[0].mxu0 %v846
        %v2922 = vpop.f32.mrb[0].mxu0
        %v2923 = vadd.f32 0.0, %v2922
        %v2924 = vpop.f32.mrb[0].mxu0
        %2925 = vmatprep.mubr.f32.mxu0 0.0
        %2926 = vmatmul.mubr.f32.gmra.mrb[0].mxu0 %v848
        %v2927 = vpop.f32.mrb[0].mxu0
        %v2928 = vadd.f32 0.0, %v2927
        %v2929 = vpop.f32.mrb[0].mxu0
        %2930 = vmatprep.mubr.f32.mxu0 0.0
        %2931 = vmatmul.mubr.f32.gmra.mrb[0].mxu0 %v850
        %v2932 = vpop.f32.mrb[0].mxu0
        %v2933 = vadd.f32 0.0, %v2932
        %v2934 = vpop.f32.mrb[0].mxu0
        %2935 = vmatprep.mubr.f32.mxu0 0.0
        %2936 = vmatmul.mubr.f32.gmra.mrb[0].mxu0 %v852
        %v2937 = vpop.f32.mrb[0].mxu0
        %v2938 = vadd.f32 0.0, %v2937
        %v2939 = vpop.f32.mrb[0].mxu0
        %2940 = vmatprep.mubr.f32.mxu0 0.0
        %2941 = vmatmul.mubr.f32.gmra.mrb[0].mxu0 %v854
        %v2942 = vpop.f32.mrb[0].mxu0
        %v2943 = vadd.f32 0.0, %v2942
        %v2944 = vpop.f32.mrb[0].mxu0
        %2945 = vmatprep.mubr.f32.mxu0 0.0
        %2946 = vmatmul.mubr.f32.gmra.mrb[0].mxu0 %v856
        %v2947 = vpop.f32.mrb[0].mxu0
        %v2948 = vadd.f32 0.0, %v2947
        %v2949 = vpop.f32.mrb[0].mxu0
        %2950 = vmatprep.mubr.f32.mxu0 0.0
        %2951 = vmatmul.mubr.f32.gmra.mrb[0].mxu0 %v858
        %v2952 = vpop.f32.mrb[0].mxu0
        %v2953 = vadd.f32 0.0, %v2952
        %v2954 = vpop.f32.mrb[0].mxu0
        %2955 = vmatprep.mubr.f32.mxu0 0.0
        %2956 = vmatmul.mubr.f32.gmra.mrb[0].mxu0 %v860
        %v2957 = vpop.f32.mrb[0].mxu0
        %v2958 = vadd.f32 0.0, %v2957
        %v2959 = vpop.f32.mrb[0].mxu0
        %2960 = vmatprep.mubr.f32.mxu0 0.0
        %2961 = vmatmul.mubr.f32.gmra.mrb[0].mxu0 %v862
        %v2962 = vpop.f32.mrb[0].mxu0
        %v2963 = vadd.f32 0.0, %v2962
        %v2964 = vpop.f32.mrb[0].mxu0
        %2965 = vmatprep.mubr.f32.mxu0 0.0
        %2966 = vmatmul.mubr.f32.gmra.mrb[0].mxu0 %v864
        %v2967 = vpop.f32.mrb[0].mxu0
        %v2968 = vadd.f32 0.0, %v2967
        %v2969 = vpop.f32.mrb[0].mxu0
        %2970 = vmatprep.mubr.f32.mxu0 0.0
        %2971 = vmatmul.mubr.f32.gmra.mrb[0].mxu0 %v866
        %v2972 = vpop.f32.mrb[0].mxu0
        %v2973 = vadd.f32 0.0, %v2972
        %v2974 = vpop.f32.mrb[0].mxu0
        %2975 = vmatprep.mubr.f32.mxu0 0.0
        %2976 = vmatmul.mubr.f32.gmra.mrb[0].mxu0 %v868
        %v2977 = vpop.f32.mrb[0].mxu0
        %v2978 = vadd.f32 0.0, %v2977
        %v2979 = vpop.f32.mrb[0].mxu0
        %2980 = vmatprep.mubr.f32.mxu0 0.0
        %2981 = vmatmul.mubr.f32.gmra.mrb[0].mxu0 %v870
        %v2982 = vpop.f32.mrb[0].mxu0
        %v2983 = vadd.f32 0.0, %v2982
        %v2984 = vpop.f32.mrb[0].mxu0
        %2985 = vmatprep.mubr.f32.mxu0 0.0
        %2986 = vmatmul.mubr.f32.gmra.mrb[0].mxu0 %v872
        %v2987 = vpop.f32.mrb[0].mxu0
        %v2988 = vadd.f32 0.0, %v2987
        %v2989 = vpop.f32.mrb[0].mxu0
        %2990 = vmatprep.mubr.f32.mxu0 0.0
        %2991 = vmatmul.mubr.f32.gmra.mrb[0].mxu0 %v874
        %v2992 = vpop.f32.mrb[0].mxu0
        %v2993 = vadd.f32 0.0, %v2992
        %v2994 = vpop.f32.mrb[0].mxu0
        %2995 = vmatprep.mubr.f32.mxu0 0.0
        %2996 = vmatmul.mubr.f32.gmra.mrb[0].mxu0 %v876
        %v2997 = vpop.f32.mrb[0].mxu0
        %v2998 = vadd.f32 0.0, %v2997
        %v2999 = vpop.f32.mrb[0].mxu0
        %3000 = vmatprep.mubr.f32.mxu0 0.0
        %3001 = vmatmul.mubr.f32.gmra.mrb[0].mxu0 %v878
        %v3002 = vpop.f32.mrb[0].mxu0
        %v3003 = vadd.f32 0.0, %v3002
        %v3004 = vpop.f32.mrb[0].mxu0
        %3005 = vmatprep.mubr.f32.mxu0 0.0
        %3006 = vmatmul.mubr.f32.gmra.mrb[0].mxu0 %v880
        %v3007 = vpop.f32.mrb[0].mxu0
        %v3008 = vadd.f32 0.0, %v3007
        %v3009 = vpop.f32.mrb[0].mxu0
        %3010 = vmatprep.mubr.f32.mxu0 0.0
        %3011 = vmatmul.mubr.f32.gmra.mrb[0].mxu0 %v882
        %v3012 = vpop.f32.mrb[0].mxu0
        %v3013 = vadd.f32 0.0, %v3012
        %v3014 = vpop.f32.mrb[0].mxu0
        %3015 = vmatprep.mubr.f32.mxu0 0.0
        %3016 = vmatmul.mubr.f32.gmra.mrb[0].mxu0 %v884
        %v3017 = vpop.f32.mrb[0].mxu0
        %v3018 = vadd.f32 0.0, %v3017
        %v3019 = vpop.f32.mrb[0].mxu0
        %3020 = vmatprep.mubr.f32.mxu0 0.0
        %3021 = vmatmul.mubr.f32.gmra.mrb[0].mxu0 %v886
        %v3022 = vpop.f32.mrb[0].mxu0
        %v3023 = vadd.f32 0.0, %v3022
        %v3024 = vpop.f32.mrb[0].mxu0
        %3025 = vmatprep.mubr.f32.mxu0 0.0
        %3026 = vmatmul.mubr.f32.gmra.mrb[0].mxu0 %v888
        %v3027 = vpop.f32.mrb[0].mxu0
        %v3028 = vadd.f32 0.0, %v3027
        %v3029 = vpop.f32.mrb[0].mxu0
        %3030 = vmatprep.mubr.f32.mxu0 0.0
        %3031 = vmatmul.mubr.f32.gmra.mrb[0].mxu0 %v890
        %v3032 = vpop.f32.mrb[0].mxu0
        %v3033 = vadd.f32 0.0, %v3032
        %v3034 = vpop.f32.mrb[0].mxu0
        %3035 = vmatprep.mubr.f32.mxu0 0.0
        %3036 = vmatmul.mubr.f32.gmra.mrb[0].mxu0 %v892
        %v3037 = vpop.f32.mrb[0].mxu0
        %v3038 = vadd.f32 0.0, %v3037
        %v3039 = vpop.f32.mrb[0].mxu0
        %3040 = vmatprep.mubr.f32.mxu0 0.0
        %3041 = vmatmul.mubr.f32.gmra.mrb[0].mxu0 %v894
        %v3042 = vpop.f32.mrb[0].mxu0
        %v3043 = vadd.f32 0.0, %v3042
        %v3044 = vpop.f32.mrb[0].mxu0
        %3045 = vmatprep.mubr.f32.mxu0 0.0
        %3046 = vmatmul.mubr.f32.gmra.mrb[0].mxu0 %v896
        %v3047 = vpop.f32.mrb[0].mxu0
        %v3048 = vadd.f32 0.0, %v3047
        %v3049 = vpop.f32.mrb[0].mxu0
        %3050 = vmatprep.mubr.f32.mxu0 0.0
        %3051 = vmatmul.mubr.f32.gmra.mrb[0].mxu0 %v898
        %v3052 = vpop.f32.mrb[0].mxu0
        %v3053 = vadd.f32 0.0, %v3052
        %v3054 = vpop.f32.mrb[0].mxu0
        %3055 = vmatprep.mubr.f32.mxu0 0.0
        %3056 = vmatmul.mubr.f32.gmra.mrb[0].mxu0 %v2727
        %v3057 = vpop.f32.mrb[0].mxu0
        %v3058 = vadd.f32 0.0, %v3057
        %v3059 = vpop.f32.mrb[0].mxu0
        %3060 = vmatprep.mubr.f32.mxu0 0.0
        %3061 = vmatmul.mubr.f32.gmra.mrb[0].mxu0 %v2729
        %v3062 = vpop.f32.mrb[0].mxu0
        %v3063 = vadd.f32 0.0, %v3062
        %v3064 = vpop.f32.mrb[0].mxu0
        %3065 = vmatprep.mubr.f32.mxu0 0.0
        %3066 = vmatmul.mubr.f32.gmra.mrb[0].mxu0 %v2731
        %v3067 = vpop.f32.mrb[0].mxu0
        %v3068 = vadd.f32 0.0, %v3067
        %v3069 = vpop.f32.mrb[0].mxu0
        %3070 = vdwg.mxu0
        %v3071 = vadd.f32 %v2663, %v2803
        %v3072 = vadd.f32 %v2664, %v2808
        %v3073 = vadd.f32 %v2665, %v2813
        %v3074 = vadd.f32 %v2666, %v2818
        %v3075 = vadd.f32 %v2667, %v2823
        %v3076 = vadd.f32 %v2668, %v2828
        %v3077 = vadd.f32 %v2669, %v2833
        %v3078 = vadd.f32 %v2670, %v2838
        %v3079 = vadd.f32 %v2671, %v2843
        %v3080 = vadd.f32 %v2672, %v2848
        %v3081 = vadd.f32 %v2673, %v2853
        %v3082 = vadd.f32 %v2674, %v2858
        %v3083 = vadd.f32 %v2675, %v2863
        %v3084 = vadd.f32 %v2676, %v2868
        %v3085 = vadd.f32 %v2677, %v2873
        %v3086 = vadd.f32 %v2678, %v2878
        %v3087 = vadd.f32 %v2679, %v2883
        %v3088 = vadd.f32 %v2680, %v2888
        %v3089 = vadd.f32 %v2681, %v2893
        %v3090 = vadd.f32 %v2682, %v2898
        %v3091 = vadd.f32 %v2683, %v2903
        %v3092 = vadd.f32 %v2684, %v2908
        %v3093 = vadd.f32 %v2685, %v2913
        %v3094 = vadd.f32 %v2686, %v2918
        %v3095 = vadd.f32 %v2687, %v2923
        %v3096 = vadd.f32 %v2688, %v2928
        %v3097 = vadd.f32 %v2689, %v2933
        %v3098 = vadd.f32 %v2690, %v2938
        %v3099 = vadd.f32 %v2691, %v2943
        %v3100 = vadd.f32 %v2692, %v2948
        %v3101 = vadd.f32 %v2693, %v2953
        %v3102 = vadd.f32 %v2694, %v2958
        %v3103 = vadd.f32 %v2695, %v2963
        %v3104 = vadd.f32 %v2696, %v2968
        %v3105 = vadd.f32 %v2697, %v2973
        %v3106 = vadd.f32 %v2698, %v2978
        %v3107 = vadd.f32 %v2699, %v2983
        %v3108 = vadd.f32 %v2700, %v2988
        %v3109 = vadd.f32 %v2701, %v2993
        %v3110 = vadd.f32 %v2702, %v2998
        %v3111 = vadd.f32 %v2703, %v3003
        %v3112 = vadd.f32 %v2704, %v3008
        %v3113 = vadd.f32 %v2705, %v3013
        %v3114 = vadd.f32 %v2706, %v3018
        %v3115 = vadd.f32 %v2707, %v3023
        %v3116 = vadd.f32 %v2708, %v3028
        %v3117 = vadd.f32 %v2709, %v3033
        %v3118 = vadd.f32 %v2710, %v3038
        %v3119 = vadd.f32 %v2711, %v3043
        %v3120 = vadd.f32 %v2712, %v3048
        %v3121 = vadd.f32 %v2713, %v3053
        %v3122 = vadd.f32 %v2714, %v3058
        %v3123 = vadd.f32 %v2715, %v3063
        %v3124 = vadd.f32 %v2716, %v3068
        %v3125 = vrot.slane %v582, 2
        %v3126 = vrot.slane %v583, 2
        %v3127 = vsel %vm1685, %v3125, %v3126
        %v3128 = vrot.slane %v584, 2
        %v3129 = vsel %vm1685, %v3126, %v3128
        %v3130 = vrot.slane %v585, 2
        %v3131 = vsel %vm1685, %v3128, %v3130
        %s3132 = scalar_lea.vmem [#allocation6], 20
        %v3133 = vld [vmem:[%s3132] sm:$0xf]
        %v3134 = vsel %vm413, %v3127, 0
        %v3136 = vsel %vm413, %v3129, 0
        %v3138 = vsel %vm413, %v3131, 0
        %v3141 = vsel %vm900, %v3133, 0
        %3143 = vmatprep.subr.mxu0 0.0
        %3144 = vmatpush1.msra.mxu0 %v3141
        %3145 = vmatprep.subr.mxu0 0.0
        %3146 = vmatpush1.msra.mxu0 0.0
        %3147 = vmatprep.subr.mxu0 0.0
        %3148 = vmatpush1.msra.mxu0 0.0
        %3149 = vmatprep.subr.mxu0 0.0
        %3150 = vmatpush1.msra.mxu0 0.0
        %3151 = vmatprep.subr.mxu0 0.0
        %3152 = vmatpush1.msra.mxu0 0.0
        %3153 = vmatprep.subr.mxu0 0.0
        %3154 = vmatpush1.msra.mxu0 0.0
        %3155 = vmatprep.subr.mxu0 0.0
        %3156 = vmatpush1.msra.mxu0 0.0
        %3157 = vmatprep.subr.mxu0 0.0
        %3158 = vmatpush1.msra.mxu0 0.0
        %3159 = vmatprep.subr.mxu0 0.0
        %3160 = vmatpush1.msra.mxu0 0.0
        %3161 = vmatprep.subr.mxu0 0.0
        %3162 = vmatpush1.msra.mxu0 0.0
        %3163 = vmatprep.subr.mxu0 0.0
        %3164 = vmatpush1.msra.mxu0 0.0
        %3165 = vmatprep.subr.mxu0 0.0
        %3166 = vmatpush1.msra.mxu0 0.0
        %3167 = vmatprep.subr.mxu0 0.0
        %3168 = vmatpush1.msra.mxu0 0.0
        %3169 = vmatprep.subr.mxu0 0.0
        %3170 = vmatpush1.msra.mxu0 0.0
        %3171 = vmatprep.subr.mxu0 0.0
        %3172 = vmatpush1.msra.mxu0 0.0
        %3173 = vmatprep.subr.mxu0 0.0
        %3174 = vmatpush1.msra.mxu0 0.0
        %3175 = vmatprep.subr.mxu0 0.0
        %3176 = vmatpush1.msra.mxu0 0.0
        %3177 = vmatprep.subr.mxu0 0.0
        %3178 = vmatpush1.msra.mxu0 0.0
        %3179 = vmatprep.subr.mxu0 0.0
        %3180 = vmatpush1.msra.mxu0 0.0
        %3181 = vmatprep.subr.mxu0 0.0
        %3182 = vmatpush1.msra.mxu0 0.0
        %3183 = vmatprep.subr.mxu0 0.0
        %3184 = vmatpush1.msra.mxu0 0.0
        %3185 = vmatprep.subr.mxu0 0.0
        %3186 = vmatpush1.msra.mxu0 0.0
        %3187 = vmatprep.subr.mxu0 0.0
        %3188 = vmatpush1.msra.mxu0 0.0
        %3189 = vmatprep.subr.mxu0 0.0
        %3190 = vmatpush1.msra.mxu0 0.0
        %3191 = vmatprep.subr.mxu0 0.0
        %3192 = vmatpush1.msra.mxu0 0.0
        %3193 = vmatprep.subr.mxu0 0.0
        %3194 = vmatpush1.msra.mxu0 0.0
        %3195 = vmatprep.subr.mxu0 0.0
        %3196 = vmatpush1.msra.mxu0 0.0
        %3197 = vmatprep.subr.mxu0 0.0
        %3198 = vmatpush1.msra.mxu0 0.0
        %3199 = vmatprep.subr.mxu0 0.0
        %3200 = vmatpush1.msra.mxu0 0.0
        %3201 = vmatprep.subr.mxu0 0.0
        %3202 = vmatpush1.msra.mxu0 0.0
        %3203 = vmatprep.subr.mxu0 0.0
        %3204 = vmatpush1.msra.mxu0 0.0
        %3205 = vmatprep.subr.mxu0 0.0
        %3206 = vmatpush1.msra.mxu0 0.0
        %3207 = vmatprep.mubr.f32.mxu0 0.0
        %3208 = vmatmul.mubr.f32.gmra.mrb[0].mxu0 %v1820
        %v3209 = vpop.f32.mrb[0].mxu0
        %v3210 = vadd.f32 0.0, %v3209
        %v3211 = vpop.f32.mrb[0].mxu0
        %3212 = vmatprep.mubr.f32.mxu0 0.0
        %3213 = vmatmul.mubr.f32.gmra.mrb[0].mxu0 %v1822
        %v3214 = vpop.f32.mrb[0].mxu0
        %v3215 = vadd.f32 0.0, %v3214
        %v3216 = vpop.f32.mrb[0].mxu0
        %3217 = vmatprep.mubr.f32.mxu0 0.0
        %3218 = vmatmul.mubr.f32.gmra.mrb[0].mxu0 %v1824
        %v3219 = vpop.f32.mrb[0].mxu0
        %v3220 = vadd.f32 0.0, %v3219
        %v3221 = vpop.f32.mrb[0].mxu0
        %3222 = vmatprep.mubr.f32.mxu0 0.0
        %3223 = vmatmul.mubr.f32.gmra.mrb[0].mxu0 %v1826
        %v3224 = vpop.f32.mrb[0].mxu0
        %v3225 = vadd.f32 0.0, %v3224
        %v3226 = vpop.f32.mrb[0].mxu0
        %3227 = vmatprep.mubr.f32.mxu0 0.0
        %3228 = vmatmul.mubr.f32.gmra.mrb[0].mxu0 %v1828
        %v3229 = vpop.f32.mrb[0].mxu0
        %v3230 = vadd.f32 0.0, %v3229
        %v3231 = vpop.f32.mrb[0].mxu0
        %3232 = vmatprep.mubr.f32.mxu0 0.0
        %3233 = vmatmul.mubr.f32.gmra.mrb[0].mxu0 %v1830
        %v3234 = vpop.f32.mrb[0].mxu0
        %v3235 = vadd.f32 0.0, %v3234
        %v3236 = vpop.f32.mrb[0].mxu0
        %3237 = vmatprep.mubr.f32.mxu0 0.0
        %3238 = vmatmul.mubr.f32.gmra.mrb[0].mxu0 %v1832
        %v3239 = vpop.f32.mrb[0].mxu0
        %v3240 = vadd.f32 0.0, %v3239
        %v3241 = vpop.f32.mrb[0].mxu0
        %3242 = vmatprep.mubr.f32.mxu0 0.0
        %3243 = vmatmul.mubr.f32.gmra.mrb[0].mxu0 %v1834
        %v3244 = vpop.f32.mrb[0].mxu0
        %v3245 = vadd.f32 0.0, %v3244
        %v3246 = vpop.f32.mrb[0].mxu0
        %3247 = vmatprep.mubr.f32.mxu0 0.0
        %3248 = vmatmul.mubr.f32.gmra.mrb[0].mxu0 %v1836
        %v3249 = vpop.f32.mrb[0].mxu0
        %v3250 = vadd.f32 0.0, %v3249
        %v3251 = vpop.f32.mrb[0].mxu0
        %3252 = vmatprep.mubr.f32.mxu0 0.0
        %3253 = vmatmul.mubr.f32.gmra.mrb[0].mxu0 %v1838
        %v3254 = vpop.f32.mrb[0].mxu0
        %v3255 = vadd.f32 0.0, %v3254
        %v3256 = vpop.f32.mrb[0].mxu0
        %3257 = vmatprep.mubr.f32.mxu0 0.0
        %3258 = vmatmul.mubr.f32.gmra.mrb[0].mxu0 %v1840
        %v3259 = vpop.f32.mrb[0].mxu0
        %v3260 = vadd.f32 0.0, %v3259
        %v3261 = vpop.f32.mrb[0].mxu0
        %3262 = vmatprep.mubr.f32.mxu0 0.0
        %3263 = vmatmul.mubr.f32.gmra.mrb[0].mxu0 %v1842
        %v3264 = vpop.f32.mrb[0].mxu0
        %v3265 = vadd.f32 0.0, %v3264
        %v3266 = vpop.f32.mrb[0].mxu0
        %3267 = vmatprep.mubr.f32.mxu0 0.0
        %3268 = vmatmul.mubr.f32.gmra.mrb[0].mxu0 %v1844
        %v3269 = vpop.f32.mrb[0].mxu0
        %v3270 = vadd.f32 0.0, %v3269
        %v3271 = vpop.f32.mrb[0].mxu0
        %3272 = vmatprep.mubr.f32.mxu0 0.0
        %3273 = vmatmul.mubr.f32.gmra.mrb[0].mxu0 %v1846
        %v3274 = vpop.f32.mrb[0].mxu0
        %v3275 = vadd.f32 0.0, %v3274
        %v3276 = vpop.f32.mrb[0].mxu0
        %3277 = vmatprep.mubr.f32.mxu0 0.0
        %3278 = vmatmul.mubr.f32.gmra.mrb[0].mxu0 %v1848
        %v3279 = vpop.f32.mrb[0].mxu0
        %v3280 = vadd.f32 0.0, %v3279
        %v3281 = vpop.f32.mrb[0].mxu0
        %3282 = vmatprep.mubr.f32.mxu0 0.0
        %3283 = vmatmul.mubr.f32.gmra.mrb[0].mxu0 %v1850
        %v3284 = vpop.f32.mrb[0].mxu0
        %v3285 = vadd.f32 0.0, %v3284
        %v3286 = vpop.f32.mrb[0].mxu0
        %3287 = vmatprep.mubr.f32.mxu0 0.0
        %3288 = vmatmul.mubr.f32.gmra.mrb[0].mxu0 %v1852
        %v3289 = vpop.f32.mrb[0].mxu0
        %v3290 = vadd.f32 0.0, %v3289
        %v3291 = vpop.f32.mrb[0].mxu0
        %3292 = vmatprep.mubr.f32.mxu0 0.0
        %3293 = vmatmul.mubr.f32.gmra.mrb[0].mxu0 %v1854
        %v3294 = vpop.f32.mrb[0].mxu0
        %v3295 = vadd.f32 0.0, %v3294
        %v3296 = vpop.f32.mrb[0].mxu0
        %3297 = vmatprep.mubr.f32.mxu0 0.0
        %3298 = vmatmul.mubr.f32.gmra.mrb[0].mxu0 %v1856
        %v3299 = vpop.f32.mrb[0].mxu0
        %v3300 = vadd.f32 0.0, %v3299
        %v3301 = vpop.f32.mrb[0].mxu0
        %3302 = vmatprep.mubr.f32.mxu0 0.0
        %3303 = vmatmul.mubr.f32.gmra.mrb[0].mxu0 %v1858
        %v3304 = vpop.f32.mrb[0].mxu0
        %v3305 = vadd.f32 0.0, %v3304
        %v3306 = vpop.f32.mrb[0].mxu0
        %3307 = vmatprep.mubr.f32.mxu0 0.0
        %3308 = vmatmul.mubr.f32.gmra.mrb[0].mxu0 %v1860
        %v3309 = vpop.f32.mrb[0].mxu0
        %v3310 = vadd.f32 0.0, %v3309
        %v3311 = vpop.f32.mrb[0].mxu0
        %3312 = vmatprep.mubr.f32.mxu0 0.0
        %3313 = vmatmul.mubr.f32.gmra.mrb[0].mxu0 %v1862
        %v3314 = vpop.f32.mrb[0].mxu0
        %v3315 = vadd.f32 0.0, %v3314
        %v3316 = vpop.f32.mrb[0].mxu0
        %3317 = vmatprep.mubr.f32.mxu0 0.0
        %3318 = vmatmul.mubr.f32.gmra.mrb[0].mxu0 %v1864
        %v3319 = vpop.f32.mrb[0].mxu0
        %v3320 = vadd.f32 0.0, %v3319
        %v3321 = vpop.f32.mrb[0].mxu0
        %3322 = vmatprep.mubr.f32.mxu0 0.0
        %3323 = vmatmul.mubr.f32.gmra.mrb[0].mxu0 %v1866
        %v3324 = vpop.f32.mrb[0].mxu0
        %v3325 = vadd.f32 0.0, %v3324
        %v3326 = vpop.f32.mrb[0].mxu0
        %3327 = vmatprep.mubr.f32.mxu0 0.0
        %3328 = vmatmul.mubr.f32.gmra.mrb[0].mxu0 %v1868
        %v3329 = vpop.f32.mrb[0].mxu0
        %v3330 = vadd.f32 0.0, %v3329
        %v3331 = vpop.f32.mrb[0].mxu0
        %3332 = vmatprep.mubr.f32.mxu0 0.0
        %3333 = vmatmul.mubr.f32.gmra.mrb[0].mxu0 %v1870
        %v3334 = vpop.f32.mrb[0].mxu0
        %v3335 = vadd.f32 0.0, %v3334
        %v3336 = vpop.f32.mrb[0].mxu0
        %3337 = vmatprep.mubr.f32.mxu0 0.0
        %3338 = vmatmul.mubr.f32.gmra.mrb[0].mxu0 %v1872
        %v3339 = vpop.f32.mrb[0].mxu0
        %v3340 = vadd.f32 0.0, %v3339
        %v3341 = vpop.f32.mrb[0].mxu0
        %3342 = vmatprep.mubr.f32.mxu0 0.0
        %3343 = vmatmul.mubr.f32.gmra.mrb[0].mxu0 %v1874
        %v3344 = vpop.f32.mrb[0].mxu0
        %v3345 = vadd.f32 0.0, %v3344
        %v3346 = vpop.f32.mrb[0].mxu0
        %3347 = vmatprep.mubr.f32.mxu0 0.0
        %3348 = vmatmul.mubr.f32.gmra.mrb[0].mxu0 %v1876
        %v3349 = vpop.f32.mrb[0].mxu0
        %v3350 = vadd.f32 0.0, %v3349
        %v3351 = vpop.f32.mrb[0].mxu0
        %3352 = vmatprep.mubr.f32.mxu0 0.0
        %3353 = vmatmul.mubr.f32.gmra.mrb[0].mxu0 %v1878
        %v3354 = vpop.f32.mrb[0].mxu0
        %v3355 = vadd.f32 0.0, %v3354
        %v3356 = vpop.f32.mrb[0].mxu0
        %3357 = vmatprep.mubr.f32.mxu0 0.0
        %3358 = vmatmul.mubr.f32.gmra.mrb[0].mxu0 %v1880
        %v3359 = vpop.f32.mrb[0].mxu0
        %v3360 = vadd.f32 0.0, %v3359
        %v3361 = vpop.f32.mrb[0].mxu0
        %3362 = vmatprep.mubr.f32.mxu0 0.0
        %3363 = vmatmul.mubr.f32.gmra.mrb[0].mxu0 %v1882
        %v3364 = vpop.f32.mrb[0].mxu0
        %v3365 = vadd.f32 0.0, %v3364
        %v3366 = vpop.f32.mrb[0].mxu0
        %3367 = vmatprep.mubr.f32.mxu0 0.0
        %3368 = vmatmul.mubr.f32.gmra.mrb[0].mxu0 %v1884
        %v3369 = vpop.f32.mrb[0].mxu0
        %v3370 = vadd.f32 0.0, %v3369
        %v3371 = vpop.f32.mrb[0].mxu0
        %3372 = vmatprep.mubr.f32.mxu0 0.0
        %3373 = vmatmul.mubr.f32.gmra.mrb[0].mxu0 %v1886
        %v3374 = vpop.f32.mrb[0].mxu0
        %v3375 = vadd.f32 0.0, %v3374
        %v3376 = vpop.f32.mrb[0].mxu0
        %3377 = vmatprep.mubr.f32.mxu0 0.0
        %3378 = vmatmul.mubr.f32.gmra.mrb[0].mxu0 %v1888
        %v3379 = vpop.f32.mrb[0].mxu0
        %v3380 = vadd.f32 0.0, %v3379
        %v3381 = vpop.f32.mrb[0].mxu0
        %3382 = vmatprep.mubr.f32.mxu0 0.0
        %3383 = vmatmul.mubr.f32.gmra.mrb[0].mxu0 %v1890
        %v3384 = vpop.f32.mrb[0].mxu0
        %v3385 = vadd.f32 0.0, %v3384
        %v3386 = vpop.f32.mrb[0].mxu0
        %3387 = vmatprep.mubr.f32.mxu0 0.0
        %3388 = vmatmul.mubr.f32.gmra.mrb[0].mxu0 %v1892
        %v3389 = vpop.f32.mrb[0].mxu0
        %v3390 = vadd.f32 0.0, %v3389
        %v3391 = vpop.f32.mrb[0].mxu0
        %3392 = vmatprep.mubr.f32.mxu0 0.0
        %3393 = vmatmul.mubr.f32.gmra.mrb[0].mxu0 %v1894
        %v3394 = vpop.f32.mrb[0].mxu0
        %v3395 = vadd.f32 0.0, %v3394
        %v3396 = vpop.f32.mrb[0].mxu0
        %3397 = vmatprep.mubr.f32.mxu0 0.0
        %3398 = vmatmul.mubr.f32.gmra.mrb[0].mxu0 %v1896
        %v3399 = vpop.f32.mrb[0].mxu0
        %v3400 = vadd.f32 0.0, %v3399
        %v3401 = vpop.f32.mrb[0].mxu0
        %3402 = vmatprep.mubr.f32.mxu0 0.0
        %3403 = vmatmul.mubr.f32.gmra.mrb[0].mxu0 %v1898
        %v3404 = vpop.f32.mrb[0].mxu0
        %v3405 = vadd.f32 0.0, %v3404
        %v3406 = vpop.f32.mrb[0].mxu0
        %3407 = vmatprep.mubr.f32.mxu0 0.0
        %3408 = vmatmul.mubr.f32.gmra.mrb[0].mxu0 %v1900
        %v3409 = vpop.f32.mrb[0].mxu0
        %v3410 = vadd.f32 0.0, %v3409
        %v3411 = vpop.f32.mrb[0].mxu0
        %3412 = vmatprep.mubr.f32.mxu0 0.0
        %3413 = vmatmul.mubr.f32.gmra.mrb[0].mxu0 %v1902
        %v3414 = vpop.f32.mrb[0].mxu0
        %v3415 = vadd.f32 0.0, %v3414
        %v3416 = vpop.f32.mrb[0].mxu0
        %3417 = vmatprep.mubr.f32.mxu0 0.0
        %3418 = vmatmul.mubr.f32.gmra.mrb[0].mxu0 %v1904
        %v3419 = vpop.f32.mrb[0].mxu0
        %v3420 = vadd.f32 0.0, %v3419
        %v3421 = vpop.f32.mrb[0].mxu0
        %3422 = vmatprep.mubr.f32.mxu0 0.0
        %3423 = vmatmul.mubr.f32.gmra.mrb[0].mxu0 %v1906
        %v3424 = vpop.f32.mrb[0].mxu0
        %v3425 = vadd.f32 0.0, %v3424
        %v3426 = vpop.f32.mrb[0].mxu0
        %3427 = vmatprep.mubr.f32.mxu0 0.0
        %3428 = vmatmul.mubr.f32.gmra.mrb[0].mxu0 %v1908
        %v3429 = vpop.f32.mrb[0].mxu0
        %v3430 = vadd.f32 0.0, %v3429
        %v3431 = vpop.f32.mrb[0].mxu0
        %3432 = vmatprep.mubr.f32.mxu0 0.0
        %3433 = vmatmul.mubr.f32.gmra.mrb[0].mxu0 %v1910
        %v3434 = vpop.f32.mrb[0].mxu0
        %v3435 = vadd.f32 0.0, %v3434
        %v3436 = vpop.f32.mrb[0].mxu0
        %3437 = vmatprep.mubr.f32.mxu0 0.0
        %3438 = vmatmul.mubr.f32.gmra.mrb[0].mxu0 %v1912
        %v3439 = vpop.f32.mrb[0].mxu0
        %v3440 = vadd.f32 0.0, %v3439
        %v3441 = vpop.f32.mrb[0].mxu0
        %3442 = vmatprep.mubr.f32.mxu0 0.0
        %3443 = vmatmul.mubr.f32.gmra.mrb[0].mxu0 %v1914
        %v3444 = vpop.f32.mrb[0].mxu0
        %v3445 = vadd.f32 0.0, %v3444
        %v3446 = vpop.f32.mrb[0].mxu0
        %3447 = vmatprep.mubr.f32.mxu0 0.0
        %3448 = vmatmul.mubr.f32.gmra.mrb[0].mxu0 %v1916
        %v3449 = vpop.f32.mrb[0].mxu0
        %v3450 = vadd.f32 0.0, %v3449
        %v3451 = vpop.f32.mrb[0].mxu0
        %3452 = vmatprep.mubr.f32.mxu0 0.0
        %3453 = vmatmul.mubr.f32.gmra.mrb[0].mxu0 %v1918
        %v3454 = vpop.f32.mrb[0].mxu0
        %v3455 = vadd.f32 0.0, %v3454
        %v3456 = vpop.f32.mrb[0].mxu0
        %3457 = vmatprep.mubr.f32.mxu0 0.0
        %3458 = vmatmul.mubr.f32.gmra.mrb[0].mxu0 %v1920
        %v3459 = vpop.f32.mrb[0].mxu0
        %v3460 = vadd.f32 0.0, %v3459
        %v3461 = vpop.f32.mrb[0].mxu0
        %3462 = vmatprep.mubr.f32.mxu0 0.0
        %3463 = vmatmul.mubr.f32.gmra.mrb[0].mxu0 %v3134
        %v3464 = vpop.f32.mrb[0].mxu0
        %v3465 = vadd.f32 0.0, %v3464
        %v3466 = vpop.f32.mrb[0].mxu0
        %3467 = vmatprep.mubr.f32.mxu0 0.0
        %3468 = vmatmul.mubr.f32.gmra.mrb[0].mxu0 %v3136
        %v3469 = vpop.f32.mrb[0].mxu0
        %v3470 = vadd.f32 0.0, %v3469
        %v3471 = vpop.f32.mrb[0].mxu0
        %3472 = vmatprep.mubr.f32.mxu0 0.0
        %3473 = vmatmul.mubr.f32.gmra.mrb[0].mxu0 %v3138
        %v3474 = vpop.f32.mrb[0].mxu0
        %v3475 = vadd.f32 0.0, %v3474
        %v3476 = vpop.f32.mrb[0].mxu0
        %3477 = vdwg.mxu0
        %v3478 = vadd.f32 %v3071, %v3210
        %v3479 = vadd.f32 %v3072, %v3215
        %v3480 = vadd.f32 %v3073, %v3220
        %v3481 = vadd.f32 %v3074, %v3225
        %v3482 = vadd.f32 %v3075, %v3230
        %v3483 = vadd.f32 %v3076, %v3235
        %v3484 = vadd.f32 %v3077, %v3240
        %v3485 = vadd.f32 %v3078, %v3245
        %v3486 = vadd.f32 %v3079, %v3250
        %v3487 = vadd.f32 %v3080, %v3255
        %v3488 = vadd.f32 %v3081, %v3260
        %v3489 = vadd.f32 %v3082, %v3265
        %v3490 = vadd.f32 %v3083, %v3270
        %v3491 = vadd.f32 %v3084, %v3275
        %v3492 = vadd.f32 %v3085, %v3280
        %v3493 = vadd.f32 %v3086, %v3285
        %v3494 = vadd.f32 %v3087, %v3290
        %v3495 = vadd.f32 %v3088, %v3295
        %v3496 = vadd.f32 %v3089, %v3300
        %v3497 = vadd.f32 %v3090, %v3305
        %v3498 = vadd.f32 %v3091, %v3310
        %v3499 = vadd.f32 %v3092, %v3315
        %v3500 = vadd.f32 %v3093, %v3320
        %v3501 = vadd.f32 %v3094, %v3325
        %v3502 = vadd.f32 %v3095, %v3330
        %v3503 = vadd.f32 %v3096, %v3335
        %v3504 = vadd.f32 %v3097, %v3340
        %v3505 = vadd.f32 %v3098, %v3345
        %v3506 = vadd.f32 %v3099, %v3350
        %v3507 = vadd.f32 %v3100, %v3355
        %v3508 = vadd.f32 %v3101, %v3360
        %v3509 = vadd.f32 %v3102, %v3365
        %v3510 = vadd.f32 %v3103, %v3370
        %v3511 = vadd.f32 %v3104, %v3375
        %v3512 = vadd.f32 %v3105, %v3380
        %v3513 = vadd.f32 %v3106, %v3385
        %v3514 = vadd.f32 %v3107, %v3390
        %v3515 = vadd.f32 %v3108, %v3395
        %v3516 = vadd.f32 %v3109, %v3400
        %v3517 = vadd.f32 %v3110, %v3405
        %v3518 = vadd.f32 %v3111, %v3410
        %v3519 = vadd.f32 %v3112, %v3415
        %v3520 = vadd.f32 %v3113, %v3420
        %v3521 = vadd.f32 %v3114, %v3425
        %v3522 = vadd.f32 %v3115, %v3430
        %v3523 = vadd.f32 %v3116, %v3435
        %v3524 = vadd.f32 %v3117, %v3440
        %v3525 = vadd.f32 %v3118, %v3445
        %v3526 = vadd.f32 %v3119, %v3450
        %v3527 = vadd.f32 %v3120, %v3455
        %v3528 = vadd.f32 %v3121, %v3460
        %v3529 = vadd.f32 %v3122, %v3465
        %v3530 = vadd.f32 %v3123, %v3470
        %v3531 = vadd.f32 %v3124, %v3475
        %s3532 = scalar_lea.vmem [#allocation6], 24
        %v3533 = vld [vmem:[%s3532] sm:$0xf]
        %v3535 = vsel %vm413, %v586, 0
        %v3538 = vsel %vm413, %v587, 0
        %v3541 = vsel %vm413, %v588, 0
        %v3544 = vsel %vm900, %v3533, 0
        %3546 = vmatprep.subr.mxu0 0.0
        %3547 = vmatpush1.msra.mxu0 %v3544
        %3548 = vmatprep.subr.mxu0 0.0
        %3549 = vmatpush1.msra.mxu0 0.0
        %3550 = vmatprep.subr.mxu0 0.0
        %3551 = vmatpush1.msra.mxu0 0.0
        %3552 = vmatprep.subr.mxu0 0.0
        %3553 = vmatpush1.msra.mxu0 0.0
        %3554 = vmatprep.subr.mxu0 0.0
        %3555 = vmatpush1.msra.mxu0 0.0
        %3556 = vmatprep.subr.mxu0 0.0
        %3557 = vmatpush1.msra.mxu0 0.0
        %3558 = vmatprep.subr.mxu0 0.0
        %3559 = vmatpush1.msra.mxu0 0.0
        %3560 = vmatprep.subr.mxu0 0.0
        %3561 = vmatpush1.msra.mxu0 0.0
        %3562 = vmatprep.subr.mxu0 0.0
        %3563 = vmatpush1.msra.mxu0 0.0
        %3564 = vmatprep.subr.mxu0 0.0
        %3565 = vmatpush1.msra.mxu0 0.0
        %3566 = vmatprep.subr.mxu0 0.0
        %3567 = vmatpush1.msra.mxu0 0.0
        %3568 = vmatprep.subr.mxu0 0.0
        %3569 = vmatpush1.msra.mxu0 0.0
        %3570 = vmatprep.subr.mxu0 0.0
        %3571 = vmatpush1.msra.mxu0 0.0
        %3572 = vmatprep.subr.mxu0 0.0
        %3573 = vmatpush1.msra.mxu0 0.0
        %3574 = vmatprep.subr.mxu0 0.0
        %3575 = vmatpush1.msra.mxu0 0.0
        %3576 = vmatprep.subr.mxu0 0.0
        %3577 = vmatpush1.msra.mxu0 0.0
        %3578 = vmatprep.subr.mxu0 0.0
        %3579 = vmatpush1.msra.mxu0 0.0
        %3580 = vmatprep.subr.mxu0 0.0
        %3581 = vmatpush1.msra.mxu0 0.0
        %3582 = vmatprep.subr.mxu0 0.0
        %3583 = vmatpush1.msra.mxu0 0.0
        %3584 = vmatprep.subr.mxu0 0.0
        %3585 = vmatpush1.msra.mxu0 0.0
        %3586 = vmatprep.subr.mxu0 0.0
        %3587 = vmatpush1.msra.mxu0 0.0
        %3588 = vmatprep.subr.mxu0 0.0
        %3589 = vmatpush1.msra.mxu0 0.0
        %3590 = vmatprep.subr.mxu0 0.0
        %3591 = vmatpush1.msra.mxu0 0.0
        %3592 = vmatprep.subr.mxu0 0.0
        %3593 = vmatpush1.msra.mxu0 0.0
        %3594 = vmatprep.subr.mxu0 0.0
        %3595 = vmatpush1.msra.mxu0 0.0
        %3596 = vmatprep.subr.mxu0 0.0
        %3597 = vmatpush1.msra.mxu0 0.0
        %3598 = vmatprep.subr.mxu0 0.0
        %3599 = vmatpush1.msra.mxu0 0.0
        %3600 = vmatprep.subr.mxu0 0.0
        %3601 = vmatpush1.msra.mxu0 0.0
        %3602 = vmatprep.subr.mxu0 0.0
        %3603 = vmatpush1.msra.mxu0 0.0
        %3604 = vmatprep.subr.mxu0 0.0
        %3605 = vmatpush1.msra.mxu0 0.0
        %3606 = vmatprep.subr.mxu0 0.0
        %3607 = vmatpush1.msra.mxu0 0.0
        %3608 = vmatprep.subr.mxu0 0.0
        %3609 = vmatpush1.msra.mxu0 0.0
        %3610 = vmatprep.mubr.f32.mxu0 0.0
        %3611 = vmatmul.mubr.f32.gmra.mrb[0].mxu0 %v1251
        %v3612 = vpop.f32.mrb[0].mxu0
        %v3613 = vadd.f32 0.0, %v3612
        %v3614 = vpop.f32.mrb[0].mxu0
        %3615 = vmatprep.mubr.f32.mxu0 0.0
        %3616 = vmatmul.mubr.f32.gmra.mrb[0].mxu0 %v1253
        %v3617 = vpop.f32.mrb[0].mxu0
        %v3618 = vadd.f32 0.0, %v3617
        %v3619 = vpop.f32.mrb[0].mxu0
        %3620 = vmatprep.mubr.f32.mxu0 0.0
        %3621 = vmatmul.mubr.f32.gmra.mrb[0].mxu0 %v1255
        %v3622 = vpop.f32.mrb[0].mxu0
        %v3623 = vadd.f32 0.0, %v3622
        %v3624 = vpop.f32.mrb[0].mxu0
        %3625 = vmatprep.mubr.f32.mxu0 0.0
        %3626 = vmatmul.mubr.f32.gmra.mrb[0].mxu0 %v1257
        %v3627 = vpop.f32.mrb[0].mxu0
        %v3628 = vadd.f32 0.0, %v3627
        %v3629 = vpop.f32.mrb[0].mxu0
        %3630 = vmatprep.mubr.f32.mxu0 0.0
        %3631 = vmatmul.mubr.f32.gmra.mrb[0].mxu0 %v1259
        %v3632 = vpop.f32.mrb[0].mxu0
        %v3633 = vadd.f32 0.0, %v3632
        %v3634 = vpop.f32.mrb[0].mxu0
        %3635 = vmatprep.mubr.f32.mxu0 0.0
        %3636 = vmatmul.mubr.f32.gmra.mrb[0].mxu0 %v1261
        %v3637 = vpop.f32.mrb[0].mxu0
        %v3638 = vadd.f32 0.0, %v3637
        %v3639 = vpop.f32.mrb[0].mxu0
        %3640 = vmatprep.mubr.f32.mxu0 0.0
        %3641 = vmatmul.mubr.f32.gmra.mrb[0].mxu0 %v1263
        %v3642 = vpop.f32.mrb[0].mxu0
        %v3643 = vadd.f32 0.0, %v3642
        %v3644 = vpop.f32.mrb[0].mxu0
        %3645 = vmatprep.mubr.f32.mxu0 0.0
        %3646 = vmatmul.mubr.f32.gmra.mrb[0].mxu0 %v1265
        %v3647 = vpop.f32.mrb[0].mxu0
        %v3648 = vadd.f32 0.0, %v3647
        %v3649 = vpop.f32.mrb[0].mxu0
        %3650 = vmatprep.mubr.f32.mxu0 0.0
        %3651 = vmatmul.mubr.f32.gmra.mrb[0].mxu0 %v1267
        %v3652 = vpop.f32.mrb[0].mxu0
        %v3653 = vadd.f32 0.0, %v3652
        %v3654 = vpop.f32.mrb[0].mxu0
        %3655 = vmatprep.mubr.f32.mxu0 0.0
        %3656 = vmatmul.mubr.f32.gmra.mrb[0].mxu0 %v1269
        %v3657 = vpop.f32.mrb[0].mxu0
        %v3658 = vadd.f32 0.0, %v3657
        %v3659 = vpop.f32.mrb[0].mxu0
        %3660 = vmatprep.mubr.f32.mxu0 0.0
        %3661 = vmatmul.mubr.f32.gmra.mrb[0].mxu0 %v1271
        %v3662 = vpop.f32.mrb[0].mxu0
        %v3663 = vadd.f32 0.0, %v3662
        %v3664 = vpop.f32.mrb[0].mxu0
        %3665 = vmatprep.mubr.f32.mxu0 0.0
        %3666 = vmatmul.mubr.f32.gmra.mrb[0].mxu0 %v1273
        %v3667 = vpop.f32.mrb[0].mxu0
        %v3668 = vadd.f32 0.0, %v3667
        %v3669 = vpop.f32.mrb[0].mxu0
        %3670 = vmatprep.mubr.f32.mxu0 0.0
        %3671 = vmatmul.mubr.f32.gmra.mrb[0].mxu0 %v1275
        %v3672 = vpop.f32.mrb[0].mxu0
        %v3673 = vadd.f32 0.0, %v3672
        %v3674 = vpop.f32.mrb[0].mxu0
        %3675 = vmatprep.mubr.f32.mxu0 0.0
        %3676 = vmatmul.mubr.f32.gmra.mrb[0].mxu0 %v1277
        %v3677 = vpop.f32.mrb[0].mxu0
        %v3678 = vadd.f32 0.0, %v3677
        %v3679 = vpop.f32.mrb[0].mxu0
        %3680 = vmatprep.mubr.f32.mxu0 0.0
        %3681 = vmatmul.mubr.f32.gmra.mrb[0].mxu0 %v1279
        %v3682 = vpop.f32.mrb[0].mxu0
        %v3683 = vadd.f32 0.0, %v3682
        %v3684 = vpop.f32.mrb[0].mxu0
        %3685 = vmatprep.mubr.f32.mxu0 0.0
        %3686 = vmatmul.mubr.f32.gmra.mrb[0].mxu0 %v1281
        %v3687 = vpop.f32.mrb[0].mxu0
        %v3688 = vadd.f32 0.0, %v3687
        %v3689 = vpop.f32.mrb[0].mxu0
        %3690 = vmatprep.mubr.f32.mxu0 0.0
        %3691 = vmatmul.mubr.f32.gmra.mrb[0].mxu0 %v1283
        %v3692 = vpop.f32.mrb[0].mxu0
        %v3693 = vadd.f32 0.0, %v3692
        %v3694 = vpop.f32.mrb[0].mxu0
        %3695 = vmatprep.mubr.f32.mxu0 0.0
        %3696 = vmatmul.mubr.f32.gmra.mrb[0].mxu0 %v1285
        %v3697 = vpop.f32.mrb[0].mxu0
        %v3698 = vadd.f32 0.0, %v3697
        %v3699 = vpop.f32.mrb[0].mxu0
        %3700 = vmatprep.mubr.f32.mxu0 0.0
        %3701 = vmatmul.mubr.f32.gmra.mrb[0].mxu0 %v1287
        %v3702 = vpop.f32.mrb[0].mxu0
        %v3703 = vadd.f32 0.0, %v3702
        %v3704 = vpop.f32.mrb[0].mxu0
        %3705 = vmatprep.mubr.f32.mxu0 0.0
        %3706 = vmatmul.mubr.f32.gmra.mrb[0].mxu0 %v1289
        %v3707 = vpop.f32.mrb[0].mxu0
        %v3708 = vadd.f32 0.0, %v3707
        %v3709 = vpop.f32.mrb[0].mxu0
        %3710 = vmatprep.mubr.f32.mxu0 0.0
        %3711 = vmatmul.mubr.f32.gmra.mrb[0].mxu0 %v1291
        %v3712 = vpop.f32.mrb[0].mxu0
        %v3713 = vadd.f32 0.0, %v3712
        %v3714 = vpop.f32.mrb[0].mxu0
        %3715 = vmatprep.mubr.f32.mxu0 0.0
        %3716 = vmatmul.mubr.f32.gmra.mrb[0].mxu0 %v1293
        %v3717 = vpop.f32.mrb[0].mxu0
        %v3718 = vadd.f32 0.0, %v3717
        %v3719 = vpop.f32.mrb[0].mxu0
        %3720 = vmatprep.mubr.f32.mxu0 0.0
        %3721 = vmatmul.mubr.f32.gmra.mrb[0].mxu0 %v1295
        %v3722 = vpop.f32.mrb[0].mxu0
        %v3723 = vadd.f32 0.0, %v3722
        %v3724 = vpop.f32.mrb[0].mxu0
        %3725 = vmatprep.mubr.f32.mxu0 0.0
        %3726 = vmatmul.mubr.f32.gmra.mrb[0].mxu0 %v1297
        %v3727 = vpop.f32.mrb[0].mxu0
        %v3728 = vadd.f32 0.0, %v3727
        %v3729 = vpop.f32.mrb[0].mxu0
        %3730 = vmatprep.mubr.f32.mxu0 0.0
        %3731 = vmatmul.mubr.f32.gmra.mrb[0].mxu0 %v1299
        %v3732 = vpop.f32.mrb[0].mxu0
        %v3733 = vadd.f32 0.0, %v3732
        %v3734 = vpop.f32.mrb[0].mxu0
        %3735 = vmatprep.mubr.f32.mxu0 0.0
        %3736 = vmatmul.mubr.f32.gmra.mrb[0].mxu0 %v1301
        %v3737 = vpop.f32.mrb[0].mxu0
        %v3738 = vadd.f32 0.0, %v3737
        %v3739 = vpop.f32.mrb[0].mxu0
        %3740 = vmatprep.mubr.f32.mxu0 0.0
        %3741 = vmatmul.mubr.f32.gmra.mrb[0].mxu0 %v1303
        %v3742 = vpop.f32.mrb[0].mxu0
        %v3743 = vadd.f32 0.0, %v3742
        %v3744 = vpop.f32.mrb[0].mxu0
        %3745 = vmatprep.mubr.f32.mxu0 0.0
        %3746 = vmatmul.mubr.f32.gmra.mrb[0].mxu0 %v1305
        %v3747 = vpop.f32.mrb[0].mxu0
        %v3748 = vadd.f32 0.0, %v3747
        %v3749 = vpop.f32.mrb[0].mxu0
        %3750 = vmatprep.mubr.f32.mxu0 0.0
        %3751 = vmatmul.mubr.f32.gmra.mrb[0].mxu0 %v1307
        %v3752 = vpop.f32.mrb[0].mxu0
        %v3753 = vadd.f32 0.0, %v3752
        %v3754 = vpop.f32.mrb[0].mxu0
        %3755 = vmatprep.mubr.f32.mxu0 0.0
        %3756 = vmatmul.mubr.f32.gmra.mrb[0].mxu0 %v1309
        %v3757 = vpop.f32.mrb[0].mxu0
        %v3758 = vadd.f32 0.0, %v3757
        %v3759 = vpop.f32.mrb[0].mxu0
        %3760 = vmatprep.mubr.f32.mxu0 0.0
        %3761 = vmatmul.mubr.f32.gmra.mrb[0].mxu0 %v1311
        %v3762 = vpop.f32.mrb[0].mxu0
        %v3763 = vadd.f32 0.0, %v3762
        %v3764 = vpop.f32.mrb[0].mxu0
        %3765 = vmatprep.mubr.f32.mxu0 0.0
        %3766 = vmatmul.mubr.f32.gmra.mrb[0].mxu0 %v1313
        %v3767 = vpop.f32.mrb[0].mxu0
        %v3768 = vadd.f32 0.0, %v3767
        %v3769 = vpop.f32.mrb[0].mxu0
        %3770 = vmatprep.mubr.f32.mxu0 0.0
        %3771 = vmatmul.mubr.f32.gmra.mrb[0].mxu0 %v1315
        %v3772 = vpop.f32.mrb[0].mxu0
        %v3773 = vadd.f32 0.0, %v3772
        %v3774 = vpop.f32.mrb[0].mxu0
        %3775 = vmatprep.mubr.f32.mxu0 0.0
        %3776 = vmatmul.mubr.f32.gmra.mrb[0].mxu0 %v1317
        %v3777 = vpop.f32.mrb[0].mxu0
        %v3778 = vadd.f32 0.0, %v3777
        %v3779 = vpop.f32.mrb[0].mxu0
        %3780 = vmatprep.mubr.f32.mxu0 0.0
        %3781 = vmatmul.mubr.f32.gmra.mrb[0].mxu0 %v1319
        %v3782 = vpop.f32.mrb[0].mxu0
        %v3783 = vadd.f32 0.0, %v3782
        %v3784 = vpop.f32.mrb[0].mxu0
        %3785 = vmatprep.mubr.f32.mxu0 0.0
        %3786 = vmatmul.mubr.f32.gmra.mrb[0].mxu0 %v1321
        %v3787 = vpop.f32.mrb[0].mxu0
        %v3788 = vadd.f32 0.0, %v3787
        %v3789 = vpop.f32.mrb[0].mxu0
        %3790 = vmatprep.mubr.f32.mxu0 0.0
        %3791 = vmatmul.mubr.f32.gmra.mrb[0].mxu0 %v1323
        %v3792 = vpop.f32.mrb[0].mxu0
        %v3793 = vadd.f32 0.0, %v3792
        %v3794 = vpop.f32.mrb[0].mxu0
        %3795 = vmatprep.mubr.f32.mxu0 0.0
        %3796 = vmatmul.mubr.f32.gmra.mrb[0].mxu0 %v1325
        %v3797 = vpop.f32.mrb[0].mxu0
        %v3798 = vadd.f32 0.0, %v3797
        %v3799 = vpop.f32.mrb[0].mxu0
        %3800 = vmatprep.mubr.f32.mxu0 0.0
        %3801 = vmatmul.mubr.f32.gmra.mrb[0].mxu0 %v1327
        %v3802 = vpop.f32.mrb[0].mxu0
        %v3803 = vadd.f32 0.0, %v3802
        %v3804 = vpop.f32.mrb[0].mxu0
        %3805 = vmatprep.mubr.f32.mxu0 0.0
        %3806 = vmatmul.mubr.f32.gmra.mrb[0].mxu0 %v1329
        %v3807 = vpop.f32.mrb[0].mxu0
        %v3808 = vadd.f32 0.0, %v3807
        %v3809 = vpop.f32.mrb[0].mxu0
        %3810 = vmatprep.mubr.f32.mxu0 0.0
        %3811 = vmatmul.mubr.f32.gmra.mrb[0].mxu0 %v1331
        %v3812 = vpop.f32.mrb[0].mxu0
        %v3813 = vadd.f32 0.0, %v3812
        %v3814 = vpop.f32.mrb[0].mxu0
        %3815 = vmatprep.mubr.f32.mxu0 0.0
        %3816 = vmatmul.mubr.f32.gmra.mrb[0].mxu0 %v1333
        %v3817 = vpop.f32.mrb[0].mxu0
        %v3818 = vadd.f32 0.0, %v3817
        %v3819 = vpop.f32.mrb[0].mxu0
        %3820 = vmatprep.mubr.f32.mxu0 0.0
        %3821 = vmatmul.mubr.f32.gmra.mrb[0].mxu0 %v1335
        %v3822 = vpop.f32.mrb[0].mxu0
        %v3823 = vadd.f32 0.0, %v3822
        %v3824 = vpop.f32.mrb[0].mxu0
        %3825 = vmatprep.mubr.f32.mxu0 0.0
        %3826 = vmatmul.mubr.f32.gmra.mrb[0].mxu0 %v1337
        %v3827 = vpop.f32.mrb[0].mxu0
        %v3828 = vadd.f32 0.0, %v3827
        %v3829 = vpop.f32.mrb[0].mxu0
        %3830 = vmatprep.mubr.f32.mxu0 0.0
        %3831 = vmatmul.mubr.f32.gmra.mrb[0].mxu0 %v1339
        %v3832 = vpop.f32.mrb[0].mxu0
        %v3833 = vadd.f32 0.0, %v3832
        %v3834 = vpop.f32.mrb[0].mxu0
        %3835 = vmatprep.mubr.f32.mxu0 0.0
        %3836 = vmatmul.mubr.f32.gmra.mrb[0].mxu0 %v1341
        %v3837 = vpop.f32.mrb[0].mxu0
        %v3838 = vadd.f32 0.0, %v3837
        %v3839 = vpop.f32.mrb[0].mxu0
        %3840 = vmatprep.mubr.f32.mxu0 0.0
        %3841 = vmatmul.mubr.f32.gmra.mrb[0].mxu0 %v1343
        %v3842 = vpop.f32.mrb[0].mxu0
        %v3843 = vadd.f32 0.0, %v3842
        %v3844 = vpop.f32.mrb[0].mxu0
        %3845 = vmatprep.mubr.f32.mxu0 0.0
        %3846 = vmatmul.mubr.f32.gmra.mrb[0].mxu0 %v1345
        %v3847 = vpop.f32.mrb[0].mxu0
        %v3848 = vadd.f32 0.0, %v3847
        %v3849 = vpop.f32.mrb[0].mxu0
        %3850 = vmatprep.mubr.f32.mxu0 0.0
        %3851 = vmatmul.mubr.f32.gmra.mrb[0].mxu0 %v2317
        %v3852 = vpop.f32.mrb[0].mxu0
        %v3853 = vadd.f32 0.0, %v3852
        %v3854 = vpop.f32.mrb[0].mxu0
        %3855 = vmatprep.mubr.f32.mxu0 0.0
        %3856 = vmatmul.mubr.f32.gmra.mrb[0].mxu0 %v2320
        %v3857 = vpop.f32.mrb[0].mxu0
        %v3858 = vadd.f32 0.0, %v3857
        %v3859 = vpop.f32.mrb[0].mxu0
        %3860 = vmatprep.mubr.f32.mxu0 0.0
        %3861 = vmatmul.mubr.f32.gmra.mrb[0].mxu0 %v2323
        %v3862 = vpop.f32.mrb[0].mxu0
        %v3863 = vadd.f32 0.0, %v3862
        %v3864 = vpop.f32.mrb[0].mxu0
        %3865 = vmatprep.mubr.f32.mxu0 0.0
        %3866 = vmatmul.mubr.f32.gmra.mrb[0].mxu0 %v3535
        %v3867 = vpop.f32.mrb[0].mxu0
        %v3868 = vadd.f32 0.0, %v3867
        %v3869 = vpop.f32.mrb[0].mxu0
        %3870 = vmatprep.mubr.f32.mxu0 0.0
        %3871 = vmatmul.mubr.f32.gmra.mrb[0].mxu0 %v3538
        %v3872 = vpop.f32.mrb[0].mxu0
        %v3873 = vadd.f32 0.0, %v3872
        %v3874 = vpop.f32.mrb[0].mxu0
        %3875 = vmatprep.mubr.f32.mxu0 0.0
        %3876 = vmatmul.mubr.f32.gmra.mrb[0].mxu0 %v3541
        %v3877 = vpop.f32.mrb[0].mxu0
        %v3878 = vadd.f32 0.0, %v3877
        %v3879 = vpop.f32.mrb[0].mxu0
        %3880 = vdwg.mxu0
        %v3881 = vadd.f32 %v3478, %v3613
        %v3882 = vadd.f32 %v3479, %v3618
        %v3883 = vadd.f32 %v3480, %v3623
        %v3884 = vadd.f32 %v3481, %v3628
        %v3885 = vadd.f32 %v3482, %v3633
        %v3886 = vadd.f32 %v3483, %v3638
        %v3887 = vadd.f32 %v3484, %v3643
        %v3888 = vadd.f32 %v3485, %v3648
        %v3889 = vadd.f32 %v3486, %v3653
        %v3890 = vadd.f32 %v3487, %v3658
        %v3891 = vadd.f32 %v3488, %v3663
        %v3892 = vadd.f32 %v3489, %v3668
        %v3893 = vadd.f32 %v3490, %v3673
        %v3894 = vadd.f32 %v3491, %v3678
        %v3895 = vadd.f32 %v3492, %v3683
        %v3896 = vadd.f32 %v3493, %v3688
        %v3897 = vadd.f32 %v3494, %v3693
        %v3898 = vadd.f32 %v3495, %v3698
        %v3899 = vadd.f32 %v3496, %v3703
        %v3900 = vadd.f32 %v3497, %v3708
        %v3901 = vadd.f32 %v3498, %v3713
        %v3902 = vadd.f32 %v3499, %v3718
        %v3903 = vadd.f32 %v3500, %v3723
        %v3904 = vadd.f32 %v3501, %v3728
        %v3905 = vadd.f32 %v3502, %v3733
        %v3906 = vadd.f32 %v3503, %v3738
        %v3907 = vadd.f32 %v3504, %v3743
        %v3908 = vadd.f32 %v3505, %v3748
        %v3909 = vadd.f32 %v3506, %v3753
        %v3910 = vadd.f32 %v3507, %v3758
        %v3911 = vadd.f32 %v3508, %v3763
        %v3912 = vadd.f32 %v3509, %v3768
        %v3913 = vadd.f32 %v3510, %v3773
        %v3914 = vadd.f32 %v3511, %v3778
        %v3915 = vadd.f32 %v3512, %v3783
        %v3916 = vadd.f32 %v3513, %v3788
        %v3917 = vadd.f32 %v3514, %v3793
        %v3918 = vadd.f32 %v3515, %v3798
        %v3919 = vadd.f32 %v3516, %v3803
        %v3920 = vadd.f32 %v3517, %v3808
        %v3921 = vadd.f32 %v3518, %v3813
        %v3922 = vadd.f32 %v3519, %v3818
        %v3923 = vadd.f32 %v3520, %v3823
        %v3924 = vadd.f32 %v3521, %v3828
        %v3925 = vadd.f32 %v3522, %v3833
        %v3926 = vadd.f32 %v3523, %v3838
        %v3927 = vadd.f32 %v3524, %v3843
        %v3928 = vadd.f32 %v3525, %v3848
        %v3929 = vadd.f32 %v3526, %v3853
        %v3930 = vadd.f32 %v3527, %v3858
        %v3931 = vadd.f32 %v3528, %v3863
        %v3932 = vadd.f32 %v3529, %v3868
        %v3933 = vadd.f32 %v3530, %v3873
        %v3934 = vadd.f32 %v3531, %v3878
        %v3936 = vrot.slane %v586, 1
        %v3937 = vrot.slane %v587, 1
        %v3938 = vsel %vm663, %v3936, %v3937
        %v3939 = vrot.slane %v588, 1
        %v3940 = vsel %vm663, %v3937, %v3939
        %v3941 = vrot.slane %v589, 1
        %v3942 = vsel %vm663, %v3939, %v3941
        %s3943 = scalar_lea.vmem [#allocation6], 28
        %v3944 = vld [vmem:[%s3943] sm:$0xf]
        %v3945 = vsel %vm413, %v3938, 0
        %v3947 = vsel %vm413, %v3940, 0
        %v3949 = vsel %vm413, %v3942, 0
        %v3952 = vsel %vm900, %v3944, 0
        %3954 = vmatprep.subr.mxu0 0.0
        %3955 = vmatpush1.msra.mxu0 %v3952
        %3956 = vmatprep.subr.mxu0 0.0
        %3957 = vmatpush1.msra.mxu0 0.0
        %3958 = vmatprep.subr.mxu0 0.0
        %3959 = vmatpush1.msra.mxu0 0.0
        %3960 = vmatprep.subr.mxu0 0.0
        %3961 = vmatpush1.msra.mxu0 0.0
        %3962 = vmatprep.subr.mxu0 0.0
        %3963 = vmatpush1.msra.mxu0 0.0
        %3964 = vmatprep.subr.mxu0 0.0
        %3965 = vmatpush1.msra.mxu0 0.0
        %3966 = vmatprep.subr.mxu0 0.0
        %3967 = vmatpush1.msra.mxu0 0.0
        %3968 = vmatprep.subr.mxu0 0.0
        %3969 = vmatpush1.msra.mxu0 0.0
        %3970 = vmatprep.subr.mxu0 0.0
        %3971 = vmatpush1.msra.mxu0 0.0
        %3972 = vmatprep.subr.mxu0 0.0
        %3973 = vmatpush1.msra.mxu0 0.0
        %3974 = vmatprep.subr.mxu0 0.0
        %3975 = vmatpush1.msra.mxu0 0.0
        %3976 = vmatprep.subr.mxu0 0.0
        %3977 = vmatpush1.msra.mxu0 0.0
        %3978 = vmatprep.subr.mxu0 0.0
        %3979 = vmatpush1.msra.mxu0 0.0
        %3980 = vmatprep.subr.mxu0 0.0
        %3981 = vmatpush1.msra.mxu0 0.0
        %3982 = vmatprep.subr.mxu0 0.0
        %3983 = vmatpush1.msra.mxu0 0.0
        %3984 = vmatprep.subr.mxu0 0.0
        %3985 = vmatpush1.msra.mxu0 0.0
        %3986 = vmatprep.subr.mxu0 0.0
        %3987 = vmatpush1.msra.mxu0 0.0
        %3988 = vmatprep.subr.mxu0 0.0
        %3989 = vmatpush1.msra.mxu0 0.0
        %3990 = vmatprep.subr.mxu0 0.0
        %3991 = vmatpush1.msra.mxu0 0.0
        %3992 = vmatprep.subr.mxu0 0.0
        %3993 = vmatpush1.msra.mxu0 0.0
        %3994 = vmatprep.subr.mxu0 0.0
        %3995 = vmatpush1.msra.mxu0 0.0
        %3996 = vmatprep.subr.mxu0 0.0
        %3997 = vmatpush1.msra.mxu0 0.0
        %3998 = vmatprep.subr.mxu0 0.0
        %3999 = vmatpush1.msra.mxu0 0.0
        %4000 = vmatprep.subr.mxu0 0.0
        %4001 = vmatpush1.msra.mxu0 0.0
        %4002 = vmatprep.subr.mxu0 0.0
        %4003 = vmatpush1.msra.mxu0 0.0
        %4004 = vmatprep.subr.mxu0 0.0
        %4005 = vmatpush1.msra.mxu0 0.0
        %4006 = vmatprep.subr.mxu0 0.0
        %4007 = vmatpush1.msra.mxu0 0.0
        %4008 = vmatprep.subr.mxu0 0.0
        %4009 = vmatpush1.msra.mxu0 0.0
        %4010 = vmatprep.subr.mxu0 0.0
        %4011 = vmatpush1.msra.mxu0 0.0
        %4012 = vmatprep.subr.mxu0 0.0
        %4013 = vmatpush1.msra.mxu0 0.0
        %4014 = vmatprep.subr.mxu0 0.0
        %4015 = vmatpush1.msra.mxu0 0.0
        %4016 = vmatprep.subr.mxu0 0.0
        %4017 = vmatpush1.msra.mxu0 0.0
        %4018 = vmatprep.mubr.f32.mxu0 0.0
        %4019 = vmatmul.mubr.f32.gmra.mrb[0].mxu0 %v804
        %v4020 = vpop.f32.mrb[0].mxu0
        %v4021 = vadd.f32 0.0, %v4020
        %v4022 = vpop.f32.mrb[0].mxu0
        %4023 = vmatprep.mubr.f32.mxu0 0.0
        %4024 = vmatmul.mubr.f32.gmra.mrb[0].mxu0 %v806
        %v4025 = vpop.f32.mrb[0].mxu0
        %v4026 = vadd.f32 0.0, %v4025
        %v4027 = vpop.f32.mrb[0].mxu0
        %4028 = vmatprep.mubr.f32.mxu0 0.0
        %4029 = vmatmul.mubr.f32.gmra.mrb[0].mxu0 %v808
        %v4030 = vpop.f32.mrb[0].mxu0
        %v4031 = vadd.f32 0.0, %v4030
        %v4032 = vpop.f32.mrb[0].mxu0
        %4033 = vmatprep.mubr.f32.mxu0 0.0
        %4034 = vmatmul.mubr.f32.gmra.mrb[0].mxu0 %v810
        %v4035 = vpop.f32.mrb[0].mxu0
        %v4036 = vadd.f32 0.0, %v4035
        %v4037 = vpop.f32.mrb[0].mxu0
        %4038 = vmatprep.mubr.f32.mxu0 0.0
        %4039 = vmatmul.mubr.f32.gmra.mrb[0].mxu0 %v812
        %v4040 = vpop.f32.mrb[0].mxu0
        %v4041 = vadd.f32 0.0, %v4040
        %v4042 = vpop.f32.mrb[0].mxu0
        %4043 = vmatprep.mubr.f32.mxu0 0.0
        %4044 = vmatmul.mubr.f32.gmra.mrb[0].mxu0 %v814
        %v4045 = vpop.f32.mrb[0].mxu0
        %v4046 = vadd.f32 0.0, %v4045
        %v4047 = vpop.f32.mrb[0].mxu0
        %4048 = vmatprep.mubr.f32.mxu0 0.0
        %4049 = vmatmul.mubr.f32.gmra.mrb[0].mxu0 %v816
        %v4050 = vpop.f32.mrb[0].mxu0
        %v4051 = vadd.f32 0.0, %v4050
        %v4052 = vpop.f32.mrb[0].mxu0
        %4053 = vmatprep.mubr.f32.mxu0 0.0
        %4054 = vmatmul.mubr.f32.gmra.mrb[0].mxu0 %v818
        %v4055 = vpop.f32.mrb[0].mxu0
        %v4056 = vadd.f32 0.0, %v4055
        %v4057 = vpop.f32.mrb[0].mxu0
        %4058 = vmatprep.mubr.f32.mxu0 0.0
        %4059 = vmatmul.mubr.f32.gmra.mrb[0].mxu0 %v820
        %v4060 = vpop.f32.mrb[0].mxu0
        %v4061 = vadd.f32 0.0, %v4060
        %v4062 = vpop.f32.mrb[0].mxu0
        %4063 = vmatprep.mubr.f32.mxu0 0.0
        %4064 = vmatmul.mubr.f32.gmra.mrb[0].mxu0 %v822
        %v4065 = vpop.f32.mrb[0].mxu0
        %v4066 = vadd.f32 0.0, %v4065
        %v4067 = vpop.f32.mrb[0].mxu0
        %4068 = vmatprep.mubr.f32.mxu0 0.0
        %4069 = vmatmul.mubr.f32.gmra.mrb[0].mxu0 %v824
        %v4070 = vpop.f32.mrb[0].mxu0
        %v4071 = vadd.f32 0.0, %v4070
        %v4072 = vpop.f32.mrb[0].mxu0
        %4073 = vmatprep.mubr.f32.mxu0 0.0
        %4074 = vmatmul.mubr.f32.gmra.mrb[0].mxu0 %v826
        %v4075 = vpop.f32.mrb[0].mxu0
        %v4076 = vadd.f32 0.0, %v4075
        %v4077 = vpop.f32.mrb[0].mxu0
        %4078 = vmatprep.mubr.f32.mxu0 0.0
        %4079 = vmatmul.mubr.f32.gmra.mrb[0].mxu0 %v828
        %v4080 = vpop.f32.mrb[0].mxu0
        %v4081 = vadd.f32 0.0, %v4080
        %v4082 = vpop.f32.mrb[0].mxu0
        %4083 = vmatprep.mubr.f32.mxu0 0.0
        %4084 = vmatmul.mubr.f32.gmra.mrb[0].mxu0 %v830
        %v4085 = vpop.f32.mrb[0].mxu0
        %v4086 = vadd.f32 0.0, %v4085
        %v4087 = vpop.f32.mrb[0].mxu0
        %4088 = vmatprep.mubr.f32.mxu0 0.0
        %4089 = vmatmul.mubr.f32.gmra.mrb[0].mxu0 %v832
        %v4090 = vpop.f32.mrb[0].mxu0
        %v4091 = vadd.f32 0.0, %v4090
        %v4092 = vpop.f32.mrb[0].mxu0
        %4093 = vmatprep.mubr.f32.mxu0 0.0
        %4094 = vmatmul.mubr.f32.gmra.mrb[0].mxu0 %v834
        %v4095 = vpop.f32.mrb[0].mxu0
        %v4096 = vadd.f32 0.0, %v4095
        %v4097 = vpop.f32.mrb[0].mxu0
        %4098 = vmatprep.mubr.f32.mxu0 0.0
        %4099 = vmatmul.mubr.f32.gmra.mrb[0].mxu0 %v836
        %v4100 = vpop.f32.mrb[0].mxu0
        %v4101 = vadd.f32 0.0, %v4100
        %v4102 = vpop.f32.mrb[0].mxu0
        %4103 = vmatprep.mubr.f32.mxu0 0.0
        %4104 = vmatmul.mubr.f32.gmra.mrb[0].mxu0 %v838
        %v4105 = vpop.f32.mrb[0].mxu0
        %v4106 = vadd.f32 0.0, %v4105
        %v4107 = vpop.f32.mrb[0].mxu0
        %4108 = vmatprep.mubr.f32.mxu0 0.0
        %4109 = vmatmul.mubr.f32.gmra.mrb[0].mxu0 %v840
        %v4110 = vpop.f32.mrb[0].mxu0
        %v4111 = vadd.f32 0.0, %v4110
        %v4112 = vpop.f32.mrb[0].mxu0
        %4113 = vmatprep.mubr.f32.mxu0 0.0
        %4114 = vmatmul.mubr.f32.gmra.mrb[0].mxu0 %v842
        %v4115 = vpop.f32.mrb[0].mxu0
        %v4116 = vadd.f32 0.0, %v4115
        %v4117 = vpop.f32.mrb[0].mxu0
        %4118 = vmatprep.mubr.f32.mxu0 0.0
        %4119 = vmatmul.mubr.f32.gmra.mrb[0].mxu0 %v844
        %v4120 = vpop.f32.mrb[0].mxu0
        %v4121 = vadd.f32 0.0, %v4120
        %v4122 = vpop.f32.mrb[0].mxu0
        %4123 = vmatprep.mubr.f32.mxu0 0.0
        %4124 = vmatmul.mubr.f32.gmra.mrb[0].mxu0 %v846
        %v4125 = vpop.f32.mrb[0].mxu0
        %v4126 = vadd.f32 0.0, %v4125
        %v4127 = vpop.f32.mrb[0].mxu0
        %4128 = vmatprep.mubr.f32.mxu0 0.0
        %4129 = vmatmul.mubr.f32.gmra.mrb[0].mxu0 %v848
        %v4130 = vpop.f32.mrb[0].mxu0
        %v4131 = vadd.f32 0.0, %v4130
        %v4132 = vpop.f32.mrb[0].mxu0
        %4133 = vmatprep.mubr.f32.mxu0 0.0
        %4134 = vmatmul.mubr.f32.gmra.mrb[0].mxu0 %v850
        %v4135 = vpop.f32.mrb[0].mxu0
        %v4136 = vadd.f32 0.0, %v4135
        %v4137 = vpop.f32.mrb[0].mxu0
        %4138 = vmatprep.mubr.f32.mxu0 0.0
        %4139 = vmatmul.mubr.f32.gmra.mrb[0].mxu0 %v852
        %v4140 = vpop.f32.mrb[0].mxu0
        %v4141 = vadd.f32 0.0, %v4140
        %v4142 = vpop.f32.mrb[0].mxu0
        %4143 = vmatprep.mubr.f32.mxu0 0.0
        %4144 = vmatmul.mubr.f32.gmra.mrb[0].mxu0 %v854
        %v4145 = vpop.f32.mrb[0].mxu0
        %v4146 = vadd.f32 0.0, %v4145
        %v4147 = vpop.f32.mrb[0].mxu0
        %4148 = vmatprep.mubr.f32.mxu0 0.0
        %4149 = vmatmul.mubr.f32.gmra.mrb[0].mxu0 %v856
        %v4150 = vpop.f32.mrb[0].mxu0
        %v4151 = vadd.f32 0.0, %v4150
        %v4152 = vpop.f32.mrb[0].mxu0
        %4153 = vmatprep.mubr.f32.mxu0 0.0
        %4154 = vmatmul.mubr.f32.gmra.mrb[0].mxu0 %v858
        %v4155 = vpop.f32.mrb[0].mxu0
        %v4156 = vadd.f32 0.0, %v4155
        %v4157 = vpop.f32.mrb[0].mxu0
        %4158 = vmatprep.mubr.f32.mxu0 0.0
        %4159 = vmatmul.mubr.f32.gmra.mrb[0].mxu0 %v860
        %v4160 = vpop.f32.mrb[0].mxu0
        %v4161 = vadd.f32 0.0, %v4160
        %v4162 = vpop.f32.mrb[0].mxu0
        %4163 = vmatprep.mubr.f32.mxu0 0.0
        %4164 = vmatmul.mubr.f32.gmra.mrb[0].mxu0 %v862
        %v4165 = vpop.f32.mrb[0].mxu0
        %v4166 = vadd.f32 0.0, %v4165
        %v4167 = vpop.f32.mrb[0].mxu0
        %4168 = vmatprep.mubr.f32.mxu0 0.0
        %4169 = vmatmul.mubr.f32.gmra.mrb[0].mxu0 %v864
        %v4170 = vpop.f32.mrb[0].mxu0
        %v4171 = vadd.f32 0.0, %v4170
        %v4172 = vpop.f32.mrb[0].mxu0
        %4173 = vmatprep.mubr.f32.mxu0 0.0
        %4174 = vmatmul.mubr.f32.gmra.mrb[0].mxu0 %v866
        %v4175 = vpop.f32.mrb[0].mxu0
        %v4176 = vadd.f32 0.0, %v4175
        %v4177 = vpop.f32.mrb[0].mxu0
        %4178 = vmatprep.mubr.f32.mxu0 0.0
        %4179 = vmatmul.mubr.f32.gmra.mrb[0].mxu0 %v868
        %v4180 = vpop.f32.mrb[0].mxu0
        %v4181 = vadd.f32 0.0, %v4180
        %v4182 = vpop.f32.mrb[0].mxu0
        %4183 = vmatprep.mubr.f32.mxu0 0.0
        %4184 = vmatmul.mubr.f32.gmra.mrb[0].mxu0 %v870
        %v4185 = vpop.f32.mrb[0].mxu0
        %v4186 = vadd.f32 0.0, %v4185
        %v4187 = vpop.f32.mrb[0].mxu0
        %4188 = vmatprep.mubr.f32.mxu0 0.0
        %4189 = vmatmul.mubr.f32.gmra.mrb[0].mxu0 %v872
        %v4190 = vpop.f32.mrb[0].mxu0
        %v4191 = vadd.f32 0.0, %v4190
        %v4192 = vpop.f32.mrb[0].mxu0
        %4193 = vmatprep.mubr.f32.mxu0 0.0
        %4194 = vmatmul.mubr.f32.gmra.mrb[0].mxu0 %v874
        %v4195 = vpop.f32.mrb[0].mxu0
        %v4196 = vadd.f32 0.0, %v4195
        %v4197 = vpop.f32.mrb[0].mxu0
        %4198 = vmatprep.mubr.f32.mxu0 0.0
        %4199 = vmatmul.mubr.f32.gmra.mrb[0].mxu0 %v876
        %v4200 = vpop.f32.mrb[0].mxu0
        %v4201 = vadd.f32 0.0, %v4200
        %v4202 = vpop.f32.mrb[0].mxu0
        %4203 = vmatprep.mubr.f32.mxu0 0.0
        %4204 = vmatmul.mubr.f32.gmra.mrb[0].mxu0 %v878
        %v4205 = vpop.f32.mrb[0].mxu0
        %v4206 = vadd.f32 0.0, %v4205
        %v4207 = vpop.f32.mrb[0].mxu0
        %4208 = vmatprep.mubr.f32.mxu0 0.0
        %4209 = vmatmul.mubr.f32.gmra.mrb[0].mxu0 %v880
        %v4210 = vpop.f32.mrb[0].mxu0
        %v4211 = vadd.f32 0.0, %v4210
        %v4212 = vpop.f32.mrb[0].mxu0
        %4213 = vmatprep.mubr.f32.mxu0 0.0
        %4214 = vmatmul.mubr.f32.gmra.mrb[0].mxu0 %v882
        %v4215 = vpop.f32.mrb[0].mxu0
        %v4216 = vadd.f32 0.0, %v4215
        %v4217 = vpop.f32.mrb[0].mxu0
        %4218 = vmatprep.mubr.f32.mxu0 0.0
        %4219 = vmatmul.mubr.f32.gmra.mrb[0].mxu0 %v884
        %v4220 = vpop.f32.mrb[0].mxu0
        %v4221 = vadd.f32 0.0, %v4220
        %v4222 = vpop.f32.mrb[0].mxu0
        %4223 = vmatprep.mubr.f32.mxu0 0.0
        %4224 = vmatmul.mubr.f32.gmra.mrb[0].mxu0 %v886
        %v4225 = vpop.f32.mrb[0].mxu0
        %v4226 = vadd.f32 0.0, %v4225
        %v4227 = vpop.f32.mrb[0].mxu0
        %4228 = vmatprep.mubr.f32.mxu0 0.0
        %4229 = vmatmul.mubr.f32.gmra.mrb[0].mxu0 %v888
        %v4230 = vpop.f32.mrb[0].mxu0
        %v4231 = vadd.f32 0.0, %v4230
        %v4232 = vpop.f32.mrb[0].mxu0
        %4233 = vmatprep.mubr.f32.mxu0 0.0
        %4234 = vmatmul.mubr.f32.gmra.mrb[0].mxu0 %v890
        %v4235 = vpop.f32.mrb[0].mxu0
        %v4236 = vadd.f32 0.0, %v4235
        %v4237 = vpop.f32.mrb[0].mxu0
        %4238 = vmatprep.mubr.f32.mxu0 0.0
        %4239 = vmatmul.mubr.f32.gmra.mrb[0].mxu0 %v892
        %v4240 = vpop.f32.mrb[0].mxu0
        %v4241 = vadd.f32 0.0, %v4240
        %v4242 = vpop.f32.mrb[0].mxu0
        %4243 = vmatprep.mubr.f32.mxu0 0.0
        %4244 = vmatmul.mubr.f32.gmra.mrb[0].mxu0 %v894
        %v4245 = vpop.f32.mrb[0].mxu0
        %v4246 = vadd.f32 0.0, %v4245
        %v4247 = vpop.f32.mrb[0].mxu0
        %4248 = vmatprep.mubr.f32.mxu0 0.0
        %4249 = vmatmul.mubr.f32.gmra.mrb[0].mxu0 %v896
        %v4250 = vpop.f32.mrb[0].mxu0
        %v4251 = vadd.f32 0.0, %v4250
        %v4252 = vpop.f32.mrb[0].mxu0
        %4253 = vmatprep.mubr.f32.mxu0 0.0
        %4254 = vmatmul.mubr.f32.gmra.mrb[0].mxu0 %v898
        %v4255 = vpop.f32.mrb[0].mxu0
        %v4256 = vadd.f32 0.0, %v4255
        %v4257 = vpop.f32.mrb[0].mxu0
        %4258 = vmatprep.mubr.f32.mxu0 0.0
        %4259 = vmatmul.mubr.f32.gmra.mrb[0].mxu0 %v2727
        %v4260 = vpop.f32.mrb[0].mxu0
        %v4261 = vadd.f32 0.0, %v4260
        %v4262 = vpop.f32.mrb[0].mxu0
        %4263 = vmatprep.mubr.f32.mxu0 0.0
        %4264 = vmatmul.mubr.f32.gmra.mrb[0].mxu0 %v2729
        %v4265 = vpop.f32.mrb[0].mxu0
        %v4266 = vadd.f32 0.0, %v4265
        %v4267 = vpop.f32.mrb[0].mxu0
        %4268 = vmatprep.mubr.f32.mxu0 0.0
        %4269 = vmatmul.mubr.f32.gmra.mrb[0].mxu0 %v2731
        %v4270 = vpop.f32.mrb[0].mxu0
        %v4271 = vadd.f32 0.0, %v4270
        %v4272 = vpop.f32.mrb[0].mxu0
        %4273 = vmatprep.mubr.f32.mxu0 0.0
        %4274 = vmatmul.mubr.f32.gmra.mrb[0].mxu0 %v3945
        %v4275 = vpop.f32.mrb[0].mxu0
        %v4276 = vadd.f32 0.0, %v4275
        %v4277 = vpop.f32.mrb[0].mxu0
        %4278 = vmatprep.mubr.f32.mxu0 0.0
        %4279 = vmatmul.mubr.f32.gmra.mrb[0].mxu0 %v3947
        %v4280 = vpop.f32.mrb[0].mxu0
        %v4281 = vadd.f32 0.0, %v4280
        %v4282 = vpop.f32.mrb[0].mxu0
        %4283 = vmatprep.mubr.f32.mxu0 0.0
        %4284 = vmatmul.mubr.f32.gmra.mrb[0].mxu0 %v3949
        %v4285 = vpop.f32.mrb[0].mxu0
        %v4286 = vadd.f32 0.0, %v4285
        %v4287 = vpop.f32.mrb[0].mxu0
        %4288 = vdwg.mxu0
        %v4289 = vadd.f32 %v3881, %v4021
        %v4290 = vadd.f32 %v3882, %v4026
        %v4291 = vadd.f32 %v3883, %v4031
        %v4292 = vadd.f32 %v3884, %v4036
        %v4293 = vadd.f32 %v3885, %v4041
        %v4294 = vadd.f32 %v3886, %v4046
        %v4295 = vadd.f32 %v3887, %v4051
        %v4296 = vadd.f32 %v3888, %v4056
        %v4297 = vadd.f32 %v3889, %v4061
        %v4298 = vadd.f32 %v3890, %v4066
        %v4299 = vadd.f32 %v3891, %v4071
        %v4300 = vadd.f32 %v3892, %v4076
        %v4301 = vadd.f32 %v3893, %v4081
        %v4302 = vadd.f32 %v3894, %v4086
        %v4303 = vadd.f32 %v3895, %v4091
        %v4304 = vadd.f32 %v3896, %v4096
        %v4305 = vadd.f32 %v3897, %v4101
        %v4306 = vadd.f32 %v3898, %v4106
        %v4307 = vadd.f32 %v3899, %v4111
        %v4308 = vadd.f32 %v3900, %v4116
        %v4309 = vadd.f32 %v3901, %v4121
        %v4310 = vadd.f32 %v3902, %v4126
        %v4311 = vadd.f32 %v3903, %v4131
        %v4312 = vadd.f32 %v3904, %v4136
        %v4313 = vadd.f32 %v3905, %v4141
        %v4314 = vadd.f32 %v3906, %v4146
        %v4315 = vadd.f32 %v3907, %v4151
        %v4316 = vadd.f32 %v3908, %v4156
        %v4317 = vadd.f32 %v3909, %v4161
        %v4318 = vadd.f32 %v3910, %v4166
        %v4319 = vadd.f32 %v3911, %v4171
        %v4320 = vadd.f32 %v3912, %v4176
        %v4321 = vadd.f32 %v3913, %v4181
        %v4322 = vadd.f32 %v3914, %v4186
        %v4323 = vadd.f32 %v3915, %v4191
        %v4324 = vadd.f32 %v3916, %v4196
        %v4325 = vadd.f32 %v3917, %v4201
        %v4326 = vadd.f32 %v3918, %v4206
        %v4327 = vadd.f32 %v3919, %v4211
        %v4328 = vadd.f32 %v3920, %v4216
        %v4329 = vadd.f32 %v3921, %v4221
        %v4330 = vadd.f32 %v3922, %v4226
        %v4331 = vadd.f32 %v3923, %v4231
        %v4332 = vadd.f32 %v3924, %v4236
        %v4333 = vadd.f32 %v3925, %v4241
        %v4334 = vadd.f32 %v3926, %v4246
        %v4335 = vadd.f32 %v3927, %v4251
        %v4336 = vadd.f32 %v3928, %v4256
        %v4337 = vadd.f32 %v3929, %v4261
        %v4338 = vadd.f32 %v3930, %v4266
        %v4339 = vadd.f32 %v3931, %v4271
        %v4340 = vadd.f32 %v3932, %v4276
        %v4341 = vadd.f32 %v3933, %v4281
        %v4342 = vadd.f32 %v3934, %v4286
        %v4343 = vrot.slane %v586, 2
        %v4344 = vrot.slane %v587, 2
        %v4345 = vsel %vm1685, %v4343, %v4344
        %v4346 = vrot.slane %v588, 2
        %v4347 = vsel %vm1685, %v4344, %v4346
        %v4348 = vrot.slane %v589, 2
        %v4349 = vsel %vm1685, %v4346, %v4348
        %s4350 = scalar_lea.vmem [#allocation6], 32
        %v4351 = vld [vmem:[%s4350] sm:$0xf]
        %v4352 = vsel %vm413, %v4345, 0
        %v4354 = vsel %vm413, %v4347, 0
        %v4356 = vsel %vm413, %v4349, 0
        %v4359 = vsel %vm900, %v4351, 0
        %4361 = vmatprep.subr.mxu0 0.0
        %4362 = vmatpush1.msra.mxu0 %v4359
        %4363 = vmatprep.subr.mxu0 0.0
        %4364 = vmatpush1.msra.mxu0 0.0
        %4365 = vmatprep.subr.mxu0 0.0
        %4366 = vmatpush1.msra.mxu0 0.0
        %4367 = vmatprep.subr.mxu0 0.0
        %4368 = vmatpush1.msra.mxu0 0.0
        %4369 = vmatprep.subr.mxu0 0.0
        %4370 = vmatpush1.msra.mxu0 0.0
        %4371 = vmatprep.subr.mxu0 0.0
        %4372 = vmatpush1.msra.mxu0 0.0
        %4373 = vmatprep.subr.mxu0 0.0
        %4374 = vmatpush1.msra.mxu0 0.0
        %4375 = vmatprep.subr.mxu0 0.0
        %4376 = vmatpush1.msra.mxu0 0.0
        %4377 = vmatprep.subr.mxu0 0.0
        %4378 = vmatpush1.msra.mxu0 0.0
        %4379 = vmatprep.subr.mxu0 0.0
        %4380 = vmatpush1.msra.mxu0 0.0
        %4381 = vmatprep.subr.mxu0 0.0
        %4382 = vmatpush1.msra.mxu0 0.0
        %4383 = vmatprep.subr.mxu0 0.0
        %4384 = vmatpush1.msra.mxu0 0.0
        %4385 = vmatprep.subr.mxu0 0.0
        %4386 = vmatpush1.msra.mxu0 0.0
        %4387 = vmatprep.subr.mxu0 0.0
        %4388 = vmatpush1.msra.mxu0 0.0
        %4389 = vmatprep.subr.mxu0 0.0
        %4390 = vmatpush1.msra.mxu0 0.0
        %4391 = vmatprep.subr.mxu0 0.0
        %4392 = vmatpush1.msra.mxu0 0.0
        %4393 = vmatprep.subr.mxu0 0.0
        %4394 = vmatpush1.msra.mxu0 0.0
        %4395 = vmatprep.subr.mxu0 0.0
        %4396 = vmatpush1.msra.mxu0 0.0
        %4397 = vmatprep.subr.mxu0 0.0
        %4398 = vmatpush1.msra.mxu0 0.0
        %4399 = vmatprep.subr.mxu0 0.0
        %4400 = vmatpush1.msra.mxu0 0.0
        %4401 = vmatprep.subr.mxu0 0.0
        %4402 = vmatpush1.msra.mxu0 0.0
        %4403 = vmatprep.subr.mxu0 0.0
        %4404 = vmatpush1.msra.mxu0 0.0
        %4405 = vmatprep.subr.mxu0 0.0
        %4406 = vmatpush1.msra.mxu0 0.0
        %4407 = vmatprep.subr.mxu0 0.0
        %4408 = vmatpush1.msra.mxu0 0.0
        %4409 = vmatprep.subr.mxu0 0.0
        %4410 = vmatpush1.msra.mxu0 0.0
        %4411 = vmatprep.subr.mxu0 0.0
        %4412 = vmatpush1.msra.mxu0 0.0
        %4413 = vmatprep.subr.mxu0 0.0
        %4414 = vmatpush1.msra.mxu0 0.0
        %4415 = vmatprep.subr.mxu0 0.0
        %4416 = vmatpush1.msra.mxu0 0.0
        %4417 = vmatprep.subr.mxu0 0.0
        %4418 = vmatpush1.msra.mxu0 0.0
        %4419 = vmatprep.subr.mxu0 0.0
        %4420 = vmatpush1.msra.mxu0 0.0
        %4421 = vmatprep.subr.mxu0 0.0
        %4422 = vmatpush1.msra.mxu0 0.0
        %4423 = vmatprep.subr.mxu0 0.0
        %4424 = vmatpush1.msra.mxu0 0.0
        %4425 = vmatprep.mubr.f32.mxu0 0.0
        %4426 = vmatmul.mubr.f32.gmra.mrb[0].mxu0 %v1826
        %v4427 = vpop.f32.mrb[0].mxu0
        %v4428 = vadd.f32 0.0, %v4427
        %v4429 = vpop.f32.mrb[0].mxu0
        %4430 = vmatprep.mubr.f32.mxu0 0.0
        %4431 = vmatmul.mubr.f32.gmra.mrb[0].mxu0 %v1828
        %v4432 = vpop.f32.mrb[0].mxu0
        %v4433 = vadd.f32 0.0, %v4432
        %v4434 = vpop.f32.mrb[0].mxu0
        %4435 = vmatprep.mubr.f32.mxu0 0.0
        %4436 = vmatmul.mubr.f32.gmra.mrb[0].mxu0 %v1830
        %v4437 = vpop.f32.mrb[0].mxu0
        %v4438 = vadd.f32 0.0, %v4437
        %v4439 = vpop.f32.mrb[0].mxu0
        %4440 = vmatprep.mubr.f32.mxu0 0.0
        %4441 = vmatmul.mubr.f32.gmra.mrb[0].mxu0 %v1832
        %v4442 = vpop.f32.mrb[0].mxu0
        %v4443 = vadd.f32 0.0, %v4442
        %v4444 = vpop.f32.mrb[0].mxu0
        %4445 = vmatprep.mubr.f32.mxu0 0.0
        %4446 = vmatmul.mubr.f32.gmra.mrb[0].mxu0 %v1834
        %v4447 = vpop.f32.mrb[0].mxu0
        %v4448 = vadd.f32 0.0, %v4447
        %v4449 = vpop.f32.mrb[0].mxu0
        %4450 = vmatprep.mubr.f32.mxu0 0.0
        %4451 = vmatmul.mubr.f32.gmra.mrb[0].mxu0 %v1836
        %v4452 = vpop.f32.mrb[0].mxu0
        %v4453 = vadd.f32 0.0, %v4452
        %v4454 = vpop.f32.mrb[0].mxu0
        %4455 = vmatprep.mubr.f32.mxu0 0.0
        %4456 = vmatmul.mubr.f32.gmra.mrb[0].mxu0 %v1838
        %v4457 = vpop.f32.mrb[0].mxu0
        %v4458 = vadd.f32 0.0, %v4457
        %v4459 = vpop.f32.mrb[0].mxu0
        %4460 = vmatprep.mubr.f32.mxu0 0.0
        %4461 = vmatmul.mubr.f32.gmra.mrb[0].mxu0 %v1840
        %v4462 = vpop.f32.mrb[0].mxu0
        %v4463 = vadd.f32 0.0, %v4462
        %v4464 = vpop.f32.mrb[0].mxu0
        %4465 = vmatprep.mubr.f32.mxu0 0.0
        %4466 = vmatmul.mubr.f32.gmra.mrb[0].mxu0 %v1842
        %v4467 = vpop.f32.mrb[0].mxu0
        %v4468 = vadd.f32 0.0, %v4467
        %v4469 = vpop.f32.mrb[0].mxu0
        %4470 = vmatprep.mubr.f32.mxu0 0.0
        %4471 = vmatmul.mubr.f32.gmra.mrb[0].mxu0 %v1844
        %v4472 = vpop.f32.mrb[0].mxu0
        %v4473 = vadd.f32 0.0, %v4472
        %v4474 = vpop.f32.mrb[0].mxu0
        %4475 = vmatprep.mubr.f32.mxu0 0.0
        %4476 = vmatmul.mubr.f32.gmra.mrb[0].mxu0 %v1846
        %v4477 = vpop.f32.mrb[0].mxu0
        %v4478 = vadd.f32 0.0, %v4477
        %v4479 = vpop.f32.mrb[0].mxu0
        %4480 = vmatprep.mubr.f32.mxu0 0.0
        %4481 = vmatmul.mubr.f32.gmra.mrb[0].mxu0 %v1848
        %v4482 = vpop.f32.mrb[0].mxu0
        %v4483 = vadd.f32 0.0, %v4482
        %v4484 = vpop.f32.mrb[0].mxu0
        %4485 = vmatprep.mubr.f32.mxu0 0.0
        %4486 = vmatmul.mubr.f32.gmra.mrb[0].mxu0 %v1850
        %v4487 = vpop.f32.mrb[0].mxu0
        %v4488 = vadd.f32 0.0, %v4487
        %v4489 = vpop.f32.mrb[0].mxu0
        %4490 = vmatprep.mubr.f32.mxu0 0.0
        %4491 = vmatmul.mubr.f32.gmra.mrb[0].mxu0 %v1852
        %v4492 = vpop.f32.mrb[0].mxu0
        %v4493 = vadd.f32 0.0, %v4492
        %v4494 = vpop.f32.mrb[0].mxu0
        %4495 = vmatprep.mubr.f32.mxu0 0.0
        %4496 = vmatmul.mubr.f32.gmra.mrb[0].mxu0 %v1854
        %v4497 = vpop.f32.mrb[0].mxu0
        %v4498 = vadd.f32 0.0, %v4497
        %v4499 = vpop.f32.mrb[0].mxu0
        %4500 = vmatprep.mubr.f32.mxu0 0.0
        %4501 = vmatmul.mubr.f32.gmra.mrb[0].mxu0 %v1856
        %v4502 = vpop.f32.mrb[0].mxu0
        %v4503 = vadd.f32 0.0, %v4502
        %v4504 = vpop.f32.mrb[0].mxu0
        %4505 = vmatprep.mubr.f32.mxu0 0.0
        %4506 = vmatmul.mubr.f32.gmra.mrb[0].mxu0 %v1858
        %v4507 = vpop.f32.mrb[0].mxu0
        %v4508 = vadd.f32 0.0, %v4507
        %v4509 = vpop.f32.mrb[0].mxu0
        %4510 = vmatprep.mubr.f32.mxu0 0.0
        %4511 = vmatmul.mubr.f32.gmra.mrb[0].mxu0 %v1860
        %v4512 = vpop.f32.mrb[0].mxu0
        %v4513 = vadd.f32 0.0, %v4512
        %v4514 = vpop.f32.mrb[0].mxu0
        %4515 = vmatprep.mubr.f32.mxu0 0.0
        %4516 = vmatmul.mubr.f32.gmra.mrb[0].mxu0 %v1862
        %v4517 = vpop.f32.mrb[0].mxu0
        %v4518 = vadd.f32 0.0, %v4517
        %v4519 = vpop.f32.mrb[0].mxu0
        %4520 = vmatprep.mubr.f32.mxu0 0.0
        %4521 = vmatmul.mubr.f32.gmra.mrb[0].mxu0 %v1864
        %v4522 = vpop.f32.mrb[0].mxu0
        %v4523 = vadd.f32 0.0, %v4522
        %v4524 = vpop.f32.mrb[0].mxu0
        %4525 = vmatprep.mubr.f32.mxu0 0.0
        %4526 = vmatmul.mubr.f32.gmra.mrb[0].mxu0 %v1866
        %v4527 = vpop.f32.mrb[0].mxu0
        %v4528 = vadd.f32 0.0, %v4527
        %v4529 = vpop.f32.mrb[0].mxu0
        %4530 = vmatprep.mubr.f32.mxu0 0.0
        %4531 = vmatmul.mubr.f32.gmra.mrb[0].mxu0 %v1868
        %v4532 = vpop.f32.mrb[0].mxu0
        %v4533 = vadd.f32 0.0, %v4532
        %v4534 = vpop.f32.mrb[0].mxu0
        %4535 = vmatprep.mubr.f32.mxu0 0.0
        %4536 = vmatmul.mubr.f32.gmra.mrb[0].mxu0 %v1870
        %v4537 = vpop.f32.mrb[0].mxu0
        %v4538 = vadd.f32 0.0, %v4537
        %v4539 = vpop.f32.mrb[0].mxu0
        %4540 = vmatprep.mubr.f32.mxu0 0.0
        %4541 = vmatmul.mubr.f32.gmra.mrb[0].mxu0 %v1872
        %v4542 = vpop.f32.mrb[0].mxu0
        %v4543 = vadd.f32 0.0, %v4542
        %v4544 = vpop.f32.mrb[0].mxu0
        %4545 = vmatprep.mubr.f32.mxu0 0.0
        %4546 = vmatmul.mubr.f32.gmra.mrb[0].mxu0 %v1874
        %v4547 = vpop.f32.mrb[0].mxu0
        %v4548 = vadd.f32 0.0, %v4547
        %v4549 = vpop.f32.mrb[0].mxu0
        %4550 = vmatprep.mubr.f32.mxu0 0.0
        %4551 = vmatmul.mubr.f32.gmra.mrb[0].mxu0 %v1876
        %v4552 = vpop.f32.mrb[0].mxu0
        %v4553 = vadd.f32 0.0, %v4552
        %v4554 = vpop.f32.mrb[0].mxu0
        %4555 = vmatprep.mubr.f32.mxu0 0.0
        %4556 = vmatmul.mubr.f32.gmra.mrb[0].mxu0 %v1878
        %v4557 = vpop.f32.mrb[0].mxu0
        %v4558 = vadd.f32 0.0, %v4557
        %v4559 = vpop.f32.mrb[0].mxu0
        %4560 = vmatprep.mubr.f32.mxu0 0.0
        %4561 = vmatmul.mubr.f32.gmra.mrb[0].mxu0 %v1880
        %v4562 = vpop.f32.mrb[0].mxu0
        %v4563 = vadd.f32 0.0, %v4562
        %v4564 = vpop.f32.mrb[0].mxu0
        %4565 = vmatprep.mubr.f32.mxu0 0.0
        %4566 = vmatmul.mubr.f32.gmra.mrb[0].mxu0 %v1882
        %v4567 = vpop.f32.mrb[0].mxu0
        %v4568 = vadd.f32 0.0, %v4567
        %v4569 = vpop.f32.mrb[0].mxu0
        %4570 = vmatprep.mubr.f32.mxu0 0.0
        %4571 = vmatmul.mubr.f32.gmra.mrb[0].mxu0 %v1884
        %v4572 = vpop.f32.mrb[0].mxu0
        %v4573 = vadd.f32 0.0, %v4572
        %v4574 = vpop.f32.mrb[0].mxu0
        %4575 = vmatprep.mubr.f32.mxu0 0.0
        %4576 = vmatmul.mubr.f32.gmra.mrb[0].mxu0 %v1886
        %v4577 = vpop.f32.mrb[0].mxu0
        %v4578 = vadd.f32 0.0, %v4577
        %v4579 = vpop.f32.mrb[0].mxu0
        %4580 = vmatprep.mubr.f32.mxu0 0.0
        %4581 = vmatmul.mubr.f32.gmra.mrb[0].mxu0 %v1888
        %v4582 = vpop.f32.mrb[0].mxu0
        %v4583 = vadd.f32 0.0, %v4582
        %v4584 = vpop.f32.mrb[0].mxu0
        %4585 = vmatprep.mubr.f32.mxu0 0.0
        %4586 = vmatmul.mubr.f32.gmra.mrb[0].mxu0 %v1890
        %v4587 = vpop.f32.mrb[0].mxu0
        %v4588 = vadd.f32 0.0, %v4587
        %v4589 = vpop.f32.mrb[0].mxu0
        %4590 = vmatprep.mubr.f32.mxu0 0.0
        %4591 = vmatmul.mubr.f32.gmra.mrb[0].mxu0 %v1892
        %v4592 = vpop.f32.mrb[0].mxu0
        %v4593 = vadd.f32 0.0, %v4592
        %v4594 = vpop.f32.mrb[0].mxu0
        %4595 = vmatprep.mubr.f32.mxu0 0.0
        %4596 = vmatmul.mubr.f32.gmra.mrb[0].mxu0 %v1894
        %v4597 = vpop.f32.mrb[0].mxu0
        %v4598 = vadd.f32 0.0, %v4597
        %v4599 = vpop.f32.mrb[0].mxu0
        %4600 = vmatprep.mubr.f32.mxu0 0.0
        %4601 = vmatmul.mubr.f32.gmra.mrb[0].mxu0 %v1896
        %v4602 = vpop.f32.mrb[0].mxu0
        %v4603 = vadd.f32 0.0, %v4602
        %v4604 = vpop.f32.mrb[0].mxu0
        %4605 = vmatprep.mubr.f32.mxu0 0.0
        %4606 = vmatmul.mubr.f32.gmra.mrb[0].mxu0 %v1898
        %v4607 = vpop.f32.mrb[0].mxu0
        %v4608 = vadd.f32 0.0, %v4607
        %v4609 = vpop.f32.mrb[0].mxu0
        %4610 = vmatprep.mubr.f32.mxu0 0.0
        %4611 = vmatmul.mubr.f32.gmra.mrb[0].mxu0 %v1900
        %v4612 = vpop.f32.mrb[0].mxu0
        %v4613 = vadd.f32 0.0, %v4612
        %v4614 = vpop.f32.mrb[0].mxu0
        %4615 = vmatprep.mubr.f32.mxu0 0.0
        %4616 = vmatmul.mubr.f32.gmra.mrb[0].mxu0 %v1902
        %v4617 = vpop.f32.mrb[0].mxu0
        %v4618 = vadd.f32 0.0, %v4617
        %v4619 = vpop.f32.mrb[0].mxu0
        %4620 = vmatprep.mubr.f32.mxu0 0.0
        %4621 = vmatmul.mubr.f32.gmra.mrb[0].mxu0 %v1904
        %v4622 = vpop.f32.mrb[0].mxu0
        %v4623 = vadd.f32 0.0, %v4622
        %v4624 = vpop.f32.mrb[0].mxu0
        %4625 = vmatprep.mubr.f32.mxu0 0.0
        %4626 = vmatmul.mubr.f32.gmra.mrb[0].mxu0 %v1906
        %v4627 = vpop.f32.mrb[0].mxu0
        %v4628 = vadd.f32 0.0, %v4627
        %v4629 = vpop.f32.mrb[0].mxu0
        %4630 = vmatprep.mubr.f32.mxu0 0.0
        %4631 = vmatmul.mubr.f32.gmra.mrb[0].mxu0 %v1908
        %v4632 = vpop.f32.mrb[0].mxu0
        %v4633 = vadd.f32 0.0, %v4632
        %v4634 = vpop.f32.mrb[0].mxu0
        %4635 = vmatprep.mubr.f32.mxu0 0.0
        %4636 = vmatmul.mubr.f32.gmra.mrb[0].mxu0 %v1910
        %v4637 = vpop.f32.mrb[0].mxu0
        %v4638 = vadd.f32 0.0, %v4637
        %v4639 = vpop.f32.mrb[0].mxu0
        %4640 = vmatprep.mubr.f32.mxu0 0.0
        %4641 = vmatmul.mubr.f32.gmra.mrb[0].mxu0 %v1912
        %v4642 = vpop.f32.mrb[0].mxu0
        %v4643 = vadd.f32 0.0, %v4642
        %v4644 = vpop.f32.mrb[0].mxu0
        %4645 = vmatprep.mubr.f32.mxu0 0.0
        %4646 = vmatmul.mubr.f32.gmra.mrb[0].mxu0 %v1914
        %v4647 = vpop.f32.mrb[0].mxu0
        %v4648 = vadd.f32 0.0, %v4647
        %v4649 = vpop.f32.mrb[0].mxu0
        %4650 = vmatprep.mubr.f32.mxu0 0.0
        %4651 = vmatmul.mubr.f32.gmra.mrb[0].mxu0 %v1916
        %v4652 = vpop.f32.mrb[0].mxu0
        %v4653 = vadd.f32 0.0, %v4652
        %v4654 = vpop.f32.mrb[0].mxu0
        %4655 = vmatprep.mubr.f32.mxu0 0.0
        %4656 = vmatmul.mubr.f32.gmra.mrb[0].mxu0 %v1918
        %v4657 = vpop.f32.mrb[0].mxu0
        %v4658 = vadd.f32 0.0, %v4657
        %v4659 = vpop.f32.mrb[0].mxu0
        %4660 = vmatprep.mubr.f32.mxu0 0.0
        %4661 = vmatmul.mubr.f32.gmra.mrb[0].mxu0 %v1920
        %v4662 = vpop.f32.mrb[0].mxu0
        %v4663 = vadd.f32 0.0, %v4662
        %v4664 = vpop.f32.mrb[0].mxu0
        %4665 = vmatprep.mubr.f32.mxu0 0.0
        %4666 = vmatmul.mubr.f32.gmra.mrb[0].mxu0 %v3134
        %v4667 = vpop.f32.mrb[0].mxu0
        %v4668 = vadd.f32 0.0, %v4667
        %v4669 = vpop.f32.mrb[0].mxu0
        %4670 = vmatprep.mubr.f32.mxu0 0.0
        %4671 = vmatmul.mubr.f32.gmra.mrb[0].mxu0 %v3136
        %v4672 = vpop.f32.mrb[0].mxu0
        %v4673 = vadd.f32 0.0, %v4672
        %v4674 = vpop.f32.mrb[0].mxu0
        %4675 = vmatprep.mubr.f32.mxu0 0.0
        %4676 = vmatmul.mubr.f32.gmra.mrb[0].mxu0 %v3138
        %v4677 = vpop.f32.mrb[0].mxu0
        %v4678 = vadd.f32 0.0, %v4677
        %v4679 = vpop.f32.mrb[0].mxu0
        %4680 = vmatprep.mubr.f32.mxu0 0.0
        %4681 = vmatmul.mubr.f32.gmra.mrb[0].mxu0 %v4352
        %v4682 = vpop.f32.mrb[0].mxu0
        %v4683 = vadd.f32 0.0, %v4682
        %v4684 = vpop.f32.mrb[0].mxu0
        %4685 = vmatprep.mubr.f32.mxu0 0.0
        %4686 = vmatmul.mubr.f32.gmra.mrb[0].mxu0 %v4354
        %v4687 = vpop.f32.mrb[0].mxu0
        %v4688 = vadd.f32 0.0, %v4687
        %v4689 = vpop.f32.mrb[0].mxu0
        %4690 = vmatprep.mubr.f32.mxu0 0.0
        %4691 = vmatmul.mubr.f32.gmra.mrb[0].mxu0 %v4356
        %v4692 = vpop.f32.mrb[0].mxu0
        %v4693 = vadd.f32 0.0, %v4692
        %v4694 = vpop.f32.mrb[0].mxu0
        %4695 = vdwg.mxu0
        %v4696 = vadd.f32 %v4289, %v4428
        %v4697 = vadd.f32 %v4290, %v4433
        %v4698 = vadd.f32 %v4291, %v4438
        %v4699 = vadd.f32 %v4292, %v4443
        %v4700 = vadd.f32 %v4293, %v4448
        %v4701 = vadd.f32 %v4294, %v4453
        %v4702 = vadd.f32 %v4295, %v4458
        %v4703 = vadd.f32 %v4296, %v4463
        %v4704 = vadd.f32 %v4297, %v4468
        %v4705 = vadd.f32 %v4298, %v4473
        %v4706 = vadd.f32 %v4299, %v4478
        %v4707 = vadd.f32 %v4300, %v4483
        %v4708 = vadd.f32 %v4301, %v4488
        %v4709 = vadd.f32 %v4302, %v4493
        %v4710 = vadd.f32 %v4303, %v4498
        %v4711 = vadd.f32 %v4304, %v4503
        %v4712 = vadd.f32 %v4305, %v4508
        %v4713 = vadd.f32 %v4306, %v4513
        %v4714 = vadd.f32 %v4307, %v4518
        %v4715 = vadd.f32 %v4308, %v4523
        %v4716 = vadd.f32 %v4309, %v4528
        %v4717 = vadd.f32 %v4310, %v4533
        %v4718 = vadd.f32 %v4311, %v4538
        %v4719 = vadd.f32 %v4312, %v4543
        %v4720 = vadd.f32 %v4313, %v4548
        %v4721 = vadd.f32 %v4314, %v4553
        %v4722 = vadd.f32 %v4315, %v4558
        %v4723 = vadd.f32 %v4316, %v4563
        %v4724 = vadd.f32 %v4317, %v4568
        %v4725 = vadd.f32 %v4318, %v4573
        %v4726 = vadd.f32 %v4319, %v4578
        %v4727 = vadd.f32 %v4320, %v4583
        %v4728 = vadd.f32 %v4321, %v4588
        %v4729 = vadd.f32 %v4322, %v4593
        %v4730 = vadd.f32 %v4323, %v4598
        %v4731 = vadd.f32 %v4324, %v4603
        %v4732 = vadd.f32 %v4325, %v4608
        %v4733 = vadd.f32 %v4326, %v4613
        %v4734 = vadd.f32 %v4327, %v4618
        %v4735 = vadd.f32 %v4328, %v4623
        %v4736 = vadd.f32 %v4329, %v4628
        %v4737 = vadd.f32 %v4330, %v4633
        %v4738 = vadd.f32 %v4331, %v4638
        %v4739 = vadd.f32 %v4332, %v4643
        %v4740 = vadd.f32 %v4333, %v4648
        %v4741 = vadd.f32 %v4334, %v4653
        %v4742 = vadd.f32 %v4335, %v4658
        %v4743 = vadd.f32 %v4336, %v4663
        %v4744 = vadd.f32 %v4337, %v4668
        %v4745 = vadd.f32 %v4338, %v4673
        %v4746 = vadd.f32 %v4339, %v4678
        %v4747 = vadd.f32 %v4340, %v4683
        %v4748 = vadd.f32 %v4341, %v4688
        %v4749 = vadd.f32 %v4342, %v4693
        %v4750 = vld [vmem:[%s342] sm:$0x1]
        %v4752 = vlaneseq
        %v4753 = vshrl.u32 %v4752, 7
        %v4754 = vsub.s32 0, %v4753
        %v4755 = vrot.slane %v4750, %v4754
        %v4757 = vmul.f32 %v4696, %v4755
        %v4758 = vmul.f32 %v4697, %v4755
        %v4759 = vmul.f32 %v4698, %v4755
        %v4760 = vmul.f32 %v4699, %v4755
        %v4761 = vmul.f32 %v4700, %v4755
        %v4762 = vmul.f32 %v4701, %v4755
        %v4763 = vmul.f32 %v4702, %v4755
        %v4764 = vmul.f32 %v4703, %v4755
        %v4765 = vmul.f32 %v4704, %v4755
        %v4766 = vmul.f32 %v4705, %v4755
        %v4767 = vmul.f32 %v4706, %v4755
        %v4768 = vmul.f32 %v4707, %v4755
        %v4769 = vmul.f32 %v4708, %v4755
        %v4770 = vmul.f32 %v4709, %v4755
        %v4771 = vmul.f32 %v4710, %v4755
        %v4772 = vmul.f32 %v4711, %v4755
        %v4773 = vmul.f32 %v4712, %v4755
        %v4774 = vmul.f32 %v4713, %v4755
        %v4775 = vmul.f32 %v4714, %v4755
        %v4776 = vmul.f32 %v4715, %v4755
        %v4777 = vmul.f32 %v4716, %v4755
        %v4778 = vmul.f32 %v4717, %v4755
        %v4779 = vmul.f32 %v4718, %v4755
        %v4780 = vmul.f32 %v4719, %v4755
        %v4781 = vmul.f32 %v4720, %v4755
        %v4782 = vmul.f32 %v4721, %v4755
        %v4783 = vmul.f32 %v4722, %v4755
        %v4784 = vmul.f32 %v4723, %v4755
        %v4785 = vmul.f32 %v4724, %v4755
        %v4786 = vmul.f32 %v4725, %v4755
        %v4787 = vmul.f32 %v4726, %v4755
        %v4788 = vmul.f32 %v4727, %v4755
        %v4789 = vmul.f32 %v4728, %v4755
        %v4790 = vmul.f32 %v4729, %v4755
        %v4791 = vmul.f32 %v4730, %v4755
        %v4792 = vmul.f32 %v4731, %v4755
        %v4793 = vmul.f32 %v4732, %v4755
        %v4794 = vmul.f32 %v4733, %v4755
        %v4795 = vmul.f32 %v4734, %v4755
        %v4796 = vmul.f32 %v4735, %v4755
        %v4797 = vmul.f32 %v4736, %v4755
        %v4798 = vmul.f32 %v4737, %v4755
        %v4799 = vmul.f32 %v4738, %v4755
        %v4800 = vmul.f32 %v4739, %v4755
        %v4801 = vmul.f32 %v4740, %v4755
        %v4802 = vmul.f32 %v4741, %v4755
        %v4803 = vmul.f32 %v4742, %v4755
        %v4804 = vmul.f32 %v4743, %v4755
        %v4805 = vmul.f32 %v4744, %v4755
        %v4806 = vmul.f32 %v4745, %v4755
        %v4807 = vmul.f32 %v4746, %v4755
        %v4808 = vmul.f32 %v4747, %v4755
        %v4809 = vmul.f32 %v4748, %v4755
        %v4810 = vmul.f32 %v4749, %v4755
        %v4811 = vld [vmem:[%s350] sm:$0x1]
        %v4813 = vlaneseq
        %v4814 = vshrl.u32 %v4813, 7
        %v4815 = vsub.s32 0, %v4814
        %v4816 = vrot.slane %v4811, %v4815
        %v4818 = vadd.f32 %v4757, %v4816
        %v4819 = vadd.f32 %v4758, %v4816
        %v4820 = vadd.f32 %v4759, %v4816
        %v4821 = vadd.f32 %v4760, %v4816
        %v4822 = vadd.f32 %v4761, %v4816
        %v4823 = vadd.f32 %v4762, %v4816
        %v4824 = vadd.f32 %v4763, %v4816
        %v4825 = vadd.f32 %v4764, %v4816
        %v4826 = vadd.f32 %v4765, %v4816
        %v4827 = vadd.f32 %v4766, %v4816
        %v4828 = vadd.f32 %v4767, %v4816
        %v4829 = vadd.f32 %v4768, %v4816
        %v4830 = vadd.f32 %v4769, %v4816
        %v4831 = vadd.f32 %v4770, %v4816
        %v4832 = vadd.f32 %v4771, %v4816
        %v4833 = vadd.f32 %v4772, %v4816
        %v4834 = vadd.f32 %v4773, %v4816
        %v4835 = vadd.f32 %v4774, %v4816
        %v4836 = vadd.f32 %v4775, %v4816
        %v4837 = vadd.f32 %v4776, %v4816
        %v4838 = vadd.f32 %v4777, %v4816
        %v4839 = vadd.f32 %v4778, %v4816
        %v4840 = vadd.f32 %v4779, %v4816
        %v4841 = vadd.f32 %v4780, %v4816
        %v4842 = vadd.f32 %v4781, %v4816
        %v4843 = vadd.f32 %v4782, %v4816
        %v4844 = vadd.f32 %v4783, %v4816
        %v4845 = vadd.f32 %v4784, %v4816
        %v4846 = vadd.f32 %v4785, %v4816
        %v4847 = vadd.f32 %v4786, %v4816
        %v4848 = vadd.f32 %v4787, %v4816
        %v4849 = vadd.f32 %v4788, %v4816
        %v4850 = vadd.f32 %v4789, %v4816
        %v4851 = vadd.f32 %v4790, %v4816
        %v4852 = vadd.f32 %v4791, %v4816
        %v4853 = vadd.f32 %v4792, %v4816
        %v4854 = vadd.f32 %v4793, %v4816
        %v4855 = vadd.f32 %v4794, %v4816
        %v4856 = vadd.f32 %v4795, %v4816
        %v4857 = vadd.f32 %v4796, %v4816
        %v4858 = vadd.f32 %v4797, %v4816
        %v4859 = vadd.f32 %v4798, %v4816
        %v4860 = vadd.f32 %v4799, %v4816
        %v4861 = vadd.f32 %v4800, %v4816
        %v4862 = vadd.f32 %v4801, %v4816
        %v4863 = vadd.f32 %v4802, %v4816
        %v4864 = vadd.f32 %v4803, %v4816
        %v4865 = vadd.f32 %v4804, %v4816
        %v4866 = vadd.f32 %v4805, %v4816
        %v4867 = vadd.f32 %v4806, %v4816
        %v4868 = vadd.f32 %v4807, %v4816
        %v4869 = vadd.f32 %v4808, %v4816
        %v4870 = vadd.f32 %v4809, %v4816
        %v4871 = vadd.f32 %v4810, %v4816
        %vm4872 = vcmp.ge.f32.partialorder %v4818, 0.0
        %vm4873 = vcmp.ge.f32.partialorder %v4819, 0.0
        %vm4874 = vcmp.ge.f32.partialorder %v4820, 0.0
        %vm4875 = vcmp.ge.f32.partialorder %v4821, 0.0
        %vm4876 = vcmp.ge.f32.partialorder %v4822, 0.0
        %vm4877 = vcmp.ge.f32.partialorder %v4823, 0.0
        %vm4878 = vcmp.ge.f32.partialorder %v4824, 0.0
        %vm4879 = vcmp.ge.f32.partialorder %v4825, 0.0
        %vm4880 = vcmp.ge.f32.partialorder %v4826, 0.0
        %vm4881 = vcmp.ge.f32.partialorder %v4827, 0.0
        %vm4882 = vcmp.ge.f32.partialorder %v4828, 0.0
        %vm4883 = vcmp.ge.f32.partialorder %v4829, 0.0
        %vm4884 = vcmp.ge.f32.partialorder %v4830, 0.0
        %vm4885 = vcmp.ge.f32.partialorder %v4831, 0.0
        %vm4886 = vcmp.ge.f32.partialorder %v4832, 0.0
        %vm4887 = vcmp.ge.f32.partialorder %v4833, 0.0
        %vm4888 = vcmp.ge.f32.partialorder %v4834, 0.0
        %vm4889 = vcmp.ge.f32.partialorder %v4835, 0.0
        %vm4890 = vcmp.ge.f32.partialorder %v4836, 0.0
        %vm4891 = vcmp.ge.f32.partialorder %v4837, 0.0
        %vm4892 = vcmp.ge.f32.partialorder %v4838, 0.0
        %vm4893 = vcmp.ge.f32.partialorder %v4839, 0.0
        %vm4894 = vcmp.ge.f32.partialorder %v4840, 0.0
        %vm4895 = vcmp.ge.f32.partialorder %v4841, 0.0
        %vm4896 = vcmp.ge.f32.partialorder %v4842, 0.0
        %vm4897 = vcmp.ge.f32.partialorder %v4843, 0.0
        %vm4898 = vcmp.ge.f32.partialorder %v4844, 0.0
        %vm4899 = vcmp.ge.f32.partialorder %v4845, 0.0
        %vm4900 = vcmp.ge.f32.partialorder %v4846, 0.0
        %vm4901 = vcmp.ge.f32.partialorder %v4847, 0.0
        %vm4902 = vcmp.ge.f32.partialorder %v4848, 0.0
        %vm4903 = vcmp.ge.f32.partialorder %v4849, 0.0
        %vm4904 = vcmp.ge.f32.partialorder %v4850, 0.0
        %vm4905 = vcmp.ge.f32.partialorder %v4851, 0.0
        %vm4906 = vcmp.ge.f32.partialorder %v4852, 0.0
        %vm4907 = vcmp.ge.f32.partialorder %v4853, 0.0
        %vm4908 = vcmp.ge.f32.partialorder %v4854, 0.0
        %vm4909 = vcmp.ge.f32.partialorder %v4855, 0.0
        %vm4910 = vcmp.ge.f32.partialorder %v4856, 0.0
        %vm4911 = vcmp.ge.f32.partialorder %v4857, 0.0
        %vm4912 = vcmp.ge.f32.partialorder %v4858, 0.0
        %vm4913 = vcmp.ge.f32.partialorder %v4859, 0.0
        %vm4914 = vcmp.ge.f32.partialorder %v4860, 0.0
        %vm4915 = vcmp.ge.f32.partialorder %v4861, 0.0
        %vm4916 = vcmp.ge.f32.partialorder %v4862, 0.0
        %vm4917 = vcmp.ge.f32.partialorder %v4863, 0.0
        %vm4918 = vcmp.ge.f32.partialorder %v4864, 0.0
        %vm4919 = vcmp.ge.f32.partialorder %v4865, 0.0
        %vm4920 = vcmp.ge.f32.partialorder %v4866, 0.0
        %vm4921 = vcmp.ge.f32.partialorder %v4867, 0.0
        %vm4922 = vcmp.ge.f32.partialorder %v4868, 0.0
        %vm4923 = vcmp.ge.f32.partialorder %v4869, 0.0
        %vm4924 = vcmp.ge.f32.partialorder %v4870, 0.0
        %vm4925 = vcmp.ge.f32.partialorder %v4871, 0.0
        %v4926 = vmul.f32 %v4818, 0.2
        %v4927 = vmul.f32 %v4819, 0.2
        %v4928 = vmul.f32 %v4820, 0.2
        %v4929 = vmul.f32 %v4821, 0.2
        %v4930 = vmul.f32 %v4822, 0.2
        %v4931 = vmul.f32 %v4823, 0.2
        %v4932 = vmul.f32 %v4824, 0.2
        %v4933 = vmul.f32 %v4825, 0.2
        %v4934 = vmul.f32 %v4826, 0.2
        %v4935 = vmul.f32 %v4827, 0.2
        %v4936 = vmul.f32 %v4828, 0.2
        %v4937 = vmul.f32 %v4829, 0.2
        %v4938 = vmul.f32 %v4830, 0.2
        %v4939 = vmul.f32 %v4831, 0.2
        %v4940 = vmul.f32 %v4832, 0.2
        %v4941 = vmul.f32 %v4833, 0.2
        %v4942 = vmul.f32 %v4834, 0.2
        %v4943 = vmul.f32 %v4835, 0.2
        %v4944 = vmul.f32 %v4836, 0.2
        %v4945 = vmul.f32 %v4837, 0.2
        %v4946 = vmul.f32 %v4838, 0.2
        %v4947 = vmul.f32 %v4839, 0.2
        %v4948 = vmul.f32 %v4840, 0.2
        %v4949 = vmul.f32 %v4841, 0.2
        %v4950 = vmul.f32 %v4842, 0.2
        %v4951 = vmul.f32 %v4843, 0.2
        %v4952 = vmul.f32 %v4844, 0.2
        %v4953 = vmul.f32 %v4845, 0.2
        %v4954 = vmul.f32 %v4846, 0.2
        %v4955 = vmul.f32 %v4847, 0.2
        %v4956 = vmul.f32 %v4848, 0.2
        %v4957 = vmul.f32 %v4849, 0.2
        %v4958 = vmul.f32 %v4850, 0.2
        %v4959 = vmul.f32 %v4851, 0.2
        %v4960 = vmul.f32 %v4852, 0.2
        %v4961 = vmul.f32 %v4853, 0.2
        %v4962 = vmul.f32 %v4854, 0.2
        %v4963 = vmul.f32 %v4855, 0.2
        %v4964 = vmul.f32 %v4856, 0.2
        %v4965 = vmul.f32 %v4857, 0.2
        %v4966 = vmul.f32 %v4858, 0.2
        %v4967 = vmul.f32 %v4859, 0.2
        %v4968 = vmul.f32 %v4860, 0.2
        %v4969 = vmul.f32 %v4861, 0.2
        %v4970 = vmul.f32 %v4862, 0.2
        %v4971 = vmul.f32 %v4863, 0.2
        %v4972 = vmul.f32 %v4864, 0.2
        %v4973 = vmul.f32 %v4865, 0.2
        %v4974 = vmul.f32 %v4866, 0.2
        %v4975 = vmul.f32 %v4867, 0.2
        %v4976 = vmul.f32 %v4868, 0.2
        %v4977 = vmul.f32 %v4869, 0.2
        %v4978 = vmul.f32 %v4870, 0.2
        %v4979 = vmul.f32 %v4871, 0.2
        %v4980 = vsel %vm4872, %v4818, %v4926
        %v4981 = vsel %vm4873, %v4819, %v4927
        %v4982 = vsel %vm4874, %v4820, %v4928
        %v4983 = vsel %vm4875, %v4821, %v4929
        %v4984 = vsel %vm4876, %v4822, %v4930
        %v4985 = vsel %vm4877, %v4823, %v4931
        %v4986 = vsel %vm4878, %v4824, %v4932
        %v4987 = vsel %vm4879, %v4825, %v4933
        %v4988 = vsel %vm4880, %v4826, %v4934
        %v4989 = vsel %vm4881, %v4827, %v4935
        %v4990 = vsel %vm4882, %v4828, %v4936
        %v4991 = vsel %vm4883, %v4829, %v4937
        %v4992 = vsel %vm4884, %v4830, %v4938
        %v4993 = vsel %vm4885, %v4831, %v4939
        %v4994 = vsel %vm4886, %v4832, %v4940
        %v4995 = vsel %vm4887, %v4833, %v4941
        %v4996 = vsel %vm4888, %v4834, %v4942
        %v4997 = vsel %vm4889, %v4835, %v4943
        %v4998 = vsel %vm4890, %v4836, %v4944
        %v4999 = vsel %vm4891, %v4837, %v4945
        %v5000 = vsel %vm4892, %v4838, %v4946
        %v5001 = vsel %vm4893, %v4839, %v4947
        %v5002 = vsel %vm4894, %v4840, %v4948
        %v5003 = vsel %vm4895, %v4841, %v4949
        %v5004 = vsel %vm4896, %v4842, %v4950
        %v5005 = vsel %vm4897, %v4843, %v4951
        %v5006 = vsel %vm4898, %v4844, %v4952
        %v5007 = vsel %vm4899, %v4845, %v4953
        %v5008 = vsel %vm4900, %v4846, %v4954
        %v5009 = vsel %vm4901, %v4847, %v4955
        %v5010 = vsel %vm4902, %v4848, %v4956
        %v5011 = vsel %vm4903, %v4849, %v4957
        %v5012 = vsel %vm4904, %v4850, %v4958
        %v5013 = vsel %vm4905, %v4851, %v4959
        %v5014 = vsel %vm4906, %v4852, %v4960
        %v5015 = vsel %vm4907, %v4853, %v4961
        %v5016 = vsel %vm4908, %v4854, %v4962
        %v5017 = vsel %vm4909, %v4855, %v4963
        %v5018 = vsel %vm4910, %v4856, %v4964
        %v5019 = vsel %vm4911, %v4857, %v4965
        %v5020 = vsel %vm4912, %v4858, %v4966
        %v5021 = vsel %vm4913, %v4859, %v4967
        %v5022 = vsel %vm4914, %v4860, %v4968
        %v5023 = vsel %vm4915, %v4861, %v4969
        %v5024 = vsel %vm4916, %v4862, %v4970
        %v5025 = vsel %vm4917, %v4863, %v4971
        %v5026 = vsel %vm4918, %v4864, %v4972
        %v5027 = vsel %vm4919, %v4865, %v4973
        %v5028 = vsel %vm4920, %v4866, %v4974
        %v5029 = vsel %vm4921, %v4867, %v4975
        %v5030 = vsel %vm4922, %v4868, %v4976
        %v5031 = vsel %vm4923, %v4869, %v4977
        %v5032 = vsel %vm4924, %v4870, %v4978
        %v5033 = vsel %vm4925, %v4871, %v4979
        %s5034 = ssub.s32 %s391, 1
        %v5035 = vstv %s5034
        %v5036 = vadd.s32 %v5035, 1
        %v5037 = vadd.s32 %v5035, 2
        %v5038 = vadd.s32 %v5035, 3
        %v5039 = vadd.s32 %v5035, 4
        %v5040 = vadd.s32 %v5035, 5
        %v5041 = vadd.s32 %v5035, 6
        %v5042 = vadd.s32 %v5035, 7
        %v5043 = vadd.s32 %v5035, 8
        %v5044 = vadd.s32 %v5035, 9
        %v5045 = vadd.s32 %v5035, 10
        %v5046 = vadd.s32 %v5035, 11
        %v5047 = vadd.s32 %v5035, 12
        %v5048 = vadd.s32 %v5035, 13
        %v5049 = vadd.s32 %v5035, 14
        %v5050 = vadd.s32 %v5035, 15
        %v5051 = vadd.s32 %v5035, 16
        %v5052 = vadd.s32 %v5035, 17
        %v5053 = vlaneseq
        %v5054 = vshrl.u32 %v5053, 7
        %v5055 = vadd.s32 %v5054, 8
        %v5056 = vadd.s32 %v5054, 16
        %v5057 = vadd.s32 %v5054, 4294967295
        %v5058 = vadd.s32 %v5055, 4294967295
        %v5059 = vadd.s32 %v5056, 4294967295
        %vm5060 = vcmp.ge.s32.totalorder %v5035, 0
        %vm5061 = vcmp.ge.s32.totalorder %v5036, 0
        %vm5062 = vcmp.ge.s32.totalorder %v5037, 0
        %vm5063 = vcmp.ge.s32.totalorder %v5038, 0
        %vm5064 = vcmp.ge.s32.totalorder %v5039, 0
        %vm5065 = vcmp.ge.s32.totalorder %v5040, 0
        %vm5066 = vcmp.ge.s32.totalorder %v5041, 0
        %vm5067 = vcmp.ge.s32.totalorder %v5042, 0
        %vm5068 = vcmp.ge.s32.totalorder %v5043, 0
        %vm5069 = vcmp.ge.s32.totalorder %v5044, 0
        %vm5070 = vcmp.ge.s32.totalorder %v5045, 0
        %vm5071 = vcmp.ge.s32.totalorder %v5046, 0
        %vm5072 = vcmp.ge.s32.totalorder %v5047, 0
        %vm5073 = vcmp.ge.s32.totalorder %v5048, 0
        %vm5074 = vcmp.ge.s32.totalorder %v5049, 0
        %vm5075 = vcmp.ge.s32.totalorder %v5050, 0
        %vm5076 = vcmp.ge.s32.totalorder %v5051, 0
        %vm5077 = vcmp.ge.s32.totalorder %v5052, 0
        %vm5078 = vcmp.lt.s32.totalorder %v5035, 16
        %vm5079 = vcmp.lt.s32.totalorder %v5036, 16
        %vm5080 = vcmp.lt.s32.totalorder %v5037, 16
        %vm5081 = vcmp.lt.s32.totalorder %v5038, 16
        %vm5082 = vcmp.lt.s32.totalorder %v5039, 16
        %vm5083 = vcmp.lt.s32.totalorder %v5040, 16
        %vm5084 = vcmp.lt.s32.totalorder %v5041, 16
        %vm5085 = vcmp.lt.s32.totalorder %v5042, 16
        %vm5086 = vcmp.lt.s32.totalorder %v5043, 16
        %vm5087 = vcmp.lt.s32.totalorder %v5044, 16
        %vm5088 = vcmp.lt.s32.totalorder %v5045, 16
        %vm5089 = vcmp.lt.s32.totalorder %v5046, 16
        %vm5090 = vcmp.lt.s32.totalorder %v5047, 16
        %vm5091 = vcmp.lt.s32.totalorder %v5048, 16
        %vm5092 = vcmp.lt.s32.totalorder %v5049, 16
        %vm5093 = vcmp.lt.s32.totalorder %v5050, 16
        %vm5094 = vcmp.lt.s32.totalorder %v5051, 16
        %vm5095 = vcmp.lt.s32.totalorder %v5052, 16
        %vm5096 = vmand %vm5060, %vm5078
        %vm5097 = vmand %vm5061, %vm5079
        %vm5098 = vmand %vm5062, %vm5080
        %vm5099 = vmand %vm5063, %vm5081
        %vm5100 = vmand %vm5064, %vm5082
        %vm5101 = vmand %vm5065, %vm5083
        %vm5102 = vmand %vm5066, %vm5084
        %vm5103 = vmand %vm5067, %vm5085
        %vm5104 = vmand %vm5068, %vm5086
        %vm5105 = vmand %vm5069, %vm5087
        %vm5106 = vmand %vm5070, %vm5088
        %vm5107 = vmand %vm5071, %vm5089
        %vm5108 = vmand %vm5072, %vm5090
        %vm5109 = vmand %vm5073, %vm5091
        %vm5110 = vmand %vm5074, %vm5092
        %vm5111 = vmand %vm5075, %vm5093
        %vm5112 = vmand %vm5076, %vm5094
        %vm5113 = vmand %vm5077, %vm5095
        %vm5114 = vcmp.ge.s32.totalorder %v5057, 0
        %vm5115 = vcmp.ge.s32.totalorder %v5058, 0
        %vm5116 = vcmp.ge.s32.totalorder %v5059, 0
        %vm5117 = vmand %vm5096, %vm5114
        %vm5118 = vmand %vm5096, %vm5115
        %vm5119 = vmand %vm5096, %vm5116
        %vm5120 = vmand %vm5097, %vm5114
        %vm5121 = vmand %vm5097, %vm5115
        %vm5122 = vmand %vm5097, %vm5116
        %vm5123 = vmand %vm5098, %vm5114
        %vm5124 = vmand %vm5098, %vm5115
        %vm5125 = vmand %vm5098, %vm5116
        %vm5126 = vmand %vm5099, %vm5114
        %vm5127 = vmand %vm5099, %vm5115
        %vm5128 = vmand %vm5099, %vm5116
        %vm5129 = vmand %vm5100, %vm5114
        %vm5130 = vmand %vm5100, %vm5115
        %vm5131 = vmand %vm5100, %vm5116
        %vm5132 = vmand %vm5101, %vm5114
        %vm5133 = vmand %vm5101, %vm5115
        %vm5134 = vmand %vm5101, %vm5116
        %vm5135 = vmand %vm5102, %vm5114
        %vm5136 = vmand %vm5102, %vm5115
        %vm5137 = vmand %vm5102, %vm5116
        %vm5138 = vmand %vm5103, %vm5114
        %vm5139 = vmand %vm5103, %vm5115
        %vm5140 = vmand %vm5103, %vm5116
        %vm5141 = vmand %vm5104, %vm5114
        %vm5142 = vmand %vm5104, %vm5115
        %vm5143 = vmand %vm5104, %vm5116
        %vm5144 = vmand %vm5105, %vm5114
        %vm5145 = vmand %vm5105, %vm5115
        %vm5146 = vmand %vm5105, %vm5116
        %vm5147 = vmand %vm5106, %vm5114
        %vm5148 = vmand %vm5106, %vm5115
        %vm5149 = vmand %vm5106, %vm5116
        %vm5150 = vmand %vm5107, %vm5114
        %vm5151 = vmand %vm5107, %vm5115
        %vm5152 = vmand %vm5107, %vm5116
        %vm5153 = vmand %vm5108, %vm5114
        %vm5154 = vmand %vm5108, %vm5115
        %vm5155 = vmand %vm5108, %vm5116
        %vm5156 = vmand %vm5109, %vm5114
        %vm5157 = vmand %vm5109, %vm5115
        %vm5158 = vmand %vm5109, %vm5116
        %vm5159 = vmand %vm5110, %vm5114
        %vm5160 = vmand %vm5110, %vm5115
        %vm5161 = vmand %vm5110, %vm5116
        %vm5162 = vmand %vm5111, %vm5114
        %vm5163 = vmand %vm5111, %vm5115
        %vm5164 = vmand %vm5111, %vm5116
        %vm5165 = vmand %vm5112, %vm5114
        %vm5166 = vmand %vm5112, %vm5115
        %vm5167 = vmand %vm5112, %vm5116
        %vm5168 = vmand %vm5113, %vm5114
        %vm5169 = vmand %vm5113, %vm5115
        %vm5170 = vmand %vm5113, %vm5116
        %vm5171 = vcmp.lt.s32.totalorder %v5057, 16
        %vm5172 = vcmp.lt.s32.totalorder %v5058, 16
        %vm5173 = vcmp.lt.s32.totalorder %v5059, 16
        %vm5174 = vmand %vm5117, %vm5171
        %vm5175 = vmand %vm5118, %vm5172
        %vm5176 = vmand %vm5119, %vm5173
        %vm5177 = vmand %vm5120, %vm5171
        %vm5178 = vmand %vm5121, %vm5172
        %vm5179 = vmand %vm5122, %vm5173
        %vm5180 = vmand %vm5123, %vm5171
        %vm5181 = vmand %vm5124, %vm5172
        %vm5182 = vmand %vm5125, %vm5173
        %vm5183 = vmand %vm5126, %vm5171
        %vm5184 = vmand %vm5127, %vm5172
        %vm5185 = vmand %vm5128, %vm5173
        %vm5186 = vmand %vm5129, %vm5171
        %vm5187 = vmand %vm5130, %vm5172
        %vm5188 = vmand %vm5131, %vm5173
        %vm5189 = vmand %vm5132, %vm5171
        %vm5190 = vmand %vm5133, %vm5172
        %vm5191 = vmand %vm5134, %vm5173
        %vm5192 = vmand %vm5135, %vm5171
        %vm5193 = vmand %vm5136, %vm5172
        %vm5194 = vmand %vm5137, %vm5173
        %vm5195 = vmand %vm5138, %vm5171
        %vm5196 = vmand %vm5139, %vm5172
        %vm5197 = vmand %vm5140, %vm5173
        %vm5198 = vmand %vm5141, %vm5171
        %vm5199 = vmand %vm5142, %vm5172
        %vm5200 = vmand %vm5143, %vm5173
        %vm5201 = vmand %vm5144, %vm5171
        %vm5202 = vmand %vm5145, %vm5172
        %vm5203 = vmand %vm5146, %vm5173
        %vm5204 = vmand %vm5147, %vm5171
        %vm5205 = vmand %vm5148, %vm5172
        %vm5206 = vmand %vm5149, %vm5173
        %vm5207 = vmand %vm5150, %vm5171
        %vm5208 = vmand %vm5151, %vm5172
        %vm5209 = vmand %vm5152, %vm5173
        %vm5210 = vmand %vm5153, %vm5171
        %vm5211 = vmand %vm5154, %vm5172
        %vm5212 = vmand %vm5155, %vm5173
        %vm5213 = vmand %vm5156, %vm5171
        %vm5214 = vmand %vm5157, %vm5172
        %vm5215 = vmand %vm5158, %vm5173
        %vm5216 = vmand %vm5159, %vm5171
        %vm5217 = vmand %vm5160, %vm5172
        %vm5218 = vmand %vm5161, %vm5173
        %vm5219 = vmand %vm5162, %vm5171
        %vm5220 = vmand %vm5163, %vm5172
        %vm5221 = vmand %vm5164, %vm5173
        %vm5222 = vmand %vm5165, %vm5171
        %vm5223 = vmand %vm5166, %vm5172
        %vm5224 = vmand %vm5167, %vm5173
        %vm5225 = vmand %vm5168, %vm5171
        %vm5226 = vmand %vm5169, %vm5172
        %vm5227 = vmand %vm5170, %vm5173
        %v5228 = vsel %vm5174, 1, 0
        %v5229 = vsel %vm5175, 1, 0
        %v5230 = vsel %vm5176, 1, 0
        %v5231 = vsel %vm5177, 1, 0
        %v5232 = vsel %vm5178, 1, 0
        %v5233 = vsel %vm5179, 1, 0
        %v5234 = vsel %vm5180, 1, 0
        %v5235 = vsel %vm5181, 1, 0
        %v5236 = vsel %vm5182, 1, 0
        %v5237 = vsel %vm5183, 1, 0
        %v5238 = vsel %vm5184, 1, 0
        %v5239 = vsel %vm5185, 1, 0
        %v5240 = vsel %vm5186, 1, 0
        %v5241 = vsel %vm5187, 1, 0
        %v5242 = vsel %vm5188, 1, 0
        %v5243 = vsel %vm5189, 1, 0
        %v5244 = vsel %vm5190, 1, 0
        %v5245 = vsel %vm5191, 1, 0
        %v5246 = vsel %vm5192, 1, 0
        %v5247 = vsel %vm5193, 1, 0
        %v5248 = vsel %vm5194, 1, 0
        %v5249 = vsel %vm5195, 1, 0
        %v5250 = vsel %vm5196, 1, 0
        %v5251 = vsel %vm5197, 1, 0
        %v5252 = vsel %vm5198, 1, 0
        %v5253 = vsel %vm5199, 1, 0
        %v5254 = vsel %vm5200, 1, 0
        %v5255 = vsel %vm5201, 1, 0
        %v5256 = vsel %vm5202, 1, 0
        %v5257 = vsel %vm5203, 1, 0
        %v5258 = vsel %vm5204, 1, 0
        %v5259 = vsel %vm5205, 1, 0
        %v5260 = vsel %vm5206, 1, 0
        %v5261 = vsel %vm5207, 1, 0
        %v5262 = vsel %vm5208, 1, 0
        %v5263 = vsel %vm5209, 1, 0
        %v5264 = vsel %vm5210, 1, 0
        %v5265 = vsel %vm5211, 1, 0
        %v5266 = vsel %vm5212, 1, 0
        %v5267 = vsel %vm5213, 1, 0
        %v5268 = vsel %vm5214, 1, 0
        %v5269 = vsel %vm5215, 1, 0
        %v5270 = vsel %vm5216, 1, 0
        %v5271 = vsel %vm5217, 1, 0
        %v5272 = vsel %vm5218, 1, 0
        %v5273 = vsel %vm5219, 1, 0
        %v5274 = vsel %vm5220, 1, 0
        %v5275 = vsel %vm5221, 1, 0
        %v5276 = vsel %vm5222, 1, 0
        %v5277 = vsel %vm5223, 1, 0
        %v5278 = vsel %vm5224, 1, 0
        %v5279 = vsel %vm5225, 1, 0
        %v5280 = vsel %vm5226, 1, 0
        %v5281 = vsel %vm5227, 1, 0
        %vm5282 = vcmp.eq.s32.totalorder %v5228, 1
        %vm5283 = vcmp.eq.s32.totalorder %v5229, 1
        %vm5284 = vcmp.eq.s32.totalorder %v5230, 1
        %vm5285 = vcmp.eq.s32.totalorder %v5231, 1
        %vm5286 = vcmp.eq.s32.totalorder %v5232, 1
        %vm5287 = vcmp.eq.s32.totalorder %v5233, 1
        %vm5288 = vcmp.eq.s32.totalorder %v5234, 1
        %vm5289 = vcmp.eq.s32.totalorder %v5235, 1
        %vm5290 = vcmp.eq.s32.totalorder %v5236, 1
        %vm5291 = vcmp.eq.s32.totalorder %v5237, 1
        %vm5292 = vcmp.eq.s32.totalorder %v5238, 1
        %vm5293 = vcmp.eq.s32.totalorder %v5239, 1
        %vm5294 = vcmp.eq.s32.totalorder %v5240, 1
        %vm5295 = vcmp.eq.s32.totalorder %v5241, 1
        %vm5296 = vcmp.eq.s32.totalorder %v5242, 1
        %vm5297 = vcmp.eq.s32.totalorder %v5243, 1
        %vm5298 = vcmp.eq.s32.totalorder %v5244, 1
        %vm5299 = vcmp.eq.s32.totalorder %v5245, 1
        %vm5300 = vcmp.eq.s32.totalorder %v5246, 1
        %vm5301 = vcmp.eq.s32.totalorder %v5247, 1
        %vm5302 = vcmp.eq.s32.totalorder %v5248, 1
        %vm5303 = vcmp.eq.s32.totalorder %v5249, 1
        %vm5304 = vcmp.eq.s32.totalorder %v5250, 1
        %vm5305 = vcmp.eq.s32.totalorder %v5251, 1
        %vm5306 = vcmp.eq.s32.totalorder %v5252, 1
        %vm5307 = vcmp.eq.s32.totalorder %v5253, 1
        %vm5308 = vcmp.eq.s32.totalorder %v5254, 1
        %vm5309 = vcmp.eq.s32.totalorder %v5255, 1
        %vm5310 = vcmp.eq.s32.totalorder %v5256, 1
        %vm5311 = vcmp.eq.s32.totalorder %v5257, 1
        %vm5312 = vcmp.eq.s32.totalorder %v5258, 1
        %vm5313 = vcmp.eq.s32.totalorder %v5259, 1
        %vm5314 = vcmp.eq.s32.totalorder %v5260, 1
        %vm5315 = vcmp.eq.s32.totalorder %v5261, 1
        %vm5316 = vcmp.eq.s32.totalorder %v5262, 1
        %vm5317 = vcmp.eq.s32.totalorder %v5263, 1
        %vm5318 = vcmp.eq.s32.totalorder %v5264, 1
        %vm5319 = vcmp.eq.s32.totalorder %v5265, 1
        %vm5320 = vcmp.eq.s32.totalorder %v5266, 1
        %vm5321 = vcmp.eq.s32.totalorder %v5267, 1
        %vm5322 = vcmp.eq.s32.totalorder %v5268, 1
        %vm5323 = vcmp.eq.s32.totalorder %v5269, 1
        %vm5324 = vcmp.eq.s32.totalorder %v5270, 1
        %vm5325 = vcmp.eq.s32.totalorder %v5271, 1
        %vm5326 = vcmp.eq.s32.totalorder %v5272, 1
        %vm5327 = vcmp.eq.s32.totalorder %v5273, 1
        %vm5328 = vcmp.eq.s32.totalorder %v5274, 1
        %vm5329 = vcmp.eq.s32.totalorder %v5275, 1
        %vm5330 = vcmp.eq.s32.totalorder %v5276, 1
        %vm5331 = vcmp.eq.s32.totalorder %v5277, 1
        %vm5332 = vcmp.eq.s32.totalorder %v5278, 1
        %vm5333 = vcmp.eq.s32.totalorder %v5279, 1
        %vm5334 = vcmp.eq.s32.totalorder %v5280, 1
        %vm5335 = vcmp.eq.s32.totalorder %v5281, 1
        %v5336 = vsel %vm5282, %v4980, 0.0
        %v5337 = vsel %vm5283, %v4981, 0.0
        %v5338 = vsel %vm5284, %v4982, 0.0
        %v5339 = vsel %vm5285, %v4983, 0.0
        %v5340 = vsel %vm5286, %v4984, 0.0
        %v5341 = vsel %vm5287, %v4985, 0.0
        %v5342 = vsel %vm5288, %v4986, 0.0
        %v5343 = vsel %vm5289, %v4987, 0.0
        %v5344 = vsel %vm5290, %v4988, 0.0
        %v5345 = vsel %vm5291, %v4989, 0.0
        %v5346 = vsel %vm5292, %v4990, 0.0
        %v5347 = vsel %vm5293, %v4991, 0.0
        %v5348 = vsel %vm5294, %v4992, 0.0
        %v5349 = vsel %vm5295, %v4993, 0.0
        %v5350 = vsel %vm5296, %v4994, 0.0
        %v5351 = vsel %vm5297, %v4995, 0.0
        %v5352 = vsel %vm5298, %v4996, 0.0
        %v5353 = vsel %vm5299, %v4997, 0.0
        %v5354 = vsel %vm5300, %v4998, 0.0
        %v5355 = vsel %vm5301, %v4999, 0.0
        %v5356 = vsel %vm5302, %v5000, 0.0
        %v5357 = vsel %vm5303, %v5001, 0.0
        %v5358 = vsel %vm5304, %v5002, 0.0
        %v5359 = vsel %vm5305, %v5003, 0.0
        %v5360 = vsel %vm5306, %v5004, 0.0
        %v5361 = vsel %vm5307, %v5005, 0.0
        %v5362 = vsel %vm5308, %v5006, 0.0
        %v5363 = vsel %vm5309, %v5007, 0.0
        %v5364 = vsel %vm5310, %v5008, 0.0
        %v5365 = vsel %vm5311, %v5009, 0.0
        %v5366 = vsel %vm5312, %v5010, 0.0
        %v5367 = vsel %vm5313, %v5011, 0.0
        %v5368 = vsel %vm5314, %v5012, 0.0
        %v5369 = vsel %vm5315, %v5013, 0.0
        %v5370 = vsel %vm5316, %v5014, 0.0
        %v5371 = vsel %vm5317, %v5015, 0.0
        %v5372 = vsel %vm5318, %v5016, 0.0
        %v5373 = vsel %vm5319, %v5017, 0.0
        %v5374 = vsel %vm5320, %v5018, 0.0
        %v5375 = vsel %vm5321, %v5019, 0.0
        %v5376 = vsel %vm5322, %v5020, 0.0
        %v5377 = vsel %vm5323, %v5021, 0.0
        %v5378 = vsel %vm5324, %v5022, 0.0
        %v5379 = vsel %vm5325, %v5023, 0.0
        %v5380 = vsel %vm5326, %v5024, 0.0
        %v5381 = vsel %vm5327, %v5025, 0.0
        %v5382 = vsel %vm5328, %v5026, 0.0
        %v5383 = vsel %vm5329, %v5027, 0.0
        %v5384 = vsel %vm5330, %v5028, 0.0
        %v5385 = vsel %vm5331, %v5029, 0.0
        %v5386 = vsel %vm5332, %v5030, 0.0
        %v5387 = vsel %vm5333, %v5031, 0.0
        %v5388 = vsel %vm5334, %v5032, 0.0
        %v5389 = vsel %vm5335, %v5033, 0.0
        %v5390 = vld [vmem:[#allocation8] sm:$0xff]
        %v5391 = vld [vmem:[#allocation8 + $0x8] sm:$0xff]
        %v5392 = vld [vmem:[#allocation8 + $0x10] sm:$0xff]
        %v5393 = vld [vmem:[#allocation8 + $0x18] sm:$0xff]
        %v5394 = vld [vmem:[#allocation8 + $0x20] sm:$0xff]
        %v5395 = vld [vmem:[#allocation8 + $0x28] sm:$0xff]
        %v5396 = vld [vmem:[#allocation8 + $0x30] sm:$0xff]
        %v5397 = vld [vmem:[#allocation8 + $0x38] sm:$0xff]
        %v5398 = vld [vmem:[#allocation8 + $0x40] sm:$0xff]
        %v5399 = vld [vmem:[#allocation8 + $0x48] sm:$0xff]
        %v5400 = vld [vmem:[#allocation8 + $0x50] sm:$0xff]
        %v5401 = vld [vmem:[#allocation8 + $0x58] sm:$0xff]
        %v5402 = vld [vmem:[#allocation8 + $0x60] sm:$0xff]
        %v5403 = vld [vmem:[#allocation8 + $0x68] sm:$0xff]
        %v5404 = vld [vmem:[#allocation8 + $0x70] sm:$0xff]
        %v5405 = vld [vmem:[#allocation8 + $0x78] sm:$0xff]
        %v5454 = vrot.slane %v5336, 1
        %v5455 = vrot.slane %v5337, 1
        %v5456 = vsel %vm663, %v5454, %v5455
        %v5457 = vrot.slane %v5338, 1
        %v5458 = vsel %vm663, %v5455, %v5457
        %v5459 = vrot.slane %v5339, 1
        %v5460 = vrot.slane %v5340, 1
        %v5461 = vsel %vm663, %v5459, %v5460
        %v5462 = vrot.slane %v5341, 1
        %v5463 = vsel %vm663, %v5460, %v5462
        %v5464 = vrot.slane %v5342, 1
        %v5465 = vrot.slane %v5343, 1
        %v5466 = vsel %vm663, %v5464, %v5465
        %v5467 = vrot.slane %v5344, 1
        %v5468 = vsel %vm663, %v5465, %v5467
        %v5469 = vrot.slane %v5345, 1
        %v5470 = vrot.slane %v5346, 1
        %v5471 = vsel %vm663, %v5469, %v5470
        %v5472 = vrot.slane %v5347, 1
        %v5473 = vsel %vm663, %v5470, %v5472
        %v5474 = vrot.slane %v5348, 1
        %v5475 = vrot.slane %v5349, 1
        %v5476 = vsel %vm663, %v5474, %v5475
        %v5477 = vrot.slane %v5350, 1
        %v5478 = vsel %vm663, %v5475, %v5477
        %v5479 = vrot.slane %v5351, 1
        %v5480 = vrot.slane %v5352, 1
        %v5481 = vsel %vm663, %v5479, %v5480
        %v5482 = vrot.slane %v5353, 1
        %v5483 = vsel %vm663, %v5480, %v5482
        %v5484 = vrot.slane %v5354, 1
        %v5485 = vrot.slane %v5355, 1
        %v5486 = vsel %vm663, %v5484, %v5485
        %v5487 = vrot.slane %v5356, 1
        %v5488 = vsel %vm663, %v5485, %v5487
        %v5489 = vrot.slane %v5357, 1
        %v5490 = vrot.slane %v5358, 1
        %v5491 = vsel %vm663, %v5489, %v5490
        %v5492 = vrot.slane %v5359, 1
        %v5493 = vsel %vm663, %v5490, %v5492
        %v5494 = vrot.slane %v5360, 1
        %v5495 = vrot.slane %v5361, 1
        %v5496 = vsel %vm663, %v5494, %v5495
        %v5497 = vrot.slane %v5362, 1
        %v5498 = vsel %vm663, %v5495, %v5497
        %v5499 = vrot.slane %v5363, 1
        %v5500 = vrot.slane %v5364, 1
        %v5501 = vsel %vm663, %v5499, %v5500
        %v5502 = vrot.slane %v5365, 1
        %v5503 = vsel %vm663, %v5500, %v5502
        %v5504 = vrot.slane %v5366, 1
        %v5505 = vrot.slane %v5367, 1
        %v5506 = vsel %vm663, %v5504, %v5505
        %v5507 = vrot.slane %v5368, 1
        %v5508 = vsel %vm663, %v5505, %v5507
        %v5509 = vrot.slane %v5369, 1
        %v5510 = vrot.slane %v5370, 1
        %v5511 = vsel %vm663, %v5509, %v5510
        %v5512 = vrot.slane %v5371, 1
        %v5513 = vsel %vm663, %v5510, %v5512
        %v5514 = vrot.slane %v5372, 1
        %v5515 = vrot.slane %v5373, 1
        %v5516 = vsel %vm663, %v5514, %v5515
        %v5517 = vrot.slane %v5374, 1
        %v5518 = vsel %vm663, %v5515, %v5517
        %v5519 = vrot.slane %v5375, 1
        %v5520 = vrot.slane %v5376, 1
        %v5521 = vsel %vm663, %v5519, %v5520
        %v5522 = vrot.slane %v5377, 1
        %v5523 = vsel %vm663, %v5520, %v5522
        %v5524 = vrot.slane %v5378, 1
        %v5525 = vrot.slane %v5379, 1
        %v5526 = vsel %vm663, %v5524, %v5525
        %v5527 = vrot.slane %v5380, 1
        %v5528 = vsel %vm663, %v5525, %v5527
        %v5529 = vrot.slane %v5381, 1
        %v5530 = vrot.slane %v5382, 1
        %v5531 = vsel %vm663, %v5529, %v5530
        %v5532 = vrot.slane %v5383, 1
        %v5533 = vsel %vm663, %v5530, %v5532
        %s5566 = scalar_lea.vmem [#allocation8], 128
        %v5567 = vld [vmem:[%s5566] sm:$0xff]
        %v5568 = vld [vmem:[%s5566 + $0x8] sm:$0xff]
        %v5569 = vld [vmem:[%s5566 + $0x10] sm:$0xff]
        %v5570 = vld [vmem:[%s5566 + $0x18] sm:$0xff]
        %v5571 = vld [vmem:[%s5566 + $0x20] sm:$0xff]
        %v5572 = vld [vmem:[%s5566 + $0x28] sm:$0xff]
        %v5573 = vld [vmem:[%s5566 + $0x30] sm:$0xff]
        %v5574 = vld [vmem:[%s5566 + $0x38] sm:$0xff]
        %v5575 = vld [vmem:[%s5566 + $0x40] sm:$0xff]
        %v5576 = vld [vmem:[%s5566 + $0x48] sm:$0xff]
        %v5577 = vld [vmem:[%s5566 + $0x50] sm:$0xff]
        %v5578 = vld [vmem:[%s5566 + $0x58] sm:$0xff]
        %v5579 = vld [vmem:[%s5566 + $0x60] sm:$0xff]
        %v5580 = vld [vmem:[%s5566 + $0x68] sm:$0xff]
        %v5581 = vld [vmem:[%s5566 + $0x70] sm:$0xff]
        %v5582 = vld [vmem:[%s5566 + $0x78] sm:$0xff]
        %5583 = vmatprep.subr.mxu0 0.0
        %5584 = vmatpush1.msra.mxu0 %v5567
        %5585 = vmatprep.subr.mxu0 0.0
        %5586 = vmatpush1.msra.mxu0 %v5568
        %5587 = vmatprep.subr.mxu0 0.0
        %5588 = vmatpush1.msra.mxu0 %v5569
        %5589 = vmatprep.subr.mxu0 0.0
        %5590 = vmatpush1.msra.mxu0 %v5570
        %5591 = vmatprep.subr.mxu0 0.0
        %5592 = vmatpush1.msra.mxu0 %v5571
        %5593 = vmatprep.subr.mxu0 0.0
        %5594 = vmatpush1.msra.mxu0 %v5572
        %5595 = vmatprep.subr.mxu0 0.0
        %5596 = vmatpush1.msra.mxu0 %v5573
        %5597 = vmatprep.subr.mxu0 0.0
        %5598 = vmatpush1.msra.mxu0 %v5574
        %5599 = vmatprep.subr.mxu0 0.0
        %5600 = vmatpush1.msra.mxu0 %v5575
        %5601 = vmatprep.subr.mxu0 0.0
        %5602 = vmatpush1.msra.mxu0 %v5576
        %5603 = vmatprep.subr.mxu0 0.0
        %5604 = vmatpush1.msra.mxu0 %v5577
        %5605 = vmatprep.subr.mxu0 0.0
        %5606 = vmatpush1.msra.mxu0 %v5578
        %5607 = vmatprep.subr.mxu0 0.0
        %5608 = vmatpush1.msra.mxu0 %v5579
        %5609 = vmatprep.subr.mxu0 0.0
        %5610 = vmatpush1.msra.mxu0 %v5580
        %5611 = vmatprep.subr.mxu0 0.0
        %5612 = vmatpush1.msra.mxu0 %v5581
        %5613 = vmatprep.subr.mxu0 0.0
        %5614 = vmatpush1.msra.mxu0 %v5582
        %5615 = vmatprep.subr.mxu0 0.0
        %5616 = vmatpush1.msra.mxu0 0.0
        %5617 = vmatprep.subr.mxu0 0.0
        %5618 = vmatpush1.msra.mxu0 0.0
        %5619 = vmatprep.subr.mxu0 0.0
        %5620 = vmatpush1.msra.mxu0 0.0
        %5621 = vmatprep.subr.mxu0 0.0
        %5622 = vmatpush1.msra.mxu0 0.0
        %5623 = vmatprep.subr.mxu0 0.0
        %5624 = vmatpush1.msra.mxu0 0.0
        %5625 = vmatprep.subr.mxu0 0.0
        %5626 = vmatpush1.msra.mxu0 0.0
        %5627 = vmatprep.subr.mxu0 0.0
        %5628 = vmatpush1.msra.mxu0 0.0
        %5629 = vmatprep.subr.mxu0 0.0
        %5630 = vmatpush1.msra.mxu0 0.0
        %5631 = vmatprep.subr.mxu0 0.0
        %5632 = vmatpush1.msra.mxu0 0.0
        %5633 = vmatprep.subr.mxu0 0.0
        %5634 = vmatpush1.msra.mxu0 0.0
        %5635 = vmatprep.subr.mxu0 0.0
        %5636 = vmatpush1.msra.mxu0 0.0
        %5637 = vmatprep.subr.mxu0 0.0
        %5638 = vmatpush1.msra.mxu0 0.0
        %5639 = vmatprep.subr.mxu0 0.0
        %5640 = vmatpush1.msra.mxu0 0.0
        %5641 = vmatprep.subr.mxu0 0.0
        %5642 = vmatpush1.msra.mxu0 0.0
        %5643 = vmatprep.subr.mxu0 0.0
        %5644 = vmatpush1.msra.mxu0 0.0
        %5645 = vmatprep.subr.mxu0 0.0
        %5646 = vmatpush1.msra.mxu0 0.0
        %5647 = vmatprep.mubr.f32.mxu0 0.0
        %5648 = vmatmul.mubr.f32.gmra.mrb[0].mxu0 %v5456
        %v5649 = vpop.f32.mrb[0].mxu0
        %v5650 = vadd.f32 0.0, %v5649
        %v5651 = vpop.f32.mrb[0].mxu0
        %5652 = vmatprep.mubr.f32.mxu0 0.0
        %5653 = vmatmul.mubr.f32.gmra.mrb[0].mxu0 %v5458
        %v5654 = vpop.f32.mrb[0].mxu0
        %v5655 = vadd.f32 0.0, %v5654
        %v5656 = vpop.f32.mrb[0].mxu0
        %5657 = vmatprep.mubr.f32.mxu0 0.0
        %5658 = vmatmul.mubr.f32.gmra.mrb[0].mxu0 %v5461
        %v5659 = vpop.f32.mrb[0].mxu0
        %v5660 = vadd.f32 0.0, %v5659
        %v5661 = vpop.f32.mrb[0].mxu0
        %5662 = vmatprep.mubr.f32.mxu0 0.0
        %5663 = vmatmul.mubr.f32.gmra.mrb[0].mxu0 %v5463
        %v5664 = vpop.f32.mrb[0].mxu0
        %v5665 = vadd.f32 0.0, %v5664
        %v5666 = vpop.f32.mrb[0].mxu0
        %5667 = vmatprep.mubr.f32.mxu0 0.0
        %5668 = vmatmul.mubr.f32.gmra.mrb[0].mxu0 %v5466
        %v5669 = vpop.f32.mrb[0].mxu0
        %v5670 = vadd.f32 0.0, %v5669
        %v5671 = vpop.f32.mrb[0].mxu0
        %5672 = vmatprep.mubr.f32.mxu0 0.0
        %5673 = vmatmul.mubr.f32.gmra.mrb[0].mxu0 %v5468
        %v5674 = vpop.f32.mrb[0].mxu0
        %v5675 = vadd.f32 0.0, %v5674
        %v5676 = vpop.f32.mrb[0].mxu0
        %5677 = vmatprep.mubr.f32.mxu0 0.0
        %5678 = vmatmul.mubr.f32.gmra.mrb[0].mxu0 %v5471
        %v5679 = vpop.f32.mrb[0].mxu0
        %v5680 = vadd.f32 0.0, %v5679
        %v5681 = vpop.f32.mrb[0].mxu0
        %5682 = vmatprep.mubr.f32.mxu0 0.0
        %5683 = vmatmul.mubr.f32.gmra.mrb[0].mxu0 %v5473
        %v5684 = vpop.f32.mrb[0].mxu0
        %v5685 = vadd.f32 0.0, %v5684
        %v5686 = vpop.f32.mrb[0].mxu0
        %5687 = vmatprep.mubr.f32.mxu0 0.0
        %5688 = vmatmul.mubr.f32.gmra.mrb[0].mxu0 %v5476
        %v5689 = vpop.f32.mrb[0].mxu0
        %v5690 = vadd.f32 0.0, %v5689
        %v5691 = vpop.f32.mrb[0].mxu0
        %5692 = vmatprep.mubr.f32.mxu0 0.0
        %5693 = vmatmul.mubr.f32.gmra.mrb[0].mxu0 %v5478
        %v5694 = vpop.f32.mrb[0].mxu0
        %v5695 = vadd.f32 0.0, %v5694
        %v5696 = vpop.f32.mrb[0].mxu0
        %5697 = vmatprep.mubr.f32.mxu0 0.0
        %5698 = vmatmul.mubr.f32.gmra.mrb[0].mxu0 %v5481
        %v5699 = vpop.f32.mrb[0].mxu0
        %v5700 = vadd.f32 0.0, %v5699
        %v5701 = vpop.f32.mrb[0].mxu0
        %5702 = vmatprep.mubr.f32.mxu0 0.0
        %5703 = vmatmul.mubr.f32.gmra.mrb[0].mxu0 %v5483
        %v5704 = vpop.f32.mrb[0].mxu0
        %v5705 = vadd.f32 0.0, %v5704
        %v5706 = vpop.f32.mrb[0].mxu0
        %5707 = vmatprep.mubr.f32.mxu0 0.0
        %5708 = vmatmul.mubr.f32.gmra.mrb[0].mxu0 %v5486
        %v5709 = vpop.f32.mrb[0].mxu0
        %v5710 = vadd.f32 0.0, %v5709
        %v5711 = vpop.f32.mrb[0].mxu0
        %5712 = vmatprep.mubr.f32.mxu0 0.0
        %5713 = vmatmul.mubr.f32.gmra.mrb[0].mxu0 %v5488
        %v5714 = vpop.f32.mrb[0].mxu0
        %v5715 = vadd.f32 0.0, %v5714
        %v5716 = vpop.f32.mrb[0].mxu0
        %5717 = vmatprep.mubr.f32.mxu0 0.0
        %5718 = vmatmul.mubr.f32.gmra.mrb[0].mxu0 %v5491
        %v5719 = vpop.f32.mrb[0].mxu0
        %v5720 = vadd.f32 0.0, %v5719
        %v5721 = vpop.f32.mrb[0].mxu0
        %5722 = vmatprep.mubr.f32.mxu0 0.0
        %5723 = vmatmul.mubr.f32.gmra.mrb[0].mxu0 %v5493
        %v5724 = vpop.f32.mrb[0].mxu0
        %v5725 = vadd.f32 0.0, %v5724
        %v5726 = vpop.f32.mrb[0].mxu0
        %5727 = vmatprep.mubr.f32.mxu0 0.0
        %5728 = vmatmul.mubr.f32.gmra.mrb[0].mxu0 %v5496
        %v5729 = vpop.f32.mrb[0].mxu0
        %v5730 = vadd.f32 0.0, %v5729
        %v5731 = vpop.f32.mrb[0].mxu0
        %5732 = vmatprep.mubr.f32.mxu0 0.0
        %5733 = vmatmul.mubr.f32.gmra.mrb[0].mxu0 %v5498
        %v5734 = vpop.f32.mrb[0].mxu0
        %v5735 = vadd.f32 0.0, %v5734
        %v5736 = vpop.f32.mrb[0].mxu0
        %5737 = vmatprep.mubr.f32.mxu0 0.0
        %5738 = vmatmul.mubr.f32.gmra.mrb[0].mxu0 %v5501
        %v5739 = vpop.f32.mrb[0].mxu0
        %v5740 = vadd.f32 0.0, %v5739
        %v5741 = vpop.f32.mrb[0].mxu0
        %5742 = vmatprep.mubr.f32.mxu0 0.0
        %5743 = vmatmul.mubr.f32.gmra.mrb[0].mxu0 %v5503
        %v5744 = vpop.f32.mrb[0].mxu0
        %v5745 = vadd.f32 0.0, %v5744
        %v5746 = vpop.f32.mrb[0].mxu0
        %5747 = vmatprep.mubr.f32.mxu0 0.0
        %5748 = vmatmul.mubr.f32.gmra.mrb[0].mxu0 %v5506
        %v5749 = vpop.f32.mrb[0].mxu0
        %v5750 = vadd.f32 0.0, %v5749
        %v5751 = vpop.f32.mrb[0].mxu0
        %5752 = vmatprep.mubr.f32.mxu0 0.0
        %5753 = vmatmul.mubr.f32.gmra.mrb[0].mxu0 %v5508
        %v5754 = vpop.f32.mrb[0].mxu0
        %v5755 = vadd.f32 0.0, %v5754
        %v5756 = vpop.f32.mrb[0].mxu0
        %5757 = vmatprep.mubr.f32.mxu0 0.0
        %5758 = vmatmul.mubr.f32.gmra.mrb[0].mxu0 %v5511
        %v5759 = vpop.f32.mrb[0].mxu0
        %v5760 = vadd.f32 0.0, %v5759
        %v5761 = vpop.f32.mrb[0].mxu0
        %5762 = vmatprep.mubr.f32.mxu0 0.0
        %5763 = vmatmul.mubr.f32.gmra.mrb[0].mxu0 %v5513
        %v5764 = vpop.f32.mrb[0].mxu0
        %v5765 = vadd.f32 0.0, %v5764
        %v5766 = vpop.f32.mrb[0].mxu0
        %5767 = vmatprep.mubr.f32.mxu0 0.0
        %5768 = vmatmul.mubr.f32.gmra.mrb[0].mxu0 %v5516
        %v5769 = vpop.f32.mrb[0].mxu0
        %v5770 = vadd.f32 0.0, %v5769
        %v5771 = vpop.f32.mrb[0].mxu0
        %5772 = vmatprep.mubr.f32.mxu0 0.0
        %5773 = vmatmul.mubr.f32.gmra.mrb[0].mxu0 %v5518
        %v5774 = vpop.f32.mrb[0].mxu0
        %v5775 = vadd.f32 0.0, %v5774
        %v5776 = vpop.f32.mrb[0].mxu0
        %5777 = vmatprep.mubr.f32.mxu0 0.0
        %5778 = vmatmul.mubr.f32.gmra.mrb[0].mxu0 %v5521
        %v5779 = vpop.f32.mrb[0].mxu0
        %v5780 = vadd.f32 0.0, %v5779
        %v5781 = vpop.f32.mrb[0].mxu0
        %5782 = vmatprep.mubr.f32.mxu0 0.0
        %5783 = vmatmul.mubr.f32.gmra.mrb[0].mxu0 %v5523
        %v5784 = vpop.f32.mrb[0].mxu0
        %v5785 = vadd.f32 0.0, %v5784
        %v5786 = vpop.f32.mrb[0].mxu0
        %5787 = vmatprep.mubr.f32.mxu0 0.0
        %5788 = vmatmul.mubr.f32.gmra.mrb[0].mxu0 %v5526
        %v5789 = vpop.f32.mrb[0].mxu0
        %v5790 = vadd.f32 0.0, %v5789
        %v5791 = vpop.f32.mrb[0].mxu0
        %5792 = vmatprep.mubr.f32.mxu0 0.0
        %5793 = vmatmul.mubr.f32.gmra.mrb[0].mxu0 %v5528
        %v5794 = vpop.f32.mrb[0].mxu0
        %v5795 = vadd.f32 0.0, %v5794
        %v5796 = vpop.f32.mrb[0].mxu0
        %5797 = vmatprep.mubr.f32.mxu0 0.0
        %5798 = vmatmul.mubr.f32.gmra.mrb[0].mxu0 %v5531
        %v5799 = vpop.f32.mrb[0].mxu0
        %v5800 = vadd.f32 0.0, %v5799
        %v5801 = vpop.f32.mrb[0].mxu0
        %5802 = vmatprep.mubr.f32.mxu0 0.0
        %5803 = vmatmul.mubr.f32.gmra.mrb[0].mxu0 %v5533
        %v5804 = vpop.f32.mrb[0].mxu0
        %v5805 = vadd.f32 0.0, %v5804
        %v5806 = vpop.f32.mrb[0].mxu0
        %5807 = vdwg.mxu0
        %5808 = vmatprep.subr.mxu0 0.0
        %5809 = vmatpush1.msra.mxu0 %v5390
        %5810 = vmatprep.subr.mxu0 0.0
        %5811 = vmatpush1.msra.mxu0 %v5391
        %5812 = vmatprep.subr.mxu0 0.0
        %5813 = vmatpush1.msra.mxu0 %v5392
        %5814 = vmatprep.subr.mxu0 0.0
        %5815 = vmatpush1.msra.mxu0 %v5393
        %5816 = vmatprep.subr.mxu0 0.0
        %5817 = vmatpush1.msra.mxu0 %v5394
        %5818 = vmatprep.subr.mxu0 0.0
        %5819 = vmatpush1.msra.mxu0 %v5395
        %5820 = vmatprep.subr.mxu0 0.0
        %5821 = vmatpush1.msra.mxu0 %v5396
        %5822 = vmatprep.subr.mxu0 0.0
        %5823 = vmatpush1.msra.mxu0 %v5397
        %5824 = vmatprep.subr.mxu0 0.0
        %5825 = vmatpush1.msra.mxu0 %v5398
        %5826 = vmatprep.subr.mxu0 0.0
        %5827 = vmatpush1.msra.mxu0 %v5399
        %5828 = vmatprep.subr.mxu0 0.0
        %5829 = vmatpush1.msra.mxu0 %v5400
        %5830 = vmatprep.subr.mxu0 0.0
        %5831 = vmatpush1.msra.mxu0 %v5401
        %5832 = vmatprep.subr.mxu0 0.0
        %5833 = vmatpush1.msra.mxu0 %v5402
        %5834 = vmatprep.subr.mxu0 0.0
        %5835 = vmatpush1.msra.mxu0 %v5403
        %5836 = vmatprep.subr.mxu0 0.0
        %5837 = vmatpush1.msra.mxu0 %v5404
        %5838 = vmatprep.subr.mxu0 0.0
        %5839 = vmatpush1.msra.mxu0 %v5405
        %5840 = vmatprep.subr.mxu0 0.0
        %5841 = vmatpush1.msra.mxu0 0.0
        %5842 = vmatprep.subr.mxu0 0.0
        %5843 = vmatpush1.msra.mxu0 0.0
        %5844 = vmatprep.subr.mxu0 0.0
        %5845 = vmatpush1.msra.mxu0 0.0
        %5846 = vmatprep.subr.mxu0 0.0
        %5847 = vmatpush1.msra.mxu0 0.0
        %5848 = vmatprep.subr.mxu0 0.0
        %5849 = vmatpush1.msra.mxu0 0.0
        %5850 = vmatprep.subr.mxu0 0.0
        %5851 = vmatpush1.msra.mxu0 0.0
        %5852 = vmatprep.subr.mxu0 0.0
        %5853 = vmatpush1.msra.mxu0 0.0
        %5854 = vmatprep.subr.mxu0 0.0
        %5855 = vmatpush1.msra.mxu0 0.0
        %5856 = vmatprep.subr.mxu0 0.0
        %5857 = vmatpush1.msra.mxu0 0.0
        %5858 = vmatprep.subr.mxu0 0.0
        %5859 = vmatpush1.msra.mxu0 0.0
        %5860 = vmatprep.subr.mxu0 0.0
        %5861 = vmatpush1.msra.mxu0 0.0
        %5862 = vmatprep.subr.mxu0 0.0
        %5863 = vmatpush1.msra.mxu0 0.0
        %5864 = vmatprep.subr.mxu0 0.0
        %5865 = vmatpush1.msra.mxu0 0.0
        %5866 = vmatprep.subr.mxu0 0.0
        %5867 = vmatpush1.msra.mxu0 0.0
        %5868 = vmatprep.subr.mxu0 0.0
        %5869 = vmatpush1.msra.mxu0 0.0
        %5870 = vmatprep.subr.mxu0 0.0
        %5871 = vmatpush1.msra.mxu0 0.0
        %5872 = vmatprep.mubr.f32.mxu0 0.0
        %5873 = vmatmul.mubr.f32.gmra.mrb[0].mxu0 %v5336
        %v5874 = vpop.f32.mrb[0].mxu0
        %v5875 = vadd.f32 %v5650, %v5874
        %v5876 = vpop.f32.mrb[0].mxu0
        %5877 = vmatprep.mubr.f32.mxu0 0.0
        %5878 = vmatmul.mubr.f32.gmra.mrb[0].mxu0 %v5337
        %v5879 = vpop.f32.mrb[0].mxu0
        %v5880 = vadd.f32 %v5655, %v5879
        %v5881 = vpop.f32.mrb[0].mxu0
        %5882 = vmatprep.mubr.f32.mxu0 0.0
        %5883 = vmatmul.mubr.f32.gmra.mrb[0].mxu0 %v5339
        %v5884 = vpop.f32.mrb[0].mxu0
        %v5885 = vadd.f32 %v5660, %v5884
        %v5886 = vpop.f32.mrb[0].mxu0
        %5887 = vmatprep.mubr.f32.mxu0 0.0
        %5888 = vmatmul.mubr.f32.gmra.mrb[0].mxu0 %v5340
        %v5889 = vpop.f32.mrb[0].mxu0
        %v5890 = vadd.f32 %v5665, %v5889
        %v5891 = vpop.f32.mrb[0].mxu0
        %5892 = vmatprep.mubr.f32.mxu0 0.0
        %5893 = vmatmul.mubr.f32.gmra.mrb[0].mxu0 %v5342
        %v5894 = vpop.f32.mrb[0].mxu0
        %v5895 = vadd.f32 %v5670, %v5894
        %v5896 = vpop.f32.mrb[0].mxu0
        %5897 = vmatprep.mubr.f32.mxu0 0.0
        %5898 = vmatmul.mubr.f32.gmra.mrb[0].mxu0 %v5343
        %v5899 = vpop.f32.mrb[0].mxu0
        %v5900 = vadd.f32 %v5675, %v5899
        %v5901 = vpop.f32.mrb[0].mxu0
        %5902 = vmatprep.mubr.f32.mxu0 0.0
        %5903 = vmatmul.mubr.f32.gmra.mrb[0].mxu0 %v5345
        %v5904 = vpop.f32.mrb[0].mxu0
        %v5905 = vadd.f32 %v5680, %v5904
        %v5906 = vpop.f32.mrb[0].mxu0
        %5907 = vmatprep.mubr.f32.mxu0 0.0
        %5908 = vmatmul.mubr.f32.gmra.mrb[0].mxu0 %v5346
        %v5909 = vpop.f32.mrb[0].mxu0
        %v5910 = vadd.f32 %v5685, %v5909
        %v5911 = vpop.f32.mrb[0].mxu0
        %5912 = vmatprep.mubr.f32.mxu0 0.0
        %5913 = vmatmul.mubr.f32.gmra.mrb[0].mxu0 %v5348
        %v5914 = vpop.f32.mrb[0].mxu0
        %v5915 = vadd.f32 %v5690, %v5914
        %v5916 = vpop.f32.mrb[0].mxu0
        %5917 = vmatprep.mubr.f32.mxu0 0.0
        %5918 = vmatmul.mubr.f32.gmra.mrb[0].mxu0 %v5349
        %v5919 = vpop.f32.mrb[0].mxu0
        %v5920 = vadd.f32 %v5695, %v5919
        %v5921 = vpop.f32.mrb[0].mxu0
        %5922 = vmatprep.mubr.f32.mxu0 0.0
        %5923 = vmatmul.mubr.f32.gmra.mrb[0].mxu0 %v5351
        %v5924 = vpop.f32.mrb[0].mxu0
        %v5925 = vadd.f32 %v5700, %v5924
        %v5926 = vpop.f32.mrb[0].mxu0
        %5927 = vmatprep.mubr.f32.mxu0 0.0
        %5928 = vmatmul.mubr.f32.gmra.mrb[0].mxu0 %v5352
        %v5929 = vpop.f32.mrb[0].mxu0
        %v5930 = vadd.f32 %v5705, %v5929
        %v5931 = vpop.f32.mrb[0].mxu0
        %5932 = vmatprep.mubr.f32.mxu0 0.0
        %5933 = vmatmul.mubr.f32.gmra.mrb[0].mxu0 %v5354
        %v5934 = vpop.f32.mrb[0].mxu0
        %v5935 = vadd.f32 %v5710, %v5934
        %v5936 = vpop.f32.mrb[0].mxu0
        %5937 = vmatprep.mubr.f32.mxu0 0.0
        %5938 = vmatmul.mubr.f32.gmra.mrb[0].mxu0 %v5355
        %v5939 = vpop.f32.mrb[0].mxu0
        %v5940 = vadd.f32 %v5715, %v5939
        %v5941 = vpop.f32.mrb[0].mxu0
        %5942 = vmatprep.mubr.f32.mxu0 0.0
        %5943 = vmatmul.mubr.f32.gmra.mrb[0].mxu0 %v5357
        %v5944 = vpop.f32.mrb[0].mxu0
        %v5945 = vadd.f32 %v5720, %v5944
        %v5946 = vpop.f32.mrb[0].mxu0
        %5947 = vmatprep.mubr.f32.mxu0 0.0
        %5948 = vmatmul.mubr.f32.gmra.mrb[0].mxu0 %v5358
        %v5949 = vpop.f32.mrb[0].mxu0
        %v5950 = vadd.f32 %v5725, %v5949
        %v5951 = vpop.f32.mrb[0].mxu0
        %5952 = vmatprep.mubr.f32.mxu0 0.0
        %5953 = vmatmul.mubr.f32.gmra.mrb[0].mxu0 %v5360
        %v5954 = vpop.f32.mrb[0].mxu0
        %v5955 = vadd.f32 %v5730, %v5954
        %v5956 = vpop.f32.mrb[0].mxu0
        %5957 = vmatprep.mubr.f32.mxu0 0.0
        %5958 = vmatmul.mubr.f32.gmra.mrb[0].mxu0 %v5361
        %v5959 = vpop.f32.mrb[0].mxu0
        %v5960 = vadd.f32 %v5735, %v5959
        %v5961 = vpop.f32.mrb[0].mxu0
        %5962 = vmatprep.mubr.f32.mxu0 0.0
        %5963 = vmatmul.mubr.f32.gmra.mrb[0].mxu0 %v5363
        %v5964 = vpop.f32.mrb[0].mxu0
        %v5965 = vadd.f32 %v5740, %v5964
        %v5966 = vpop.f32.mrb[0].mxu0
        %5967 = vmatprep.mubr.f32.mxu0 0.0
        %5968 = vmatmul.mubr.f32.gmra.mrb[0].mxu0 %v5364
        %v5969 = vpop.f32.mrb[0].mxu0
        %v5970 = vadd.f32 %v5745, %v5969
        %v5971 = vpop.f32.mrb[0].mxu0
        %5972 = vmatprep.mubr.f32.mxu0 0.0
        %5973 = vmatmul.mubr.f32.gmra.mrb[0].mxu0 %v5366
        %v5974 = vpop.f32.mrb[0].mxu0
        %v5975 = vadd.f32 %v5750, %v5974
        %v5976 = vpop.f32.mrb[0].mxu0
        %5977 = vmatprep.mubr.f32.mxu0 0.0
        %5978 = vmatmul.mubr.f32.gmra.mrb[0].mxu0 %v5367
        %v5979 = vpop.f32.mrb[0].mxu0
        %v5980 = vadd.f32 %v5755, %v5979
        %v5981 = vpop.f32.mrb[0].mxu0
        %5982 = vmatprep.mubr.f32.mxu0 0.0
        %5983 = vmatmul.mubr.f32.gmra.mrb[0].mxu0 %v5369
        %v5984 = vpop.f32.mrb[0].mxu0
        %v5985 = vadd.f32 %v5760, %v5984
        %v5986 = vpop.f32.mrb[0].mxu0
        %5987 = vmatprep.mubr.f32.mxu0 0.0
        %5988 = vmatmul.mubr.f32.gmra.mrb[0].mxu0 %v5370
        %v5989 = vpop.f32.mrb[0].mxu0
        %v5990 = vadd.f32 %v5765, %v5989
        %v5991 = vpop.f32.mrb[0].mxu0
        %5992 = vmatprep.mubr.f32.mxu0 0.0
        %5993 = vmatmul.mubr.f32.gmra.mrb[0].mxu0 %v5372
        %v5994 = vpop.f32.mrb[0].mxu0
        %v5995 = vadd.f32 %v5770, %v5994
        %v5996 = vpop.f32.mrb[0].mxu0
        %5997 = vmatprep.mubr.f32.mxu0 0.0
        %5998 = vmatmul.mubr.f32.gmra.mrb[0].mxu0 %v5373
        %v5999 = vpop.f32.mrb[0].mxu0
        %v6000 = vadd.f32 %v5775, %v5999
        %v6001 = vpop.f32.mrb[0].mxu0
        %6002 = vmatprep.mubr.f32.mxu0 0.0
        %6003 = vmatmul.mubr.f32.gmra.mrb[0].mxu0 %v5375
        %v6004 = vpop.f32.mrb[0].mxu0
        %v6005 = vadd.f32 %v5780, %v6004
        %v6006 = vpop.f32.mrb[0].mxu0
        %6007 = vmatprep.mubr.f32.mxu0 0.0
        %6008 = vmatmul.mubr.f32.gmra.mrb[0].mxu0 %v5376
        %v6009 = vpop.f32.mrb[0].mxu0
        %v6010 = vadd.f32 %v5785, %v6009
        %v6011 = vpop.f32.mrb[0].mxu0
        %6012 = vmatprep.mubr.f32.mxu0 0.0
        %6013 = vmatmul.mubr.f32.gmra.mrb[0].mxu0 %v5378
        %v6014 = vpop.f32.mrb[0].mxu0
        %v6015 = vadd.f32 %v5790, %v6014
        %v6016 = vpop.f32.mrb[0].mxu0
        %6017 = vmatprep.mubr.f32.mxu0 0.0
        %6018 = vmatmul.mubr.f32.gmra.mrb[0].mxu0 %v5379
        %v6019 = vpop.f32.mrb[0].mxu0
        %v6020 = vadd.f32 %v5795, %v6019
        %v6021 = vpop.f32.mrb[0].mxu0
        %6022 = vmatprep.mubr.f32.mxu0 0.0
        %6023 = vmatmul.mubr.f32.gmra.mrb[0].mxu0 %v5381
        %v6024 = vpop.f32.mrb[0].mxu0
        %v6025 = vadd.f32 %v5800, %v6024
        %v6026 = vpop.f32.mrb[0].mxu0
        %6027 = vmatprep.mubr.f32.mxu0 0.0
        %6028 = vmatmul.mubr.f32.gmra.mrb[0].mxu0 %v5382
        %v6029 = vpop.f32.mrb[0].mxu0
        %v6030 = vadd.f32 %v5805, %v6029
        %v6031 = vpop.f32.mrb[0].mxu0
        %6032 = vdwg.mxu0
        %v6033 = vrot.slane %v5336, 2
        %v6034 = vrot.slane %v5337, 2
        %v6035 = vsel %vm1685, %v6033, %v6034
        %v6036 = vrot.slane %v5338, 2
        %v6037 = vsel %vm1685, %v6034, %v6036
        %v6038 = vrot.slane %v5339, 2
        %v6039 = vrot.slane %v5340, 2
        %v6040 = vsel %vm1685, %v6038, %v6039
        %v6041 = vrot.slane %v5341, 2
        %v6042 = vsel %vm1685, %v6039, %v6041
        %v6043 = vrot.slane %v5342, 2
        %v6044 = vrot.slane %v5343, 2
        %v6045 = vsel %vm1685, %v6043, %v6044
        %v6046 = vrot.slane %v5344, 2
        %v6047 = vsel %vm1685, %v6044, %v6046
        %v6048 = vrot.slane %v5345, 2
        %v6049 = vrot.slane %v5346, 2
        %v6050 = vsel %vm1685, %v6048, %v6049
        %v6051 = vrot.slane %v5347, 2
        %v6052 = vsel %vm1685, %v6049, %v6051
        %v6053 = vrot.slane %v5348, 2
        %v6054 = vrot.slane %v5349, 2
        %v6055 = vsel %vm1685, %v6053, %v6054
        %v6056 = vrot.slane %v5350, 2
        %v6057 = vsel %vm1685, %v6054, %v6056
        %v6058 = vrot.slane %v5351, 2
        %v6059 = vrot.slane %v5352, 2
        %v6060 = vsel %vm1685, %v6058, %v6059
        %v6061 = vrot.slane %v5353, 2
        %v6062 = vsel %vm1685, %v6059, %v6061
        %v6063 = vrot.slane %v5354, 2
        %v6064 = vrot.slane %v5355, 2
        %v6065 = vsel %vm1685, %v6063, %v6064
        %v6066 = vrot.slane %v5356, 2
        %v6067 = vsel %vm1685, %v6064, %v6066
        %v6068 = vrot.slane %v5357, 2
        %v6069 = vrot.slane %v5358, 2
        %v6070 = vsel %vm1685, %v6068, %v6069
        %v6071 = vrot.slane %v5359, 2
        %v6072 = vsel %vm1685, %v6069, %v6071
        %v6073 = vrot.slane %v5360, 2
        %v6074 = vrot.slane %v5361, 2
        %v6075 = vsel %vm1685, %v6073, %v6074
        %v6076 = vrot.slane %v5362, 2
        %v6077 = vsel %vm1685, %v6074, %v6076
        %v6078 = vrot.slane %v5363, 2
        %v6079 = vrot.slane %v5364, 2
        %v6080 = vsel %vm1685, %v6078, %v6079
        %v6081 = vrot.slane %v5365, 2
        %v6082 = vsel %vm1685, %v6079, %v6081
        %v6083 = vrot.slane %v5366, 2
        %v6084 = vrot.slane %v5367, 2
        %v6085 = vsel %vm1685, %v6083, %v6084
        %v6086 = vrot.slane %v5368, 2
        %v6087 = vsel %vm1685, %v6084, %v6086
        %v6088 = vrot.slane %v5369, 2
        %v6089 = vrot.slane %v5370, 2
        %v6090 = vsel %vm1685, %v6088, %v6089
        %v6091 = vrot.slane %v5371, 2
        %v6092 = vsel %vm1685, %v6089, %v6091
        %v6093 = vrot.slane %v5372, 2
        %v6094 = vrot.slane %v5373, 2
        %v6095 = vsel %vm1685, %v6093, %v6094
        %v6096 = vrot.slane %v5374, 2
        %v6097 = vsel %vm1685, %v6094, %v6096
        %v6098 = vrot.slane %v5375, 2
        %v6099 = vrot.slane %v5376, 2
        %v6100 = vsel %vm1685, %v6098, %v6099
        %v6101 = vrot.slane %v5377, 2
        %v6102 = vsel %vm1685, %v6099, %v6101
        %v6103 = vrot.slane %v5378, 2
        %v6104 = vrot.slane %v5379, 2
        %v6105 = vsel %vm1685, %v6103, %v6104
        %v6106 = vrot.slane %v5380, 2
        %v6107 = vsel %vm1685, %v6104, %v6106
        %v6108 = vrot.slane %v5381, 2
        %v6109 = vrot.slane %v5382, 2
        %v6110 = vsel %vm1685, %v6108, %v6109
        %v6111 = vrot.slane %v5383, 2
        %v6112 = vsel %vm1685, %v6109, %v6111
        %s6145 = scalar_lea.vmem [#allocation8], 256
        %v6146 = vld [vmem:[%s6145] sm:$0xff]
        %v6147 = vld [vmem:[%s6145 + $0x8] sm:$0xff]
        %v6148 = vld [vmem:[%s6145 + $0x10] sm:$0xff]
        %v6149 = vld [vmem:[%s6145 + $0x18] sm:$0xff]
        %v6150 = vld [vmem:[%s6145 + $0x20] sm:$0xff]
        %v6151 = vld [vmem:[%s6145 + $0x28] sm:$0xff]
        %v6152 = vld [vmem:[%s6145 + $0x30] sm:$0xff]
        %v6153 = vld [vmem:[%s6145 + $0x38] sm:$0xff]
        %v6154 = vld [vmem:[%s6145 + $0x40] sm:$0xff]
        %v6155 = vld [vmem:[%s6145 + $0x48] sm:$0xff]
        %v6156 = vld [vmem:[%s6145 + $0x50] sm:$0xff]
        %v6157 = vld [vmem:[%s6145 + $0x58] sm:$0xff]
        %v6158 = vld [vmem:[%s6145 + $0x60] sm:$0xff]
        %v6159 = vld [vmem:[%s6145 + $0x68] sm:$0xff]
        %v6160 = vld [vmem:[%s6145 + $0x70] sm:$0xff]
        %v6161 = vld [vmem:[%s6145 + $0x78] sm:$0xff]
        %6162 = vmatprep.subr.mxu0 0.0
        %6163 = vmatpush1.msra.mxu0 %v6146
        %6164 = vmatprep.subr.mxu0 0.0
        %6165 = vmatpush1.msra.mxu0 %v6147
        %6166 = vmatprep.subr.mxu0 0.0
        %6167 = vmatpush1.msra.mxu0 %v6148
        %6168 = vmatprep.subr.mxu0 0.0
        %6169 = vmatpush1.msra.mxu0 %v6149
        %6170 = vmatprep.subr.mxu0 0.0
        %6171 = vmatpush1.msra.mxu0 %v6150
        %6172 = vmatprep.subr.mxu0 0.0
        %6173 = vmatpush1.msra.mxu0 %v6151
        %6174 = vmatprep.subr.mxu0 0.0
        %6175 = vmatpush1.msra.mxu0 %v6152
        %6176 = vmatprep.subr.mxu0 0.0
        %6177 = vmatpush1.msra.mxu0 %v6153
        %6178 = vmatprep.subr.mxu0 0.0
        %6179 = vmatpush1.msra.mxu0 %v6154
        %6180 = vmatprep.subr.mxu0 0.0
        %6181 = vmatpush1.msra.mxu0 %v6155
        %6182 = vmatprep.subr.mxu0 0.0
        %6183 = vmatpush1.msra.mxu0 %v6156
        %6184 = vmatprep.subr.mxu0 0.0
        %6185 = vmatpush1.msra.mxu0 %v6157
        %6186 = vmatprep.subr.mxu0 0.0
        %6187 = vmatpush1.msra.mxu0 %v6158
        %6188 = vmatprep.subr.mxu0 0.0
        %6189 = vmatpush1.msra.mxu0 %v6159
        %6190 = vmatprep.subr.mxu0 0.0
        %6191 = vmatpush1.msra.mxu0 %v6160
        %6192 = vmatprep.subr.mxu0 0.0
        %6193 = vmatpush1.msra.mxu0 %v6161
        %6194 = vmatprep.subr.mxu0 0.0
        %6195 = vmatpush1.msra.mxu0 0.0
        %6196 = vmatprep.subr.mxu0 0.0
        %6197 = vmatpush1.msra.mxu0 0.0
        %6198 = vmatprep.subr.mxu0 0.0
        %6199 = vmatpush1.msra.mxu0 0.0
        %6200 = vmatprep.subr.mxu0 0.0
        %6201 = vmatpush1.msra.mxu0 0.0
        %6202 = vmatprep.subr.mxu0 0.0
        %6203 = vmatpush1.msra.mxu0 0.0
        %6204 = vmatprep.subr.mxu0 0.0
        %6205 = vmatpush1.msra.mxu0 0.0
        %6206 = vmatprep.subr.mxu0 0.0
        %6207 = vmatpush1.msra.mxu0 0.0
        %6208 = vmatprep.subr.mxu0 0.0
        %6209 = vmatpush1.msra.mxu0 0.0
        %6210 = vmatprep.subr.mxu0 0.0
        %6211 = vmatpush1.msra.mxu0 0.0
        %6212 = vmatprep.subr.mxu0 0.0
        %6213 = vmatpush1.msra.mxu0 0.0
        %6214 = vmatprep.subr.mxu0 0.0
        %6215 = vmatpush1.msra.mxu0 0.0
        %6216 = vmatprep.subr.mxu0 0.0
        %6217 = vmatpush1.msra.mxu0 0.0
        %6218 = vmatprep.subr.mxu0 0.0
        %6219 = vmatpush1.msra.mxu0 0.0
        %6220 = vmatprep.subr.mxu0 0.0
        %6221 = vmatpush1.msra.mxu0 0.0
        %6222 = vmatprep.subr.mxu0 0.0
        %6223 = vmatpush1.msra.mxu0 0.0
        %6224 = vmatprep.subr.mxu0 0.0
        %6225 = vmatpush1.msra.mxu0 0.0
        %6226 = vmatprep.mubr.f32.mxu0 0.0
        %6227 = vmatmul.mubr.f32.gmra.mrb[0].mxu0 %v6035
        %v6228 = vpop.f32.mrb[0].mxu0
        %v6229 = vadd.f32 0.0, %v6228
        %v6230 = vpop.f32.mrb[0].mxu0
        %6231 = vmatprep.mubr.f32.mxu0 0.0
        %6232 = vmatmul.mubr.f32.gmra.mrb[0].mxu0 %v6037
        %v6233 = vpop.f32.mrb[0].mxu0
        %v6234 = vadd.f32 0.0, %v6233
        %v6235 = vpop.f32.mrb[0].mxu0
        %6236 = vmatprep.mubr.f32.mxu0 0.0
        %6237 = vmatmul.mubr.f32.gmra.mrb[0].mxu0 %v6040
        %v6238 = vpop.f32.mrb[0].mxu0
        %v6239 = vadd.f32 0.0, %v6238
        %v6240 = vpop.f32.mrb[0].mxu0
        %6241 = vmatprep.mubr.f32.mxu0 0.0
        %6242 = vmatmul.mubr.f32.gmra.mrb[0].mxu0 %v6042
        %v6243 = vpop.f32.mrb[0].mxu0
        %v6244 = vadd.f32 0.0, %v6243
        %v6245 = vpop.f32.mrb[0].mxu0
        %6246 = vmatprep.mubr.f32.mxu0 0.0
        %6247 = vmatmul.mubr.f32.gmra.mrb[0].mxu0 %v6045
        %v6248 = vpop.f32.mrb[0].mxu0
        %v6249 = vadd.f32 0.0, %v6248
        %v6250 = vpop.f32.mrb[0].mxu0
        %6251 = vmatprep.mubr.f32.mxu0 0.0
        %6252 = vmatmul.mubr.f32.gmra.mrb[0].mxu0 %v6047
        %v6253 = vpop.f32.mrb[0].mxu0
        %v6254 = vadd.f32 0.0, %v6253
        %v6255 = vpop.f32.mrb[0].mxu0
        %6256 = vmatprep.mubr.f32.mxu0 0.0
        %6257 = vmatmul.mubr.f32.gmra.mrb[0].mxu0 %v6050
        %v6258 = vpop.f32.mrb[0].mxu0
        %v6259 = vadd.f32 0.0, %v6258
        %v6260 = vpop.f32.mrb[0].mxu0
        %6261 = vmatprep.mubr.f32.mxu0 0.0
        %6262 = vmatmul.mubr.f32.gmra.mrb[0].mxu0 %v6052
        %v6263 = vpop.f32.mrb[0].mxu0
        %v6264 = vadd.f32 0.0, %v6263
        %v6265 = vpop.f32.mrb[0].mxu0
        %6266 = vmatprep.mubr.f32.mxu0 0.0
        %6267 = vmatmul.mubr.f32.gmra.mrb[0].mxu0 %v6055
        %v6268 = vpop.f32.mrb[0].mxu0
        %v6269 = vadd.f32 0.0, %v6268
        %v6270 = vpop.f32.mrb[0].mxu0
        %6271 = vmatprep.mubr.f32.mxu0 0.0
        %6272 = vmatmul.mubr.f32.gmra.mrb[0].mxu0 %v6057
        %v6273 = vpop.f32.mrb[0].mxu0
        %v6274 = vadd.f32 0.0, %v6273
        %v6275 = vpop.f32.mrb[0].mxu0
        %6276 = vmatprep.mubr.f32.mxu0 0.0
        %6277 = vmatmul.mubr.f32.gmra.mrb[0].mxu0 %v6060
        %v6278 = vpop.f32.mrb[0].mxu0
        %v6279 = vadd.f32 0.0, %v6278
        %v6280 = vpop.f32.mrb[0].mxu0
        %6281 = vmatprep.mubr.f32.mxu0 0.0
        %6282 = vmatmul.mubr.f32.gmra.mrb[0].mxu0 %v6062
        %v6283 = vpop.f32.mrb[0].mxu0
        %v6284 = vadd.f32 0.0, %v6283
        %v6285 = vpop.f32.mrb[0].mxu0
        %6286 = vmatprep.mubr.f32.mxu0 0.0
        %6287 = vmatmul.mubr.f32.gmra.mrb[0].mxu0 %v6065
        %v6288 = vpop.f32.mrb[0].mxu0
        %v6289 = vadd.f32 0.0, %v6288
        %v6290 = vpop.f32.mrb[0].mxu0
        %6291 = vmatprep.mubr.f32.mxu0 0.0
        %6292 = vmatmul.mubr.f32.gmra.mrb[0].mxu0 %v6067
        %v6293 = vpop.f32.mrb[0].mxu0
        %v6294 = vadd.f32 0.0, %v6293
        %v6295 = vpop.f32.mrb[0].mxu0
        %6296 = vmatprep.mubr.f32.mxu0 0.0
        %6297 = vmatmul.mubr.f32.gmra.mrb[0].mxu0 %v6070
        %v6298 = vpop.f32.mrb[0].mxu0
        %v6299 = vadd.f32 0.0, %v6298
        %v6300 = vpop.f32.mrb[0].mxu0
        %6301 = vmatprep.mubr.f32.mxu0 0.0
        %6302 = vmatmul.mubr.f32.gmra.mrb[0].mxu0 %v6072
        %v6303 = vpop.f32.mrb[0].mxu0
        %v6304 = vadd.f32 0.0, %v6303
        %v6305 = vpop.f32.mrb[0].mxu0
        %6306 = vmatprep.mubr.f32.mxu0 0.0
        %6307 = vmatmul.mubr.f32.gmra.mrb[0].mxu0 %v6075
        %v6308 = vpop.f32.mrb[0].mxu0
        %v6309 = vadd.f32 0.0, %v6308
        %v6310 = vpop.f32.mrb[0].mxu0
        %6311 = vmatprep.mubr.f32.mxu0 0.0
        %6312 = vmatmul.mubr.f32.gmra.mrb[0].mxu0 %v6077
        %v6313 = vpop.f32.mrb[0].mxu0
        %v6314 = vadd.f32 0.0, %v6313
        %v6315 = vpop.f32.mrb[0].mxu0
        %6316 = vmatprep.mubr.f32.mxu0 0.0
        %6317 = vmatmul.mubr.f32.gmra.mrb[0].mxu0 %v6080
        %v6318 = vpop.f32.mrb[0].mxu0
        %v6319 = vadd.f32 0.0, %v6318
        %v6320 = vpop.f32.mrb[0].mxu0
        %6321 = vmatprep.mubr.f32.mxu0 0.0
        %6322 = vmatmul.mubr.f32.gmra.mrb[0].mxu0 %v6082
        %v6323 = vpop.f32.mrb[0].mxu0
        %v6324 = vadd.f32 0.0, %v6323
        %v6325 = vpop.f32.mrb[0].mxu0
        %6326 = vmatprep.mubr.f32.mxu0 0.0
        %6327 = vmatmul.mubr.f32.gmra.mrb[0].mxu0 %v6085
        %v6328 = vpop.f32.mrb[0].mxu0
        %v6329 = vadd.f32 0.0, %v6328
        %v6330 = vpop.f32.mrb[0].mxu0
        %6331 = vmatprep.mubr.f32.mxu0 0.0
        %6332 = vmatmul.mubr.f32.gmra.mrb[0].mxu0 %v6087
        %v6333 = vpop.f32.mrb[0].mxu0
        %v6334 = vadd.f32 0.0, %v6333
        %v6335 = vpop.f32.mrb[0].mxu0
        %6336 = vmatprep.mubr.f32.mxu0 0.0
        %6337 = vmatmul.mubr.f32.gmra.mrb[0].mxu0 %v6090
        %v6338 = vpop.f32.mrb[0].mxu0
        %v6339 = vadd.f32 0.0, %v6338
        %v6340 = vpop.f32.mrb[0].mxu0
        %6341 = vmatprep.mubr.f32.mxu0 0.0
        %6342 = vmatmul.mubr.f32.gmra.mrb[0].mxu0 %v6092
        %v6343 = vpop.f32.mrb[0].mxu0
        %v6344 = vadd.f32 0.0, %v6343
        %v6345 = vpop.f32.mrb[0].mxu0
        %6346 = vmatprep.mubr.f32.mxu0 0.0
        %6347 = vmatmul.mubr.f32.gmra.mrb[0].mxu0 %v6095
        %v6348 = vpop.f32.mrb[0].mxu0
        %v6349 = vadd.f32 0.0, %v6348
        %v6350 = vpop.f32.mrb[0].mxu0
        %6351 = vmatprep.mubr.f32.mxu0 0.0
        %6352 = vmatmul.mubr.f32.gmra.mrb[0].mxu0 %v6097
        %v6353 = vpop.f32.mrb[0].mxu0
        %v6354 = vadd.f32 0.0, %v6353
        %v6355 = vpop.f32.mrb[0].mxu0
        %6356 = vmatprep.mubr.f32.mxu0 0.0
        %6357 = vmatmul.mubr.f32.gmra.mrb[0].mxu0 %v6100
        %v6358 = vpop.f32.mrb[0].mxu0
        %v6359 = vadd.f32 0.0, %v6358
        %v6360 = vpop.f32.mrb[0].mxu0
        %6361 = vmatprep.mubr.f32.mxu0 0.0
        %6362 = vmatmul.mubr.f32.gmra.mrb[0].mxu0 %v6102
        %v6363 = vpop.f32.mrb[0].mxu0
        %v6364 = vadd.f32 0.0, %v6363
        %v6365 = vpop.f32.mrb[0].mxu0
        %6366 = vmatprep.mubr.f32.mxu0 0.0
        %6367 = vmatmul.mubr.f32.gmra.mrb[0].mxu0 %v6105
        %v6368 = vpop.f32.mrb[0].mxu0
        %v6369 = vadd.f32 0.0, %v6368
        %v6370 = vpop.f32.mrb[0].mxu0
        %6371 = vmatprep.mubr.f32.mxu0 0.0
        %6372 = vmatmul.mubr.f32.gmra.mrb[0].mxu0 %v6107
        %v6373 = vpop.f32.mrb[0].mxu0
        %v6374 = vadd.f32 0.0, %v6373
        %v6375 = vpop.f32.mrb[0].mxu0
        %6376 = vmatprep.mubr.f32.mxu0 0.0
        %6377 = vmatmul.mubr.f32.gmra.mrb[0].mxu0 %v6110
        %v6378 = vpop.f32.mrb[0].mxu0
        %v6379 = vadd.f32 0.0, %v6378
        %v6380 = vpop.f32.mrb[0].mxu0
        %6381 = vmatprep.mubr.f32.mxu0 0.0
        %6382 = vmatmul.mubr.f32.gmra.mrb[0].mxu0 %v6112
        %v6383 = vpop.f32.mrb[0].mxu0
        %v6384 = vadd.f32 0.0, %v6383
        %v6385 = vpop.f32.mrb[0].mxu0
        %6386 = vdwg.mxu0
        %v6387 = vadd.f32 %v5875, %v6229
        %v6388 = vadd.f32 %v5880, %v6234
        %v6389 = vadd.f32 %v5885, %v6239
        %v6390 = vadd.f32 %v5890, %v6244
        %v6391 = vadd.f32 %v5895, %v6249
        %v6392 = vadd.f32 %v5900, %v6254
        %v6393 = vadd.f32 %v5905, %v6259
        %v6394 = vadd.f32 %v5910, %v6264
        %v6395 = vadd.f32 %v5915, %v6269
        %v6396 = vadd.f32 %v5920, %v6274
        %v6397 = vadd.f32 %v5925, %v6279
        %v6398 = vadd.f32 %v5930, %v6284
        %v6399 = vadd.f32 %v5935, %v6289
        %v6400 = vadd.f32 %v5940, %v6294
        %v6401 = vadd.f32 %v5945, %v6299
        %v6402 = vadd.f32 %v5950, %v6304
        %v6403 = vadd.f32 %v5955, %v6309
        %v6404 = vadd.f32 %v5960, %v6314
        %v6405 = vadd.f32 %v5965, %v6319
        %v6406 = vadd.f32 %v5970, %v6324
        %v6407 = vadd.f32 %v5975, %v6329
        %v6408 = vadd.f32 %v5980, %v6334
        %v6409 = vadd.f32 %v5985, %v6339
        %v6410 = vadd.f32 %v5990, %v6344
        %v6411 = vadd.f32 %v5995, %v6349
        %v6412 = vadd.f32 %v6000, %v6354
        %v6413 = vadd.f32 %v6005, %v6359
        %v6414 = vadd.f32 %v6010, %v6364
        %v6415 = vadd.f32 %v6015, %v6369
        %v6416 = vadd.f32 %v6020, %v6374
        %v6417 = vadd.f32 %v6025, %v6379
        %v6418 = vadd.f32 %v6030, %v6384
        %s6419 = scalar_lea.vmem [#allocation8], 384
        %v6420 = vld [vmem:[%s6419] sm:$0xff]
        %v6421 = vld [vmem:[%s6419 + $0x8] sm:$0xff]
        %v6422 = vld [vmem:[%s6419 + $0x10] sm:$0xff]
        %v6423 = vld [vmem:[%s6419 + $0x18] sm:$0xff]
        %v6424 = vld [vmem:[%s6419 + $0x20] sm:$0xff]
        %v6425 = vld [vmem:[%s6419 + $0x28] sm:$0xff]
        %v6426 = vld [vmem:[%s6419 + $0x30] sm:$0xff]
        %v6427 = vld [vmem:[%s6419 + $0x38] sm:$0xff]
        %v6428 = vld [vmem:[%s6419 + $0x40] sm:$0xff]
        %v6429 = vld [vmem:[%s6419 + $0x48] sm:$0xff]
        %v6430 = vld [vmem:[%s6419 + $0x50] sm:$0xff]
        %v6431 = vld [vmem:[%s6419 + $0x58] sm:$0xff]
        %v6432 = vld [vmem:[%s6419 + $0x60] sm:$0xff]
        %v6433 = vld [vmem:[%s6419 + $0x68] sm:$0xff]
        %v6434 = vld [vmem:[%s6419 + $0x70] sm:$0xff]
        %v6435 = vld [vmem:[%s6419 + $0x78] sm:$0xff]
        %6436 = vmatprep.subr.mxu0 0.0
        %6437 = vmatpush1.msra.mxu0 %v6420
        %6438 = vmatprep.subr.mxu0 0.0
        %6439 = vmatpush1.msra.mxu0 %v6421
        %6440 = vmatprep.subr.mxu0 0.0
        %6441 = vmatpush1.msra.mxu0 %v6422
        %6442 = vmatprep.subr.mxu0 0.0
        %6443 = vmatpush1.msra.mxu0 %v6423
        %6444 = vmatprep.subr.mxu0 0.0
        %6445 = vmatpush1.msra.mxu0 %v6424
        %6446 = vmatprep.subr.mxu0 0.0
        %6447 = vmatpush1.msra.mxu0 %v6425
        %6448 = vmatprep.subr.mxu0 0.0
        %6449 = vmatpush1.msra.mxu0 %v6426
        %6450 = vmatprep.subr.mxu0 0.0
        %6451 = vmatpush1.msra.mxu0 %v6427
        %6452 = vmatprep.subr.mxu0 0.0
        %6453 = vmatpush1.msra.mxu0 %v6428
        %6454 = vmatprep.subr.mxu0 0.0
        %6455 = vmatpush1.msra.mxu0 %v6429
        %6456 = vmatprep.subr.mxu0 0.0
        %6457 = vmatpush1.msra.mxu0 %v6430
        %6458 = vmatprep.subr.mxu0 0.0
        %6459 = vmatpush1.msra.mxu0 %v6431
        %6460 = vmatprep.subr.mxu0 0.0
        %6461 = vmatpush1.msra.mxu0 %v6432
        %6462 = vmatprep.subr.mxu0 0.0
        %6463 = vmatpush1.msra.mxu0 %v6433
        %6464 = vmatprep.subr.mxu0 0.0
        %6465 = vmatpush1.msra.mxu0 %v6434
        %6466 = vmatprep.subr.mxu0 0.0
        %6467 = vmatpush1.msra.mxu0 %v6435
        %6468 = vmatprep.subr.mxu0 0.0
        %6469 = vmatpush1.msra.mxu0 0.0
        %6470 = vmatprep.subr.mxu0 0.0
        %6471 = vmatpush1.msra.mxu0 0.0
        %6472 = vmatprep.subr.mxu0 0.0
        %6473 = vmatpush1.msra.mxu0 0.0
        %6474 = vmatprep.subr.mxu0 0.0
        %6475 = vmatpush1.msra.mxu0 0.0
        %6476 = vmatprep.subr.mxu0 0.0
        %6477 = vmatpush1.msra.mxu0 0.0
        %6478 = vmatprep.subr.mxu0 0.0
        %6479 = vmatpush1.msra.mxu0 0.0
        %6480 = vmatprep.subr.mxu0 0.0
        %6481 = vmatpush1.msra.mxu0 0.0
        %6482 = vmatprep.subr.mxu0 0.0
        %6483 = vmatpush1.msra.mxu0 0.0
        %6484 = vmatprep.subr.mxu0 0.0
        %6485 = vmatpush1.msra.mxu0 0.0
        %6486 = vmatprep.subr.mxu0 0.0
        %6487 = vmatpush1.msra.mxu0 0.0
        %6488 = vmatprep.subr.mxu0 0.0
        %6489 = vmatpush1.msra.mxu0 0.0
        %6490 = vmatprep.subr.mxu0 0.0
        %6491 = vmatpush1.msra.mxu0 0.0
        %6492 = vmatprep.subr.mxu0 0.0
        %6493 = vmatpush1.msra.mxu0 0.0
        %6494 = vmatprep.subr.mxu0 0.0
        %6495 = vmatpush1.msra.mxu0 0.0
        %6496 = vmatprep.subr.mxu0 0.0
        %6497 = vmatpush1.msra.mxu0 0.0
        %6498 = vmatprep.subr.mxu0 0.0
        %6499 = vmatpush1.msra.mxu0 0.0
        %6500 = vmatprep.mubr.f32.mxu0 0.0
        %6501 = vmatmul.mubr.f32.gmra.mrb[0].mxu0 %v5339
        %v6502 = vpop.f32.mrb[0].mxu0
        %v6503 = vadd.f32 0.0, %v6502
        %v6504 = vpop.f32.mrb[0].mxu0
        %6505 = vmatprep.mubr.f32.mxu0 0.0
        %6506 = vmatmul.mubr.f32.gmra.mrb[0].mxu0 %v5340
        %v6507 = vpop.f32.mrb[0].mxu0
        %v6508 = vadd.f32 0.0, %v6507
        %v6509 = vpop.f32.mrb[0].mxu0
        %6510 = vmatprep.mubr.f32.mxu0 0.0
        %6511 = vmatmul.mubr.f32.gmra.mrb[0].mxu0 %v5342
        %v6512 = vpop.f32.mrb[0].mxu0
        %v6513 = vadd.f32 0.0, %v6512
        %v6514 = vpop.f32.mrb[0].mxu0
        %6515 = vmatprep.mubr.f32.mxu0 0.0
        %6516 = vmatmul.mubr.f32.gmra.mrb[0].mxu0 %v5343
        %v6517 = vpop.f32.mrb[0].mxu0
        %v6518 = vadd.f32 0.0, %v6517
        %v6519 = vpop.f32.mrb[0].mxu0
        %6520 = vmatprep.mubr.f32.mxu0 0.0
        %6521 = vmatmul.mubr.f32.gmra.mrb[0].mxu0 %v5345
        %v6522 = vpop.f32.mrb[0].mxu0
        %v6523 = vadd.f32 0.0, %v6522
        %v6524 = vpop.f32.mrb[0].mxu0
        %6525 = vmatprep.mubr.f32.mxu0 0.0
        %6526 = vmatmul.mubr.f32.gmra.mrb[0].mxu0 %v5346
        %v6527 = vpop.f32.mrb[0].mxu0
        %v6528 = vadd.f32 0.0, %v6527
        %v6529 = vpop.f32.mrb[0].mxu0
        %6530 = vmatprep.mubr.f32.mxu0 0.0
        %6531 = vmatmul.mubr.f32.gmra.mrb[0].mxu0 %v5348
        %v6532 = vpop.f32.mrb[0].mxu0
        %v6533 = vadd.f32 0.0, %v6532
        %v6534 = vpop.f32.mrb[0].mxu0
        %6535 = vmatprep.mubr.f32.mxu0 0.0
        %6536 = vmatmul.mubr.f32.gmra.mrb[0].mxu0 %v5349
        %v6537 = vpop.f32.mrb[0].mxu0
        %v6538 = vadd.f32 0.0, %v6537
        %v6539 = vpop.f32.mrb[0].mxu0
        %6540 = vmatprep.mubr.f32.mxu0 0.0
        %6541 = vmatmul.mubr.f32.gmra.mrb[0].mxu0 %v5351
        %v6542 = vpop.f32.mrb[0].mxu0
        %v6543 = vadd.f32 0.0, %v6542
        %v6544 = vpop.f32.mrb[0].mxu0
        %6545 = vmatprep.mubr.f32.mxu0 0.0
        %6546 = vmatmul.mubr.f32.gmra.mrb[0].mxu0 %v5352
        %v6547 = vpop.f32.mrb[0].mxu0
        %v6548 = vadd.f32 0.0, %v6547
        %v6549 = vpop.f32.mrb[0].mxu0
        %6550 = vmatprep.mubr.f32.mxu0 0.0
        %6551 = vmatmul.mubr.f32.gmra.mrb[0].mxu0 %v5354
        %v6552 = vpop.f32.mrb[0].mxu0
        %v6553 = vadd.f32 0.0, %v6552
        %v6554 = vpop.f32.mrb[0].mxu0
        %6555 = vmatprep.mubr.f32.mxu0 0.0
        %6556 = vmatmul.mubr.f32.gmra.mrb[0].mxu0 %v5355
        %v6557 = vpop.f32.mrb[0].mxu0
        %v6558 = vadd.f32 0.0, %v6557
        %v6559 = vpop.f32.mrb[0].mxu0
        %6560 = vmatprep.mubr.f32.mxu0 0.0
        %6561 = vmatmul.mubr.f32.gmra.mrb[0].mxu0 %v5357
        %v6562 = vpop.f32.mrb[0].mxu0
        %v6563 = vadd.f32 0.0, %v6562
        %v6564 = vpop.f32.mrb[0].mxu0
        %6565 = vmatprep.mubr.f32.mxu0 0.0
        %6566 = vmatmul.mubr.f32.gmra.mrb[0].mxu0 %v5358
        %v6567 = vpop.f32.mrb[0].mxu0
        %v6568 = vadd.f32 0.0, %v6567
        %v6569 = vpop.f32.mrb[0].mxu0
        %6570 = vmatprep.mubr.f32.mxu0 0.0
        %6571 = vmatmul.mubr.f32.gmra.mrb[0].mxu0 %v5360
        %v6572 = vpop.f32.mrb[0].mxu0
        %v6573 = vadd.f32 0.0, %v6572
        %v6574 = vpop.f32.mrb[0].mxu0
        %6575 = vmatprep.mubr.f32.mxu0 0.0
        %6576 = vmatmul.mubr.f32.gmra.mrb[0].mxu0 %v5361
        %v6577 = vpop.f32.mrb[0].mxu0
        %v6578 = vadd.f32 0.0, %v6577
        %v6579 = vpop.f32.mrb[0].mxu0
        %6580 = vmatprep.mubr.f32.mxu0 0.0
        %6581 = vmatmul.mubr.f32.gmra.mrb[0].mxu0 %v5363
        %v6582 = vpop.f32.mrb[0].mxu0
        %v6583 = vadd.f32 0.0, %v6582
        %v6584 = vpop.f32.mrb[0].mxu0
        %6585 = vmatprep.mubr.f32.mxu0 0.0
        %6586 = vmatmul.mubr.f32.gmra.mrb[0].mxu0 %v5364
        %v6587 = vpop.f32.mrb[0].mxu0
        %v6588 = vadd.f32 0.0, %v6587
        %v6589 = vpop.f32.mrb[0].mxu0
        %6590 = vmatprep.mubr.f32.mxu0 0.0
        %6591 = vmatmul.mubr.f32.gmra.mrb[0].mxu0 %v5366
        %v6592 = vpop.f32.mrb[0].mxu0
        %v6593 = vadd.f32 0.0, %v6592
        %v6594 = vpop.f32.mrb[0].mxu0
        %6595 = vmatprep.mubr.f32.mxu0 0.0
        %6596 = vmatmul.mubr.f32.gmra.mrb[0].mxu0 %v5367
        %v6597 = vpop.f32.mrb[0].mxu0
        %v6598 = vadd.f32 0.0, %v6597
        %v6599 = vpop.f32.mrb[0].mxu0
        %6600 = vmatprep.mubr.f32.mxu0 0.0
        %6601 = vmatmul.mubr.f32.gmra.mrb[0].mxu0 %v5369
        %v6602 = vpop.f32.mrb[0].mxu0
        %v6603 = vadd.f32 0.0, %v6602
        %v6604 = vpop.f32.mrb[0].mxu0
        %6605 = vmatprep.mubr.f32.mxu0 0.0
        %6606 = vmatmul.mubr.f32.gmra.mrb[0].mxu0 %v5370
        %v6607 = vpop.f32.mrb[0].mxu0
        %v6608 = vadd.f32 0.0, %v6607
        %v6609 = vpop.f32.mrb[0].mxu0
        %6610 = vmatprep.mubr.f32.mxu0 0.0
        %6611 = vmatmul.mubr.f32.gmra.mrb[0].mxu0 %v5372
        %v6612 = vpop.f32.mrb[0].mxu0
        %v6613 = vadd.f32 0.0, %v6612
        %v6614 = vpop.f32.mrb[0].mxu0
        %6615 = vmatprep.mubr.f32.mxu0 0.0
        %6616 = vmatmul.mubr.f32.gmra.mrb[0].mxu0 %v5373
        %v6617 = vpop.f32.mrb[0].mxu0
        %v6618 = vadd.f32 0.0, %v6617
        %v6619 = vpop.f32.mrb[0].mxu0
        %6620 = vmatprep.mubr.f32.mxu0 0.0
        %6621 = vmatmul.mubr.f32.gmra.mrb[0].mxu0 %v5375
        %v6622 = vpop.f32.mrb[0].mxu0
        %v6623 = vadd.f32 0.0, %v6622
        %v6624 = vpop.f32.mrb[0].mxu0
        %6625 = vmatprep.mubr.f32.mxu0 0.0
        %6626 = vmatmul.mubr.f32.gmra.mrb[0].mxu0 %v5376
        %v6627 = vpop.f32.mrb[0].mxu0
        %v6628 = vadd.f32 0.0, %v6627
        %v6629 = vpop.f32.mrb[0].mxu0
        %6630 = vmatprep.mubr.f32.mxu0 0.0
        %6631 = vmatmul.mubr.f32.gmra.mrb[0].mxu0 %v5378
        %v6632 = vpop.f32.mrb[0].mxu0
        %v6633 = vadd.f32 0.0, %v6632
        %v6634 = vpop.f32.mrb[0].mxu0
        %6635 = vmatprep.mubr.f32.mxu0 0.0
        %6636 = vmatmul.mubr.f32.gmra.mrb[0].mxu0 %v5379
        %v6637 = vpop.f32.mrb[0].mxu0
        %v6638 = vadd.f32 0.0, %v6637
        %v6639 = vpop.f32.mrb[0].mxu0
        %6640 = vmatprep.mubr.f32.mxu0 0.0
        %6641 = vmatmul.mubr.f32.gmra.mrb[0].mxu0 %v5381
        %v6642 = vpop.f32.mrb[0].mxu0
        %v6643 = vadd.f32 0.0, %v6642
        %v6644 = vpop.f32.mrb[0].mxu0
        %6645 = vmatprep.mubr.f32.mxu0 0.0
        %6646 = vmatmul.mubr.f32.gmra.mrb[0].mxu0 %v5382
        %v6647 = vpop.f32.mrb[0].mxu0
        %v6648 = vadd.f32 0.0, %v6647
        %v6649 = vpop.f32.mrb[0].mxu0
        %6650 = vmatprep.mubr.f32.mxu0 0.0
        %6651 = vmatmul.mubr.f32.gmra.mrb[0].mxu0 %v5384
        %v6652 = vpop.f32.mrb[0].mxu0
        %v6653 = vadd.f32 0.0, %v6652
        %v6654 = vpop.f32.mrb[0].mxu0
        %6655 = vmatprep.mubr.f32.mxu0 0.0
        %6656 = vmatmul.mubr.f32.gmra.mrb[0].mxu0 %v5385
        %v6657 = vpop.f32.mrb[0].mxu0
        %v6658 = vadd.f32 0.0, %v6657
        %v6659 = vpop.f32.mrb[0].mxu0
        %6660 = vdwg.mxu0
        %v6661 = vadd.f32 %v6387, %v6503
        %v6662 = vadd.f32 %v6388, %v6508
        %v6663 = vadd.f32 %v6389, %v6513
        %v6664 = vadd.f32 %v6390, %v6518
        %v6665 = vadd.f32 %v6391, %v6523
        %v6666 = vadd.f32 %v6392, %v6528
        %v6667 = vadd.f32 %v6393, %v6533
        %v6668 = vadd.f32 %v6394, %v6538
        %v6669 = vadd.f32 %v6395, %v6543
        %v6670 = vadd.f32 %v6396, %v6548
        %v6671 = vadd.f32 %v6397, %v6553
        %v6672 = vadd.f32 %v6398, %v6558
        %v6673 = vadd.f32 %v6399, %v6563
        %v6674 = vadd.f32 %v6400, %v6568
        %v6675 = vadd.f32 %v6401, %v6573
        %v6676 = vadd.f32 %v6402, %v6578
        %v6677 = vadd.f32 %v6403, %v6583
        %v6678 = vadd.f32 %v6404, %v6588
        %v6679 = vadd.f32 %v6405, %v6593
        %v6680 = vadd.f32 %v6406, %v6598
        %v6681 = vadd.f32 %v6407, %v6603
        %v6682 = vadd.f32 %v6408, %v6608
        %v6683 = vadd.f32 %v6409, %v6613
        %v6684 = vadd.f32 %v6410, %v6618
        %v6685 = vadd.f32 %v6411, %v6623
        %v6686 = vadd.f32 %v6412, %v6628
        %v6687 = vadd.f32 %v6413, %v6633
        %v6688 = vadd.f32 %v6414, %v6638
        %v6689 = vadd.f32 %v6415, %v6643
        %v6690 = vadd.f32 %v6416, %v6648
        %v6691 = vadd.f32 %v6417, %v6653
        %v6692 = vadd.f32 %v6418, %v6658
        %v6696 = vrot.slane %v5384, 1
        %v6697 = vrot.slane %v5385, 1
        %v6698 = vsel %vm663, %v6696, %v6697
        %v6699 = vrot.slane %v5386, 1
        %v6700 = vsel %vm663, %v6697, %v6699
        %s6703 = scalar_lea.vmem [#allocation8], 512
        %v6704 = vld [vmem:[%s6703] sm:$0xff]
        %v6705 = vld [vmem:[%s6703 + $0x8] sm:$0xff]
        %v6706 = vld [vmem:[%s6703 + $0x10] sm:$0xff]
        %v6707 = vld [vmem:[%s6703 + $0x18] sm:$0xff]
        %v6708 = vld [vmem:[%s6703 + $0x20] sm:$0xff]
        %v6709 = vld [vmem:[%s6703 + $0x28] sm:$0xff]
        %v6710 = vld [vmem:[%s6703 + $0x30] sm:$0xff]
        %v6711 = vld [vmem:[%s6703 + $0x38] sm:$0xff]
        %v6712 = vld [vmem:[%s6703 + $0x40] sm:$0xff]
        %v6713 = vld [vmem:[%s6703 + $0x48] sm:$0xff]
        %v6714 = vld [vmem:[%s6703 + $0x50] sm:$0xff]
        %v6715 = vld [vmem:[%s6703 + $0x58] sm:$0xff]
        %v6716 = vld [vmem:[%s6703 + $0x60] sm:$0xff]
        %v6717 = vld [vmem:[%s6703 + $0x68] sm:$0xff]
        %v6718 = vld [vmem:[%s6703 + $0x70] sm:$0xff]
        %v6719 = vld [vmem:[%s6703 + $0x78] sm:$0xff]
        %6720 = vmatprep.subr.mxu0 0.0
        %6721 = vmatpush1.msra.mxu0 %v6704
        %6722 = vmatprep.subr.mxu0 0.0
        %6723 = vmatpush1.msra.mxu0 %v6705
        %6724 = vmatprep.subr.mxu0 0.0
        %6725 = vmatpush1.msra.mxu0 %v6706
        %6726 = vmatprep.subr.mxu0 0.0
        %6727 = vmatpush1.msra.mxu0 %v6707
        %6728 = vmatprep.subr.mxu0 0.0
        %6729 = vmatpush1.msra.mxu0 %v6708
        %6730 = vmatprep.subr.mxu0 0.0
        %6731 = vmatpush1.msra.mxu0 %v6709
        %6732 = vmatprep.subr.mxu0 0.0
        %6733 = vmatpush1.msra.mxu0 %v6710
        %6734 = vmatprep.subr.mxu0 0.0
        %6735 = vmatpush1.msra.mxu0 %v6711
        %6736 = vmatprep.subr.mxu0 0.0
        %6737 = vmatpush1.msra.mxu0 %v6712
        %6738 = vmatprep.subr.mxu0 0.0
        %6739 = vmatpush1.msra.mxu0 %v6713
        %6740 = vmatprep.subr.mxu0 0.0
        %6741 = vmatpush1.msra.mxu0 %v6714
        %6742 = vmatprep.subr.mxu0 0.0
        %6743 = vmatpush1.msra.mxu0 %v6715
        %6744 = vmatprep.subr.mxu0 0.0
        %6745 = vmatpush1.msra.mxu0 %v6716
        %6746 = vmatprep.subr.mxu0 0.0
        %6747 = vmatpush1.msra.mxu0 %v6717
        %6748 = vmatprep.subr.mxu0 0.0
        %6749 = vmatpush1.msra.mxu0 %v6718
        %6750 = vmatprep.subr.mxu0 0.0
        %6751 = vmatpush1.msra.mxu0 %v6719
        %6752 = vmatprep.subr.mxu0 0.0
        %6753 = vmatpush1.msra.mxu0 0.0
        %6754 = vmatprep.subr.mxu0 0.0
        %6755 = vmatpush1.msra.mxu0 0.0
        %6756 = vmatprep.subr.mxu0 0.0
        %6757 = vmatpush1.msra.mxu0 0.0
        %6758 = vmatprep.subr.mxu0 0.0
        %6759 = vmatpush1.msra.mxu0 0.0
        %6760 = vmatprep.subr.mxu0 0.0
        %6761 = vmatpush1.msra.mxu0 0.0
        %6762 = vmatprep.subr.mxu0 0.0
        %6763 = vmatpush1.msra.mxu0 0.0
        %6764 = vmatprep.subr.mxu0 0.0
        %6765 = vmatpush1.msra.mxu0 0.0
        %6766 = vmatprep.subr.mxu0 0.0
        %6767 = vmatpush1.msra.mxu0 0.0
        %6768 = vmatprep.subr.mxu0 0.0
        %6769 = vmatpush1.msra.mxu0 0.0
        %6770 = vmatprep.subr.mxu0 0.0
        %6771 = vmatpush1.msra.mxu0 0.0
        %6772 = vmatprep.subr.mxu0 0.0
        %6773 = vmatpush1.msra.mxu0 0.0
        %6774 = vmatprep.subr.mxu0 0.0
        %6775 = vmatpush1.msra.mxu0 0.0
        %6776 = vmatprep.subr.mxu0 0.0
        %6777 = vmatpush1.msra.mxu0 0.0
        %6778 = vmatprep.subr.mxu0 0.0
        %6779 = vmatpush1.msra.mxu0 0.0
        %6780 = vmatprep.subr.mxu0 0.0
        %6781 = vmatpush1.msra.mxu0 0.0
        %6782 = vmatprep.subr.mxu0 0.0
        %6783 = vmatpush1.msra.mxu0 0.0
        %6784 = vmatprep.mubr.f32.mxu0 0.0
        %6785 = vmatmul.mubr.f32.gmra.mrb[0].mxu0 %v5461
        %v6786 = vpop.f32.mrb[0].mxu0
        %v6787 = vadd.f32 0.0, %v6786
        %v6788 = vpop.f32.mrb[0].mxu0
        %6789 = vmatprep.mubr.f32.mxu0 0.0
        %6790 = vmatmul.mubr.f32.gmra.mrb[0].mxu0 %v5463
        %v6791 = vpop.f32.mrb[0].mxu0
        %v6792 = vadd.f32 0.0, %v6791
        %v6793 = vpop.f32.mrb[0].mxu0
        %6794 = vmatprep.mubr.f32.mxu0 0.0
        %6795 = vmatmul.mubr.f32.gmra.mrb[0].mxu0 %v5466
        %v6796 = vpop.f32.mrb[0].mxu0
        %v6797 = vadd.f32 0.0, %v6796
        %v6798 = vpop.f32.mrb[0].mxu0
        %6799 = vmatprep.mubr.f32.mxu0 0.0
        %6800 = vmatmul.mubr.f32.gmra.mrb[0].mxu0 %v5468
        %v6801 = vpop.f32.mrb[0].mxu0
        %v6802 = vadd.f32 0.0, %v6801
        %v6803 = vpop.f32.mrb[0].mxu0
        %6804 = vmatprep.mubr.f32.mxu0 0.0
        %6805 = vmatmul.mubr.f32.gmra.mrb[0].mxu0 %v5471
        %v6806 = vpop.f32.mrb[0].mxu0
        %v6807 = vadd.f32 0.0, %v6806
        %v6808 = vpop.f32.mrb[0].mxu0
        %6809 = vmatprep.mubr.f32.mxu0 0.0
        %6810 = vmatmul.mubr.f32.gmra.mrb[0].mxu0 %v5473
        %v6811 = vpop.f32.mrb[0].mxu0
        %v6812 = vadd.f32 0.0, %v6811
        %v6813 = vpop.f32.mrb[0].mxu0
        %6814 = vmatprep.mubr.f32.mxu0 0.0
        %6815 = vmatmul.mubr.f32.gmra.mrb[0].mxu0 %v5476
        %v6816 = vpop.f32.mrb[0].mxu0
        %v6817 = vadd.f32 0.0, %v6816
        %v6818 = vpop.f32.mrb[0].mxu0
        %6819 = vmatprep.mubr.f32.mxu0 0.0
        %6820 = vmatmul.mubr.f32.gmra.mrb[0].mxu0 %v5478
        %v6821 = vpop.f32.mrb[0].mxu0
        %v6822 = vadd.f32 0.0, %v6821
        %v6823 = vpop.f32.mrb[0].mxu0
        %6824 = vmatprep.mubr.f32.mxu0 0.0
        %6825 = vmatmul.mubr.f32.gmra.mrb[0].mxu0 %v5481
        %v6826 = vpop.f32.mrb[0].mxu0
        %v6827 = vadd.f32 0.0, %v6826
        %v6828 = vpop.f32.mrb[0].mxu0
        %6829 = vmatprep.mubr.f32.mxu0 0.0
        %6830 = vmatmul.mubr.f32.gmra.mrb[0].mxu0 %v5483
        %v6831 = vpop.f32.mrb[0].mxu0
        %v6832 = vadd.f32 0.0, %v6831
        %v6833 = vpop.f32.mrb[0].mxu0
        %6834 = vmatprep.mubr.f32.mxu0 0.0
        %6835 = vmatmul.mubr.f32.gmra.mrb[0].mxu0 %v5486
        %v6836 = vpop.f32.mrb[0].mxu0
        %v6837 = vadd.f32 0.0, %v6836
        %v6838 = vpop.f32.mrb[0].mxu0
        %6839 = vmatprep.mubr.f32.mxu0 0.0
        %6840 = vmatmul.mubr.f32.gmra.mrb[0].mxu0 %v5488
        %v6841 = vpop.f32.mrb[0].mxu0
        %v6842 = vadd.f32 0.0, %v6841
        %v6843 = vpop.f32.mrb[0].mxu0
        %6844 = vmatprep.mubr.f32.mxu0 0.0
        %6845 = vmatmul.mubr.f32.gmra.mrb[0].mxu0 %v5491
        %v6846 = vpop.f32.mrb[0].mxu0
        %v6847 = vadd.f32 0.0, %v6846
        %v6848 = vpop.f32.mrb[0].mxu0
        %6849 = vmatprep.mubr.f32.mxu0 0.0
        %6850 = vmatmul.mubr.f32.gmra.mrb[0].mxu0 %v5493
        %v6851 = vpop.f32.mrb[0].mxu0
        %v6852 = vadd.f32 0.0, %v6851
        %v6853 = vpop.f32.mrb[0].mxu0
        %6854 = vmatprep.mubr.f32.mxu0 0.0
        %6855 = vmatmul.mubr.f32.gmra.mrb[0].mxu0 %v5496
        %v6856 = vpop.f32.mrb[0].mxu0
        %v6857 = vadd.f32 0.0, %v6856
        %v6858 = vpop.f32.mrb[0].mxu0
        %6859 = vmatprep.mubr.f32.mxu0 0.0
        %6860 = vmatmul.mubr.f32.gmra.mrb[0].mxu0 %v5498
        %v6861 = vpop.f32.mrb[0].mxu0
        %v6862 = vadd.f32 0.0, %v6861
        %v6863 = vpop.f32.mrb[0].mxu0
        %6864 = vmatprep.mubr.f32.mxu0 0.0
        %6865 = vmatmul.mubr.f32.gmra.mrb[0].mxu0 %v5501
        %v6866 = vpop.f32.mrb[0].mxu0
        %v6867 = vadd.f32 0.0, %v6866
        %v6868 = vpop.f32.mrb[0].mxu0
        %6869 = vmatprep.mubr.f32.mxu0 0.0
        %6870 = vmatmul.mubr.f32.gmra.mrb[0].mxu0 %v5503
        %v6871 = vpop.f32.mrb[0].mxu0
        %v6872 = vadd.f32 0.0, %v6871
        %v6873 = vpop.f32.mrb[0].mxu0
        %6874 = vmatprep.mubr.f32.mxu0 0.0
        %6875 = vmatmul.mubr.f32.gmra.mrb[0].mxu0 %v5506
        %v6876 = vpop.f32.mrb[0].mxu0
        %v6877 = vadd.f32 0.0, %v6876
        %v6878 = vpop.f32.mrb[0].mxu0
        %6879 = vmatprep.mubr.f32.mxu0 0.0
        %6880 = vmatmul.mubr.f32.gmra.mrb[0].mxu0 %v5508
        %v6881 = vpop.f32.mrb[0].mxu0
        %v6882 = vadd.f32 0.0, %v6881
        %v6883 = vpop.f32.mrb[0].mxu0
        %6884 = vmatprep.mubr.f32.mxu0 0.0
        %6885 = vmatmul.mubr.f32.gmra.mrb[0].mxu0 %v5511
        %v6886 = vpop.f32.mrb[0].mxu0
        %v6887 = vadd.f32 0.0, %v6886
        %v6888 = vpop.f32.mrb[0].mxu0
        %6889 = vmatprep.mubr.f32.mxu0 0.0
        %6890 = vmatmul.mubr.f32.gmra.mrb[0].mxu0 %v5513
        %v6891 = vpop.f32.mrb[0].mxu0
        %v6892 = vadd.f32 0.0, %v6891
        %v6893 = vpop.f32.mrb[0].mxu0
        %6894 = vmatprep.mubr.f32.mxu0 0.0
        %6895 = vmatmul.mubr.f32.gmra.mrb[0].mxu0 %v5516
        %v6896 = vpop.f32.mrb[0].mxu0
        %v6897 = vadd.f32 0.0, %v6896
        %v6898 = vpop.f32.mrb[0].mxu0
        %6899 = vmatprep.mubr.f32.mxu0 0.0
        %6900 = vmatmul.mubr.f32.gmra.mrb[0].mxu0 %v5518
        %v6901 = vpop.f32.mrb[0].mxu0
        %v6902 = vadd.f32 0.0, %v6901
        %v6903 = vpop.f32.mrb[0].mxu0
        %6904 = vmatprep.mubr.f32.mxu0 0.0
        %6905 = vmatmul.mubr.f32.gmra.mrb[0].mxu0 %v5521
        %v6906 = vpop.f32.mrb[0].mxu0
        %v6907 = vadd.f32 0.0, %v6906
        %v6908 = vpop.f32.mrb[0].mxu0
        %6909 = vmatprep.mubr.f32.mxu0 0.0
        %6910 = vmatmul.mubr.f32.gmra.mrb[0].mxu0 %v5523
        %v6911 = vpop.f32.mrb[0].mxu0
        %v6912 = vadd.f32 0.0, %v6911
        %v6913 = vpop.f32.mrb[0].mxu0
        %6914 = vmatprep.mubr.f32.mxu0 0.0
        %6915 = vmatmul.mubr.f32.gmra.mrb[0].mxu0 %v5526
        %v6916 = vpop.f32.mrb[0].mxu0
        %v6917 = vadd.f32 0.0, %v6916
        %v6918 = vpop.f32.mrb[0].mxu0
        %6919 = vmatprep.mubr.f32.mxu0 0.0
        %6920 = vmatmul.mubr.f32.gmra.mrb[0].mxu0 %v5528
        %v6921 = vpop.f32.mrb[0].mxu0
        %v6922 = vadd.f32 0.0, %v6921
        %v6923 = vpop.f32.mrb[0].mxu0
        %6924 = vmatprep.mubr.f32.mxu0 0.0
        %6925 = vmatmul.mubr.f32.gmra.mrb[0].mxu0 %v5531
        %v6926 = vpop.f32.mrb[0].mxu0
        %v6927 = vadd.f32 0.0, %v6926
        %v6928 = vpop.f32.mrb[0].mxu0
        %6929 = vmatprep.mubr.f32.mxu0 0.0
        %6930 = vmatmul.mubr.f32.gmra.mrb[0].mxu0 %v5533
        %v6931 = vpop.f32.mrb[0].mxu0
        %v6932 = vadd.f32 0.0, %v6931
        %v6933 = vpop.f32.mrb[0].mxu0
        %6934 = vmatprep.mubr.f32.mxu0 0.0
        %6935 = vmatmul.mubr.f32.gmra.mrb[0].mxu0 %v6698
        %v6936 = vpop.f32.mrb[0].mxu0
        %v6937 = vadd.f32 0.0, %v6936
        %v6938 = vpop.f32.mrb[0].mxu0
        %6939 = vmatprep.mubr.f32.mxu0 0.0
        %6940 = vmatmul.mubr.f32.gmra.mrb[0].mxu0 %v6700
        %v6941 = vpop.f32.mrb[0].mxu0
        %v6942 = vadd.f32 0.0, %v6941
        %v6943 = vpop.f32.mrb[0].mxu0
        %6944 = vdwg.mxu0
        %v6945 = vadd.f32 %v6661, %v6787
        %v6946 = vadd.f32 %v6662, %v6792
        %v6947 = vadd.f32 %v6663, %v6797
        %v6948 = vadd.f32 %v6664, %v6802
        %v6949 = vadd.f32 %v6665, %v6807
        %v6950 = vadd.f32 %v6666, %v6812
        %v6951 = vadd.f32 %v6667, %v6817
        %v6952 = vadd.f32 %v6668, %v6822
        %v6953 = vadd.f32 %v6669, %v6827
        %v6954 = vadd.f32 %v6670, %v6832
        %v6955 = vadd.f32 %v6671, %v6837
        %v6956 = vadd.f32 %v6672, %v6842
        %v6957 = vadd.f32 %v6673, %v6847
        %v6958 = vadd.f32 %v6674, %v6852
        %v6959 = vadd.f32 %v6675, %v6857
        %v6960 = vadd.f32 %v6676, %v6862
        %v6961 = vadd.f32 %v6677, %v6867
        %v6962 = vadd.f32 %v6678, %v6872
        %v6963 = vadd.f32 %v6679, %v6877
        %v6964 = vadd.f32 %v6680, %v6882
        %v6965 = vadd.f32 %v6681, %v6887
        %v6966 = vadd.f32 %v6682, %v6892
        %v6967 = vadd.f32 %v6683, %v6897
        %v6968 = vadd.f32 %v6684, %v6902
        %v6969 = vadd.f32 %v6685, %v6907
        %v6970 = vadd.f32 %v6686, %v6912
        %v6971 = vadd.f32 %v6687, %v6917
        %v6972 = vadd.f32 %v6688, %v6922
        %v6973 = vadd.f32 %v6689, %v6927
        %v6974 = vadd.f32 %v6690, %v6932
        %v6975 = vadd.f32 %v6691, %v6937
        %v6976 = vadd.f32 %v6692, %v6942
        %v6977 = vrot.slane %v5384, 2
        %v6978 = vrot.slane %v5385, 2
        %v6979 = vsel %vm1685, %v6977, %v6978
        %v6980 = vrot.slane %v5386, 2
        %v6981 = vsel %vm1685, %v6978, %v6980
        %s6984 = scalar_lea.vmem [#allocation8], 640
        %v6985 = vld [vmem:[%s6984] sm:$0xff]
        %v6986 = vld [vmem:[%s6984 + $0x8] sm:$0xff]
        %v6987 = vld [vmem:[%s6984 + $0x10] sm:$0xff]
        %v6988 = vld [vmem:[%s6984 + $0x18] sm:$0xff]
        %v6989 = vld [vmem:[%s6984 + $0x20] sm:$0xff]
        %v6990 = vld [vmem:[%s6984 + $0x28] sm:$0xff]
        %v6991 = vld [vmem:[%s6984 + $0x30] sm:$0xff]
        %v6992 = vld [vmem:[%s6984 + $0x38] sm:$0xff]
        %v6993 = vld [vmem:[%s6984 + $0x40] sm:$0xff]
        %v6994 = vld [vmem:[%s6984 + $0x48] sm:$0xff]
        %v6995 = vld [vmem:[%s6984 + $0x50] sm:$0xff]
        %v6996 = vld [vmem:[%s6984 + $0x58] sm:$0xff]
        %v6997 = vld [vmem:[%s6984 + $0x60] sm:$0xff]
        %v6998 = vld [vmem:[%s6984 + $0x68] sm:$0xff]
        %v6999 = vld [vmem:[%s6984 + $0x70] sm:$0xff]
        %v7000 = vld [vmem:[%s6984 + $0x78] sm:$0xff]
        %7001 = vmatprep.subr.mxu0 0.0
        %7002 = vmatpush1.msra.mxu0 %v6985
        %7003 = vmatprep.subr.mxu0 0.0
        %7004 = vmatpush1.msra.mxu0 %v6986
        %7005 = vmatprep.subr.mxu0 0.0
        %7006 = vmatpush1.msra.mxu0 %v6987
        %7007 = vmatprep.subr.mxu0 0.0
        %7008 = vmatpush1.msra.mxu0 %v6988
        %7009 = vmatprep.subr.mxu0 0.0
        %7010 = vmatpush1.msra.mxu0 %v6989
        %7011 = vmatprep.subr.mxu0 0.0
        %7012 = vmatpush1.msra.mxu0 %v6990
        %7013 = vmatprep.subr.mxu0 0.0
        %7014 = vmatpush1.msra.mxu0 %v6991
        %7015 = vmatprep.subr.mxu0 0.0
        %7016 = vmatpush1.msra.mxu0 %v6992
        %7017 = vmatprep.subr.mxu0 0.0
        %7018 = vmatpush1.msra.mxu0 %v6993
        %7019 = vmatprep.subr.mxu0 0.0
        %7020 = vmatpush1.msra.mxu0 %v6994
        %7021 = vmatprep.subr.mxu0 0.0
        %7022 = vmatpush1.msra.mxu0 %v6995
        %7023 = vmatprep.subr.mxu0 0.0
        %7024 = vmatpush1.msra.mxu0 %v6996
        %7025 = vmatprep.subr.mxu0 0.0
        %7026 = vmatpush1.msra.mxu0 %v6997
        %7027 = vmatprep.subr.mxu0 0.0
        %7028 = vmatpush1.msra.mxu0 %v6998
        %7029 = vmatprep.subr.mxu0 0.0
        %7030 = vmatpush1.msra.mxu0 %v6999
        %7031 = vmatprep.subr.mxu0 0.0
        %7032 = vmatpush1.msra.mxu0 %v7000
        %7033 = vmatprep.subr.mxu0 0.0
        %7034 = vmatpush1.msra.mxu0 0.0
        %7035 = vmatprep.subr.mxu0 0.0
        %7036 = vmatpush1.msra.mxu0 0.0
        %7037 = vmatprep.subr.mxu0 0.0
        %7038 = vmatpush1.msra.mxu0 0.0
        %7039 = vmatprep.subr.mxu0 0.0
        %7040 = vmatpush1.msra.mxu0 0.0
        %7041 = vmatprep.subr.mxu0 0.0
        %7042 = vmatpush1.msra.mxu0 0.0
        %7043 = vmatprep.subr.mxu0 0.0
        %7044 = vmatpush1.msra.mxu0 0.0
        %7045 = vmatprep.subr.mxu0 0.0
        %7046 = vmatpush1.msra.mxu0 0.0
        %7047 = vmatprep.subr.mxu0 0.0
        %7048 = vmatpush1.msra.mxu0 0.0
        %7049 = vmatprep.subr.mxu0 0.0
        %7050 = vmatpush1.msra.mxu0 0.0
        %7051 = vmatprep.subr.mxu0 0.0
        %7052 = vmatpush1.msra.mxu0 0.0
        %7053 = vmatprep.subr.mxu0 0.0
        %7054 = vmatpush1.msra.mxu0 0.0
        %7055 = vmatprep.subr.mxu0 0.0
        %7056 = vmatpush1.msra.mxu0 0.0
        %7057 = vmatprep.subr.mxu0 0.0
        %7058 = vmatpush1.msra.mxu0 0.0
        %7059 = vmatprep.subr.mxu0 0.0
        %7060 = vmatpush1.msra.mxu0 0.0
        %7061 = vmatprep.subr.mxu0 0.0
        %7062 = vmatpush1.msra.mxu0 0.0
        %7063 = vmatprep.subr.mxu0 0.0
        %7064 = vmatpush1.msra.mxu0 0.0
        %7065 = vmatprep.mubr.f32.mxu0 0.0
        %7066 = vmatmul.mubr.f32.gmra.mrb[0].mxu0 %v6040
        %v7067 = vpop.f32.mrb[0].mxu0
        %v7068 = vadd.f32 0.0, %v7067
        %v7069 = vpop.f32.mrb[0].mxu0
        %7070 = vmatprep.mubr.f32.mxu0 0.0
        %7071 = vmatmul.mubr.f32.gmra.mrb[0].mxu0 %v6042
        %v7072 = vpop.f32.mrb[0].mxu0
        %v7073 = vadd.f32 0.0, %v7072
        %v7074 = vpop.f32.mrb[0].mxu0
        %7075 = vmatprep.mubr.f32.mxu0 0.0
        %7076 = vmatmul.mubr.f32.gmra.mrb[0].mxu0 %v6045
        %v7077 = vpop.f32.mrb[0].mxu0
        %v7078 = vadd.f32 0.0, %v7077
        %v7079 = vpop.f32.mrb[0].mxu0
        %7080 = vmatprep.mubr.f32.mxu0 0.0
        %7081 = vmatmul.mubr.f32.gmra.mrb[0].mxu0 %v6047
        %v7082 = vpop.f32.mrb[0].mxu0
        %v7083 = vadd.f32 0.0, %v7082
        %v7084 = vpop.f32.mrb[0].mxu0
        %7085 = vmatprep.mubr.f32.mxu0 0.0
        %7086 = vmatmul.mubr.f32.gmra.mrb[0].mxu0 %v6050
        %v7087 = vpop.f32.mrb[0].mxu0
        %v7088 = vadd.f32 0.0, %v7087
        %v7089 = vpop.f32.mrb[0].mxu0
        %7090 = vmatprep.mubr.f32.mxu0 0.0
        %7091 = vmatmul.mubr.f32.gmra.mrb[0].mxu0 %v6052
        %v7092 = vpop.f32.mrb[0].mxu0
        %v7093 = vadd.f32 0.0, %v7092
        %v7094 = vpop.f32.mrb[0].mxu0
        %7095 = vmatprep.mubr.f32.mxu0 0.0
        %7096 = vmatmul.mubr.f32.gmra.mrb[0].mxu0 %v6055
        %v7097 = vpop.f32.mrb[0].mxu0
        %v7098 = vadd.f32 0.0, %v7097
        %v7099 = vpop.f32.mrb[0].mxu0
        %7100 = vmatprep.mubr.f32.mxu0 0.0
        %7101 = vmatmul.mubr.f32.gmra.mrb[0].mxu0 %v6057
        %v7102 = vpop.f32.mrb[0].mxu0
        %v7103 = vadd.f32 0.0, %v7102
        %v7104 = vpop.f32.mrb[0].mxu0
        %7105 = vmatprep.mubr.f32.mxu0 0.0
        %7106 = vmatmul.mubr.f32.gmra.mrb[0].mxu0 %v6060
        %v7107 = vpop.f32.mrb[0].mxu0
        %v7108 = vadd.f32 0.0, %v7107
        %v7109 = vpop.f32.mrb[0].mxu0
        %7110 = vmatprep.mubr.f32.mxu0 0.0
        %7111 = vmatmul.mubr.f32.gmra.mrb[0].mxu0 %v6062
        %v7112 = vpop.f32.mrb[0].mxu0
        %v7113 = vadd.f32 0.0, %v7112
        %v7114 = vpop.f32.mrb[0].mxu0
        %7115 = vmatprep.mubr.f32.mxu0 0.0
        %7116 = vmatmul.mubr.f32.gmra.mrb[0].mxu0 %v6065
        %v7117 = vpop.f32.mrb[0].mxu0
        %v7118 = vadd.f32 0.0, %v7117
        %v7119 = vpop.f32.mrb[0].mxu0
        %7120 = vmatprep.mubr.f32.mxu0 0.0
        %7121 = vmatmul.mubr.f32.gmra.mrb[0].mxu0 %v6067
        %v7122 = vpop.f32.mrb[0].mxu0
        %v7123 = vadd.f32 0.0, %v7122
        %v7124 = vpop.f32.mrb[0].mxu0
        %7125 = vmatprep.mubr.f32.mxu0 0.0
        %7126 = vmatmul.mubr.f32.gmra.mrb[0].mxu0 %v6070
        %v7127 = vpop.f32.mrb[0].mxu0
        %v7128 = vadd.f32 0.0, %v7127
        %v7129 = vpop.f32.mrb[0].mxu0
        %7130 = vmatprep.mubr.f32.mxu0 0.0
        %7131 = vmatmul.mubr.f32.gmra.mrb[0].mxu0 %v6072
        %v7132 = vpop.f32.mrb[0].mxu0
        %v7133 = vadd.f32 0.0, %v7132
        %v7134 = vpop.f32.mrb[0].mxu0
        %7135 = vmatprep.mubr.f32.mxu0 0.0
        %7136 = vmatmul.mubr.f32.gmra.mrb[0].mxu0 %v6075
        %v7137 = vpop.f32.mrb[0].mxu0
        %v7138 = vadd.f32 0.0, %v7137
        %v7139 = vpop.f32.mrb[0].mxu0
        %7140 = vmatprep.mubr.f32.mxu0 0.0
        %7141 = vmatmul.mubr.f32.gmra.mrb[0].mxu0 %v6077
        %v7142 = vpop.f32.mrb[0].mxu0
        %v7143 = vadd.f32 0.0, %v7142
        %v7144 = vpop.f32.mrb[0].mxu0
        %7145 = vmatprep.mubr.f32.mxu0 0.0
        %7146 = vmatmul.mubr.f32.gmra.mrb[0].mxu0 %v6080
        %v7147 = vpop.f32.mrb[0].mxu0
        %v7148 = vadd.f32 0.0, %v7147
        %v7149 = vpop.f32.mrb[0].mxu0
        %7150 = vmatprep.mubr.f32.mxu0 0.0
        %7151 = vmatmul.mubr.f32.gmra.mrb[0].mxu0 %v6082
        %v7152 = vpop.f32.mrb[0].mxu0
        %v7153 = vadd.f32 0.0, %v7152
        %v7154 = vpop.f32.mrb[0].mxu0
        %7155 = vmatprep.mubr.f32.mxu0 0.0
        %7156 = vmatmul.mubr.f32.gmra.mrb[0].mxu0 %v6085
        %v7157 = vpop.f32.mrb[0].mxu0
        %v7158 = vadd.f32 0.0, %v7157
        %v7159 = vpop.f32.mrb[0].mxu0
        %7160 = vmatprep.mubr.f32.mxu0 0.0
        %7161 = vmatmul.mubr.f32.gmra.mrb[0].mxu0 %v6087
        %v7162 = vpop.f32.mrb[0].mxu0
        %v7163 = vadd.f32 0.0, %v7162
        %v7164 = vpop.f32.mrb[0].mxu0
        %7165 = vmatprep.mubr.f32.mxu0 0.0
        %7166 = vmatmul.mubr.f32.gmra.mrb[0].mxu0 %v6090
        %v7167 = vpop.f32.mrb[0].mxu0
        %v7168 = vadd.f32 0.0, %v7167
        %v7169 = vpop.f32.mrb[0].mxu0
        %7170 = vmatprep.mubr.f32.mxu0 0.0
        %7171 = vmatmul.mubr.f32.gmra.mrb[0].mxu0 %v6092
        %v7172 = vpop.f32.mrb[0].mxu0
        %v7173 = vadd.f32 0.0, %v7172
        %v7174 = vpop.f32.mrb[0].mxu0
        %7175 = vmatprep.mubr.f32.mxu0 0.0
        %7176 = vmatmul.mubr.f32.gmra.mrb[0].mxu0 %v6095
        %v7177 = vpop.f32.mrb[0].mxu0
        %v7178 = vadd.f32 0.0, %v7177
        %v7179 = vpop.f32.mrb[0].mxu0
        %7180 = vmatprep.mubr.f32.mxu0 0.0
        %7181 = vmatmul.mubr.f32.gmra.mrb[0].mxu0 %v6097
        %v7182 = vpop.f32.mrb[0].mxu0
        %v7183 = vadd.f32 0.0, %v7182
        %v7184 = vpop.f32.mrb[0].mxu0
        %7185 = vmatprep.mubr.f32.mxu0 0.0
        %7186 = vmatmul.mubr.f32.gmra.mrb[0].mxu0 %v6100
        %v7187 = vpop.f32.mrb[0].mxu0
        %v7188 = vadd.f32 0.0, %v7187
        %v7189 = vpop.f32.mrb[0].mxu0
        %7190 = vmatprep.mubr.f32.mxu0 0.0
        %7191 = vmatmul.mubr.f32.gmra.mrb[0].mxu0 %v6102
        %v7192 = vpop.f32.mrb[0].mxu0
        %v7193 = vadd.f32 0.0, %v7192
        %v7194 = vpop.f32.mrb[0].mxu0
        %7195 = vmatprep.mubr.f32.mxu0 0.0
        %7196 = vmatmul.mubr.f32.gmra.mrb[0].mxu0 %v6105
        %v7197 = vpop.f32.mrb[0].mxu0
        %v7198 = vadd.f32 0.0, %v7197
        %v7199 = vpop.f32.mrb[0].mxu0
        %7200 = vmatprep.mubr.f32.mxu0 0.0
        %7201 = vmatmul.mubr.f32.gmra.mrb[0].mxu0 %v6107
        %v7202 = vpop.f32.mrb[0].mxu0
        %v7203 = vadd.f32 0.0, %v7202
        %v7204 = vpop.f32.mrb[0].mxu0
        %7205 = vmatprep.mubr.f32.mxu0 0.0
        %7206 = vmatmul.mubr.f32.gmra.mrb[0].mxu0 %v6110
        %v7207 = vpop.f32.mrb[0].mxu0
        %v7208 = vadd.f32 0.0, %v7207
        %v7209 = vpop.f32.mrb[0].mxu0
        %7210 = vmatprep.mubr.f32.mxu0 0.0
        %7211 = vmatmul.mubr.f32.gmra.mrb[0].mxu0 %v6112
        %v7212 = vpop.f32.mrb[0].mxu0
        %v7213 = vadd.f32 0.0, %v7212
        %v7214 = vpop.f32.mrb[0].mxu0
        %7215 = vmatprep.mubr.f32.mxu0 0.0
        %7216 = vmatmul.mubr.f32.gmra.mrb[0].mxu0 %v6979
        %v7217 = vpop.f32.mrb[0].mxu0
        %v7218 = vadd.f32 0.0, %v7217
        %v7219 = vpop.f32.mrb[0].mxu0
        %7220 = vmatprep.mubr.f32.mxu0 0.0
        %7221 = vmatmul.mubr.f32.gmra.mrb[0].mxu0 %v6981
        %v7222 = vpop.f32.mrb[0].mxu0
        %v7223 = vadd.f32 0.0, %v7222
        %v7224 = vpop.f32.mrb[0].mxu0
        %7225 = vdwg.mxu0
        %v7226 = vadd.f32 %v6945, %v7068
        %v7227 = vadd.f32 %v6946, %v7073
        %v7228 = vadd.f32 %v6947, %v7078
        %v7229 = vadd.f32 %v6948, %v7083
        %v7230 = vadd.f32 %v6949, %v7088
        %v7231 = vadd.f32 %v6950, %v7093
        %v7232 = vadd.f32 %v6951, %v7098
        %v7233 = vadd.f32 %v6952, %v7103
        %v7234 = vadd.f32 %v6953, %v7108
        %v7235 = vadd.f32 %v6954, %v7113
        %v7236 = vadd.f32 %v6955, %v7118
        %v7237 = vadd.f32 %v6956, %v7123
        %v7238 = vadd.f32 %v6957, %v7128
        %v7239 = vadd.f32 %v6958, %v7133
        %v7240 = vadd.f32 %v6959, %v7138
        %v7241 = vadd.f32 %v6960, %v7143
        %v7242 = vadd.f32 %v6961, %v7148
        %v7243 = vadd.f32 %v6962, %v7153
        %v7244 = vadd.f32 %v6963, %v7158
        %v7245 = vadd.f32 %v6964, %v7163
        %v7246 = vadd.f32 %v6965, %v7168
        %v7247 = vadd.f32 %v6966, %v7173
        %v7248 = vadd.f32 %v6967, %v7178
        %v7249 = vadd.f32 %v6968, %v7183
        %v7250 = vadd.f32 %v6969, %v7188
        %v7251 = vadd.f32 %v6970, %v7193
        %v7252 = vadd.f32 %v6971, %v7198
        %v7253 = vadd.f32 %v6972, %v7203
        %v7254 = vadd.f32 %v6973, %v7208
        %v7255 = vadd.f32 %v6974, %v7213
        %v7256 = vadd.f32 %v6975, %v7218
        %v7257 = vadd.f32 %v6976, %v7223
        %s7258 = scalar_lea.vmem [#allocation8], 768
        %v7259 = vld [vmem:[%s7258] sm:$0xff]
        %v7260 = vld [vmem:[%s7258 + $0x8] sm:$0xff]
        %v7261 = vld [vmem:[%s7258 + $0x10] sm:$0xff]
        %v7262 = vld [vmem:[%s7258 + $0x18] sm:$0xff]
        %v7263 = vld [vmem:[%s7258 + $0x20] sm:$0xff]
        %v7264 = vld [vmem:[%s7258 + $0x28] sm:$0xff]
        %v7265 = vld [vmem:[%s7258 + $0x30] sm:$0xff]
        %v7266 = vld [vmem:[%s7258 + $0x38] sm:$0xff]
        %v7267 = vld [vmem:[%s7258 + $0x40] sm:$0xff]
        %v7268 = vld [vmem:[%s7258 + $0x48] sm:$0xff]
        %v7269 = vld [vmem:[%s7258 + $0x50] sm:$0xff]
        %v7270 = vld [vmem:[%s7258 + $0x58] sm:$0xff]
        %v7271 = vld [vmem:[%s7258 + $0x60] sm:$0xff]
        %v7272 = vld [vmem:[%s7258 + $0x68] sm:$0xff]
        %v7273 = vld [vmem:[%s7258 + $0x70] sm:$0xff]
        %v7274 = vld [vmem:[%s7258 + $0x78] sm:$0xff]
        %7275 = vmatprep.subr.mxu0 0.0
        %7276 = vmatpush1.msra.mxu0 %v7259
        %7277 = vmatprep.subr.mxu0 0.0
        %7278 = vmatpush1.msra.mxu0 %v7260
        %7279 = vmatprep.subr.mxu0 0.0
        %7280 = vmatpush1.msra.mxu0 %v7261
        %7281 = vmatprep.subr.mxu0 0.0
        %7282 = vmatpush1.msra.mxu0 %v7262
        %7283 = vmatprep.subr.mxu0 0.0
        %7284 = vmatpush1.msra.mxu0 %v7263
        %7285 = vmatprep.subr.mxu0 0.0
        %7286 = vmatpush1.msra.mxu0 %v7264
        %7287 = vmatprep.subr.mxu0 0.0
        %7288 = vmatpush1.msra.mxu0 %v7265
        %7289 = vmatprep.subr.mxu0 0.0
        %7290 = vmatpush1.msra.mxu0 %v7266
        %7291 = vmatprep.subr.mxu0 0.0
        %7292 = vmatpush1.msra.mxu0 %v7267
        %7293 = vmatprep.subr.mxu0 0.0
        %7294 = vmatpush1.msra.mxu0 %v7268
        %7295 = vmatprep.subr.mxu0 0.0
        %7296 = vmatpush1.msra.mxu0 %v7269
        %7297 = vmatprep.subr.mxu0 0.0
        %7298 = vmatpush1.msra.mxu0 %v7270
        %7299 = vmatprep.subr.mxu0 0.0
        %7300 = vmatpush1.msra.mxu0 %v7271
        %7301 = vmatprep.subr.mxu0 0.0
        %7302 = vmatpush1.msra.mxu0 %v7272
        %7303 = vmatprep.subr.mxu0 0.0
        %7304 = vmatpush1.msra.mxu0 %v7273
        %7305 = vmatprep.subr.mxu0 0.0
        %7306 = vmatpush1.msra.mxu0 %v7274
        %7307 = vmatprep.subr.mxu0 0.0
        %7308 = vmatpush1.msra.mxu0 0.0
        %7309 = vmatprep.subr.mxu0 0.0
        %7310 = vmatpush1.msra.mxu0 0.0
        %7311 = vmatprep.subr.mxu0 0.0
        %7312 = vmatpush1.msra.mxu0 0.0
        %7313 = vmatprep.subr.mxu0 0.0
        %7314 = vmatpush1.msra.mxu0 0.0
        %7315 = vmatprep.subr.mxu0 0.0
        %7316 = vmatpush1.msra.mxu0 0.0
        %7317 = vmatprep.subr.mxu0 0.0
        %7318 = vmatpush1.msra.mxu0 0.0
        %7319 = vmatprep.subr.mxu0 0.0
        %7320 = vmatpush1.msra.mxu0 0.0
        %7321 = vmatprep.subr.mxu0 0.0
        %7322 = vmatpush1.msra.mxu0 0.0
        %7323 = vmatprep.subr.mxu0 0.0
        %7324 = vmatpush1.msra.mxu0 0.0
        %7325 = vmatprep.subr.mxu0 0.0
        %7326 = vmatpush1.msra.mxu0 0.0
        %7327 = vmatprep.subr.mxu0 0.0
        %7328 = vmatpush1.msra.mxu0 0.0
        %7329 = vmatprep.subr.mxu0 0.0
        %7330 = vmatpush1.msra.mxu0 0.0
        %7331 = vmatprep.subr.mxu0 0.0
        %7332 = vmatpush1.msra.mxu0 0.0
        %7333 = vmatprep.subr.mxu0 0.0
        %7334 = vmatpush1.msra.mxu0 0.0
        %7335 = vmatprep.subr.mxu0 0.0
        %7336 = vmatpush1.msra.mxu0 0.0
        %7337 = vmatprep.subr.mxu0 0.0
        %7338 = vmatpush1.msra.mxu0 0.0
        %7339 = vmatprep.mubr.f32.mxu0 0.0
        %7340 = vmatmul.mubr.f32.gmra.mrb[0].mxu0 %v5342
        %v7341 = vpop.f32.mrb[0].mxu0
        %v7342 = vadd.f32 0.0, %v7341
        %v7343 = vpop.f32.mrb[0].mxu0
        %7344 = vmatprep.mubr.f32.mxu0 0.0
        %7345 = vmatmul.mubr.f32.gmra.mrb[0].mxu0 %v5343
        %v7346 = vpop.f32.mrb[0].mxu0
        %v7347 = vadd.f32 0.0, %v7346
        %v7348 = vpop.f32.mrb[0].mxu0
        %7349 = vmatprep.mubr.f32.mxu0 0.0
        %7350 = vmatmul.mubr.f32.gmra.mrb[0].mxu0 %v5345
        %v7351 = vpop.f32.mrb[0].mxu0
        %v7352 = vadd.f32 0.0, %v7351
        %v7353 = vpop.f32.mrb[0].mxu0
        %7354 = vmatprep.mubr.f32.mxu0 0.0
        %7355 = vmatmul.mubr.f32.gmra.mrb[0].mxu0 %v5346
        %v7356 = vpop.f32.mrb[0].mxu0
        %v7357 = vadd.f32 0.0, %v7356
        %v7358 = vpop.f32.mrb[0].mxu0
        %7359 = vmatprep.mubr.f32.mxu0 0.0
        %7360 = vmatmul.mubr.f32.gmra.mrb[0].mxu0 %v5348
        %v7361 = vpop.f32.mrb[0].mxu0
        %v7362 = vadd.f32 0.0, %v7361
        %v7363 = vpop.f32.mrb[0].mxu0
        %7364 = vmatprep.mubr.f32.mxu0 0.0
        %7365 = vmatmul.mubr.f32.gmra.mrb[0].mxu0 %v5349
        %v7366 = vpop.f32.mrb[0].mxu0
        %v7367 = vadd.f32 0.0, %v7366
        %v7368 = vpop.f32.mrb[0].mxu0
        %7369 = vmatprep.mubr.f32.mxu0 0.0
        %7370 = vmatmul.mubr.f32.gmra.mrb[0].mxu0 %v5351
        %v7371 = vpop.f32.mrb[0].mxu0
        %v7372 = vadd.f32 0.0, %v7371
        %v7373 = vpop.f32.mrb[0].mxu0
        %7374 = vmatprep.mubr.f32.mxu0 0.0
        %7375 = vmatmul.mubr.f32.gmra.mrb[0].mxu0 %v5352
        %v7376 = vpop.f32.mrb[0].mxu0
        %v7377 = vadd.f32 0.0, %v7376
        %v7378 = vpop.f32.mrb[0].mxu0
        %7379 = vmatprep.mubr.f32.mxu0 0.0
        %7380 = vmatmul.mubr.f32.gmra.mrb[0].mxu0 %v5354
        %v7381 = vpop.f32.mrb[0].mxu0
        %v7382 = vadd.f32 0.0, %v7381
        %v7383 = vpop.f32.mrb[0].mxu0
        %7384 = vmatprep.mubr.f32.mxu0 0.0
        %7385 = vmatmul.mubr.f32.gmra.mrb[0].mxu0 %v5355
        %v7386 = vpop.f32.mrb[0].mxu0
        %v7387 = vadd.f32 0.0, %v7386
        %v7388 = vpop.f32.mrb[0].mxu0
        %7389 = vmatprep.mubr.f32.mxu0 0.0
        %7390 = vmatmul.mubr.f32.gmra.mrb[0].mxu0 %v5357
        %v7391 = vpop.f32.mrb[0].mxu0
        %v7392 = vadd.f32 0.0, %v7391
        %v7393 = vpop.f32.mrb[0].mxu0
        %7394 = vmatprep.mubr.f32.mxu0 0.0
        %7395 = vmatmul.mubr.f32.gmra.mrb[0].mxu0 %v5358
        %v7396 = vpop.f32.mrb[0].mxu0
        %v7397 = vadd.f32 0.0, %v7396
        %v7398 = vpop.f32.mrb[0].mxu0
        %7399 = vmatprep.mubr.f32.mxu0 0.0
        %7400 = vmatmul.mubr.f32.gmra.mrb[0].mxu0 %v5360
        %v7401 = vpop.f32.mrb[0].mxu0
        %v7402 = vadd.f32 0.0, %v7401
        %v7403 = vpop.f32.mrb[0].mxu0
        %7404 = vmatprep.mubr.f32.mxu0 0.0
        %7405 = vmatmul.mubr.f32.gmra.mrb[0].mxu0 %v5361
        %v7406 = vpop.f32.mrb[0].mxu0
        %v7407 = vadd.f32 0.0, %v7406
        %v7408 = vpop.f32.mrb[0].mxu0
        %7409 = vmatprep.mubr.f32.mxu0 0.0
        %7410 = vmatmul.mubr.f32.gmra.mrb[0].mxu0 %v5363
        %v7411 = vpop.f32.mrb[0].mxu0
        %v7412 = vadd.f32 0.0, %v7411
        %v7413 = vpop.f32.mrb[0].mxu0
        %7414 = vmatprep.mubr.f32.mxu0 0.0
        %7415 = vmatmul.mubr.f32.gmra.mrb[0].mxu0 %v5364
        %v7416 = vpop.f32.mrb[0].mxu0
        %v7417 = vadd.f32 0.0, %v7416
        %v7418 = vpop.f32.mrb[0].mxu0
        %7419 = vmatprep.mubr.f32.mxu0 0.0
        %7420 = vmatmul.mubr.f32.gmra.mrb[0].mxu0 %v5366
        %v7421 = vpop.f32.mrb[0].mxu0
        %v7422 = vadd.f32 0.0, %v7421
        %v7423 = vpop.f32.mrb[0].mxu0
        %7424 = vmatprep.mubr.f32.mxu0 0.0
        %7425 = vmatmul.mubr.f32.gmra.mrb[0].mxu0 %v5367
        %v7426 = vpop.f32.mrb[0].mxu0
        %v7427 = vadd.f32 0.0, %v7426
        %v7428 = vpop.f32.mrb[0].mxu0
        %7429 = vmatprep.mubr.f32.mxu0 0.0
        %7430 = vmatmul.mubr.f32.gmra.mrb[0].mxu0 %v5369
        %v7431 = vpop.f32.mrb[0].mxu0
        %v7432 = vadd.f32 0.0, %v7431
        %v7433 = vpop.f32.mrb[0].mxu0
        %7434 = vmatprep.mubr.f32.mxu0 0.0
        %7435 = vmatmul.mubr.f32.gmra.mrb[0].mxu0 %v5370
        %v7436 = vpop.f32.mrb[0].mxu0
        %v7437 = vadd.f32 0.0, %v7436
        %v7438 = vpop.f32.mrb[0].mxu0
        %7439 = vmatprep.mubr.f32.mxu0 0.0
        %7440 = vmatmul.mubr.f32.gmra.mrb[0].mxu0 %v5372
        %v7441 = vpop.f32.mrb[0].mxu0
        %v7442 = vadd.f32 0.0, %v7441
        %v7443 = vpop.f32.mrb[0].mxu0
        %7444 = vmatprep.mubr.f32.mxu0 0.0
        %7445 = vmatmul.mubr.f32.gmra.mrb[0].mxu0 %v5373
        %v7446 = vpop.f32.mrb[0].mxu0
        %v7447 = vadd.f32 0.0, %v7446
        %v7448 = vpop.f32.mrb[0].mxu0
        %7449 = vmatprep.mubr.f32.mxu0 0.0
        %7450 = vmatmul.mubr.f32.gmra.mrb[0].mxu0 %v5375
        %v7451 = vpop.f32.mrb[0].mxu0
        %v7452 = vadd.f32 0.0, %v7451
        %v7453 = vpop.f32.mrb[0].mxu0
        %7454 = vmatprep.mubr.f32.mxu0 0.0
        %7455 = vmatmul.mubr.f32.gmra.mrb[0].mxu0 %v5376
        %v7456 = vpop.f32.mrb[0].mxu0
        %v7457 = vadd.f32 0.0, %v7456
        %v7458 = vpop.f32.mrb[0].mxu0
        %7459 = vmatprep.mubr.f32.mxu0 0.0
        %7460 = vmatmul.mubr.f32.gmra.mrb[0].mxu0 %v5378
        %v7461 = vpop.f32.mrb[0].mxu0
        %v7462 = vadd.f32 0.0, %v7461
        %v7463 = vpop.f32.mrb[0].mxu0
        %7464 = vmatprep.mubr.f32.mxu0 0.0
        %7465 = vmatmul.mubr.f32.gmra.mrb[0].mxu0 %v5379
        %v7466 = vpop.f32.mrb[0].mxu0
        %v7467 = vadd.f32 0.0, %v7466
        %v7468 = vpop.f32.mrb[0].mxu0
        %7469 = vmatprep.mubr.f32.mxu0 0.0
        %7470 = vmatmul.mubr.f32.gmra.mrb[0].mxu0 %v5381
        %v7471 = vpop.f32.mrb[0].mxu0
        %v7472 = vadd.f32 0.0, %v7471
        %v7473 = vpop.f32.mrb[0].mxu0
        %7474 = vmatprep.mubr.f32.mxu0 0.0
        %7475 = vmatmul.mubr.f32.gmra.mrb[0].mxu0 %v5382
        %v7476 = vpop.f32.mrb[0].mxu0
        %v7477 = vadd.f32 0.0, %v7476
        %v7478 = vpop.f32.mrb[0].mxu0
        %7479 = vmatprep.mubr.f32.mxu0 0.0
        %7480 = vmatmul.mubr.f32.gmra.mrb[0].mxu0 %v5384
        %v7481 = vpop.f32.mrb[0].mxu0
        %v7482 = vadd.f32 0.0, %v7481
        %v7483 = vpop.f32.mrb[0].mxu0
        %7484 = vmatprep.mubr.f32.mxu0 0.0
        %7485 = vmatmul.mubr.f32.gmra.mrb[0].mxu0 %v5385
        %v7486 = vpop.f32.mrb[0].mxu0
        %v7487 = vadd.f32 0.0, %v7486
        %v7488 = vpop.f32.mrb[0].mxu0
        %7489 = vmatprep.mubr.f32.mxu0 0.0
        %7490 = vmatmul.mubr.f32.gmra.mrb[0].mxu0 %v5387
        %v7491 = vpop.f32.mrb[0].mxu0
        %v7492 = vadd.f32 0.0, %v7491
        %v7493 = vpop.f32.mrb[0].mxu0
        %7494 = vmatprep.mubr.f32.mxu0 0.0
        %7495 = vmatmul.mubr.f32.gmra.mrb[0].mxu0 %v5388
        %v7496 = vpop.f32.mrb[0].mxu0
        %v7497 = vadd.f32 0.0, %v7496
        %v7498 = vpop.f32.mrb[0].mxu0
        %7499 = vdwg.mxu0
        %v7500 = vadd.f32 %v7226, %v7342
        %v7501 = vadd.f32 %v7227, %v7347
        %v7502 = vadd.f32 %v7228, %v7352
        %v7503 = vadd.f32 %v7229, %v7357
        %v7504 = vadd.f32 %v7230, %v7362
        %v7505 = vadd.f32 %v7231, %v7367
        %v7506 = vadd.f32 %v7232, %v7372
        %v7507 = vadd.f32 %v7233, %v7377
        %v7508 = vadd.f32 %v7234, %v7382
        %v7509 = vadd.f32 %v7235, %v7387
        %v7510 = vadd.f32 %v7236, %v7392
        %v7511 = vadd.f32 %v7237, %v7397
        %v7512 = vadd.f32 %v7238, %v7402
        %v7513 = vadd.f32 %v7239, %v7407
        %v7514 = vadd.f32 %v7240, %v7412
        %v7515 = vadd.f32 %v7241, %v7417
        %v7516 = vadd.f32 %v7242, %v7422
        %v7517 = vadd.f32 %v7243, %v7427
        %v7518 = vadd.f32 %v7244, %v7432
        %v7519 = vadd.f32 %v7245, %v7437
        %v7520 = vadd.f32 %v7246, %v7442
        %v7521 = vadd.f32 %v7247, %v7447
        %v7522 = vadd.f32 %v7248, %v7452
        %v7523 = vadd.f32 %v7249, %v7457
        %v7524 = vadd.f32 %v7250, %v7462
        %v7525 = vadd.f32 %v7251, %v7467
        %v7526 = vadd.f32 %v7252, %v7472
        %v7527 = vadd.f32 %v7253, %v7477
        %v7528 = vadd.f32 %v7254, %v7482
        %v7529 = vadd.f32 %v7255, %v7487
        %v7530 = vadd.f32 %v7256, %v7492
        %v7531 = vadd.f32 %v7257, %v7497
        %v7535 = vrot.slane %v5387, 1
        %v7536 = vrot.slane %v5388, 1
        %v7537 = vsel %vm663, %v7535, %v7536
        %v7538 = vrot.slane %v5389, 1
        %v7539 = vsel %vm663, %v7536, %v7538
        %s7542 = scalar_lea.vmem [#allocation8], 896
        %v7543 = vld [vmem:[%s7542] sm:$0xff]
        %v7544 = vld [vmem:[%s7542 + $0x8] sm:$0xff]
        %v7545 = vld [vmem:[%s7542 + $0x10] sm:$0xff]
        %v7546 = vld [vmem:[%s7542 + $0x18] sm:$0xff]
        %v7547 = vld [vmem:[%s7542 + $0x20] sm:$0xff]
        %v7548 = vld [vmem:[%s7542 + $0x28] sm:$0xff]
        %v7549 = vld [vmem:[%s7542 + $0x30] sm:$0xff]
        %v7550 = vld [vmem:[%s7542 + $0x38] sm:$0xff]
        %v7551 = vld [vmem:[%s7542 + $0x40] sm:$0xff]
        %v7552 = vld [vmem:[%s7542 + $0x48] sm:$0xff]
        %v7553 = vld [vmem:[%s7542 + $0x50] sm:$0xff]
        %v7554 = vld [vmem:[%s7542 + $0x58] sm:$0xff]
        %v7555 = vld [vmem:[%s7542 + $0x60] sm:$0xff]
        %v7556 = vld [vmem:[%s7542 + $0x68] sm:$0xff]
        %v7557 = vld [vmem:[%s7542 + $0x70] sm:$0xff]
        %v7558 = vld [vmem:[%s7542 + $0x78] sm:$0xff]
        %7559 = vmatprep.subr.mxu0 0.0
        %7560 = vmatpush1.msra.mxu0 %v7543
        %7561 = vmatprep.subr.mxu0 0.0
        %7562 = vmatpush1.msra.mxu0 %v7544
        %7563 = vmatprep.subr.mxu0 0.0
        %7564 = vmatpush1.msra.mxu0 %v7545
        %7565 = vmatprep.subr.mxu0 0.0
        %7566 = vmatpush1.msra.mxu0 %v7546
        %7567 = vmatprep.subr.mxu0 0.0
        %7568 = vmatpush1.msra.mxu0 %v7547
        %7569 = vmatprep.subr.mxu0 0.0
        %7570 = vmatpush1.msra.mxu0 %v7548
        %7571 = vmatprep.subr.mxu0 0.0
        %7572 = vmatpush1.msra.mxu0 %v7549
        %7573 = vmatprep.subr.mxu0 0.0
        %7574 = vmatpush1.msra.mxu0 %v7550
        %7575 = vmatprep.subr.mxu0 0.0
        %7576 = vmatpush1.msra.mxu0 %v7551
        %7577 = vmatprep.subr.mxu0 0.0
        %7578 = vmatpush1.msra.mxu0 %v7552
        %7579 = vmatprep.subr.mxu0 0.0
        %7580 = vmatpush1.msra.mxu0 %v7553
        %7581 = vmatprep.subr.mxu0 0.0
        %7582 = vmatpush1.msra.mxu0 %v7554
        %7583 = vmatprep.subr.mxu0 0.0
        %7584 = vmatpush1.msra.mxu0 %v7555
        %7585 = vmatprep.subr.mxu0 0.0
        %7586 = vmatpush1.msra.mxu0 %v7556
        %7587 = vmatprep.subr.mxu0 0.0
        %7588 = vmatpush1.msra.mxu0 %v7557
        %7589 = vmatprep.subr.mxu0 0.0
        %7590 = vmatpush1.msra.mxu0 %v7558
        %7591 = vmatprep.subr.mxu0 0.0
        %7592 = vmatpush1.msra.mxu0 0.0
        %7593 = vmatprep.subr.mxu0 0.0
        %7594 = vmatpush1.msra.mxu0 0.0
        %7595 = vmatprep.subr.mxu0 0.0
        %7596 = vmatpush1.msra.mxu0 0.0
        %7597 = vmatprep.subr.mxu0 0.0
        %7598 = vmatpush1.msra.mxu0 0.0
        %7599 = vmatprep.subr.mxu0 0.0
        %7600 = vmatpush1.msra.mxu0 0.0
        %7601 = vmatprep.subr.mxu0 0.0
        %7602 = vmatpush1.msra.mxu0 0.0
        %7603 = vmatprep.subr.mxu0 0.0
        %7604 = vmatpush1.msra.mxu0 0.0
        %7605 = vmatprep.subr.mxu0 0.0
        %7606 = vmatpush1.msra.mxu0 0.0
        %7607 = vmatprep.subr.mxu0 0.0
        %7608 = vmatpush1.msra.mxu0 0.0
        %7609 = vmatprep.subr.mxu0 0.0
        %7610 = vmatpush1.msra.mxu0 0.0
        %7611 = vmatprep.subr.mxu0 0.0
        %7612 = vmatpush1.msra.mxu0 0.0
        %7613 = vmatprep.subr.mxu0 0.0
        %7614 = vmatpush1.msra.mxu0 0.0
        %7615 = vmatprep.subr.mxu0 0.0
        %7616 = vmatpush1.msra.mxu0 0.0
        %7617 = vmatprep.subr.mxu0 0.0
        %7618 = vmatpush1.msra.mxu0 0.0
        %7619 = vmatprep.subr.mxu0 0.0
        %7620 = vmatpush1.msra.mxu0 0.0
        %7621 = vmatprep.subr.mxu0 0.0
        %7622 = vmatpush1.msra.mxu0 0.0
        %7623 = vmatprep.mubr.f32.mxu0 0.0
        %7624 = vmatmul.mubr.f32.gmra.mrb[0].mxu0 %v5466
        %v7625 = vpop.f32.mrb[0].mxu0
        %v7626 = vadd.f32 0.0, %v7625
        %v7627 = vpop.f32.mrb[0].mxu0
        %7628 = vmatprep.mubr.f32.mxu0 0.0
        %7629 = vmatmul.mubr.f32.gmra.mrb[0].mxu0 %v5468
        %v7630 = vpop.f32.mrb[0].mxu0
        %v7631 = vadd.f32 0.0, %v7630
        %v7632 = vpop.f32.mrb[0].mxu0
        %7633 = vmatprep.mubr.f32.mxu0 0.0
        %7634 = vmatmul.mubr.f32.gmra.mrb[0].mxu0 %v5471
        %v7635 = vpop.f32.mrb[0].mxu0
        %v7636 = vadd.f32 0.0, %v7635
        %v7637 = vpop.f32.mrb[0].mxu0
        %7638 = vmatprep.mubr.f32.mxu0 0.0
        %7639 = vmatmul.mubr.f32.gmra.mrb[0].mxu0 %v5473
        %v7640 = vpop.f32.mrb[0].mxu0
        %v7641 = vadd.f32 0.0, %v7640
        %v7642 = vpop.f32.mrb[0].mxu0
        %7643 = vmatprep.mubr.f32.mxu0 0.0
        %7644 = vmatmul.mubr.f32.gmra.mrb[0].mxu0 %v5476
        %v7645 = vpop.f32.mrb[0].mxu0
        %v7646 = vadd.f32 0.0, %v7645
        %v7647 = vpop.f32.mrb[0].mxu0
        %7648 = vmatprep.mubr.f32.mxu0 0.0
        %7649 = vmatmul.mubr.f32.gmra.mrb[0].mxu0 %v5478
        %v7650 = vpop.f32.mrb[0].mxu0
        %v7651 = vadd.f32 0.0, %v7650
        %v7652 = vpop.f32.mrb[0].mxu0
        %7653 = vmatprep.mubr.f32.mxu0 0.0
        %7654 = vmatmul.mubr.f32.gmra.mrb[0].mxu0 %v5481
        %v7655 = vpop.f32.mrb[0].mxu0
        %v7656 = vadd.f32 0.0, %v7655
        %v7657 = vpop.f32.mrb[0].mxu0
        %7658 = vmatprep.mubr.f32.mxu0 0.0
        %7659 = vmatmul.mubr.f32.gmra.mrb[0].mxu0 %v5483
        %v7660 = vpop.f32.mrb[0].mxu0
        %v7661 = vadd.f32 0.0, %v7660
        %v7662 = vpop.f32.mrb[0].mxu0
        %7663 = vmatprep.mubr.f32.mxu0 0.0
        %7664 = vmatmul.mubr.f32.gmra.mrb[0].mxu0 %v5486
        %v7665 = vpop.f32.mrb[0].mxu0
        %v7666 = vadd.f32 0.0, %v7665
        %v7667 = vpop.f32.mrb[0].mxu0
        %7668 = vmatprep.mubr.f32.mxu0 0.0
        %7669 = vmatmul.mubr.f32.gmra.mrb[0].mxu0 %v5488
        %v7670 = vpop.f32.mrb[0].mxu0
        %v7671 = vadd.f32 0.0, %v7670
        %v7672 = vpop.f32.mrb[0].mxu0
        %7673 = vmatprep.mubr.f32.mxu0 0.0
        %7674 = vmatmul.mubr.f32.gmra.mrb[0].mxu0 %v5491
        %v7675 = vpop.f32.mrb[0].mxu0
        %v7676 = vadd.f32 0.0, %v7675
        %v7677 = vpop.f32.mrb[0].mxu0
        %7678 = vmatprep.mubr.f32.mxu0 0.0
        %7679 = vmatmul.mubr.f32.gmra.mrb[0].mxu0 %v5493
        %v7680 = vpop.f32.mrb[0].mxu0
        %v7681 = vadd.f32 0.0, %v7680
        %v7682 = vpop.f32.mrb[0].mxu0
        %7683 = vmatprep.mubr.f32.mxu0 0.0
        %7684 = vmatmul.mubr.f32.gmra.mrb[0].mxu0 %v5496
        %v7685 = vpop.f32.mrb[0].mxu0
        %v7686 = vadd.f32 0.0, %v7685
        %v7687 = vpop.f32.mrb[0].mxu0
        %7688 = vmatprep.mubr.f32.mxu0 0.0
        %7689 = vmatmul.mubr.f32.gmra.mrb[0].mxu0 %v5498
        %v7690 = vpop.f32.mrb[0].mxu0
        %v7691 = vadd.f32 0.0, %v7690
        %v7692 = vpop.f32.mrb[0].mxu0
        %7693 = vmatprep.mubr.f32.mxu0 0.0
        %7694 = vmatmul.mubr.f32.gmra.mrb[0].mxu0 %v5501
        %v7695 = vpop.f32.mrb[0].mxu0
        %v7696 = vadd.f32 0.0, %v7695
        %v7697 = vpop.f32.mrb[0].mxu0
        %7698 = vmatprep.mubr.f32.mxu0 0.0
        %7699 = vmatmul.mubr.f32.gmra.mrb[0].mxu0 %v5503
        %v7700 = vpop.f32.mrb[0].mxu0
        %v7701 = vadd.f32 0.0, %v7700
        %v7702 = vpop.f32.mrb[0].mxu0
        %7703 = vmatprep.mubr.f32.mxu0 0.0
        %7704 = vmatmul.mubr.f32.gmra.mrb[0].mxu0 %v5506
        %v7705 = vpop.f32.mrb[0].mxu0
        %v7706 = vadd.f32 0.0, %v7705
        %v7707 = vpop.f32.mrb[0].mxu0
        %7708 = vmatprep.mubr.f32.mxu0 0.0
        %7709 = vmatmul.mubr.f32.gmra.mrb[0].mxu0 %v5508
        %v7710 = vpop.f32.mrb[0].mxu0
        %v7711 = vadd.f32 0.0, %v7710
        %v7712 = vpop.f32.mrb[0].mxu0
        %7713 = vmatprep.mubr.f32.mxu0 0.0
        %7714 = vmatmul.mubr.f32.gmra.mrb[0].mxu0 %v5511
        %v7715 = vpop.f32.mrb[0].mxu0
        %v7716 = vadd.f32 0.0, %v7715
        %v7717 = vpop.f32.mrb[0].mxu0
        %7718 = vmatprep.mubr.f32.mxu0 0.0
        %7719 = vmatmul.mubr.f32.gmra.mrb[0].mxu0 %v5513
        %v7720 = vpop.f32.mrb[0].mxu0
        %v7721 = vadd.f32 0.0, %v7720
        %v7722 = vpop.f32.mrb[0].mxu0
        %7723 = vmatprep.mubr.f32.mxu0 0.0
        %7724 = vmatmul.mubr.f32.gmra.mrb[0].mxu0 %v5516
        %v7725 = vpop.f32.mrb[0].mxu0
        %v7726 = vadd.f32 0.0, %v7725
        %v7727 = vpop.f32.mrb[0].mxu0
        %7728 = vmatprep.mubr.f32.mxu0 0.0
        %7729 = vmatmul.mubr.f32.gmra.mrb[0].mxu0 %v5518
        %v7730 = vpop.f32.mrb[0].mxu0
        %v7731 = vadd.f32 0.0, %v7730
        %v7732 = vpop.f32.mrb[0].mxu0
        %7733 = vmatprep.mubr.f32.mxu0 0.0
        %7734 = vmatmul.mubr.f32.gmra.mrb[0].mxu0 %v5521
        %v7735 = vpop.f32.mrb[0].mxu0
        %v7736 = vadd.f32 0.0, %v7735
        %v7737 = vpop.f32.mrb[0].mxu0
        %7738 = vmatprep.mubr.f32.mxu0 0.0
        %7739 = vmatmul.mubr.f32.gmra.mrb[0].mxu0 %v5523
        %v7740 = vpop.f32.mrb[0].mxu0
        %v7741 = vadd.f32 0.0, %v7740
        %v7742 = vpop.f32.mrb[0].mxu0
        %7743 = vmatprep.mubr.f32.mxu0 0.0
        %7744 = vmatmul.mubr.f32.gmra.mrb[0].mxu0 %v5526
        %v7745 = vpop.f32.mrb[0].mxu0
        %v7746 = vadd.f32 0.0, %v7745
        %v7747 = vpop.f32.mrb[0].mxu0
        %7748 = vmatprep.mubr.f32.mxu0 0.0
        %7749 = vmatmul.mubr.f32.gmra.mrb[0].mxu0 %v5528
        %v7750 = vpop.f32.mrb[0].mxu0
        %v7751 = vadd.f32 0.0, %v7750
        %v7752 = vpop.f32.mrb[0].mxu0
        %7753 = vmatprep.mubr.f32.mxu0 0.0
        %7754 = vmatmul.mubr.f32.gmra.mrb[0].mxu0 %v5531
        %v7755 = vpop.f32.mrb[0].mxu0
        %v7756 = vadd.f32 0.0, %v7755
        %v7757 = vpop.f32.mrb[0].mxu0
        %7758 = vmatprep.mubr.f32.mxu0 0.0
        %7759 = vmatmul.mubr.f32.gmra.mrb[0].mxu0 %v5533
        %v7760 = vpop.f32.mrb[0].mxu0
        %v7761 = vadd.f32 0.0, %v7760
        %v7762 = vpop.f32.mrb[0].mxu0
        %7763 = vmatprep.mubr.f32.mxu0 0.0
        %7764 = vmatmul.mubr.f32.gmra.mrb[0].mxu0 %v6698
        %v7765 = vpop.f32.mrb[0].mxu0
        %v7766 = vadd.f32 0.0, %v7765
        %v7767 = vpop.f32.mrb[0].mxu0
        %7768 = vmatprep.mubr.f32.mxu0 0.0
        %7769 = vmatmul.mubr.f32.gmra.mrb[0].mxu0 %v6700
        %v7770 = vpop.f32.mrb[0].mxu0
        %v7771 = vadd.f32 0.0, %v7770
        %v7772 = vpop.f32.mrb[0].mxu0
        %7773 = vmatprep.mubr.f32.mxu0 0.0
        %7774 = vmatmul.mubr.f32.gmra.mrb[0].mxu0 %v7537
        %v7775 = vpop.f32.mrb[0].mxu0
        %v7776 = vadd.f32 0.0, %v7775
        %v7777 = vpop.f32.mrb[0].mxu0
        %7778 = vmatprep.mubr.f32.mxu0 0.0
        %7779 = vmatmul.mubr.f32.gmra.mrb[0].mxu0 %v7539
        %v7780 = vpop.f32.mrb[0].mxu0
        %v7781 = vadd.f32 0.0, %v7780
        %v7782 = vpop.f32.mrb[0].mxu0
        %7783 = vdwg.mxu0
        %v7784 = vadd.f32 %v7500, %v7626
        %v7785 = vadd.f32 %v7501, %v7631
        %v7786 = vadd.f32 %v7502, %v7636
        %v7787 = vadd.f32 %v7503, %v7641
        %v7788 = vadd.f32 %v7504, %v7646
        %v7789 = vadd.f32 %v7505, %v7651
        %v7790 = vadd.f32 %v7506, %v7656
        %v7791 = vadd.f32 %v7507, %v7661
        %v7792 = vadd.f32 %v7508, %v7666
        %v7793 = vadd.f32 %v7509, %v7671
        %v7794 = vadd.f32 %v7510, %v7676
        %v7795 = vadd.f32 %v7511, %v7681
        %v7796 = vadd.f32 %v7512, %v7686
        %v7797 = vadd.f32 %v7513, %v7691
        %v7798 = vadd.f32 %v7514, %v7696
        %v7799 = vadd.f32 %v7515, %v7701
        %v7800 = vadd.f32 %v7516, %v7706
        %v7801 = vadd.f32 %v7517, %v7711
        %v7802 = vadd.f32 %v7518, %v7716
        %v7803 = vadd.f32 %v7519, %v7721
        %v7804 = vadd.f32 %v7520, %v7726
        %v7805 = vadd.f32 %v7521, %v7731
        %v7806 = vadd.f32 %v7522, %v7736
        %v7807 = vadd.f32 %v7523, %v7741
        %v7808 = vadd.f32 %v7524, %v7746
        %v7809 = vadd.f32 %v7525, %v7751
        %v7810 = vadd.f32 %v7526, %v7756
        %v7811 = vadd.f32 %v7527, %v7761
        %v7812 = vadd.f32 %v7528, %v7766
        %v7813 = vadd.f32 %v7529, %v7771
        %v7814 = vadd.f32 %v7530, %v7776
        %v7815 = vadd.f32 %v7531, %v7781
        %v7816 = vrot.slane %v5387, 2
        %v7817 = vrot.slane %v5388, 2
        %v7818 = vsel %vm1685, %v7816, %v7817
        %v7819 = vrot.slane %v5389, 2
        %v7820 = vsel %vm1685, %v7817, %v7819
        %s7823 = scalar_lea.vmem [#allocation8], 1024
        %v7824 = vld [vmem:[%s7823] sm:$0xff]
        %v7825 = vld [vmem:[%s7823 + $0x8] sm:$0xff]
        %v7826 = vld [vmem:[%s7823 + $0x10] sm:$0xff]
        %v7827 = vld [vmem:[%s7823 + $0x18] sm:$0xff]
        %v7828 = vld [vmem:[%s7823 + $0x20] sm:$0xff]
        %v7829 = vld [vmem:[%s7823 + $0x28] sm:$0xff]
        %v7830 = vld [vmem:[%s7823 + $0x30] sm:$0xff]
        %v7831 = vld [vmem:[%s7823 + $0x38] sm:$0xff]
        %v7832 = vld [vmem:[%s7823 + $0x40] sm:$0xff]
        %v7833 = vld [vmem:[%s7823 + $0x48] sm:$0xff]
        %v7834 = vld [vmem:[%s7823 + $0x50] sm:$0xff]
        %v7835 = vld [vmem:[%s7823 + $0x58] sm:$0xff]
        %v7836 = vld [vmem:[%s7823 + $0x60] sm:$0xff]
        %v7837 = vld [vmem:[%s7823 + $0x68] sm:$0xff]
        %v7838 = vld [vmem:[%s7823 + $0x70] sm:$0xff]
        %v7839 = vld [vmem:[%s7823 + $0x78] sm:$0xff]
        %7840 = vmatprep.subr.mxu0 0.0
        %7841 = vmatpush1.msra.mxu0 %v7824
        %7842 = vmatprep.subr.mxu0 0.0
        %7843 = vmatpush1.msra.mxu0 %v7825
        %7844 = vmatprep.subr.mxu0 0.0
        %7845 = vmatpush1.msra.mxu0 %v7826
        %7846 = vmatprep.subr.mxu0 0.0
        %7847 = vmatpush1.msra.mxu0 %v7827
        %7848 = vmatprep.subr.mxu0 0.0
        %7849 = vmatpush1.msra.mxu0 %v7828
        %7850 = vmatprep.subr.mxu0 0.0
        %7851 = vmatpush1.msra.mxu0 %v7829
        %7852 = vmatprep.subr.mxu0 0.0
        %7853 = vmatpush1.msra.mxu0 %v7830
        %7854 = vmatprep.subr.mxu0 0.0
        %7855 = vmatpush1.msra.mxu0 %v7831
        %7856 = vmatprep.subr.mxu0 0.0
        %7857 = vmatpush1.msra.mxu0 %v7832
        %7858 = vmatprep.subr.mxu0 0.0
        %7859 = vmatpush1.msra.mxu0 %v7833
        %7860 = vmatprep.subr.mxu0 0.0
        %7861 = vmatpush1.msra.mxu0 %v7834
        %7862 = vmatprep.subr.mxu0 0.0
        %7863 = vmatpush1.msra.mxu0 %v7835
        %7864 = vmatprep.subr.mxu0 0.0
        %7865 = vmatpush1.msra.mxu0 %v7836
        %7866 = vmatprep.subr.mxu0 0.0
        %7867 = vmatpush1.msra.mxu0 %v7837
        %7868 = vmatprep.subr.mxu0 0.0
        %7869 = vmatpush1.msra.mxu0 %v7838
        %7870 = vmatprep.subr.mxu0 0.0
        %7871 = vmatpush1.msra.mxu0 %v7839
        %7872 = vmatprep.subr.mxu0 0.0
        %7873 = vmatpush1.msra.mxu0 0.0
        %7874 = vmatprep.subr.mxu0 0.0
        %7875 = vmatpush1.msra.mxu0 0.0
        %7876 = vmatprep.subr.mxu0 0.0
        %7877 = vmatpush1.msra.mxu0 0.0
        %7878 = vmatprep.subr.mxu0 0.0
        %7879 = vmatpush1.msra.mxu0 0.0
        %7880 = vmatprep.subr.mxu0 0.0
        %7881 = vmatpush1.msra.mxu0 0.0
        %7882 = vmatprep.subr.mxu0 0.0
        %7883 = vmatpush1.msra.mxu0 0.0
        %7884 = vmatprep.subr.mxu0 0.0
        %7885 = vmatpush1.msra.mxu0 0.0
        %7886 = vmatprep.subr.mxu0 0.0
        %7887 = vmatpush1.msra.mxu0 0.0
        %7888 = vmatprep.subr.mxu0 0.0
        %7889 = vmatpush1.msra.mxu0 0.0
        %7890 = vmatprep.subr.mxu0 0.0
        %7891 = vmatpush1.msra.mxu0 0.0
        %7892 = vmatprep.subr.mxu0 0.0
        %7893 = vmatpush1.msra.mxu0 0.0
        %7894 = vmatprep.subr.mxu0 0.0
        %7895 = vmatpush1.msra.mxu0 0.0
        %7896 = vmatprep.subr.mxu0 0.0
        %7897 = vmatpush1.msra.mxu0 0.0
        %7898 = vmatprep.subr.mxu0 0.0
        %7899 = vmatpush1.msra.mxu0 0.0
        %7900 = vmatprep.subr.mxu0 0.0
        %7901 = vmatpush1.msra.mxu0 0.0
        %7902 = vmatprep.subr.mxu0 0.0
        %7903 = vmatpush1.msra.mxu0 0.0
        %7904 = vmatprep.mubr.f32.mxu0 0.0
        %7905 = vmatmul.mubr.f32.gmra.mrb[0].mxu0 %v6045
        %v7906 = vpop.f32.mrb[0].mxu0
        %v7907 = vadd.f32 0.0, %v7906
        %v7908 = vpop.f32.mrb[0].mxu0
        %7909 = vmatprep.mubr.f32.mxu0 0.0
        %7910 = vmatmul.mubr.f32.gmra.mrb[0].mxu0 %v6047
        %v7911 = vpop.f32.mrb[0].mxu0
        %v7912 = vadd.f32 0.0, %v7911
        %v7913 = vpop.f32.mrb[0].mxu0
        %7914 = vmatprep.mubr.f32.mxu0 0.0
        %7915 = vmatmul.mubr.f32.gmra.mrb[0].mxu0 %v6050
        %v7916 = vpop.f32.mrb[0].mxu0
        %v7917 = vadd.f32 0.0, %v7916
        %v7918 = vpop.f32.mrb[0].mxu0
        %7919 = vmatprep.mubr.f32.mxu0 0.0
        %7920 = vmatmul.mubr.f32.gmra.mrb[0].mxu0 %v6052
        %v7921 = vpop.f32.mrb[0].mxu0
        %v7922 = vadd.f32 0.0, %v7921
        %v7923 = vpop.f32.mrb[0].mxu0
        %7924 = vmatprep.mubr.f32.mxu0 0.0
        %7925 = vmatmul.mubr.f32.gmra.mrb[0].mxu0 %v6055
        %v7926 = vpop.f32.mrb[0].mxu0
        %v7927 = vadd.f32 0.0, %v7926
        %v7928 = vpop.f32.mrb[0].mxu0
        %7929 = vmatprep.mubr.f32.mxu0 0.0
        %7930 = vmatmul.mubr.f32.gmra.mrb[0].mxu0 %v6057
        %v7931 = vpop.f32.mrb[0].mxu0
        %v7932 = vadd.f32 0.0, %v7931
        %v7933 = vpop.f32.mrb[0].mxu0
        %7934 = vmatprep.mubr.f32.mxu0 0.0
        %7935 = vmatmul.mubr.f32.gmra.mrb[0].mxu0 %v6060
        %v7936 = vpop.f32.mrb[0].mxu0
        %v7937 = vadd.f32 0.0, %v7936
        %v7938 = vpop.f32.mrb[0].mxu0
        %7939 = vmatprep.mubr.f32.mxu0 0.0
        %7940 = vmatmul.mubr.f32.gmra.mrb[0].mxu0 %v6062
        %v7941 = vpop.f32.mrb[0].mxu0
        %v7942 = vadd.f32 0.0, %v7941
        %v7943 = vpop.f32.mrb[0].mxu0
        %7944 = vmatprep.mubr.f32.mxu0 0.0
        %7945 = vmatmul.mubr.f32.gmra.mrb[0].mxu0 %v6065
        %v7946 = vpop.f32.mrb[0].mxu0
        %v7947 = vadd.f32 0.0, %v7946
        %v7948 = vpop.f32.mrb[0].mxu0
        %7949 = vmatprep.mubr.f32.mxu0 0.0
        %7950 = vmatmul.mubr.f32.gmra.mrb[0].mxu0 %v6067
        %v7951 = vpop.f32.mrb[0].mxu0
        %v7952 = vadd.f32 0.0, %v7951
        %v7953 = vpop.f32.mrb[0].mxu0
        %7954 = vmatprep.mubr.f32.mxu0 0.0
        %7955 = vmatmul.mubr.f32.gmra.mrb[0].mxu0 %v6070
        %v7956 = vpop.f32.mrb[0].mxu0
        %v7957 = vadd.f32 0.0, %v7956
        %v7958 = vpop.f32.mrb[0].mxu0
        %7959 = vmatprep.mubr.f32.mxu0 0.0
        %7960 = vmatmul.mubr.f32.gmra.mrb[0].mxu0 %v6072
        %v7961 = vpop.f32.mrb[0].mxu0
        %v7962 = vadd.f32 0.0, %v7961
        %v7963 = vpop.f32.mrb[0].mxu0
        %7964 = vmatprep.mubr.f32.mxu0 0.0
        %7965 = vmatmul.mubr.f32.gmra.mrb[0].mxu0 %v6075
        %v7966 = vpop.f32.mrb[0].mxu0
        %v7967 = vadd.f32 0.0, %v7966
        %v7968 = vpop.f32.mrb[0].mxu0
        %7969 = vmatprep.mubr.f32.mxu0 0.0
        %7970 = vmatmul.mubr.f32.gmra.mrb[0].mxu0 %v6077
        %v7971 = vpop.f32.mrb[0].mxu0
        %v7972 = vadd.f32 0.0, %v7971
        %v7973 = vpop.f32.mrb[0].mxu0
        %7974 = vmatprep.mubr.f32.mxu0 0.0
        %7975 = vmatmul.mubr.f32.gmra.mrb[0].mxu0 %v6080
        %v7976 = vpop.f32.mrb[0].mxu0
        %v7977 = vadd.f32 0.0, %v7976
        %v7978 = vpop.f32.mrb[0].mxu0
        %7979 = vmatprep.mubr.f32.mxu0 0.0
        %7980 = vmatmul.mubr.f32.gmra.mrb[0].mxu0 %v6082
        %v7981 = vpop.f32.mrb[0].mxu0
        %v7982 = vadd.f32 0.0, %v7981
        %v7983 = vpop.f32.mrb[0].mxu0
        %7984 = vmatprep.mubr.f32.mxu0 0.0
        %7985 = vmatmul.mubr.f32.gmra.mrb[0].mxu0 %v6085
        %v7986 = vpop.f32.mrb[0].mxu0
        %v7987 = vadd.f32 0.0, %v7986
        %v7988 = vpop.f32.mrb[0].mxu0
        %7989 = vmatprep.mubr.f32.mxu0 0.0
        %7990 = vmatmul.mubr.f32.gmra.mrb[0].mxu0 %v6087
        %v7991 = vpop.f32.mrb[0].mxu0
        %v7992 = vadd.f32 0.0, %v7991
        %v7993 = vpop.f32.mrb[0].mxu0
        %7994 = vmatprep.mubr.f32.mxu0 0.0
        %7995 = vmatmul.mubr.f32.gmra.mrb[0].mxu0 %v6090
        %v7996 = vpop.f32.mrb[0].mxu0
        %v7997 = vadd.f32 0.0, %v7996
        %v7998 = vpop.f32.mrb[0].mxu0
        %7999 = vmatprep.mubr.f32.mxu0 0.0
        %8000 = vmatmul.mubr.f32.gmra.mrb[0].mxu0 %v6092
        %v8001 = vpop.f32.mrb[0].mxu0
        %v8002 = vadd.f32 0.0, %v8001
        %v8003 = vpop.f32.mrb[0].mxu0
        %8004 = vmatprep.mubr.f32.mxu0 0.0
        %8005 = vmatmul.mubr.f32.gmra.mrb[0].mxu0 %v6095
        %v8006 = vpop.f32.mrb[0].mxu0
        %v8007 = vadd.f32 0.0, %v8006
        %v8008 = vpop.f32.mrb[0].mxu0
        %8009 = vmatprep.mubr.f32.mxu0 0.0
        %8010 = vmatmul.mubr.f32.gmra.mrb[0].mxu0 %v6097
        %v8011 = vpop.f32.mrb[0].mxu0
        %v8012 = vadd.f32 0.0, %v8011
        %v8013 = vpop.f32.mrb[0].mxu0
        %8014 = vmatprep.mubr.f32.mxu0 0.0
        %8015 = vmatmul.mubr.f32.gmra.mrb[0].mxu0 %v6100
        %v8016 = vpop.f32.mrb[0].mxu0
        %v8017 = vadd.f32 0.0, %v8016
        %v8018 = vpop.f32.mrb[0].mxu0
        %8019 = vmatprep.mubr.f32.mxu0 0.0
        %8020 = vmatmul.mubr.f32.gmra.mrb[0].mxu0 %v6102
        %v8021 = vpop.f32.mrb[0].mxu0
        %v8022 = vadd.f32 0.0, %v8021
        %v8023 = vpop.f32.mrb[0].mxu0
        %8024 = vmatprep.mubr.f32.mxu0 0.0
        %8025 = vmatmul.mubr.f32.gmra.mrb[0].mxu0 %v6105
        %v8026 = vpop.f32.mrb[0].mxu0
        %v8027 = vadd.f32 0.0, %v8026
        %v8028 = vpop.f32.mrb[0].mxu0
        %8029 = vmatprep.mubr.f32.mxu0 0.0
        %8030 = vmatmul.mubr.f32.gmra.mrb[0].mxu0 %v6107
        %v8031 = vpop.f32.mrb[0].mxu0
        %v8032 = vadd.f32 0.0, %v8031
        %v8033 = vpop.f32.mrb[0].mxu0
        %8034 = vmatprep.mubr.f32.mxu0 0.0
        %8035 = vmatmul.mubr.f32.gmra.mrb[0].mxu0 %v6110
        %v8036 = vpop.f32.mrb[0].mxu0
        %v8037 = vadd.f32 0.0, %v8036
        %v8038 = vpop.f32.mrb[0].mxu0
        %8039 = vmatprep.mubr.f32.mxu0 0.0
        %8040 = vmatmul.mubr.f32.gmra.mrb[0].mxu0 %v6112
        %v8041 = vpop.f32.mrb[0].mxu0
        %v8042 = vadd.f32 0.0, %v8041
        %v8043 = vpop.f32.mrb[0].mxu0
        %8044 = vmatprep.mubr.f32.mxu0 0.0
        %8045 = vmatmul.mubr.f32.gmra.mrb[0].mxu0 %v6979
        %v8046 = vpop.f32.mrb[0].mxu0
        %v8047 = vadd.f32 0.0, %v8046
        %v8048 = vpop.f32.mrb[0].mxu0
        %8049 = vmatprep.mubr.f32.mxu0 0.0
        %8050 = vmatmul.mubr.f32.gmra.mrb[0].mxu0 %v6981
        %v8051 = vpop.f32.mrb[0].mxu0
        %v8052 = vadd.f32 0.0, %v8051
        %v8053 = vpop.f32.mrb[0].mxu0
        %8054 = vmatprep.mubr.f32.mxu0 0.0
        %8055 = vmatmul.mubr.f32.gmra.mrb[0].mxu0 %v7818
        %v8056 = vpop.f32.mrb[0].mxu0
        %v8057 = vadd.f32 0.0, %v8056
        %v8058 = vpop.f32.mrb[0].mxu0
        %8059 = vmatprep.mubr.f32.mxu0 0.0
        %8060 = vmatmul.mubr.f32.gmra.mrb[0].mxu0 %v7820
        %v8061 = vpop.f32.mrb[0].mxu0
        %v8062 = vadd.f32 0.0, %v8061
        %v8063 = vpop.f32.mrb[0].mxu0
        %8064 = vdwg.mxu0
        %v8065 = vadd.f32 %v7784, %v7907
        %v8066 = vadd.f32 %v7785, %v7912
        %v8067 = vadd.f32 %v7786, %v7917
        %v8068 = vadd.f32 %v7787, %v7922
        %v8069 = vadd.f32 %v7788, %v7927
        %v8070 = vadd.f32 %v7789, %v7932
        %v8071 = vadd.f32 %v7790, %v7937
        %v8072 = vadd.f32 %v7791, %v7942
        %v8073 = vadd.f32 %v7792, %v7947
        %v8074 = vadd.f32 %v7793, %v7952
        %v8075 = vadd.f32 %v7794, %v7957
        %v8076 = vadd.f32 %v7795, %v7962
        %v8077 = vadd.f32 %v7796, %v7967
        %v8078 = vadd.f32 %v7797, %v7972
        %v8079 = vadd.f32 %v7798, %v7977
        %v8080 = vadd.f32 %v7799, %v7982
        %v8081 = vadd.f32 %v7800, %v7987
        %v8082 = vadd.f32 %v7801, %v7992
        %v8083 = vadd.f32 %v7802, %v7997
        %v8084 = vadd.f32 %v7803, %v8002
        %v8085 = vadd.f32 %v7804, %v8007
        %v8086 = vadd.f32 %v7805, %v8012
        %v8087 = vadd.f32 %v7806, %v8017
        %v8088 = vadd.f32 %v7807, %v8022
        %v8089 = vadd.f32 %v7808, %v8027
        %v8090 = vadd.f32 %v7809, %v8032
        %v8091 = vadd.f32 %v7810, %v8037
        %v8092 = vadd.f32 %v7811, %v8042
        %v8093 = vadd.f32 %v7812, %v8047
        %v8094 = vadd.f32 %v7813, %v8052
        %v8095 = vadd.f32 %v7814, %v8057
        %v8096 = vadd.f32 %v7815, %v8062
        %v8097 = vld [vmem:[#allocation12] sm:$0x1]
        %v8099 = vlaneseq
        %v8100 = vshrl.u32 %v8099, 7
        %v8101 = vsub.s32 0, %v8100
        %v8102 = vrot.slane %v8097, %v8101
        %v8104 = vadd.f32 %v8065, %v8102
        %v8105 = vadd.f32 %v8066, %v8102
        %v8106 = vadd.f32 %v8067, %v8102
        %v8107 = vadd.f32 %v8068, %v8102
        %v8108 = vadd.f32 %v8069, %v8102
        %v8109 = vadd.f32 %v8070, %v8102
        %v8110 = vadd.f32 %v8071, %v8102
        %v8111 = vadd.f32 %v8072, %v8102
        %v8112 = vadd.f32 %v8073, %v8102
        %v8113 = vadd.f32 %v8074, %v8102
        %v8114 = vadd.f32 %v8075, %v8102
        %v8115 = vadd.f32 %v8076, %v8102
        %v8116 = vadd.f32 %v8077, %v8102
        %v8117 = vadd.f32 %v8078, %v8102
        %v8118 = vadd.f32 %v8079, %v8102
        %v8119 = vadd.f32 %v8080, %v8102
        %v8120 = vadd.f32 %v8081, %v8102
        %v8121 = vadd.f32 %v8082, %v8102
        %v8122 = vadd.f32 %v8083, %v8102
        %v8123 = vadd.f32 %v8084, %v8102
        %v8124 = vadd.f32 %v8085, %v8102
        %v8125 = vadd.f32 %v8086, %v8102
        %v8126 = vadd.f32 %v8087, %v8102
        %v8127 = vadd.f32 %v8088, %v8102
        %v8128 = vadd.f32 %v8089, %v8102
        %v8129 = vadd.f32 %v8090, %v8102
        %v8130 = vadd.f32 %v8091, %v8102
        %v8131 = vadd.f32 %v8092, %v8102
        %v8132 = vadd.f32 %v8093, %v8102
        %v8133 = vadd.f32 %v8094, %v8102
        %v8134 = vadd.f32 %v8095, %v8102
        %v8135 = vadd.f32 %v8096, %v8102
        %8136 = vxpose.xlu0.b32.start [1/16] %v8104, 128
        %8137 = vxpose.xlu0.b32.cont [2/16] %v8105, 128
        %8138 = vxpose.xlu0.b32.cont [3/16] %v8106, 128
        %8139 = vxpose.xlu0.b32.cont [4/16] %v8107, 128
        %8140 = vxpose.xlu0.b32.cont [5/16] %v8108, 128
        %8141 = vxpose.xlu0.b32.cont [6/16] %v8109, 128
        %8142 = vxpose.xlu0.b32.cont [7/16] %v8110, 128
        %8143 = vxpose.xlu0.b32.cont [8/16] %v8111, 128
        %8144 = vxpose.xlu0.b32.cont [9/16] %v8112, 128
        %8145 = vxpose.xlu0.b32.cont [10/16] %v8113, 128
        %8146 = vxpose.xlu0.b32.cont [11/16] %v8114, 128
        %8147 = vxpose.xlu0.b32.cont [12/16] %v8115, 128
        %8148 = vxpose.xlu0.b32.cont [13/16] %v8116, 128
        %8149 = vxpose.xlu0.b32.cont [14/16] %v8117, 128
        %8150 = vxpose.xlu0.b32.cont [15/16] %v8118, 128
        %8151 = vxpose.xlu0.b32.end [16/16] %v8119, 128
        %v8152 = vpop.trf.xlu0
        %v8153 = vpop.trf.xlu0
        %v8154 = vpop.trf.xlu0
        %v8155 = vpop.trf.xlu0
        %v8156 = vpop.trf.xlu0
        %v8157 = vpop.trf.xlu0
        %v8158 = vpop.trf.xlu0
        %v8159 = vpop.trf.xlu0
        %v8160 = vpop.trf.xlu0
        %v8161 = vpop.trf.xlu0
        %v8162 = vpop.trf.xlu0
        %v8163 = vpop.trf.xlu0
        %v8164 = vpop.trf.xlu0
        %v8165 = vpop.trf.xlu0
        %v8166 = vpop.trf.xlu0
        %v8167 = vpop.trf.xlu0
        %8168 = vxpose.xlu0.b32.start [1/16] %v8120, 128
        %8169 = vxpose.xlu0.b32.cont [2/16] %v8121, 128
        %8170 = vxpose.xlu0.b32.cont [3/16] %v8122, 128
        %8171 = vxpose.xlu0.b32.cont [4/16] %v8123, 128
        %8172 = vxpose.xlu0.b32.cont [5/16] %v8124, 128
        %8173 = vxpose.xlu0.b32.cont [6/16] %v8125, 128
        %8174 = vxpose.xlu0.b32.cont [7/16] %v8126, 128
        %8175 = vxpose.xlu0.b32.cont [8/16] %v8127, 128
        %8176 = vxpose.xlu0.b32.cont [9/16] %v8128, 128
        %8177 = vxpose.xlu0.b32.cont [10/16] %v8129, 128
        %8178 = vxpose.xlu0.b32.cont [11/16] %v8130, 128
        %8179 = vxpose.xlu0.b32.cont [12/16] %v8131, 128
        %8180 = vxpose.xlu0.b32.cont [13/16] %v8132, 128
        %8181 = vxpose.xlu0.b32.cont [14/16] %v8133, 128
        %8182 = vxpose.xlu0.b32.cont [15/16] %v8134, 128
        %8183 = vxpose.xlu0.b32.end [16/16] %v8135, 128
        %v8184 = vpop.trf.xlu0
        %v8185 = vpop.trf.xlu0
        %v8186 = vpop.trf.xlu0
        %v8187 = vpop.trf.xlu0
        %v8188 = vpop.trf.xlu0
        %v8189 = vpop.trf.xlu0
        %v8190 = vpop.trf.xlu0
        %v8191 = vpop.trf.xlu0
        %v8192 = vpop.trf.xlu0
        %v8193 = vpop.trf.xlu0
        %v8194 = vpop.trf.xlu0
        %v8195 = vpop.trf.xlu0
        %v8196 = vpop.trf.xlu0
        %v8197 = vpop.trf.xlu0
        %v8198 = vpop.trf.xlu0
        %v8199 = vpop.trf.xlu0
        %v8202 = vcombine.low %v8152, %v8184
        %8204 = vst [vmem:[%s390] sm:$0xff] %v8202
        %s8205 = sand.u32 %s191, 1
        %s8206 = scalar_lea.sflag [#allocation5], %s8205
        %s8207 = sand.u32 %s191, 1
        %s8208 = smul.addr %s8207, 8
        %s8209 = scalar_lea.vmem [#allocation14], %s8208
        // Predicated region
        $region69: #{tpu_custom_call.1} parent=43 // pred_check
          %p8210 = pneg %p201
        $region70: #{tpu_custom_call.1} parent=43 // pred_check_branch
          %8212 = sbr.rel (%p8210) target = $region72
        $region71: #{tpu_custom_call.1} parent=43 // pred_region
          %s8214 = ssub.s32 128, 128
          %8215 = vsyncadd %s8206, %s8214
          %s8216 = smul.addr %s33, 2
          %s8217 = smul.addr %s32, 2
          %s8218 = sadd.s32 %s8216, %s8217
          %s8219 = smul.addr %s8218, 64
          %s8220 = scalar_lea.hbm %s6, %s8219
          %s8222 = sshll.u32 %s8209, 4
          %s8223 = int_to_ptr.vmem [resolvable:$true] %s8222
          %8225 = dma.vmem_to_hbm [thread:$0]  %s8223, 128, %s8220, %s8206
        $region72: #{tpu_custom_call.1} parent=43 // pred_fallthru
          _
      $region44: #{tpu_custom_call.1} parent=5 // pred_fallthru
        _
      %p8226 = scmp.le.s32.totalorder 2, %s23
      // Predicated region
      $region73: #{tpu_custom_call.1} parent=5 // pred_check
        %p8227 = pneg %p8226
      $region74: #{tpu_custom_call.1} parent=5 // pred_check_branch
        %8229 = sbr.rel (%p8227) target = $region76
      $region75: #{tpu_custom_call.1} parent=5 // pred_region
        %s8230 = ssub.s32 %s23, 2
        // Predicated region
        $region77: #{tpu_custom_call.1} parent=75 // pred_check
          %p8231 = pneg %p207
        $region78: #{tpu_custom_call.1} parent=75 // pred_check_branch
          %8233 = sbr.rel (%p8231) target = $region80
        $region79: #{tpu_custom_call.1} parent=75 // pred_region
          %s8234 = sand.u32 %s192, 1
          %s8235 = scalar_lea.sflag [#allocation5], %s8234
          %s8236 = sand.u32 %s192, 1
          %s8237 = smul.addr %s8236, 8
          %s8238 = scalar_lea.vmem [#allocation14], %s8237
          %8239 = dma.done %s8235, 128
        $region80: #{tpu_custom_call.1} parent=75 // pred_fallthru
          _
      $region76: #{tpu_custom_call.1} parent=5 // pred_fallthru
        _
    $region6: #{tpu_custom_call.1} parent=1 // loop_footer
      %s27 = sadd.s32 1, %s23
    $region7: #{tpu_custom_call.1} parent=1 // loop_footer_branch
      %22 = sbr.rel target = $region3
    $region8: #{tpu_custom_call.1} parent=1 // loop_exit
      _
    %8240 = vsyncpa [#allocation4], 1
    %s8241 = scalar_lea.sflag [#allocation4], 1
    %8242 = vsyncpa %s8241, 1
    %8243 = vsyncpa [#allocation7], 1
    %8244 = vsyncpa [#allocation10], 1
    %s8245 = scalar_lea.sflag [#allocation10], 1
    %8246 = vsyncpa %s8245, 1
    %8247 = vsyncpa [#allocation13], 1
    %8248 = vsyncpa [#allocation5], 1
    %s8249 = scalar_lea.sflag [#allocation5], 1
    %8250 = vsyncpa %s8249, 1

</llo_original>
